<compile_context>
chip_gen: v5e
topology: v5e:2x2
jax: 0.10.0
libtpu: 0.0.40
codegen_flags: <defaults>
</compile_context>

<pallas_src>
import jax
import jax.numpy as jnp
from jax.experimental import pallas as pl
from jax.experimental.pallas import tpu as pltpu

# ----------------------- small, TPU-friendly test config -----------------------
BATCH = 8              # (module default: 64)
SEQ_LEN = 8
INPUT_FEATURES = 128   # (module default: 1000)
HIDDEN = 128           # (module default: 512)
NUM_LAYERS = 2         # (module default: 16)
OUTPUT_DIM = 2


def _round_up(x, m):
    return (x + m - 1) // m * m


D0_PAD = _round_up(INPUT_FEATURES, 128)   # layer-0 padded input width
D_W = max(D0_PAD, 2 * HIDDEN)             # stacked W_ih row count (shared across layers)


# ------------------------------ fused Pallas kernel ---------------------------------
def _bilstm_fused_kernel(x_ref, wih_ref, whh_ref, h0_ref, c0_ref,
                         wfc_ref, bfc_ref, out_ref, act_scr, gx_scr):
    """grid=(L,). One grid step = one bidirectional LSTM layer.

    x_ref:   (T*B, D0)     f32   layer-0 input (time-major, feature-padded to 128)
    wih_ref: (1, D_W, 8H)  bf16  input->gate weights, columns [fwd(4H) | bwd(4H)]
    whh_ref: (1, 2H, 8H)   bf16  block-diagonal [[W_hh_f, 0], [0, W_hh_b]]
    h0_ref:  (1, 2B, H)    f32   rows [0:B]=fwd h0, [B:2B]=bwd h0 (this layer)
    c0_ref:  (1, 2B, H)    f32
    wfc_ref: (2H, OUT)     bf16
    bfc_ref: (1, OUT)      f32
    out_ref: (B, OUT)      f32   softmax probabilities (written on last layer only)
    act_scr: (T*B, 2H)     f32   resident layer activations (concat output)
    gx_scr:  (T*B, 8H)     f32   hoisted x-gates for both directions
    """
    l = pl.program_id(0)
    n_layers = pl.num_programs(0)
    TB = gx_scr.shape[0]
    H = HIDDEN
    B = h0_ref.shape[1] // 2
    T = TB // B
    D0 = x_ref.shape[1]

    wih = wih_ref[0]      # (D_W, 8H) bf16
    whh = whh_ref[0]      # (2H, 8H)  bf16, block diagonal

    # ---- hoisted input projection: ONE big MXU matmul for both directions ----------
    @pl.when(l == 0)
    def _():
        # layer 0: use the true K (= D0) instead of D_W -> no wasted MACs on zero rows
        gx_scr[...] = jnp.dot(x_ref[...].astype(jnp.bfloat16), wih[0:D0, :],
                              preferred_element_type=jnp.float32)

    @pl.when(l > 0)
    def _():
        # layers >= 1: explicit [0:2H] row slice (never touches padding rows)
        gx_scr[...] = jnp.dot(act_scr[...].astype(jnp.bfloat16), wih[0:2 * H, :],
                              preferred_element_type=jnp.float32)

    h0 = h0_ref[0]
    c0 = c0_ref[0]
    h_f, c_f = h0[0:B, :], c0[0:B, :]
    h_b, c_b = h0[B:2 * B, :], c0[B:2 * B, :]

    def cell(gates, c_prev):
        i = jax.nn.sigmoid(gates[:, 0 * H:1 * H])
        f = jax.nn.sigmoid(gates[:, 1 * H:2 * H])
        g = jnp.tanh(gates[:, 2 * H:3 * H])
        o = jax.nn.sigmoid(gates[:, 3 * H:4 * H])
        c_new = f * c_prev + i * g
        h_new = o * jnp.tanh(c_new)
        return h_new, c_new

    # ---- serial recurrence, statically unrolled (T small & static; no vreg pressure
    #      issue at B=8, H=128 -> keep static; see review #8) --------------------------
    for t in range(T):
        tb = T - 1 - t
        # ONE merged fwd+bwd recurrent matmul (block-diagonal W_hh): K=2H fills the
        # 256-deep MXU on v6e/v7x and halves per-step issue/drain round-trips.
        h_cat = jnp.concatenate([h_f, h_b], axis=1).astype(jnp.bfloat16)   # (B, 2H)
        hg = jnp.dot(h_cat, whh, preferred_element_type=jnp.float32)       # (B, 8H)
        gates_f = gx_scr[t * B:(t + 1) * B, 0:4 * H] + hg[:, 0:4 * H]
        gates_b = gx_scr[tb * B:(tb + 1) * B, 4 * H:8 * H] + hg[:, 4 * H:8 * H]
        h_f, c_f = cell(gates_f, c_f)
        h_b, c_b = cell(gates_b, c_b)

        # fused "concat": forward writes cols [0:H] at t, backward writes [H:2H] at T-1-t
        act_scr[t * B:(t + 1) * B, 0:H] = h_f
        act_scr[tb * B:(tb + 1) * B, H:2 * H] = h_b

    # ---- fused final Linear + softmax on the last layer's last time step ------------
    @pl.when(l == n_layers - 1)
    def _():
        h_last = act_scr[(T - 1) * B:T * B, :]                      # (B, 2H)
        logits = jnp.dot(h_last.astype(jnp.bfloat16), wfc_ref[...],
                         preferred_element_type=jnp.float32) + bfc_ref[...]
        m = jnp.max(logits, axis=1, keepdims=True)
        e = jnp.exp(logits - m)
        out_ref[...] = e / jnp.sum(e, axis=1, keepdims=True)


def _pallas_bilstm(x2d, wih_all, whh_all, h0_all, c0_all, w_fc, b_fc):
    TB, D0 = x2d.shape
    L = wih_all.shape[0]
    H = HIDDEN
    # VMEM plan (review #4): toy config ~1.6 MB live.  At module defaults
    # (H=512, L=16, B=64, F=1000): W_ih (1024x4096 bf16, x2 buf) 16 MB + W_hh_blk
    # (1024x4096 bf16, x2 buf) 16 MB + act (512x1024 f32) 2 MB + gx (512x4096) 8 MB
    # -> store gx in bf16 and drop W_hh to single-buffering to stay inside v7x's 64 MiB.
    return pl.pallas_call(
        _bilstm_fused_kernel,
        out_shape=jax.ShapeDtypeStruct((BATCH, OUTPUT_DIM), jnp.float32),
        grid_spec=pltpu.PrefetchScalarGridSpec(
            num_scalar_prefetch=0,
            grid=(L,),
            in_specs=[
                pl.BlockSpec((TB, D0), lambda l: (0, 0)),                  # x (layer 0)
                pl.BlockSpec((1, D_W, 8 * H), lambda l: (l, 0, 0)),        # W_ih [fwd|bwd]
                pl.BlockSpec((1, 2 * H, 8 * H), lambda l: (l, 0, 0)),      # W_hh block-diag
                pl.BlockSpec((1, 2 * BATCH, H), lambda l: (l, 0, 0)),      # h0
                pl.BlockSpec((1, 2 * BATCH, H), lambda l: (l, 0, 0)),      # c0
                pl.BlockSpec((2 * H, OUTPUT_DIM), lambda l: (0, 0)),       # W_fc
                pl.BlockSpec((1, OUTPUT_DIM), lambda l: (0, 0)),           # b_fc
            ],
            out_specs=pl.BlockSpec((BATCH, OUTPUT_DIM), lambda l: (0, 0)),
            scratch_shapes=[
                pltpu.VMEM((TB, 2 * H), jnp.float32),     # resident layer activations
                pltpu.VMEM((TB, 8 * H), jnp.float32),     # hoisted x-gates (both dirs)
            ],
        ),
        compiler_params=pltpu.CompilerParams(
            dimension_semantics=("arbitrary",),           # layers are sequential
            vmem_limit_bytes=32 * 1024 * 1024,
        ),
    )(x2d, wih_all, whh_all, h0_all, c0_all, w_fc, b_fc)


@jax.jit
def bilstm_apply(X, wih_all, whh_all, h0, c0, w_fc, b_fc):
    """X: (batch, seq, features) -> (batch, OUTPUT_DIM) softmax probs."""
    B, T, F = X.shape
    x = jnp.transpose(X, (1, 0, 2))                       # time-major, like X.transpose(0,1)
    x = jnp.pad(x, ((0, 0), (0, 0), (0, D0_PAD - F)))     # zero-pad features to lane mult.
    x2d = x.reshape(T * B, D0_PAD)
    h0r = h0.reshape(NUM_LAYERS, 2 * B, HIDDEN)           # [l, 0:B]=fwd, [l, B:2B]=bwd
    c0r = c0.reshape(NUM_LAYERS, 2 * B, HIDDEN)
    return _pallas_bilstm(x2d, wih_all, whh_all, h0r, c0r, w_fc, b_fc)


# ------------------------------ parameter init ----------------------------------
def init_params(key):
    """Uniform(-1/sqrt(H), 1/sqrt(H)) init (PyTorch scale), stored pre-transposed.
    W_ih: (L, D_W, 8H), columns [fwd(4H) | bwd(4H)], layer-0 rows [F:D_W] zero (unused).
    W_hh: (L, 2H, 8H) block-diagonal [[W_hh_f, 0], [0, W_hh_b]] so one matmul feeds
    both directions' gates per time step."""
    H = HIDDEN
    scale = 1.0 / jnp.sqrt(jnp.float32(H))
    wih_list, whh_list = [], []
    for l in range(NUM_LAYERS):
        d_in = INPUT_FEATURES if l == 0 else 2 * H
        keys = jax.random.split(jax.random.fold_in(key, l), 4)
        wih_f = jax.random.uniform(keys[0], (d_in, 4 * H), jnp.float32, -scale, scale)
        whh_f = jax.random.uniform(keys[1], (H, 4 * H), jnp.float32, -scale, scale)
        wih_b = jax.random.uniform(keys[2], (d_in, 4 * H), jnp.float32, -scale, scale)
        whh_b = jax.random.uniform(keys[3], (H, 4 * H), jnp.float32, -scale, scale)

        wih_pad = jnp.zeros((D_W, 8 * H), jnp.float32)
        wih_pad = wih_pad.at[:d_in, 0:4 * H].set(wih_f)
        wih_pad = wih_pad.at[:d_in, 4 * H:8 * H].set(wih_b)
        wih_list.append(wih_pad)

        whh_blk = jnp.zeros((2 * H, 8 * H), jnp.float32)
        whh_blk = whh_blk.at[0:H, 0:4 * H].set(whh_f)
        whh_blk = whh_blk.at[H:2 * H, 4 * H:8 * H].set(whh_b)
        whh_list.append(whh_blk)

    wih_all = jnp.stack(wih_list).astype(jnp.bfloat16)     # (L, D_W, 8H)
    whh_all = jnp.stack(whh_list).astype(jnp.bfloat16)     # (L, 2H, 8H)

    kfc = jax.random.fold_in(key, 1000)
    k1, k2 = jax.random.split(kfc)
    fc_scale = 1.0 / jnp.sqrt(jnp.float32(2 * H))
    w_fc = jax.random.uniform(k1, (2 * H, OUTPUT_DIM), jnp.float32,
                              -fc_scale, fc_scale).astype(jnp.bfloat16)
    b_fc = jax.random.uniform(k2, (1, OUTPUT_DIM), jnp.float32, -fc_scale, fc_scale)
    return wih_all, whh_all, w_fc, b_fc


# ------------------------------ pure-JAX reference -------------------------------
def bilstm_reference(X, wih_all, whh_all, h0, c0, w_fc, b_fc):
    H = HIDDEN
    B = X.shape[0]
    x = jnp.transpose(X, (1, 0, 2))
    x = jnp.pad(x, ((0, 0), (0, 0), (0, D0_PAD - X.shape[2])))
    h0 = h0.reshape(NUM_LAYERS, 2, B, H)
    c0 = c0.reshape(NUM_LAYERS, 2, B, H)

    def run_dir(xs, h, c, wih, whh):
        def step(carry, xt):
            h, c = carry
            g = xt @ wih + h @ whh
            i = jax.nn.sigmoid(g[:, 0 * H:1 * H])
            f = jax.nn.sigmoid(g[:, 1 * H:2 * H])
            gg = jnp.tanh(g[:, 2 * H:3 * H])
            o = jax.nn.sigmoid(g[:, 3 * H:4 * H])
            c = f * c + i * gg
            h = o * jnp.tanh(c)
            return (h, c), h
        _, hs = jax.lax.scan(step, (h, c), xs)
        return hs

    for l in range(NUM_LAYERS):
        d_in = D0_PAD if l == 0 else 2 * H
        wih = wih_all[l, :d_in].astype(jnp.float32)
        wf, wb = wih[:, 0:4 * H], wih[:, 4 * H:8 * H]
        whf = whh_all[l, 0:H, 0:4 * H].astype(jnp.float32)
        whb = whh_all[l, H:2 * H, 4 * H:8 * H].astype(jnp.float32)
        out_f = run_dir(x, h0[l, 0], c0[l, 0], wf, whf)
        out_b = run_dir(x[::-1], h0[l, 1], c0[l, 1], wb, whb)[::-1]
        x = jnp.concatenate([out_f, out_b], axis=-1)        # (T, B, 2H)
    logits = x[-1] @ w_fc.astype(jnp.float32) + b_fc
    return jax.nn.softmax(logits, axis=1)


# ----------------------------------- main ----------------------------------------
if __name__ == "__main__":
    key = jax.random.PRNGKey(0)
    k_x, k_p, k_h, k_c = jax.random.split(key, 4)

    X = jax.random.normal(k_x, (BATCH, SEQ_LEN, INPUT_FEATURES), jnp.float32)
    wih_all, whh_all, w_fc, b_fc = init_params(k_p)

    # TODO(synk): torch.randn h0/c0 inside forward() -> deterministic jax.random inputs here.
    h0 = jax.random.normal(k_h, (NUM_LAYERS * 2, BATCH, HIDDEN), jnp.float32)
    c0 = jax.random.normal(k_c, (NUM_LAYERS * 2, BATCH, HIDDEN), jnp.float32)

    out = bilstm_apply(X, wih_all, whh_all, h0, c0, w_fc, b_fc)
    out = jax.block_until_ready(out)

    ref = bilstm_reference(X, wih_all, whh_all, h0, c0, w_fc, b_fc)

    assert out.shape == (BATCH, OUTPUT_DIM)
    assert jnp.allclose(jnp.sum(out, axis=1), 1.0, atol=1e-4)
    assert jnp.allclose(out, ref, atol=7e-2), float(jnp.max(jnp.abs(out - ref)))
    print("KERNEL_OK")
</pallas_src>

<mosaic_0001>
module attributes {stable_mosaic.version = 11 : i64} {
  func.func @_bilstm_fused_kernel(%arg0: i32, %arg1: memref<64x128xf32, #tpu.memory_space<vmem>>, %arg2: memref<1x256x1024xbf16, #tpu.memory_space<vmem>>, %arg3: memref<1x256x1024xbf16, #tpu.memory_space<vmem>>, %arg4: memref<1x16x128xf32, #tpu.memory_space<vmem>>, %arg5: memref<1x16x128xf32, #tpu.memory_space<vmem>>, %arg6: memref<256x2xbf16, #tpu.memory_space<vmem>>, %arg7: memref<1x2xf32, #tpu.memory_space<vmem>>, %arg8: memref<8x2xf32, #tpu.memory_space<vmem>>, %arg9: memref<64x256xf32, #tpu.memory_space<vmem>>, %arg10: memref<64x1024xf32, #tpu.memory_space<vmem>>) attributes {dimension_semantics = [#tpu.dimension_semantics<arbitrary>], iteration_bounds = array<i64: 2>, scalar_prefetch = 0 : i64, scratch_operands = 2 : i64, tpu.core_type = #tpu.core_type<tc>, window_params = [{pipeline_mode = #tpu.pipeline_mode<synchronous>, transform_indices = @transform_0, window_bounds = array<i64: 64, 128>}, {transform_indices = @transform_1, window_bounds = array<i64: 1, 256, 1024>}, {transform_indices = @transform_2, window_bounds = array<i64: 1, 256, 1024>}, {transform_indices = @transform_3, window_bounds = array<i64: 1, 16, 128>}, {transform_indices = @transform_4, window_bounds = array<i64: 1, 16, 128>}, {pipeline_mode = #tpu.pipeline_mode<synchronous>, transform_indices = @transform_5, window_bounds = array<i64: 256, 2>}, {pipeline_mode = #tpu.pipeline_mode<synchronous>, transform_indices = @transform_6, window_bounds = array<i64: 1, 2>}, {pipeline_mode = #tpu.pipeline_mode<synchronous>, transform_indices = @transform_7, window_bounds = array<i64: 8, 2>}]} {
    %c0 = arith.constant 0 : index
    %c0_0 = arith.constant 0 : index
    %c0_1 = arith.constant 0 : index
    %0 = vector.load %arg2[%c0, %c0_0, %c0_1] : memref<1x256x1024xbf16, #tpu.memory_space<vmem>>, vector<1x256x1024xbf16>
    %1 = vector.shape_cast %0 : vector<1x256x1024xbf16> to vector<256x1024xbf16>
    %c0_2 = arith.constant 0 : index
    %c0_3 = arith.constant 0 : index
    %c0_4 = arith.constant 0 : index
    %2 = vector.load %arg3[%c0_2, %c0_3, %c0_4] : memref<1x256x1024xbf16, #tpu.memory_space<vmem>>, vector<1x256x1024xbf16>
    %3 = vector.shape_cast %2 : vector<1x256x1024xbf16> to vector<256x1024xbf16>
    %c0_i32 = arith.constant 0 : i32
    %4 = arith.cmpi eq, %arg0, %c0_i32 : i32
    %5 = arith.extui %4 : i1 to i32
    %c0_i32_5 = arith.constant 0 : i32
    %6 = arith.cmpi ne, %5, %c0_i32_5 : i32
    scf.if %6 {
      %c0_125 = arith.constant 0 : index
      %c0_126 = arith.constant 0 : index
      %509 = vector.load %arg1[%c0_125, %c0_126] : memref<64x128xf32, #tpu.memory_space<vmem>>, vector<64x128xf32>
      %510 = arith.truncf %509 : vector<64x128xf32> to vector<64x128xbf16>
      %511 = vector.extract_strided_slice %1 {offsets = [0, 0], sizes = [128, 1024], strides = [1, 1]} : vector<256x1024xbf16> to vector<128x1024xbf16>
      %cst_127 = arith.constant dense<0.000000e+00> : vector<64x1024xf32>
      %512 = tpu.matmul %510, %511, %cst_127 {dimension_numbers = #tpu.dot_dimension_numbers<[1], [0], [0], [1], [0, 0, 1, 1], [], []>} : vector<64x128xbf16>, vector<128x1024xbf16>, vector<64x1024xf32> -> vector<64x1024xf32>
      %c0_128 = arith.constant 0 : index
      %c0_129 = arith.constant 0 : index
      %513 = vector.load %arg10[%c0_128, %c0_129] : memref<64x1024xf32, #tpu.memory_space<vmem>>, vector<64x1024xf32>
      tpu.vector_store %arg10[%c0_128, %c0_129], %512 {strides = array<i32>} : memref<64x1024xf32, #tpu.memory_space<vmem>>, vector<64x1024xf32>,
    } else {
    }
    %c0_i32_6 = arith.constant 0 : i32
    %7 = arith.cmpi sgt, %arg0, %c0_i32_6 : i32
    %8 = arith.extui %7 : i1 to i32
    %c0_i32_7 = arith.constant 0 : i32
    %9 = arith.cmpi ne, %8, %c0_i32_7 : i32
    scf.if %9 {
      %c0_125 = arith.constant 0 : index
      %c0_126 = arith.constant 0 : index
      %509 = vector.load %arg9[%c0_125, %c0_126] : memref<64x256xf32, #tpu.memory_space<vmem>>, vector<64x256xf32>
      %510 = arith.truncf %509 : vector<64x256xf32> to vector<64x256xbf16>
      %cst_127 = arith.constant dense<0.000000e+00> : vector<64x1024xf32>
      %511 = tpu.matmul %510, %1, %cst_127 {dimension_numbers = #tpu.dot_dimension_numbers<[1], [0], [0], [1], [0, 0, 1, 1], [], []>} : vector<64x256xbf16>, vector<256x1024xbf16>, vector<64x1024xf32> -> vector<64x1024xf32>
      %c0_128 = arith.constant 0 : index
      %c0_129 = arith.constant 0 : index
      %512 = vector.load %arg10[%c0_128, %c0_129] : memref<64x1024xf32, #tpu.memory_space<vmem>>, vector<64x1024xf32>
      tpu.vector_store %arg10[%c0_128, %c0_129], %511 {strides = array<i32>} : memref<64x1024xf32, #tpu.memory_space<vmem>>, vector<64x1024xf32>,
    } else {
    }
    %c0_8 = arith.constant 0 : index
    %c0_9 = arith.constant 0 : index
    %c0_10 = arith.constant 0 : index
    %10 = vector.load %arg4[%c0_8, %c0_9, %c0_10] : memref<1x16x128xf32, #tpu.memory_space<vmem>>, vector<1x16x128xf32>
    %11 = vector.shape_cast %10 : vector<1x16x128xf32> to vector<16x128xf32>
    %c0_11 = arith.constant 0 : index
    %c0_12 = arith.constant 0 : index
    %c0_13 = arith.constant 0 : index
    %12 = vector.load %arg5[%c0_11, %c0_12, %c0_13] : memref<1x16x128xf32, #tpu.memory_space<vmem>>, vector<1x16x128xf32>
    %13 = vector.shape_cast %12 : vector<1x16x128xf32> to vector<16x128xf32>
    %14 = vector.extract_strided_slice %11 {offsets = [0, 0], sizes = [8, 128], strides = [1, 1]} : vector<16x128xf32> to vector<8x128xf32>
    %15 = vector.extract_strided_slice %13 {offsets = [0, 0], sizes = [8, 128], strides = [1, 1]} : vector<16x128xf32> to vector<8x128xf32>
    %16 = vector.extract_strided_slice %11 {offsets = [8, 0], sizes = [8, 128], strides = [1, 1]} : vector<16x128xf32> to vector<8x128xf32>
    %17 = vector.extract_strided_slice %13 {offsets = [8, 0], sizes = [8, 128], strides = [1, 1]} : vector<16x128xf32> to vector<8x128xf32>
    %18 = tpu.concatenate %14, %16 in 1 : vector<8x128xf32>, vector<8x128xf32> -> vector<8x256xf32>
    %19 = arith.truncf %18 : vector<8x256xf32> to vector<8x256xbf16>
    %cst = arith.constant dense<0.000000e+00> : vector<8x1024xf32>
    %20 = tpu.matmul %19, %3, %cst {dimension_numbers = #tpu.dot_dimension_numbers<[1], [0], [0], [1], [0, 0, 1, 1], [], []>} : vector<8x256xbf16>, vector<256x1024xbf16>, vector<8x1024xf32> -> vector<8x1024xf32>
    %c0_14 = arith.constant 0 : index
    %c0_15 = arith.constant 0 : index
    %21 = vector.load %arg10[%c0_14, %c0_15] : memref<64x1024xf32, #tpu.memory_space<vmem>>, vector<8x512xf32>
    %22 = vector.extract_strided_slice %20 {offsets = [0, 0], sizes = [8, 512], strides = [1, 1]} : vector<8x1024xf32> to vector<8x512xf32>
    %23 = arith.addf %21, %22 : vector<8x512xf32>
    %c56 = arith.constant 56 : index
    %c512 = arith.constant 512 : index
    %24 = vector.load %arg10[%c56, %c512] : memref<64x1024xf32, #tpu.memory_space<vmem>>, vector<8x512xf32>
    %25 = vector.extract_strided_slice %20 {offsets = [0, 512], sizes = [8, 512], strides = [1, 1]} : vector<8x1024xf32> to vector<8x512xf32>
    %26 = arith.addf %24, %25 : vector<8x512xf32>
    %27 = vector.extract_strided_slice %23 {offsets = [0, 0], sizes = [8, 128], strides = [1, 1]} : vector<8x512xf32> to vector<8x128xf32>
    %28 = arith.negf %27 : vector<8x128xf32>
    %29 = math.exp %28 : vector<8x128xf32>
    %cst_16 = arith.constant 1.000000e+00 : f32
    %30 = vector.broadcast %cst_16 : f32 to vector<8x128xf32>
    %31 = arith.addf %30, %29 : vector<8x128xf32>
    %32 = arith.divf %30, %31 : vector<8x128xf32>
    %33 = vector.extract_strided_slice %23 {offsets = [0, 128], sizes = [8, 128], strides = [1, 1]} : vector<8x512xf32> to vector<8x128xf32>
    %34 = arith.negf %33 : vector<8x128xf32>
    %35 = math.exp %34 : vector<8x128xf32>
    %cst_17 = arith.constant 1.000000e+00 : f32
    %36 = vector.broadcast %cst_17 : f32 to vector<8x128xf32>
    %37 = arith.addf %36, %35 : vector<8x128xf32>
    %38 = arith.divf %36, %37 : vector<8x128xf32>
    %39 = vector.extract_strided_slice %23 {offsets = [0, 256], sizes = [8, 128], strides = [1, 1]} : vector<8x512xf32> to vector<8x128xf32>
    %40 = math.tanh %39 : vector<8x128xf32>
    %41 = vector.extract_strided_slice %23 {offsets = [0, 384], sizes = [8, 128], strides = [1, 1]} : vector<8x512xf32> to vector<8x128xf32>
    %42 = arith.negf %41 : vector<8x128xf32>
    %43 = math.exp %42 : vector<8x128xf32>
    %cst_18 = arith.constant 1.000000e+00 : f32
    %44 = vector.broadcast %cst_18 : f32 to vector<8x128xf32>
    %45 = arith.addf %44, %43 : vector<8x128xf32>
    %46 = arith.divf %44, %45 : vector<8x128xf32>
    %47 = arith.mulf %38, %15 : vector<8x128xf32>
    %48 = arith.mulf %32, %40 : vector<8x128xf32>
    %49 = arith.addf %47, %48 : vector<8x128xf32>
    %50 = math.tanh %49 : vector<8x128xf32>
    %51 = arith.mulf %46, %50 : vector<8x128xf32>
    %52 = vector.extract_strided_slice %26 {offsets = [0, 0], sizes = [8, 128], strides = [1, 1]} : vector<8x512xf32> to vector<8x128xf32>
    %53 = arith.negf %52 : vector<8x128xf32>
    %54 = math.exp %53 : vector<8x128xf32>
    %cst_19 = arith.constant 1.000000e+00 : f32
    %55 = vector.broadcast %cst_19 : f32 to vector<8x128xf32>
    %56 = arith.addf %55, %54 : vector<8x128xf32>
    %57 = arith.divf %55, %56 : vector<8x128xf32>
    %58 = vector.extract_strided_slice %26 {offsets = [0, 128], sizes = [8, 128], strides = [1, 1]} : vector<8x512xf32> to vector<8x128xf32>
    %59 = arith.negf %58 : vector<8x128xf32>
    %60 = math.exp %59 : vector<8x128xf32>
    %cst_20 = arith.constant 1.000000e+00 : f32
    %61 = vector.broadcast %cst_20 : f32 to vector<8x128xf32>
    %62 = arith.addf %61, %60 : vector<8x128xf32>
    %63 = arith.divf %61, %62 : vector<8x128xf32>
    %64 = vector.extract_strided_slice %26 {offsets = [0, 256], sizes = [8, 128], strides = [1, 1]} : vector<8x512xf32> to vector<8x128xf32>
    %65 = math.tanh %64 : vector<8x128xf32>
    %66 = vector.extract_strided_slice %26 {offsets = [0, 384], sizes = [8, 128], strides = [1, 1]} : vector<8x512xf32> to vector<8x128xf32>
    %67 = arith.negf %66 : vector<8x128xf32>
    %68 = math.exp %67 : vector<8x128xf32>
    %cst_21 = arith.constant 1.000000e+00 : f32
    %69 = vector.broadcast %cst_21 : f32 to vector<8x128xf32>
    %70 = arith.addf %69, %68 : vector<8x128xf32>
    %71 = arith.divf %69, %70 : vector<8x128xf32>
    %72 = arith.mulf %63, %17 : vector<8x128xf32>
    %73 = arith.mulf %57, %65 : vector<8x128xf32>
    %74 = arith.addf %72, %73 : vector<8x128xf32>
    %75 = math.tanh %74 : vector<8x128xf32>
    %76 = arith.mulf %71, %75 : vector<8x128xf32>
    %c0_22 = arith.constant 0 : index
    %c0_23 = arith.constant 0 : index
    %77 = vector.load %arg9[%c0_22, %c0_23] : memref<64x256xf32, #tpu.memory_space<vmem>>, vector<8x128xf32>
    tpu.vector_store %arg9[%c0_22, %c0_23], %51 {strides = array<i32>} : memref<64x256xf32, #tpu.memory_space<vmem>>, vector<8x128xf32>,
    %c56_24 = arith.constant 56 : index
    %c128 = arith.constant 128 : index
    %78 = vector.load %arg9[%c56_24, %c128] : memref<64x256xf32, #tpu.memory_space<vmem>>, vector<8x128xf32>
    tpu.vector_store %arg9[%c56_24, %c128], %76 {strides = array<i32>} : memref<64x256xf32, #tpu.memory_space<vmem>>, vector<8x128xf32>,
    %79 = tpu.concatenate %51, %76 in 1 : vector<8x128xf32>, vector<8x128xf32> -> vector<8x256xf32>
    %80 = arith.truncf %79 : vector<8x256xf32> to vector<8x256xbf16>
    %cst_25 = arith.constant dense<0.000000e+00> : vector<8x1024xf32>
    %81 = tpu.matmul %80, %3, %cst_25 {dimension_numbers = #tpu.dot_dimension_numbers<[1], [0], [0], [1], [0, 0, 1, 1], [], []>} : vector<8x256xbf16>, vector<256x1024xbf16>, vector<8x1024xf32> -> vector<8x1024xf32>
    %c8 = arith.constant 8 : index
    %c0_26 = arith.constant 0 : index
    %82 = vector.load %arg10[%c8, %c0_26] : memref<64x1024xf32, #tpu.memory_space<vmem>>, vector<8x512xf32>
    %83 = vector.extract_strided_slice %81 {offsets = [0, 0], sizes = [8, 512], strides = [1, 1]} : vector<8x1024xf32> to vector<8x512xf32>
    %84 = arith.addf %82, %83 : vector<8x512xf32>
    %c48 = arith.constant 48 : index
    %c512_27 = arith.constant 512 : index
    %85 = vector.load %arg10[%c48, %c512_27] : memref<64x1024xf32, #tpu.memory_space<vmem>>, vector<8x512xf32>
    %86 = vector.extract_strided_slice %81 {offsets = [0, 512], sizes = [8, 512], strides = [1, 1]} : vector<8x1024xf32> to vector<8x512xf32>
    %87 = arith.addf %85, %86 : vector<8x512xf32>
    %88 = vector.extract_strided_slice %84 {offsets = [0, 0], sizes = [8, 128], strides = [1, 1]} : vector<8x512xf32> to vector<8x128xf32>
    %89 = arith.negf %88 : vector<8x128xf32>
    %90 = math.exp %89 : vector<8x128xf32>
    %cst_28 = arith.constant 1.000000e+00 : f32
    %91 = vector.broadcast %cst_28 : f32 to vector<8x128xf32>
    %92 = arith.addf %91, %90 : vector<8x128xf32>
    %93 = arith.divf %91, %92 : vector<8x128xf32>
    %94 = vector.extract_strided_slice %84 {offsets = [0, 128], sizes = [8, 128], strides = [1, 1]} : vector<8x512xf32> to vector<8x128xf32>
    %95 = arith.negf %94 : vector<8x128xf32>
    %96 = math.exp %95 : vector<8x128xf32>
    %cst_29 = arith.constant 1.000000e+00 : f32
    %97 = vector.broadcast %cst_29 : f32 to vector<8x128xf32>
    %98 = arith.addf %97, %96 : vector<8x128xf32>
    %99 = arith.divf %97, %98 : vector<8x128xf32>
    %100 = vector.extract_strided_slice %84 {offsets = [0, 256], sizes = [8, 128], strides = [1, 1]} : vector<8x512xf32> to vector<8x128xf32>
    %101 = math.tanh %100 : vector<8x128xf32>
    %102 = vector.extract_strided_slice %84 {offsets = [0, 384], sizes = [8, 128], strides = [1, 1]} : vector<8x512xf32> to vector<8x128xf32>
    %103 = arith.negf %102 : vector<8x128xf32>
    %104 = math.exp %103 : vector<8x128xf32>
    %cst_30 = arith.constant 1.000000e+00 : f32
    %105 = vector.broadcast %cst_30 : f32 to vector<8x128xf32>
    %106 = arith.addf %105, %104 : vector<8x128xf32>
    %107 = arith.divf %105, %106 : vector<8x128xf32>
    %108 = arith.mulf %99, %49 : vector<8x128xf32>
    %109 = arith.mulf %93, %101 : vector<8x128xf32>
    %110 = arith.addf %108, %109 : vector<8x128xf32>
    %111 = math.tanh %110 : vector<8x128xf32>
    %112 = arith.mulf %107, %111 : vector<8x128xf32>
    %113 = vector.extract_strided_slice %87 {offsets = [0, 0], sizes = [8, 128], strides = [1, 1]} : vector<8x512xf32> to vector<8x128xf32>
    %114 = arith.negf %113 : vector<8x128xf32>
    %115 = math.exp %114 : vector<8x128xf32>
    %cst_31 = arith.constant 1.000000e+00 : f32
    %116 = vector.broadcast %cst_31 : f32 to vector<8x128xf32>
    %117 = arith.addf %116, %115 : vector<8x128xf32>
    %118 = arith.divf %116, %117 : vector<8x128xf32>
    %119 = vector.extract_strided_slice %87 {offsets = [0, 128], sizes = [8, 128], strides = [1, 1]} : vector<8x512xf32> to vector<8x128xf32>
    %120 = arith.negf %119 : vector<8x128xf32>
    %121 = math.exp %120 : vector<8x128xf32>
    %cst_32 = arith.constant 1.000000e+00 : f32
    %122 = vector.broadcast %cst_32 : f32 to vector<8x128xf32>
    %123 = arith.addf %122, %121 : vector<8x128xf32>
    %124 = arith.divf %122, %123 : vector<8x128xf32>
    %125 = vector.extract_strided_slice %87 {offsets = [0, 256], sizes = [8, 128], strides = [1, 1]} : vector<8x512xf32> to vector<8x128xf32>
    %126 = math.tanh %125 : vector<8x128xf32>
    %127 = vector.extract_strided_slice %87 {offsets = [0, 384], sizes = [8, 128], strides = [1, 1]} : vector<8x512xf32> to vector<8x128xf32>
    %128 = arith.negf %127 : vector<8x128xf32>
    %129 = math.exp %128 : vector<8x128xf32>
    %cst_33 = arith.constant 1.000000e+00 : f32
    %130 = vector.broadcast %cst_33 : f32 to vector<8x128xf32>
    %131 = arith.addf %130, %129 : vector<8x128xf32>
    %132 = arith.divf %130, %131 : vector<8x128xf32>
    %133 = arith.mulf %124, %74 : vector<8x128xf32>
    %134 = arith.mulf %118, %126 : vector<8x128xf32>
    %135 = arith.addf %133, %134 : vector<8x128xf32>
    %136 = math.tanh %135 : vector<8x128xf32>
    %137 = arith.mulf %132, %136 : vector<8x128xf32>
    %c8_34 = arith.constant 8 : index
    %c0_35 = arith.constant 0 : index
    %138 = vector.load %arg9[%c8_34, %c0_35] : memref<64x256xf32, #tpu.memory_space<vmem>>, vector<8x128xf32>
    tpu.vector_store %arg9[%c8_34, %c0_35], %112 {strides = array<i32>} : memref<64x256xf32, #tpu.memory_space<vmem>>, vector<8x128xf32>,
    %c48_36 = arith.constant 48 : index
    %c128_37 = arith.constant 128 : index
    %139 = vector.load %arg9[%c48_36, %c128_37] : memref<64x256xf32, #tpu.memory_space<vmem>>, vector<8x128xf32>
    tpu.vector_store %arg9[%c48_36, %c128_37], %137 {strides = array<i32>} : memref<64x256xf32, #tpu.memory_space<vmem>>, vector<8x128xf32>,
    %140 = tpu.concatenate %112, %137 in 1 : vector<8x128xf32>, vector<8x128xf32> -> vector<8x256xf32>
    %141 = arith.truncf %140 : vector<8x256xf32> to vector<8x256xbf16>
    %cst_38 = arith.constant dense<0.000000e+00> : vector<8x1024xf32>
    %142 = tpu.matmul %141, %3, %cst_38 {dimension_numbers = #tpu.dot_dimension_numbers<[1], [0], [0], [1], [0, 0, 1, 1], [], []>} : vector<8x256xbf16>, vector<256x1024xbf16>, vector<8x1024xf32> -> vector<8x1024xf32>
    %c16 = arith.constant 16 : index
    %c0_39 = arith.constant 0 : index
    %143 = vector.load %arg10[%c16, %c0_39] : memref<64x1024xf32, #tpu.memory_space<vmem>>, vector<8x512xf32>
    %144 = vector.extract_strided_slice %142 {offsets = [0, 0], sizes = [8, 512], strides = [1, 1]} : vector<8x1024xf32> to vector<8x512xf32>
    %145 = arith.addf %143, %144 : vector<8x512xf32>
    %c40 = arith.constant 40 : index
    %c512_40 = arith.constant 512 : index
    %146 = vector.load %arg10[%c40, %c512_40] : memref<64x1024xf32, #tpu.memory_space<vmem>>, vector<8x512xf32>
    %147 = vector.extract_strided_slice %142 {offsets = [0, 512], sizes = [8, 512], strides = [1, 1]} : vector<8x1024xf32> to vector<8x512xf32>
    %148 = arith.addf %146, %147 : vector<8x512xf32>
    %149 = vector.extract_strided_slice %145 {offsets = [0, 0], sizes = [8, 128], strides = [1, 1]} : vector<8x512xf32> to vector<8x128xf32>
    %150 = arith.negf %149 : vector<8x128xf32>
    %151 = math.exp %150 : vector<8x128xf32>
    %cst_41 = arith.constant 1.000000e+00 : f32
    %152 = vector.broadcast %cst_41 : f32 to vector<8x128xf32>
    %153 = arith.addf %152, %151 : vector<8x128xf32>
    %154 = arith.divf %152, %153 : vector<8x128xf32>
    %155 = vector.extract_strided_slice %145 {offsets = [0, 128], sizes = [8, 128], strides = [1, 1]} : vector<8x512xf32> to vector<8x128xf32>
    %156 = arith.negf %155 : vector<8x128xf32>
    %157 = math.exp %156 : vector<8x128xf32>
    %cst_42 = arith.constant 1.000000e+00 : f32
    %158 = vector.broadcast %cst_42 : f32 to vector<8x128xf32>
    %159 = arith.addf %158, %157 : vector<8x128xf32>
    %160 = arith.divf %158, %159 : vector<8x128xf32>
    %161 = vector.extract_strided_slice %145 {offsets = [0, 256], sizes = [8, 128], strides = [1, 1]} : vector<8x512xf32> to vector<8x128xf32>
    %162 = math.tanh %161 : vector<8x128xf32>
    %163 = vector.extract_strided_slice %145 {offsets = [0, 384], sizes = [8, 128], strides = [1, 1]} : vector<8x512xf32> to vector<8x128xf32>
    %164 = arith.negf %163 : vector<8x128xf32>
    %165 = math.exp %164 : vector<8x128xf32>
    %cst_43 = arith.constant 1.000000e+00 : f32
    %166 = vector.broadcast %cst_43 : f32 to vector<8x128xf32>
    %167 = arith.addf %166, %165 : vector<8x128xf32>
    %168 = arith.divf %166, %167 : vector<8x128xf32>
    %169 = arith.mulf %160, %110 : vector<8x128xf32>
    %170 = arith.mulf %154, %162 : vector<8x128xf32>
    %171 = arith.addf %169, %170 : vector<8x128xf32>
    %172 = math.tanh %171 : vector<8x128xf32>
    %173 = arith.mulf %168, %172 : vector<8x128xf32>
    %174 = vector.extract_strided_slice %148 {offsets = [0, 0], sizes = [8, 128], strides = [1, 1]} : vector<8x512xf32> to vector<8x128xf32>
    %175 = arith.negf %174 : vector<8x128xf32>
    %176 = math.exp %175 : vector<8x128xf32>
    %cst_44 = arith.constant 1.000000e+00 : f32
    %177 = vector.broadcast %cst_44 : f32 to vector<8x128xf32>
    %178 = arith.addf %177, %176 : vector<8x128xf32>
    %179 = arith.divf %177, %178 : vector<8x128xf32>
    %180 = vector.extract_strided_slice %148 {offsets = [0, 128], sizes = [8, 128], strides = [1, 1]} : vector<8x512xf32> to vector<8x128xf32>
    %181 = arith.negf %180 : vector<8x128xf32>
    %182 = math.exp %181 : vector<8x128xf32>
    %cst_45 = arith.constant 1.000000e+00 : f32
    %183 = vector.broadcast %cst_45 : f32 to vector<8x128xf32>
    %184 = arith.addf %183, %182 : vector<8x128xf32>
    %185 = arith.divf %183, %184 : vector<8x128xf32>
    %186 = vector.extract_strided_slice %148 {offsets = [0, 256], sizes = [8, 128], strides = [1, 1]} : vector<8x512xf32> to vector<8x128xf32>
    %187 = math.tanh %186 : vector<8x128xf32>
    %188 = vector.extract_strided_slice %148 {offsets = [0, 384], sizes = [8, 128], strides = [1, 1]} : vector<8x512xf32> to vector<8x128xf32>
    %189 = arith.negf %188 : vector<8x128xf32>
    %190 = math.exp %189 : vector<8x128xf32>
    %cst_46 = arith.constant 1.000000e+00 : f32
    %191 = vector.broadcast %cst_46 : f32 to vector<8x128xf32>
    %192 = arith.addf %191, %190 : vector<8x128xf32>
    %193 = arith.divf %191, %192 : vector<8x128xf32>
    %194 = arith.mulf %185, %135 : vector<8x128xf32>
    %195 = arith.mulf %179, %187 : vector<8x128xf32>
    %196 = arith.addf %194, %195 : vector<8x128xf32>
    %197 = math.tanh %196 : vector<8x128xf32>
    %198 = arith.mulf %193, %197 : vector<8x128xf32>
    %c16_47 = arith.constant 16 : index
    %c0_48 = arith.constant 0 : index
    %199 = vector.load %arg9[%c16_47, %c0_48] : memref<64x256xf32, #tpu.memory_space<vmem>>, vector<8x128xf32>
    tpu.vector_store %arg9[%c16_47, %c0_48], %173 {strides = array<i32>} : memref<64x256xf32, #tpu.memory_space<vmem>>, vector<8x128xf32>,
    %c40_49 = arith.constant 40 : index
    %c128_50 = arith.constant 128 : index
    %200 = vector.load %arg9[%c40_49, %c128_50] : memref<64x256xf32, #tpu.memory_space<vmem>>, vector<8x128xf32>
    tpu.vector_store %arg9[%c40_49, %c128_50], %198 {strides = array<i32>} : memref<64x256xf32, #tpu.memory_space<vmem>>, vector<8x128xf32>,
    %201 = tpu.concatenate %173, %198 in 1 : vector<8x128xf32>, vector<8x128xf32> -> vector<8x256xf32>
    %202 = arith.truncf %201 : vector<8x256xf32> to vector<8x256xbf16>
    %cst_51 = arith.constant dense<0.000000e+00> : vector<8x1024xf32>
    %203 = tpu.matmul %202, %3, %cst_51 {dimension_numbers = #tpu.dot_dimension_numbers<[1], [0], [0], [1], [0, 0, 1, 1], [], []>} : vector<8x256xbf16>, vector<256x1024xbf16>, vector<8x1024xf32> -> vector<8x1024xf32>
    %c24 = arith.constant 24 : index
    %c0_52 = arith.constant 0 : index
    %204 = vector.load %arg10[%c24, %c0_52] : memref<64x1024xf32, #tpu.memory_space<vmem>>, vector<8x512xf32>
    %205 = vector.extract_strided_slice %203 {offsets = [0, 0], sizes = [8, 512], strides = [1, 1]} : vector<8x1024xf32> to vector<8x512xf32>
    %206 = arith.addf %204, %205 : vector<8x512xf32>
    %c32 = arith.constant 32 : index
    %c512_53 = arith.constant 512 : index
    %207 = vector.load %arg10[%c32, %c512_53] : memref<64x1024xf32, #tpu.memory_space<vmem>>, vector<8x512xf32>
    %208 = vector.extract_strided_slice %203 {offsets = [0, 512], sizes = [8, 512], strides = [1, 1]} : vector<8x1024xf32> to vector<8x512xf32>
    %209 = arith.addf %207, %208 : vector<8x512xf32>
    %210 = vector.extract_strided_slice %206 {offsets = [0, 0], sizes = [8, 128], strides = [1, 1]} : vector<8x512xf32> to vector<8x128xf32>
    %211 = arith.negf %210 : vector<8x128xf32>
    %212 = math.exp %211 : vector<8x128xf32>
    %cst_54 = arith.constant 1.000000e+00 : f32
    %213 = vector.broadcast %cst_54 : f32 to vector<8x128xf32>
    %214 = arith.addf %213, %212 : vector<8x128xf32>
    %215 = arith.divf %213, %214 : vector<8x128xf32>
    %216 = vector.extract_strided_slice %206 {offsets = [0, 128], sizes = [8, 128], strides = [1, 1]} : vector<8x512xf32> to vector<8x128xf32>
    %217 = arith.negf %216 : vector<8x128xf32>
    %218 = math.exp %217 : vector<8x128xf32>
    %cst_55 = arith.constant 1.000000e+00 : f32
    %219 = vector.broadcast %cst_55 : f32 to vector<8x128xf32>
    %220 = arith.addf %219, %218 : vector<8x128xf32>
    %221 = arith.divf %219, %220 : vector<8x128xf32>
    %222 = vector.extract_strided_slice %206 {offsets = [0, 256], sizes = [8, 128], strides = [1, 1]} : vector<8x512xf32> to vector<8x128xf32>
    %223 = math.tanh %222 : vector<8x128xf32>
    %224 = vector.extract_strided_slice %206 {offsets = [0, 384], sizes = [8, 128], strides = [1, 1]} : vector<8x512xf32> to vector<8x128xf32>
    %225 = arith.negf %224 : vector<8x128xf32>
    %226 = math.exp %225 : vector<8x128xf32>
    %cst_56 = arith.constant 1.000000e+00 : f32
    %227 = vector.broadcast %cst_56 : f32 to vector<8x128xf32>
    %228 = arith.addf %227, %226 : vector<8x128xf32>
    %229 = arith.divf %227, %228 : vector<8x128xf32>
    %230 = arith.mulf %221, %171 : vector<8x128xf32>
    %231 = arith.mulf %215, %223 : vector<8x128xf32>
    %232 = arith.addf %230, %231 : vector<8x128xf32>
    %233 = math.tanh %232 : vector<8x128xf32>
    %234 = arith.mulf %229, %233 : vector<8x128xf32>
    %235 = vector.extract_strided_slice %209 {offsets = [0, 0], sizes = [8, 128], strides = [1, 1]} : vector<8x512xf32> to vector<8x128xf32>
    %236 = arith.negf %235 : vector<8x128xf32>
    %237 = math.exp %236 : vector<8x128xf32>
    %cst_57 = arith.constant 1.000000e+00 : f32
    %238 = vector.broadcast %cst_57 : f32 to vector<8x128xf32>
    %239 = arith.addf %238, %237 : vector<8x128xf32>
    %240 = arith.divf %238, %239 : vector<8x128xf32>
    %241 = vector.extract_strided_slice %209 {offsets = [0, 128], sizes = [8, 128], strides = [1, 1]} : vector<8x512xf32> to vector<8x128xf32>
    %242 = arith.negf %241 : vector<8x128xf32>
    %243 = math.exp %242 : vector<8x128xf32>
    %cst_58 = arith.constant 1.000000e+00 : f32
    %244 = vector.broadcast %cst_58 : f32 to vector<8x128xf32>
    %245 = arith.addf %244, %243 : vector<8x128xf32>
    %246 = arith.divf %244, %245 : vector<8x128xf32>
    %247 = vector.extract_strided_slice %209 {offsets = [0, 256], sizes = [8, 128], strides = [1, 1]} : vector<8x512xf32> to vector<8x128xf32>
    %248 = math.tanh %247 : vector<8x128xf32>
    %249 = vector.extract_strided_slice %209 {offsets = [0, 384], sizes = [8, 128], strides = [1, 1]} : vector<8x512xf32> to vector<8x128xf32>
    %250 = arith.negf %249 : vector<8x128xf32>
    %251 = math.exp %250 : vector<8x128xf32>
    %cst_59 = arith.constant 1.000000e+00 : f32
    %252 = vector.broadcast %cst_59 : f32 to vector<8x128xf32>
    %253 = arith.addf %252, %251 : vector<8x128xf32>
    %254 = arith.divf %252, %253 : vector<8x128xf32>
    %255 = arith.mulf %246, %196 : vector<8x128xf32>
    %256 = arith.mulf %240, %248 : vector<8x128xf32>
    %257 = arith.addf %255, %256 : vector<8x128xf32>
    %258 = math.tanh %257 : vector<8x128xf32>
    %259 = arith.mulf %254, %258 : vector<8x128xf32>
    %c24_60 = arith.constant 24 : index
    %c0_61 = arith.constant 0 : index
    %260 = vector.load %arg9[%c24_60, %c0_61] : memref<64x256xf32, #tpu.memory_space<vmem>>, vector<8x128xf32>
    tpu.vector_store %arg9[%c24_60, %c0_61], %234 {strides = array<i32>} : memref<64x256xf32, #tpu.memory_space<vmem>>, vector<8x128xf32>,
    %c32_62 = arith.constant 32 : index
    %c128_63 = arith.constant 128 : index
    %261 = vector.load %arg9[%c32_62, %c128_63] : memref<64x256xf32, #tpu.memory_space<vmem>>, vector<8x128xf32>
    tpu.vector_store %arg9[%c32_62, %c128_63], %259 {strides = array<i32>} : memref<64x256xf32, #tpu.memory_space<vmem>>, vector<8x128xf32>,
    %262 = tpu.concatenate %234, %259 in 1 : vector<8x128xf32>, vector<8x128xf32> -> vector<8x256xf32>
    %263 = arith.truncf %262 : vector<8x256xf32> to vector<8x256xbf16>
    %cst_64 = arith.constant dense<0.000000e+00> : vector<8x1024xf32>
    %264 = tpu.matmul %263, %3, %cst_64 {dimension_numbers = #tpu.dot_dimension_numbers<[1], [0], [0], [1], [0, 0, 1, 1], [], []>} : vector<8x256xbf16>, vector<256x1024xbf16>, vector<8x1024xf32> -> vector<8x1024xf32>
    %c32_65 = arith.constant 32 : index
    %c0_66 = arith.constant 0 : index
    %265 = vector.load %arg10[%c32_65, %c0_66] : memref<64x1024xf32, #tpu.memory_space<vmem>>, vector<8x512xf32>
    %266 = vector.extract_strided_slice %264 {offsets = [0, 0], sizes = [8, 512], strides = [1, 1]} : vector<8x1024xf32> to vector<8x512xf32>
    %267 = arith.addf %265, %266 : vector<8x512xf32>
    %c24_67 = arith.constant 24 : index
    %c512_68 = arith.constant 512 : index
    %268 = vector.load %arg10[%c24_67, %c512_68] : memref<64x1024xf32, #tpu.memory_space<vmem>>, vector<8x512xf32>
    %269 = vector.extract_strided_slice %264 {offsets = [0, 512], sizes = [8, 512], strides = [1, 1]} : vector<8x1024xf32> to vector<8x512xf32>
    %270 = arith.addf %268, %269 : vector<8x512xf32>
    %271 = vector.extract_strided_slice %267 {offsets = [0, 0], sizes = [8, 128], strides = [1, 1]} : vector<8x512xf32> to vector<8x128xf32>
    %272 = arith.negf %271 : vector<8x128xf32>
    %273 = math.exp %272 : vector<8x128xf32>
    %cst_69 = arith.constant 1.000000e+00 : f32
    %274 = vector.broadcast %cst_69 : f32 to vector<8x128xf32>
    %275 = arith.addf %274, %273 : vector<8x128xf32>
    %276 = arith.divf %274, %275 : vector<8x128xf32>
    %277 = vector.extract_strided_slice %267 {offsets = [0, 128], sizes = [8, 128], strides = [1, 1]} : vector<8x512xf32> to vector<8x128xf32>
    %278 = arith.negf %277 : vector<8x128xf32>
    %279 = math.exp %278 : vector<8x128xf32>
    %cst_70 = arith.constant 1.000000e+00 : f32
    %280 = vector.broadcast %cst_70 : f32 to vector<8x128xf32>
    %281 = arith.addf %280, %279 : vector<8x128xf32>
    %282 = arith.divf %280, %281 : vector<8x128xf32>
    %283 = vector.extract_strided_slice %267 {offsets = [0, 256], sizes = [8, 128], strides = [1, 1]} : vector<8x512xf32> to vector<8x128xf32>
    %284 = math.tanh %283 : vector<8x128xf32>
    %285 = vector.extract_strided_slice %267 {offsets = [0, 384], sizes = [8, 128], strides = [1, 1]} : vector<8x512xf32> to vector<8x128xf32>
    %286 = arith.negf %285 : vector<8x128xf32>
    %287 = math.exp %286 : vector<8x128xf32>
    %cst_71 = arith.constant 1.000000e+00 : f32
    %288 = vector.broadcast %cst_71 : f32 to vector<8x128xf32>
    %289 = arith.addf %288, %287 : vector<8x128xf32>
    %290 = arith.divf %288, %289 : vector<8x128xf32>
    %291 = arith.mulf %282, %232 : vector<8x128xf32>
    %292 = arith.mulf %276, %284 : vector<8x128xf32>
    %293 = arith.addf %291, %292 : vector<8x128xf32>
    %294 = math.tanh %293 : vector<8x128xf32>
    %295 = arith.mulf %290, %294 : vector<8x128xf32>
    %296 = vector.extract_strided_slice %270 {offsets = [0, 0], sizes = [8, 128], strides = [1, 1]} : vector<8x512xf32> to vector<8x128xf32>
    %297 = arith.negf %296 : vector<8x128xf32>
    %298 = math.exp %297 : vector<8x128xf32>
    %cst_72 = arith.constant 1.000000e+00 : f32
    %299 = vector.broadcast %cst_72 : f32 to vector<8x128xf32>
    %300 = arith.addf %299, %298 : vector<8x128xf32>
    %301 = arith.divf %299, %300 : vector<8x128xf32>
    %302 = vector.extract_strided_slice %270 {offsets = [0, 128], sizes = [8, 128], strides = [1, 1]} : vector<8x512xf32> to vector<8x128xf32>
    %303 = arith.negf %302 : vector<8x128xf32>
    %304 = math.exp %303 : vector<8x128xf32>
    %cst_73 = arith.constant 1.000000e+00 : f32
    %305 = vector.broadcast %cst_73 : f32 to vector<8x128xf32>
    %306 = arith.addf %305, %304 : vector<8x128xf32>
    %307 = arith.divf %305, %306 : vector<8x128xf32>
    %308 = vector.extract_strided_slice %270 {offsets = [0, 256], sizes = [8, 128], strides = [1, 1]} : vector<8x512xf32> to vector<8x128xf32>
    %309 = math.tanh %308 : vector<8x128xf32>
    %310 = vector.extract_strided_slice %270 {offsets = [0, 384], sizes = [8, 128], strides = [1, 1]} : vector<8x512xf32> to vector<8x128xf32>
    %311 = arith.negf %310 : vector<8x128xf32>
    %312 = math.exp %311 : vector<8x128xf32>
    %cst_74 = arith.constant 1.000000e+00 : f32
    %313 = vector.broadcast %cst_74 : f32 to vector<8x128xf32>
    %314 = arith.addf %313, %312 : vector<8x128xf32>
    %315 = arith.divf %313, %314 : vector<8x128xf32>
    %316 = arith.mulf %307, %257 : vector<8x128xf32>
    %317 = arith.mulf %301, %309 : vector<8x128xf32>
    %318 = arith.addf %316, %317 : vector<8x128xf32>
    %319 = math.tanh %318 : vector<8x128xf32>
    %320 = arith.mulf %315, %319 : vector<8x128xf32>
    %c32_75 = arith.constant 32 : index
    %c0_76 = arith.constant 0 : index
    %321 = vector.load %arg9[%c32_75, %c0_76] : memref<64x256xf32, #tpu.memory_space<vmem>>, vector<8x128xf32>
    tpu.vector_store %arg9[%c32_75, %c0_76], %295 {strides = array<i32>} : memref<64x256xf32, #tpu.memory_space<vmem>>, vector<8x128xf32>,
    %c24_77 = arith.constant 24 : index
    %c128_78 = arith.constant 128 : index
    %322 = vector.load %arg9[%c24_77, %c128_78] : memref<64x256xf32, #tpu.memory_space<vmem>>, vector<8x128xf32>
    tpu.vector_store %arg9[%c24_77, %c128_78], %320 {strides = array<i32>} : memref<64x256xf32, #tpu.memory_space<vmem>>, vector<8x128xf32>,
    %323 = tpu.concatenate %295, %320 in 1 : vector<8x128xf32>, vector<8x128xf32> -> vector<8x256xf32>
    %324 = arith.truncf %323 : vector<8x256xf32> to vector<8x256xbf16>
    %cst_79 = arith.constant dense<0.000000e+00> : vector<8x1024xf32>
    %325 = tpu.matmul %324, %3, %cst_79 {dimension_numbers = #tpu.dot_dimension_numbers<[1], [0], [0], [1], [0, 0, 1, 1], [], []>} : vector<8x256xbf16>, vector<256x1024xbf16>, vector<8x1024xf32> -> vector<8x1024xf32>
    %c40_80 = arith.constant 40 : index
    %c0_81 = arith.constant 0 : index
    %326 = vector.load %arg10[%c40_80, %c0_81] : memref<64x1024xf32, #tpu.memory_space<vmem>>, vector<8x512xf32>
    %327 = vector.extract_strided_slice %325 {offsets = [0, 0], sizes = [8, 512], strides = [1, 1]} : vector<8x1024xf32> to vector<8x512xf32>
    %328 = arith.addf %326, %327 : vector<8x512xf32>
    %c16_82 = arith.constant 16 : index
    %c512_83 = arith.constant 512 : index
    %329 = vector.load %arg10[%c16_82, %c512_83] : memref<64x1024xf32, #tpu.memory_space<vmem>>, vector<8x512xf32>
    %330 = vector.extract_strided_slice %325 {offsets = [0, 512], sizes = [8, 512], strides = [1, 1]} : vector<8x1024xf32> to vector<8x512xf32>
    %331 = arith.addf %329, %330 : vector<8x512xf32>
    %332 = vector.extract_strided_slice %328 {offsets = [0, 0], sizes = [8, 128], strides = [1, 1]} : vector<8x512xf32> to vector<8x128xf32>
    %333 = arith.negf %332 : vector<8x128xf32>
    %334 = math.exp %333 : vector<8x128xf32>
    %cst_84 = arith.constant 1.000000e+00 : f32
    %335 = vector.broadcast %cst_84 : f32 to vector<8x128xf32>
    %336 = arith.addf %335, %334 : vector<8x128xf32>
    %337 = arith.divf %335, %336 : vector<8x128xf32>
    %338 = vector.extract_strided_slice %328 {offsets = [0, 128], sizes = [8, 128], strides = [1, 1]} : vector<8x512xf32> to vector<8x128xf32>
    %339 = arith.negf %338 : vector<8x128xf32>
    %340 = math.exp %339 : vector<8x128xf32>
    %cst_85 = arith.constant 1.000000e+00 : f32
    %341 = vector.broadcast %cst_85 : f32 to vector<8x128xf32>
    %342 = arith.addf %341, %340 : vector<8x128xf32>
    %343 = arith.divf %341, %342 : vector<8x128xf32>
    %344 = vector.extract_strided_slice %328 {offsets = [0, 256], sizes = [8, 128], strides = [1, 1]} : vector<8x512xf32> to vector<8x128xf32>
    %345 = math.tanh %344 : vector<8x128xf32>
    %346 = vector.extract_strided_slice %328 {offsets = [0, 384], sizes = [8, 128], strides = [1, 1]} : vector<8x512xf32> to vector<8x128xf32>
    %347 = arith.negf %346 : vector<8x128xf32>
    %348 = math.exp %347 : vector<8x128xf32>
    %cst_86 = arith.constant 1.000000e+00 : f32
    %349 = vector.broadcast %cst_86 : f32 to vector<8x128xf32>
    %350 = arith.addf %349, %348 : vector<8x128xf32>
    %351 = arith.divf %349, %350 : vector<8x128xf32>
    %352 = arith.mulf %343, %293 : vector<8x128xf32>
    %353 = arith.mulf %337, %345 : vector<8x128xf32>
    %354 = arith.addf %352, %353 : vector<8x128xf32>
    %355 = math.tanh %354 : vector<8x128xf32>
    %356 = arith.mulf %351, %355 : vector<8x128xf32>
    %357 = vector.extract_strided_slice %331 {offsets = [0, 0], sizes = [8, 128], strides = [1, 1]} : vector<8x512xf32> to vector<8x128xf32>
    %358 = arith.negf %357 : vector<8x128xf32>
    %359 = math.exp %358 : vector<8x128xf32>
    %cst_87 = arith.constant 1.000000e+00 : f32
    %360 = vector.broadcast %cst_87 : f32 to vector<8x128xf32>
    %361 = arith.addf %360, %359 : vector<8x128xf32>
    %362 = arith.divf %360, %361 : vector<8x128xf32>
    %363 = vector.extract_strided_slice %331 {offsets = [0, 128], sizes = [8, 128], strides = [1, 1]} : vector<8x512xf32> to vector<8x128xf32>
    %364 = arith.negf %363 : vector<8x128xf32>
    %365 = math.exp %364 : vector<8x128xf32>
    %cst_88 = arith.constant 1.000000e+00 : f32
    %366 = vector.broadcast %cst_88 : f32 to vector<8x128xf32>
    %367 = arith.addf %366, %365 : vector<8x128xf32>
    %368 = arith.divf %366, %367 : vector<8x128xf32>
    %369 = vector.extract_strided_slice %331 {offsets = [0, 256], sizes = [8, 128], strides = [1, 1]} : vector<8x512xf32> to vector<8x128xf32>
    %370 = math.tanh %369 : vector<8x128xf32>
    %371 = vector.extract_strided_slice %331 {offsets = [0, 384], sizes = [8, 128], strides = [1, 1]} : vector<8x512xf32> to vector<8x128xf32>
    %372 = arith.negf %371 : vector<8x128xf32>
    %373 = math.exp %372 : vector<8x128xf32>
    %cst_89 = arith.constant 1.000000e+00 : f32
    %374 = vector.broadcast %cst_89 : f32 to vector<8x128xf32>
    %375 = arith.addf %374, %373 : vector<8x128xf32>
    %376 = arith.divf %374, %375 : vector<8x128xf32>
    %377 = arith.mulf %368, %318 : vector<8x128xf32>
    %378 = arith.mulf %362, %370 : vector<8x128xf32>
    %379 = arith.addf %377, %378 : vector<8x128xf32>
    %380 = math.tanh %379 : vector<8x128xf32>
    %381 = arith.mulf %376, %380 : vector<8x128xf32>
    %c40_90 = arith.constant 40 : index
    %c0_91 = arith.constant 0 : index
    %382 = vector.load %arg9[%c40_90, %c0_91] : memref<64x256xf32, #tpu.memory_space<vmem>>, vector<8x128xf32>
    tpu.vector_store %arg9[%c40_90, %c0_91], %356 {strides = array<i32>} : memref<64x256xf32, #tpu.memory_space<vmem>>, vector<8x128xf32>,
    %c16_92 = arith.constant 16 : index
    %c128_93 = arith.constant 128 : index
    %383 = vector.load %arg9[%c16_92, %c128_93] : memref<64x256xf32, #tpu.memory_space<vmem>>, vector<8x128xf32>
    tpu.vector_store %arg9[%c16_92, %c128_93], %381 {strides = array<i32>} : memref<64x256xf32, #tpu.memory_space<vmem>>, vector<8x128xf32>,
    %384 = tpu.concatenate %356, %381 in 1 : vector<8x128xf32>, vector<8x128xf32> -> vector<8x256xf32>
    %385 = arith.truncf %384 : vector<8x256xf32> to vector<8x256xbf16>
    %cst_94 = arith.constant dense<0.000000e+00> : vector<8x1024xf32>
    %386 = tpu.matmul %385, %3, %cst_94 {dimension_numbers = #tpu.dot_dimension_numbers<[1], [0], [0], [1], [0, 0, 1, 1], [], []>} : vector<8x256xbf16>, vector<256x1024xbf16>, vector<8x1024xf32> -> vector<8x1024xf32>
    %c48_95 = arith.constant 48 : index
    %c0_96 = arith.constant 0 : index
    %387 = vector.load %arg10[%c48_95, %c0_96] : memref<64x1024xf32, #tpu.memory_space<vmem>>, vector<8x512xf32>
    %388 = vector.extract_strided_slice %386 {offsets = [0, 0], sizes = [8, 512], strides = [1, 1]} : vector<8x1024xf32> to vector<8x512xf32>
    %389 = arith.addf %387, %388 : vector<8x512xf32>
    %c8_97 = arith.constant 8 : index
    %c512_98 = arith.constant 512 : index
    %390 = vector.load %arg10[%c8_97, %c512_98] : memref<64x1024xf32, #tpu.memory_space<vmem>>, vector<8x512xf32>
    %391 = vector.extract_strided_slice %386 {offsets = [0, 512], sizes = [8, 512], strides = [1, 1]} : vector<8x1024xf32> to vector<8x512xf32>
    %392 = arith.addf %390, %391 : vector<8x512xf32>
    %393 = vector.extract_strided_slice %389 {offsets = [0, 0], sizes = [8, 128], strides = [1, 1]} : vector<8x512xf32> to vector<8x128xf32>
    %394 = arith.negf %393 : vector<8x128xf32>
    %395 = math.exp %394 : vector<8x128xf32>
    %cst_99 = arith.constant 1.000000e+00 : f32
    %396 = vector.broadcast %cst_99 : f32 to vector<8x128xf32>
    %397 = arith.addf %396, %395 : vector<8x128xf32>
    %398 = arith.divf %396, %397 : vector<8x128xf32>
    %399 = vector.extract_strided_slice %389 {offsets = [0, 128], sizes = [8, 128], strides = [1, 1]} : vector<8x512xf32> to vector<8x128xf32>
    %400 = arith.negf %399 : vector<8x128xf32>
    %401 = math.exp %400 : vector<8x128xf32>
    %cst_100 = arith.constant 1.000000e+00 : f32
    %402 = vector.broadcast %cst_100 : f32 to vector<8x128xf32>
    %403 = arith.addf %402, %401 : vector<8x128xf32>
    %404 = arith.divf %402, %403 : vector<8x128xf32>
    %405 = vector.extract_strided_slice %389 {offsets = [0, 256], sizes = [8, 128], strides = [1, 1]} : vector<8x512xf32> to vector<8x128xf32>
    %406 = math.tanh %405 : vector<8x128xf32>
    %407 = vector.extract_strided_slice %389 {offsets = [0, 384], sizes = [8, 128], strides = [1, 1]} : vector<8x512xf32> to vector<8x128xf32>
    %408 = arith.negf %407 : vector<8x128xf32>
    %409 = math.exp %408 : vector<8x128xf32>
    %cst_101 = arith.constant 1.000000e+00 : f32
    %410 = vector.broadcast %cst_101 : f32 to vector<8x128xf32>
    %411 = arith.addf %410, %409 : vector<8x128xf32>
    %412 = arith.divf %410, %411 : vector<8x128xf32>
    %413 = arith.mulf %404, %354 : vector<8x128xf32>
    %414 = arith.mulf %398, %406 : vector<8x128xf32>
    %415 = arith.addf %413, %414 : vector<8x128xf32>
    %416 = math.tanh %415 : vector<8x128xf32>
    %417 = arith.mulf %412, %416 : vector<8x128xf32>
    %418 = vector.extract_strided_slice %392 {offsets = [0, 0], sizes = [8, 128], strides = [1, 1]} : vector<8x512xf32> to vector<8x128xf32>
    %419 = arith.negf %418 : vector<8x128xf32>
    %420 = math.exp %419 : vector<8x128xf32>
    %cst_102 = arith.constant 1.000000e+00 : f32
    %421 = vector.broadcast %cst_102 : f32 to vector<8x128xf32>
    %422 = arith.addf %421, %420 : vector<8x128xf32>
    %423 = arith.divf %421, %422 : vector<8x128xf32>
    %424 = vector.extract_strided_slice %392 {offsets = [0, 128], sizes = [8, 128], strides = [1, 1]} : vector<8x512xf32> to vector<8x128xf32>
    %425 = arith.negf %424 : vector<8x128xf32>
    %426 = math.exp %425 : vector<8x128xf32>
    %cst_103 = arith.constant 1.000000e+00 : f32
    %427 = vector.broadcast %cst_103 : f32 to vector<8x128xf32>
    %428 = arith.addf %427, %426 : vector<8x128xf32>
    %429 = arith.divf %427, %428 : vector<8x128xf32>
    %430 = vector.extract_strided_slice %392 {offsets = [0, 256], sizes = [8, 128], strides = [1, 1]} : vector<8x512xf32> to vector<8x128xf32>
    %431 = math.tanh %430 : vector<8x128xf32>
    %432 = vector.extract_strided_slice %392 {offsets = [0, 384], sizes = [8, 128], strides = [1, 1]} : vector<8x512xf32> to vector<8x128xf32>
    %433 = arith.negf %432 : vector<8x128xf32>
    %434 = math.exp %433 : vector<8x128xf32>
    %cst_104 = arith.constant 1.000000e+00 : f32
    %435 = vector.broadcast %cst_104 : f32 to vector<8x128xf32>
    %436 = arith.addf %435, %434 : vector<8x128xf32>
    %437 = arith.divf %435, %436 : vector<8x128xf32>
    %438 = arith.mulf %429, %379 : vector<8x128xf32>
    %439 = arith.mulf %423, %431 : vector<8x128xf32>
    %440 = arith.addf %438, %439 : vector<8x128xf32>
    %441 = math.tanh %440 : vector<8x128xf32>
    %442 = arith.mulf %437, %441 : vector<8x128xf32>
    %c48_105 = arith.constant 48 : index
    %c0_106 = arith.constant 0 : index
    %443 = vector.load %arg9[%c48_105, %c0_106] : memref<64x256xf32, #tpu.memory_space<vmem>>, vector<8x128xf32>
    tpu.vector_store %arg9[%c48_105, %c0_106], %417 {strides = array<i32>} : memref<64x256xf32, #tpu.memory_space<vmem>>, vector<8x128xf32>,
    %c8_107 = arith.constant 8 : index
    %c128_108 = arith.constant 128 : index
    %444 = vector.load %arg9[%c8_107, %c128_108] : memref<64x256xf32, #tpu.memory_space<vmem>>, vector<8x128xf32>
    tpu.vector_store %arg9[%c8_107, %c128_108], %442 {strides = array<i32>} : memref<64x256xf32, #tpu.memory_space<vmem>>, vector<8x128xf32>,
    %445 = tpu.concatenate %417, %442 in 1 : vector<8x128xf32>, vector<8x128xf32> -> vector<8x256xf32>
    %446 = arith.truncf %445 : vector<8x256xf32> to vector<8x256xbf16>
    %cst_109 = arith.constant dense<0.000000e+00> : vector<8x1024xf32>
    %447 = tpu.matmul %446, %3, %cst_109 {dimension_numbers = #tpu.dot_dimension_numbers<[1], [0], [0], [1], [0, 0, 1, 1], [], []>} : vector<8x256xbf16>, vector<256x1024xbf16>, vector<8x1024xf32> -> vector<8x1024xf32>
    %c56_110 = arith.constant 56 : index
    %c0_111 = arith.constant 0 : index
    %448 = vector.load %arg10[%c56_110, %c0_111] : memref<64x1024xf32, #tpu.memory_space<vmem>>, vector<8x512xf32>
    %449 = vector.extract_strided_slice %447 {offsets = [0, 0], sizes = [8, 512], strides = [1, 1]} : vector<8x1024xf32> to vector<8x512xf32>
    %450 = arith.addf %448, %449 : vector<8x512xf32>
    %c0_112 = arith.constant 0 : index
    %c512_113 = arith.constant 512 : index
    %451 = vector.load %arg10[%c0_112, %c512_113] : memref<64x1024xf32, #tpu.memory_space<vmem>>, vector<8x512xf32>
    %452 = vector.extract_strided_slice %447 {offsets = [0, 512], sizes = [8, 512], strides = [1, 1]} : vector<8x1024xf32> to vector<8x512xf32>
    %453 = arith.addf %451, %452 : vector<8x512xf32>
    %454 = vector.extract_strided_slice %450 {offsets = [0, 0], sizes = [8, 128], strides = [1, 1]} : vector<8x512xf32> to vector<8x128xf32>
    %455 = arith.negf %454 : vector<8x128xf32>
    %456 = math.exp %455 : vector<8x128xf32>
    %cst_114 = arith.constant 1.000000e+00 : f32
    %457 = vector.broadcast %cst_114 : f32 to vector<8x128xf32>
    %458 = arith.addf %457, %456 : vector<8x128xf32>
    %459 = arith.divf %457, %458 : vector<8x128xf32>
    %460 = vector.extract_strided_slice %450 {offsets = [0, 128], sizes = [8, 128], strides = [1, 1]} : vector<8x512xf32> to vector<8x128xf32>
    %461 = arith.negf %460 : vector<8x128xf32>
    %462 = math.exp %461 : vector<8x128xf32>
    %cst_115 = arith.constant 1.000000e+00 : f32
    %463 = vector.broadcast %cst_115 : f32 to vector<8x128xf32>
    %464 = arith.addf %463, %462 : vector<8x128xf32>
    %465 = arith.divf %463, %464 : vector<8x128xf32>
    %466 = vector.extract_strided_slice %450 {offsets = [0, 256], sizes = [8, 128], strides = [1, 1]} : vector<8x512xf32> to vector<8x128xf32>
    %467 = math.tanh %466 : vector<8x128xf32>
    %468 = vector.extract_strided_slice %450 {offsets = [0, 384], sizes = [8, 128], strides = [1, 1]} : vector<8x512xf32> to vector<8x128xf32>
    %469 = arith.negf %468 : vector<8x128xf32>
    %470 = math.exp %469 : vector<8x128xf32>
    %cst_116 = arith.constant 1.000000e+00 : f32
    %471 = vector.broadcast %cst_116 : f32 to vector<8x128xf32>
    %472 = arith.addf %471, %470 : vector<8x128xf32>
    %473 = arith.divf %471, %472 : vector<8x128xf32>
    %474 = arith.mulf %465, %415 : vector<8x128xf32>
    %475 = arith.mulf %459, %467 : vector<8x128xf32>
    %476 = arith.addf %474, %475 : vector<8x128xf32>
    %477 = math.tanh %476 : vector<8x128xf32>
    %478 = arith.mulf %473, %477 : vector<8x128xf32>
    %479 = vector.extract_strided_slice %453 {offsets = [0, 0], sizes = [8, 128], strides = [1, 1]} : vector<8x512xf32> to vector<8x128xf32>
    %480 = arith.negf %479 : vector<8x128xf32>
    %481 = math.exp %480 : vector<8x128xf32>
    %cst_117 = arith.constant 1.000000e+00 : f32
    %482 = vector.broadcast %cst_117 : f32 to vector<8x128xf32>
    %483 = arith.addf %482, %481 : vector<8x128xf32>
    %484 = arith.divf %482, %483 : vector<8x128xf32>
    %485 = vector.extract_strided_slice %453 {offsets = [0, 128], sizes = [8, 128], strides = [1, 1]} : vector<8x512xf32> to vector<8x128xf32>
    %486 = arith.negf %485 : vector<8x128xf32>
    %487 = math.exp %486 : vector<8x128xf32>
    %cst_118 = arith.constant 1.000000e+00 : f32
    %488 = vector.broadcast %cst_118 : f32 to vector<8x128xf32>
    %489 = arith.addf %488, %487 : vector<8x128xf32>
    %490 = arith.divf %488, %489 : vector<8x128xf32>
    %491 = vector.extract_strided_slice %453 {offsets = [0, 256], sizes = [8, 128], strides = [1, 1]} : vector<8x512xf32> to vector<8x128xf32>
    %492 = math.tanh %491 : vector<8x128xf32>
    %493 = vector.extract_strided_slice %453 {offsets = [0, 384], sizes = [8, 128], strides = [1, 1]} : vector<8x512xf32> to vector<8x128xf32>
    %494 = arith.negf %493 : vector<8x128xf32>
    %495 = math.exp %494 : vector<8x128xf32>
    %cst_119 = arith.constant 1.000000e+00 : f32
    %496 = vector.broadcast %cst_119 : f32 to vector<8x128xf32>
    %497 = arith.addf %496, %495 : vector<8x128xf32>
    %498 = arith.divf %496, %497 : vector<8x128xf32>
    %499 = arith.mulf %490, %440 : vector<8x128xf32>
    %500 = arith.mulf %484, %492 : vector<8x128xf32>
    %501 = arith.addf %499, %500 : vector<8x128xf32>
    %502 = math.tanh %501 : vector<8x128xf32>
    %503 = arith.mulf %498, %502 : vector<8x128xf32>
    %c56_120 = arith.constant 56 : index
    %c0_121 = arith.constant 0 : index
    %504 = vector.load %arg9[%c56_120, %c0_121] : memref<64x256xf32, #tpu.memory_space<vmem>>, vector<8x128xf32>
    tpu.vector_store %arg9[%c56_120, %c0_121], %478 {strides = array<i32>} : memref<64x256xf32, #tpu.memory_space<vmem>>, vector<8x128xf32>,
    %c0_122 = arith.constant 0 : index
    %c128_123 = arith.constant 128 : index
    %505 = vector.load %arg9[%c0_122, %c128_123] : memref<64x256xf32, #tpu.memory_space<vmem>>, vector<8x128xf32>
    tpu.vector_store %arg9[%c0_122, %c128_123], %503 {strides = array<i32>} : memref<64x256xf32, #tpu.memory_space<vmem>>, vector<8x128xf32>,
    %c1_i32 = arith.constant 1 : i32
    %506 = arith.cmpi eq, %arg0, %c1_i32 : i32
    %507 = arith.extui %506 : i1 to i32
    %c0_i32_124 = arith.constant 0 : i32
    %508 = arith.cmpi ne, %507, %c0_i32_124 : i32
    scf.if %508 {
      %c56_125 = arith.constant 56 : index
      %c0_126 = arith.constant 0 : index
      %509 = vector.load %arg9[%c56_125, %c0_126] : memref<64x256xf32, #tpu.memory_space<vmem>>, vector<8x256xf32>
      %510 = arith.truncf %509 : vector<8x256xf32> to vector<8x256xbf16>
      %c0_127 = arith.constant 0 : index
      %c0_128 = arith.constant 0 : index
      %511 = vector.load %arg6[%c0_127, %c0_128] : memref<256x2xbf16, #tpu.memory_space<vmem>>, vector<256x2xbf16>
      %cst_129 = arith.constant dense<0.000000e+00> : vector<8x2xf32>
      %512 = tpu.matmul %510, %511, %cst_129 {dimension_numbers = #tpu.dot_dimension_numbers<[1], [0], [0], [1], [0, 0, 1, 1], [], []>} : vector<8x256xbf16>, vector<256x2xbf16>, vector<8x2xf32> -> vector<8x2xf32>
      %c0_130 = arith.constant 0 : index
      %c0_131 = arith.constant 0 : index
      %513 = vector.load %arg7[%c0_130, %c0_131] : memref<1x2xf32, #tpu.memory_space<vmem>>, vector<1x2xf32>
      %514 = vector.broadcast %513 : vector<1x2xf32> to vector<8x2xf32>
      %515 = arith.addf %512, %514 : vector<8x2xf32>
      %cst_132 = arith.constant dense<0xFF800000> : vector<8xf32>
      %516 = vector.multi_reduction <maximumf>, %515, %cst_132 [1] : vector<8x2xf32> to vector<8xf32>
      %517 = vector.shape_cast %516 : vector<8xf32> to vector<8x1xf32>
      %518 = vector.broadcast %517 : vector<8x1xf32> to vector<8x2xf32>
      %519 = arith.subf %515, %518 : vector<8x2xf32>
      %520 = math.exp %519 : vector<8x2xf32>
      %cst_133 = arith.constant dense<0.000000e+00> : vector<8xf32>
      %521 = vector.multi_reduction <add>, %520, %cst_133 [1] : vector<8x2xf32> to vector<8xf32>
      %522 = vector.shape_cast %521 : vector<8xf32> to vector<8x1xf32>
      %523 = vector.broadcast %522 : vector<8x1xf32> to vector<8x2xf32>
      %524 = arith.divf %520, %523 : vector<8x2xf32>
      %c0_134 = arith.constant 0 : index
      %c0_135 = arith.constant 0 : index
      %525 = vector.load %arg8[%c0_134, %c0_135] : memref<8x2xf32, #tpu.memory_space<vmem>>, vector<8x2xf32>
      tpu.vector_store %arg8[%c0_134, %c0_135], %524 {strides = array<i32>} : memref<8x2xf32, #tpu.memory_space<vmem>>, vector<8x2xf32>,
    } else {
    }
    return
  }
  func.func @transform_0(%arg0: i32) -> (i32, i32) {
    %c0_i32 = arith.constant 0 : i32
    %c0_i32_0 = arith.constant 0 : i32
    %c0_i32_1 = arith.constant 0 : i32
    return %c0_i32, %c0_i32_0 : i32, i32
  }
  func.func @transform_1(%arg0: i32) -> (i32, i32, i32) {
    %c0_i32 = arith.constant 0 : i32
    %c0_i32_0 = arith.constant 0 : i32
    %c0_i32_1 = arith.constant 0 : i32
    return %arg0, %c0_i32, %c0_i32_0 : i32, i32, i32
  }
  func.func @transform_2(%arg0: i32) -> (i32, i32, i32) {
    %c0_i32 = arith.constant 0 : i32
    %c0_i32_0 = arith.constant 0 : i32
    %c0_i32_1 = arith.constant 0 : i32
    return %arg0, %c0_i32, %c0_i32_0 : i32, i32, i32
  }
  func.func @transform_3(%arg0: i32) -> (i32, i32, i32) {
    %c0_i32 = arith.constant 0 : i32
    %c0_i32_0 = arith.constant 0 : i32
    %c0_i32_1 = arith.constant 0 : i32
    return %arg0, %c0_i32, %c0_i32_0 : i32, i32, i32
  }
  func.func @transform_4(%arg0: i32) -> (i32, i32, i32) {
    %c0_i32 = arith.constant 0 : i32
    %c0_i32_0 = arith.constant 0 : i32
    %c0_i32_1 = arith.constant 0 : i32
    return %arg0, %c0_i32, %c0_i32_0 : i32, i32, i32
  }
  func.func @transform_5(%arg0: i32) -> (i32, i32) {
    %c0_i32 = arith.constant 0 : i32
    %c0_i32_0 = arith.constant 0 : i32
    %c0_i32_1 = arith.constant 0 : i32
    return %c0_i32, %c0_i32_0 : i32, i32
  }
  func.func @transform_6(%arg0: i32) -> (i32, i32) {
    %c0_i32 = arith.constant 0 : i32
    %c0_i32_0 = arith.constant 0 : i32
    %c0_i32_1 = arith.constant 0 : i32
    return %c0_i32, %c0_i32_0 : i32, i32
  }
  func.func @transform_7(%arg0: i32) -> (i32, i32) {
    %c0_i32 = arith.constant 0 : i32
    %c0_i32_0 = arith.constant 0 : i32
    %c0_i32_1 = arith.constant 0 : i32
    return %c0_i32, %c0_i32_0 : i32, i32
  }
}

</mosaic_0001>

<llo_original>
// kernel: bilstm_apply.1
$region0: #{bilstm_apply.1}
  #allocation0 [shape = 'u32[]', space=smem, size = 0x4, offset = 0x4, fixed_abs, tag = 'smem constant byte address 0x4 - core index']
  #allocation1 [shape = 'u32[72,128]{1,0:T(1,128)}', space=vmem, size = 0x9000, scoped, tag = 'internal scratch']
  #allocation2 [shape = 'f32[64,256]{1,0:T(8,128)}', space=vmem, size = 0x10000, scoped, tag = 'scratch operand']
  #allocation3 [shape = 'f32[64,1024]{1,0:T(8,128)}', space=vmem, size = 0x40000, scoped, tag = 'scratch operand']
  %s0 = inlined_call_operand.vmem [shape: f32[64,128], index: 0, kind: input, shape index: {}]
  %s1 = inlined_call_operand.hbm [shape: bf16[2,256,1024], index: 1, kind: input, shape index: {}]
  %s2 = inlined_call_operand.hbm [shape: bf16[2,256,1024], index: 2, kind: input, shape index: {}]
  %s3 = inlined_call_operand.vmem [shape: f32[2,16,128], index: 3, kind: input, shape index: {}]
  %s4 = inlined_call_operand.vmem [shape: f32[2,16,128], index: 4, kind: input, shape index: {}]
  %s5 = inlined_call_operand.vmem [shape: bf16[256,2], index: 5, kind: input, shape index: {}]
  %s6 = inlined_call_operand.vmem [shape: f32[1,2], index: 6, kind: input, shape index: {}]
  %s7 = inlined_call_operand.vmem [shape: f32[8,2], index: 7, kind: output, shape index: {}]
  %s8 = sld [smem:[#allocation0]]
  $region81: #{bilstm_apply.1} parent=0
    _
  %s10 = ssub.s32 1, %s8
  %s11 = scalar_select 0, %s10, %s8
  $region1: #{bilstm_apply.1} parent=0
    #allocation4 [shape = 'u8[1048576]{0}', space=vmem, size = 0x100000, scoped, tag = 'input window, operand 1']
    #allocation5 [shape = 's32[2]{0}', space=sflag, size = 0x8, scoped, tag = 'scoped memory for bilstm_apply.1']
    #allocation6 [shape = 'u8[1048576]{0}', space=vmem, size = 0x100000, scoped, tag = 'input window, operand 2']
    #allocation7 [shape = 's32[2]{0}', space=sflag, size = 0x8, scoped, tag = 'scoped memory for bilstm_apply.1']
    %12 = vsyncpa [#allocation5], 0
    %s13 = scalar_lea.sflag [#allocation5], 1
    %14 = vsyncpa %s13, 0
    %15 = vsyncpa [#allocation7], 0
    %s16 = scalar_lea.sflag [#allocation7], 1
    %17 = vsyncpa %s16, 0
    loop: start=0, step=1, limit=4
    $region2: #{bilstm_apply.1} parent=1 // loop_pre_header
      _
    $region3: #{bilstm_apply.1} parent=1 // loop_header
      %s19 = sphi 0, %s23
      %p20 = scmp.ge.s32.totalorder %s19, 4
      %s27 = sphi 0, %s27
      %s29 = sphi 0, %s27
      %s30 = sphi 0, %s29
      %s44 = sphi 0, %s30
      %s50 = sphi 0, %s52
      %s53 = sphi 0, %s50
      %s54 = sphi 0, %s53
      %s70 = sphi 0, %s54
      %s76 = sphi 0, %s78
      %s79 = sphi 0, %s76
      %s80 = sphi 0, %s79
      %s96 = sphi 0, %s80
      %s102 = sphi 0, %s104
      %s105 = sphi 0, %s102
      %s106 = sphi 0, %s105
      %s122 = sphi 0, %s106
      %s128 = sphi 0, %s130
      %s131 = sphi 0, %s128
      %s132 = sphi 0, %s131
      %s148 = sphi 0, %s132
      %s152 = sphi 0, %s152
      %s154 = sphi 0, %s152
      %s155 = sphi 0, %s154
      %s169 = sphi 0, %s155
      %s173 = sphi 0, %s173
      %s175 = sphi 0, %s173
      %s176 = sphi 0, %s175
      %s190 = sphi 0, %s176
      %s194 = sphi 0, %s194
      %s196 = sphi 0, %s194
      %s197 = sphi 0, %s196
      %s211 = sphi 0, %s197
    $region4: #{bilstm_apply.1} parent=1 // loop_header_branch
      %22 = sbr.rel (%p20) target = $region8
    $region5: #{bilstm_apply.1} parent=1 // loop_body
      %s24 = ssub.s32 %s19, 1
      %s25 = ssub.s32 %s19, 2
      %s26 = sadd.s32 %s19, 1
      %s28 = sadd.s32 %s27, 1
      %p31 = scmp.eq.s32.totalorder %s19, 1
      %p32 = scmp.ne.s32.totalorder %s27, %s29
      %p33 = scmp.eq.s32.totalorder %s19, 0
      %p34 = por %p32, %p33
      %p35 = scmp.ne.s32.totalorder %s27, %s29
      %p36 = scmp.eq.s32.totalorder %s24, 1
      %p37 = por %p35, %p36
      %p38 = scmp.ne.s32.totalorder %s29, %s30
      %p39 = scmp.eq.s32.totalorder %s24, 0
      %p40 = por %p38, %p39
      %p41 = scmp.ne.s32.totalorder %s29, %s30
      %p42 = scmp.eq.s32.totalorder %s25, 1
      %p43 = por %p41, %p42
      %p45 = scmp.ne.s32.totalorder %s30, %s44
      %p46 = scmp.eq.s32.totalorder %s25, 0
      %p47 = por %p45, %p46
      %s48 = ssub.s32 %s19, %s26
      %p49 = scmp.eq.s32.totalorder %s48, 0
      %s51 = sadd.s32 %s50, 1
      %s52 = scalar_select %p49, %s50, %s51
      %p55 = pneg %p49
      %p56 = scmp.eq.s32.totalorder %s19, 1
      %p57 = por %p55, %p56
      %p58 = scmp.ne.s32.totalorder %s50, %s53
      %p59 = scmp.eq.s32.totalorder %s19, 0
      %p60 = por %p58, %p59
      %p61 = scmp.ne.s32.totalorder %s50, %s53
      %p62 = scmp.eq.s32.totalorder %s24, 1
      %p63 = por %p61, %p62
      %p64 = scmp.ne.s32.totalorder %s53, %s54
      %p65 = scmp.eq.s32.totalorder %s24, 0
      %p66 = por %p64, %p65
      %p67 = scmp.ne.s32.totalorder %s53, %s54
      %p68 = scmp.eq.s32.totalorder %s25, 1
      %p69 = por %p67, %p68
      %p71 = scmp.ne.s32.totalorder %s54, %s70
      %p72 = scmp.eq.s32.totalorder %s25, 0
      %p73 = por %p71, %p72
      %s74 = ssub.s32 %s19, %s26
      %p75 = scmp.eq.s32.totalorder %s74, 0
      %s77 = sadd.s32 %s76, 1
      %s78 = scalar_select %p75, %s76, %s77
      %p81 = pneg %p75
      %p82 = scmp.eq.s32.totalorder %s19, 1
      %p83 = por %p81, %p82
      %p84 = scmp.ne.s32.totalorder %s76, %s79
      %p85 = scmp.eq.s32.totalorder %s19, 0
      %p86 = por %p84, %p85
      %p87 = scmp.ne.s32.totalorder %s76, %s79
      %p88 = scmp.eq.s32.totalorder %s24, 1
      %p89 = por %p87, %p88
      %p90 = scmp.ne.s32.totalorder %s79, %s80
      %p91 = scmp.eq.s32.totalorder %s24, 0
      %p92 = por %p90, %p91
      %p93 = scmp.ne.s32.totalorder %s79, %s80
      %p94 = scmp.eq.s32.totalorder %s25, 1
      %p95 = por %p93, %p94
      %p97 = scmp.ne.s32.totalorder %s80, %s96
      %p98 = scmp.eq.s32.totalorder %s25, 0
      %p99 = por %p97, %p98
      %s100 = ssub.s32 %s19, %s26
      %p101 = scmp.eq.s32.totalorder %s100, 0
      %s103 = sadd.s32 %s102, 1
      %s104 = scalar_select %p101, %s102, %s103
      %p107 = pneg %p101
      %p108 = scmp.eq.s32.totalorder %s19, 1
      %p109 = por %p107, %p108
      %p110 = scmp.ne.s32.totalorder %s102, %s105
      %p111 = scmp.eq.s32.totalorder %s19, 0
      %p112 = por %p110, %p111
      %p113 = scmp.ne.s32.totalorder %s102, %s105
      %p114 = scmp.eq.s32.totalorder %s24, 1
      %p115 = por %p113, %p114
      %p116 = scmp.ne.s32.totalorder %s105, %s106
      %p117 = scmp.eq.s32.totalorder %s24, 0
      %p118 = por %p116, %p117
      %p119 = scmp.ne.s32.totalorder %s105, %s106
      %p120 = scmp.eq.s32.totalorder %s25, 1
      %p121 = por %p119, %p120
      %p123 = scmp.ne.s32.totalorder %s106, %s122
      %p124 = scmp.eq.s32.totalorder %s25, 0
      %p125 = por %p123, %p124
      %s126 = ssub.s32 %s19, %s26
      %p127 = scmp.eq.s32.totalorder %s126, 0
      %s129 = sadd.s32 %s128, 1
      %s130 = scalar_select %p127, %s128, %s129
      %p133 = pneg %p127
      %p134 = scmp.eq.s32.totalorder %s19, 1
      %p135 = por %p133, %p134
      %p136 = scmp.ne.s32.totalorder %s128, %s131
      %p137 = scmp.eq.s32.totalorder %s19, 0
      %p138 = por %p136, %p137
      %p139 = scmp.ne.s32.totalorder %s128, %s131
      %p140 = scmp.eq.s32.totalorder %s24, 1
      %p141 = por %p139, %p140
      %p142 = scmp.ne.s32.totalorder %s131, %s132
      %p143 = scmp.eq.s32.totalorder %s24, 0
      %p144 = por %p142, %p143
      %p145 = scmp.ne.s32.totalorder %s131, %s132
      %p146 = scmp.eq.s32.totalorder %s25, 1
      %p147 = por %p145, %p146
      %p149 = scmp.ne.s32.totalorder %s132, %s148
      %p150 = scmp.eq.s32.totalorder %s25, 0
      %p151 = por %p149, %p150
      %s153 = sadd.s32 %s152, 1
      %p156 = scmp.eq.s32.totalorder %s19, 1
      %p157 = scmp.ne.s32.totalorder %s152, %s154
      %p158 = scmp.eq.s32.totalorder %s19, 0
      %p159 = por %p157, %p158
      %p160 = scmp.ne.s32.totalorder %s152, %s154
      %p161 = scmp.eq.s32.totalorder %s24, 1
      %p162 = por %p160, %p161
      %p163 = scmp.ne.s32.totalorder %s154, %s155
      %p164 = scmp.eq.s32.totalorder %s24, 0
      %p165 = por %p163, %p164
      %p166 = scmp.ne.s32.totalorder %s154, %s155
      %p167 = scmp.eq.s32.totalorder %s25, 1
      %p168 = por %p166, %p167
      %p170 = scmp.ne.s32.totalorder %s155, %s169
      %p171 = scmp.eq.s32.totalorder %s25, 0
      %p172 = por %p170, %p171
      %s174 = sadd.s32 %s173, 1
      %p177 = scmp.eq.s32.totalorder %s19, 1
      %p178 = scmp.ne.s32.totalorder %s173, %s175
      %p179 = scmp.eq.s32.totalorder %s19, 0
      %p180 = por %p178, %p179
      %p181 = scmp.ne.s32.totalorder %s173, %s175
      %p182 = scmp.eq.s32.totalorder %s24, 1
      %p183 = por %p181, %p182
      %p184 = scmp.ne.s32.totalorder %s175, %s176
      %p185 = scmp.eq.s32.totalorder %s24, 0
      %p186 = por %p184, %p185
      %p187 = scmp.ne.s32.totalorder %s175, %s176
      %p188 = scmp.eq.s32.totalorder %s25, 1
      %p189 = por %p187, %p188
      %p191 = scmp.ne.s32.totalorder %s176, %s190
      %p192 = scmp.eq.s32.totalorder %s25, 0
      %p193 = por %p191, %p192
      %s195 = sadd.s32 %s194, 1
      %p198 = scmp.eq.s32.totalorder %s19, 1
      %p199 = scmp.ne.s32.totalorder %s194, %s196
      %p200 = scmp.eq.s32.totalorder %s19, 0
      %p201 = por %p199, %p200
      %p202 = scmp.ne.s32.totalorder %s194, %s196
      %p203 = scmp.eq.s32.totalorder %s24, 1
      %p204 = por %p202, %p203
      %p205 = scmp.ne.s32.totalorder %s196, %s197
      %p206 = scmp.eq.s32.totalorder %s24, 0
      %p207 = por %p205, %p206
      %p208 = scmp.ne.s32.totalorder %s196, %s197
      %p209 = scmp.eq.s32.totalorder %s25, 1
      %p210 = por %p208, %p209
      %p212 = scmp.ne.s32.totalorder %s197, %s211
      %p213 = scmp.eq.s32.totalorder %s25, 0
      %p214 = por %p212, %p213
      %p215 = scmp.le.s32.totalorder 1, %s19
      %p216 = scmp.lt.s32.totalorder %s19, 3
      %p217 = pnand %p215, %p216
      %p218 = pneg %p217
      // Predicated region
      $region9: #{bilstm_apply.1} parent=5 // pred_check
        _
      $region10: #{bilstm_apply.1} parent=5 // pred_check_branch
        %220 = sbr.rel (%p217) target = $region12
      $region11: #{bilstm_apply.1} parent=5 // pred_region
        %s221 = ssub.s32 %s19, 1
        // Predicated region
        $region13: #{bilstm_apply.1} parent=11 // pred_check
          %p222 = pneg %p40
        $region14: #{bilstm_apply.1} parent=11 // pred_check_branch
          %224 = sbr.rel (%p222) target = $region16
        $region15: #{bilstm_apply.1} parent=11 // pred_region
          _
        $region16: #{bilstm_apply.1} parent=11 // pred_fallthru
          _
        // Predicated region
        $region17: #{bilstm_apply.1} parent=11 // pred_check
          %p225 = pneg %p165
        $region18: #{bilstm_apply.1} parent=11 // pred_check_branch
          %227 = sbr.rel (%p225) target = $region20
        $region19: #{bilstm_apply.1} parent=11 // pred_region
          _
        $region20: #{bilstm_apply.1} parent=11 // pred_fallthru
          _
        // Predicated region
        $region21: #{bilstm_apply.1} parent=11 // pred_check
          %p228 = pneg %p186
        $region22: #{bilstm_apply.1} parent=11 // pred_check_branch
          %230 = sbr.rel (%p228) target = $region24
        $region23: #{bilstm_apply.1} parent=11 // pred_region
          _
        $region24: #{bilstm_apply.1} parent=11 // pred_fallthru
          _
      $region12: #{bilstm_apply.1} parent=5 // pred_fallthru
        _
      %p231 = scmp.lt.s32.totalorder %s19, 2
      // Predicated region
      $region25: #{bilstm_apply.1} parent=5 // pred_check
        %p232 = pneg %p231
      $region26: #{bilstm_apply.1} parent=5 // pred_check_branch
        %234 = sbr.rel (%p232) target = $region28
      $region27: #{bilstm_apply.1} parent=5 // pred_region
        // Predicated region
        $region29: #{bilstm_apply.1} parent=27 // pred_check
          %p235 = pneg %p60
        $region30: #{bilstm_apply.1} parent=27 // pred_check_branch
          %237 = sbr.rel (%p235) target = $region32
        $region31: #{bilstm_apply.1} parent=27 // pred_region
          %s238 = sand.u32 %s50, 1
          %s239 = scalar_lea.sflag [#allocation5], %s238
          %s240 = sand.u32 %s50, 1
          %s241 = smul.addr %s240, 1024
          %s242 = scalar_lea.vmem [#allocation4], %s241
          %244 = vsyncadd %s239, 0
          %s245 = smul.addr %s19, 256
          %s246 = smul.addr %s245, 4
          %s247 = scalar_lea.hbm %s1, %s246
          %s248 = sshll.u32 %s247, 4
          %s249 = int_to_ptr.hbm [resolvable:$true] %s248
          %s250 = sshll.u32 %s242, 4
          %s251 = int_to_ptr.vmem [resolvable:$true] %s250
          %256 = dma.hbm_to_vmem [thread:$0]  %s249, 16384, %s251, %s239, 512, 512, 32
        $region32: #{bilstm_apply.1} parent=27 // pred_fallthru
          _
        // Predicated region
        $region33: #{bilstm_apply.1} parent=27 // pred_check
          %p257 = pneg %p86
        $region34: #{bilstm_apply.1} parent=27 // pred_check_branch
          %259 = sbr.rel (%p257) target = $region36
        $region35: #{bilstm_apply.1} parent=27 // pred_region
          %s260 = sand.u32 %s76, 1
          %s261 = scalar_lea.sflag [#allocation7], %s260
          %s262 = sand.u32 %s76, 1
          %s263 = smul.addr %s262, 1024
          %s264 = scalar_lea.vmem [#allocation6], %s263
          %266 = vsyncadd %s261, 0
          %s267 = smul.addr %s19, 256
          %s268 = smul.addr %s267, 4
          %s269 = scalar_lea.hbm %s2, %s268
          %s270 = sshll.u32 %s269, 4
          %s271 = int_to_ptr.hbm [resolvable:$true] %s270
          %s272 = sshll.u32 %s264, 4
          %s273 = int_to_ptr.vmem [resolvable:$true] %s272
          %278 = dma.hbm_to_vmem [thread:$0]  %s271, 16384, %s273, %s261, 512, 512, 32
        $region36: #{bilstm_apply.1} parent=27 // pred_fallthru
          _
        // Predicated region
        $region37: #{bilstm_apply.1} parent=27 // pred_check
          %p279 = pneg %p112
        $region38: #{bilstm_apply.1} parent=27 // pred_check_branch
          %281 = sbr.rel (%p279) target = $region40
        $region39: #{bilstm_apply.1} parent=27 // pred_region
          %p282 = scmp.lt.s32.totalorder %s19, 1
          %s283 = scalar_select %p282, %s19, 1
          %s284 = smul.addr %s283, 2
          %s285 = smul.addr %s284, 8
          %s286 = scalar_lea.vmem %s3, %s285
        $region40: #{bilstm_apply.1} parent=27 // pred_fallthru
          _
        // Predicated region
        $region41: #{bilstm_apply.1} parent=27 // pred_check
          %p287 = pneg %p138
        $region42: #{bilstm_apply.1} parent=27 // pred_check_branch
          %289 = sbr.rel (%p287) target = $region44
        $region43: #{bilstm_apply.1} parent=27 // pred_region
          %p290 = scmp.lt.s32.totalorder %s19, 1
          %s291 = scalar_select %p290, %s19, 1
          %s292 = smul.addr %s291, 2
          %s293 = smul.addr %s292, 8
          %s294 = scalar_lea.vmem %s4, %s293
        $region44: #{bilstm_apply.1} parent=27 // pred_fallthru
          _
      $region28: #{bilstm_apply.1} parent=5 // pred_fallthru
        _
      %p295 = scmp.le.s32.totalorder 1, %s19
      %p296 = scmp.lt.s32.totalorder %s19, 3
      %p297 = pnand %p295, %p296
      %p298 = pneg %p297
      // Predicated region
      $region45: #{bilstm_apply.1} parent=5 // pred_check
        _
      $region46: #{bilstm_apply.1} parent=5 // pred_check_branch
        %300 = sbr.rel (%p297) target = $region48
      $region47: #{bilstm_apply.1} parent=5 // pred_region
        %s301 = ssub.s32 %s19, 1
        %s302 = sand.u32 %s53, 1
        %s303 = scalar_lea.sflag [#allocation5], %s302
        %s304 = sand.u32 %s53, 1
        %s305 = smul.addr %s304, 1024
        %s306 = scalar_lea.vmem [#allocation4], %s305
        // Predicated region
        $region49: #{bilstm_apply.1} parent=47 // pred_check
          %p307 = pneg %p66
        $region50: #{bilstm_apply.1} parent=47 // pred_check_branch
          %309 = sbr.rel (%p307) target = $region52
        $region51: #{bilstm_apply.1} parent=47 // pred_region
          %311 = dma.done %s303, 16384
        $region52: #{bilstm_apply.1} parent=47 // pred_fallthru
          _
        %s312 = sand.u32 %s79, 1
        %s313 = scalar_lea.sflag [#allocation7], %s312
        %s314 = sand.u32 %s79, 1
        %s315 = smul.addr %s314, 1024
        %s316 = scalar_lea.vmem [#allocation6], %s315
        // Predicated region
        $region53: #{bilstm_apply.1} parent=47 // pred_check
          %p317 = pneg %p92
        $region54: #{bilstm_apply.1} parent=47 // pred_check_branch
          %319 = sbr.rel (%p317) target = $region56
        $region55: #{bilstm_apply.1} parent=47 // pred_region
          %321 = dma.done %s313, 16384
        $region56: #{bilstm_apply.1} parent=47 // pred_fallthru
          _
        %p322 = pneg %p40
        %p323 = pneg %p37
        %s324 = sand.u32 %s53, 1
        %s325 = scalar_lea.sflag [#allocation5], %s324
        %s326 = sand.u32 %s53, 1
        %s327 = smul.addr %s326, 1024
        %s328 = scalar_lea.vmem [#allocation4], %s327
        %p329 = pneg %p66
        %p330 = pneg %p63
        %s331 = sand.u32 %s79, 1
        %s332 = scalar_lea.sflag [#allocation7], %s331
        %s333 = sand.u32 %s79, 1
        %s334 = smul.addr %s333, 1024
        %s335 = scalar_lea.vmem [#allocation6], %s334
        %p336 = pneg %p92
        %p337 = pneg %p89
        %p338 = scmp.lt.s32.totalorder %s24, 1
        %s339 = scalar_select %p338, %s24, 1
        %s340 = smul.addr %s339, 2
        %s341 = smul.addr %s340, 8
        %s342 = scalar_lea.vmem %s3, %s341
        %p343 = pneg %p118
        %p344 = pneg %p115
        %p345 = scmp.lt.s32.totalorder %s24, 1
        %s346 = scalar_select %p345, %s24, 1
        %s347 = smul.addr %s346, 2
        %s348 = smul.addr %s347, 8
        %s349 = scalar_lea.vmem %s4, %s348
        %p350 = pneg %p144
        %p351 = pneg %p141
        %p352 = pneg %p165
        %p353 = pneg %p162
        %p354 = pneg %p186
        %p355 = pneg %p183
        %p356 = pneg %p207
        %p357 = pneg %p204
        %p358 = scmp.lt.s32.totalorder %s24, 1
        %s359 = scalar_select %p358, %s24, 1
        %s360 = smul.addr %s359, 2
        %s361 = smul.addr %s360, 8
        %s362 = scalar_lea.vmem %s3, %s361
        %p363 = scmp.lt.s32.totalorder %s24, 1
        %s364 = scalar_select %p363, %s24, 1
        %s365 = smul.addr %s364, 2
        %s366 = smul.addr %s365, 8
        %s367 = scalar_lea.vmem %s4, %s366
        %v368 = vld [vmem:[%s306] sm:$0xff]
        %v369 = vld [vmem:[%s306 + $0x8] sm:$0xff]
        %v370 = vld [vmem:[%s306 + $0x10] sm:$0xff]
        %v371 = vld [vmem:[%s306 + $0x18] sm:$0xff]
        %v372 = vld [vmem:[%s306 + $0x20] sm:$0xff]
        %v373 = vld [vmem:[%s306 + $0x28] sm:$0xff]
        %v374 = vld [vmem:[%s306 + $0x30] sm:$0xff]
        %v375 = vld [vmem:[%s306 + $0x38] sm:$0xff]
        %v376 = vld [vmem:[%s306 + $0x40] sm:$0xff]
        %v377 = vld [vmem:[%s306 + $0x48] sm:$0xff]
        %v378 = vld [vmem:[%s306 + $0x50] sm:$0xff]
        %v379 = vld [vmem:[%s306 + $0x58] sm:$0xff]
        %v380 = vld [vmem:[%s306 + $0x60] sm:$0xff]
        %v381 = vld [vmem:[%s306 + $0x68] sm:$0xff]
        %v382 = vld [vmem:[%s306 + $0x70] sm:$0xff]
        %v383 = vld [vmem:[%s306 + $0x78] sm:$0xff]
        %v384 = vld [vmem:[%s306 + $0x80] sm:$0xff]
        %v385 = vld [vmem:[%s306 + $0x88] sm:$0xff]
        %v386 = vld [vmem:[%s306 + $0x90] sm:$0xff]
        %v387 = vld [vmem:[%s306 + $0x98] sm:$0xff]
        %v388 = vld [vmem:[%s306 + $0xa0] sm:$0xff]
        %v389 = vld [vmem:[%s306 + $0xa8] sm:$0xff]
        %v390 = vld [vmem:[%s306 + $0xb0] sm:$0xff]
        %v391 = vld [vmem:[%s306 + $0xb8] sm:$0xff]
        %v392 = vld [vmem:[%s306 + $0xc0] sm:$0xff]
        %v393 = vld [vmem:[%s306 + $0xc8] sm:$0xff]
        %v394 = vld [vmem:[%s306 + $0xd0] sm:$0xff]
        %v395 = vld [vmem:[%s306 + $0xd8] sm:$0xff]
        %v396 = vld [vmem:[%s306 + $0xe0] sm:$0xff]
        %v397 = vld [vmem:[%s306 + $0xe8] sm:$0xff]
        %v398 = vld [vmem:[%s306 + $0xf0] sm:$0xff]
        %v399 = vld [vmem:[%s306 + $0xf8] sm:$0xff]
        %v400 = vld [vmem:[%s306 + $0x100] sm:$0xff]
        %v401 = vld [vmem:[%s306 + $0x108] sm:$0xff]
        %v402 = vld [vmem:[%s306 + $0x110] sm:$0xff]
        %v403 = vld [vmem:[%s306 + $0x118] sm:$0xff]
        %v404 = vld [vmem:[%s306 + $0x120] sm:$0xff]
        %v405 = vld [vmem:[%s306 + $0x128] sm:$0xff]
        %v406 = vld [vmem:[%s306 + $0x130] sm:$0xff]
        %v407 = vld [vmem:[%s306 + $0x138] sm:$0xff]
        %v408 = vld [vmem:[%s306 + $0x140] sm:$0xff]
        %v409 = vld [vmem:[%s306 + $0x148] sm:$0xff]
        %v410 = vld [vmem:[%s306 + $0x150] sm:$0xff]
        %v411 = vld [vmem:[%s306 + $0x158] sm:$0xff]
        %v412 = vld [vmem:[%s306 + $0x160] sm:$0xff]
        %v413 = vld [vmem:[%s306 + $0x168] sm:$0xff]
        %v414 = vld [vmem:[%s306 + $0x170] sm:$0xff]
        %v415 = vld [vmem:[%s306 + $0x178] sm:$0xff]
        %v416 = vld [vmem:[%s306 + $0x180] sm:$0xff]
        %v417 = vld [vmem:[%s306 + $0x188] sm:$0xff]
        %v418 = vld [vmem:[%s306 + $0x190] sm:$0xff]
        %v419 = vld [vmem:[%s306 + $0x198] sm:$0xff]
        %v420 = vld [vmem:[%s306 + $0x1a0] sm:$0xff]
        %v421 = vld [vmem:[%s306 + $0x1a8] sm:$0xff]
        %v422 = vld [vmem:[%s306 + $0x1b0] sm:$0xff]
        %v423 = vld [vmem:[%s306 + $0x1b8] sm:$0xff]
        %v424 = vld [vmem:[%s306 + $0x1c0] sm:$0xff]
        %v425 = vld [vmem:[%s306 + $0x1c8] sm:$0xff]
        %v426 = vld [vmem:[%s306 + $0x1d0] sm:$0xff]
        %v427 = vld [vmem:[%s306 + $0x1d8] sm:$0xff]
        %v428 = vld [vmem:[%s306 + $0x1e0] sm:$0xff]
        %v429 = vld [vmem:[%s306 + $0x1e8] sm:$0xff]
        %v430 = vld [vmem:[%s306 + $0x1f0] sm:$0xff]
        %v431 = vld [vmem:[%s306 + $0x1f8] sm:$0xff]
        %v432 = vld [vmem:[%s306 + $0x200] sm:$0xff]
        %v433 = vld [vmem:[%s306 + $0x208] sm:$0xff]
        %v434 = vld [vmem:[%s306 + $0x210] sm:$0xff]
        %v435 = vld [vmem:[%s306 + $0x218] sm:$0xff]
        %v436 = vld [vmem:[%s306 + $0x220] sm:$0xff]
        %v437 = vld [vmem:[%s306 + $0x228] sm:$0xff]
        %v438 = vld [vmem:[%s306 + $0x230] sm:$0xff]
        %v439 = vld [vmem:[%s306 + $0x238] sm:$0xff]
        %v440 = vld [vmem:[%s306 + $0x240] sm:$0xff]
        %v441 = vld [vmem:[%s306 + $0x248] sm:$0xff]
        %v442 = vld [vmem:[%s306 + $0x250] sm:$0xff]
        %v443 = vld [vmem:[%s306 + $0x258] sm:$0xff]
        %v444 = vld [vmem:[%s306 + $0x260] sm:$0xff]
        %v445 = vld [vmem:[%s306 + $0x268] sm:$0xff]
        %v446 = vld [vmem:[%s306 + $0x270] sm:$0xff]
        %v447 = vld [vmem:[%s306 + $0x278] sm:$0xff]
        %v448 = vld [vmem:[%s306 + $0x280] sm:$0xff]
        %v449 = vld [vmem:[%s306 + $0x288] sm:$0xff]
        %v450 = vld [vmem:[%s306 + $0x290] sm:$0xff]
        %v451 = vld [vmem:[%s306 + $0x298] sm:$0xff]
        %v452 = vld [vmem:[%s306 + $0x2a0] sm:$0xff]
        %v453 = vld [vmem:[%s306 + $0x2a8] sm:$0xff]
        %v454 = vld [vmem:[%s306 + $0x2b0] sm:$0xff]
        %v455 = vld [vmem:[%s306 + $0x2b8] sm:$0xff]
        %v456 = vld [vmem:[%s306 + $0x2c0] sm:$0xff]
        %v457 = vld [vmem:[%s306 + $0x2c8] sm:$0xff]
        %v458 = vld [vmem:[%s306 + $0x2d0] sm:$0xff]
        %v459 = vld [vmem:[%s306 + $0x2d8] sm:$0xff]
        %v460 = vld [vmem:[%s306 + $0x2e0] sm:$0xff]
        %v461 = vld [vmem:[%s306 + $0x2e8] sm:$0xff]
        %v462 = vld [vmem:[%s306 + $0x2f0] sm:$0xff]
        %v463 = vld [vmem:[%s306 + $0x2f8] sm:$0xff]
        %v464 = vld [vmem:[%s306 + $0x300] sm:$0xff]
        %v465 = vld [vmem:[%s306 + $0x308] sm:$0xff]
        %v466 = vld [vmem:[%s306 + $0x310] sm:$0xff]
        %v467 = vld [vmem:[%s306 + $0x318] sm:$0xff]
        %v468 = vld [vmem:[%s306 + $0x320] sm:$0xff]
        %v469 = vld [vmem:[%s306 + $0x328] sm:$0xff]
        %v470 = vld [vmem:[%s306 + $0x330] sm:$0xff]
        %v471 = vld [vmem:[%s306 + $0x338] sm:$0xff]
        %v472 = vld [vmem:[%s306 + $0x340] sm:$0xff]
        %v473 = vld [vmem:[%s306 + $0x348] sm:$0xff]
        %v474 = vld [vmem:[%s306 + $0x350] sm:$0xff]
        %v475 = vld [vmem:[%s306 + $0x358] sm:$0xff]
        %v476 = vld [vmem:[%s306 + $0x360] sm:$0xff]
        %v477 = vld [vmem:[%s306 + $0x368] sm:$0xff]
        %v478 = vld [vmem:[%s306 + $0x370] sm:$0xff]
        %v479 = vld [vmem:[%s306 + $0x378] sm:$0xff]
        %v480 = vld [vmem:[%s306 + $0x380] sm:$0xff]
        %v481 = vld [vmem:[%s306 + $0x388] sm:$0xff]
        %v482 = vld [vmem:[%s306 + $0x390] sm:$0xff]
        %v483 = vld [vmem:[%s306 + $0x398] sm:$0xff]
        %v484 = vld [vmem:[%s306 + $0x3a0] sm:$0xff]
        %v485 = vld [vmem:[%s306 + $0x3a8] sm:$0xff]
        %v486 = vld [vmem:[%s306 + $0x3b0] sm:$0xff]
        %v487 = vld [vmem:[%s306 + $0x3b8] sm:$0xff]
        %v488 = vld [vmem:[%s306 + $0x3c0] sm:$0xff]
        %v489 = vld [vmem:[%s306 + $0x3c8] sm:$0xff]
        %v490 = vld [vmem:[%s306 + $0x3d0] sm:$0xff]
        %v491 = vld [vmem:[%s306 + $0x3d8] sm:$0xff]
        %v492 = vld [vmem:[%s306 + $0x3e0] sm:$0xff]
        %v493 = vld [vmem:[%s306 + $0x3e8] sm:$0xff]
        %v494 = vld [vmem:[%s306 + $0x3f0] sm:$0xff]
        %v495 = vld [vmem:[%s306 + $0x3f8] sm:$0xff]
        %v496 = vld [vmem:[%s316] sm:$0xff]
        %v497 = vld [vmem:[%s316 + $0x8] sm:$0xff]
        %v498 = vld [vmem:[%s316 + $0x10] sm:$0xff]
        %v499 = vld [vmem:[%s316 + $0x18] sm:$0xff]
        %v500 = vld [vmem:[%s316 + $0x20] sm:$0xff]
        %v501 = vld [vmem:[%s316 + $0x28] sm:$0xff]
        %v502 = vld [vmem:[%s316 + $0x30] sm:$0xff]
        %v503 = vld [vmem:[%s316 + $0x38] sm:$0xff]
        %v504 = vld [vmem:[%s316 + $0x40] sm:$0xff]
        %v505 = vld [vmem:[%s316 + $0x48] sm:$0xff]
        %v506 = vld [vmem:[%s316 + $0x50] sm:$0xff]
        %v507 = vld [vmem:[%s316 + $0x58] sm:$0xff]
        %v508 = vld [vmem:[%s316 + $0x60] sm:$0xff]
        %v509 = vld [vmem:[%s316 + $0x68] sm:$0xff]
        %v510 = vld [vmem:[%s316 + $0x70] sm:$0xff]
        %v511 = vld [vmem:[%s316 + $0x78] sm:$0xff]
        %v512 = vld [vmem:[%s316 + $0x80] sm:$0xff]
        %v513 = vld [vmem:[%s316 + $0x88] sm:$0xff]
        %v514 = vld [vmem:[%s316 + $0x90] sm:$0xff]
        %v515 = vld [vmem:[%s316 + $0x98] sm:$0xff]
        %v516 = vld [vmem:[%s316 + $0xa0] sm:$0xff]
        %v517 = vld [vmem:[%s316 + $0xa8] sm:$0xff]
        %v518 = vld [vmem:[%s316 + $0xb0] sm:$0xff]
        %v519 = vld [vmem:[%s316 + $0xb8] sm:$0xff]
        %v520 = vld [vmem:[%s316 + $0xc0] sm:$0xff]
        %v521 = vld [vmem:[%s316 + $0xc8] sm:$0xff]
        %v522 = vld [vmem:[%s316 + $0xd0] sm:$0xff]
        %v523 = vld [vmem:[%s316 + $0xd8] sm:$0xff]
        %v524 = vld [vmem:[%s316 + $0xe0] sm:$0xff]
        %v525 = vld [vmem:[%s316 + $0xe8] sm:$0xff]
        %v526 = vld [vmem:[%s316 + $0xf0] sm:$0xff]
        %v527 = vld [vmem:[%s316 + $0xf8] sm:$0xff]
        %v528 = vld [vmem:[%s316 + $0x100] sm:$0xff]
        %v529 = vld [vmem:[%s316 + $0x108] sm:$0xff]
        %v530 = vld [vmem:[%s316 + $0x110] sm:$0xff]
        %v531 = vld [vmem:[%s316 + $0x118] sm:$0xff]
        %v532 = vld [vmem:[%s316 + $0x120] sm:$0xff]
        %v533 = vld [vmem:[%s316 + $0x128] sm:$0xff]
        %v534 = vld [vmem:[%s316 + $0x130] sm:$0xff]
        %v535 = vld [vmem:[%s316 + $0x138] sm:$0xff]
        %v536 = vld [vmem:[%s316 + $0x140] sm:$0xff]
        %v537 = vld [vmem:[%s316 + $0x148] sm:$0xff]
        %v538 = vld [vmem:[%s316 + $0x150] sm:$0xff]
        %v539 = vld [vmem:[%s316 + $0x158] sm:$0xff]
        %v540 = vld [vmem:[%s316 + $0x160] sm:$0xff]
        %v541 = vld [vmem:[%s316 + $0x168] sm:$0xff]
        %v542 = vld [vmem:[%s316 + $0x170] sm:$0xff]
        %v543 = vld [vmem:[%s316 + $0x178] sm:$0xff]
        %v544 = vld [vmem:[%s316 + $0x180] sm:$0xff]
        %v545 = vld [vmem:[%s316 + $0x188] sm:$0xff]
        %v546 = vld [vmem:[%s316 + $0x190] sm:$0xff]
        %v547 = vld [vmem:[%s316 + $0x198] sm:$0xff]
        %v548 = vld [vmem:[%s316 + $0x1a0] sm:$0xff]
        %v549 = vld [vmem:[%s316 + $0x1a8] sm:$0xff]
        %v550 = vld [vmem:[%s316 + $0x1b0] sm:$0xff]
        %v551 = vld [vmem:[%s316 + $0x1b8] sm:$0xff]
        %v552 = vld [vmem:[%s316 + $0x1c0] sm:$0xff]
        %v553 = vld [vmem:[%s316 + $0x1c8] sm:$0xff]
        %v554 = vld [vmem:[%s316 + $0x1d0] sm:$0xff]
        %v555 = vld [vmem:[%s316 + $0x1d8] sm:$0xff]
        %v556 = vld [vmem:[%s316 + $0x1e0] sm:$0xff]
        %v557 = vld [vmem:[%s316 + $0x1e8] sm:$0xff]
        %v558 = vld [vmem:[%s316 + $0x1f0] sm:$0xff]
        %v559 = vld [vmem:[%s316 + $0x1f8] sm:$0xff]
        %v560 = vld [vmem:[%s316 + $0x200] sm:$0xff]
        %v561 = vld [vmem:[%s316 + $0x208] sm:$0xff]
        %v562 = vld [vmem:[%s316 + $0x210] sm:$0xff]
        %v563 = vld [vmem:[%s316 + $0x218] sm:$0xff]
        %v564 = vld [vmem:[%s316 + $0x220] sm:$0xff]
        %v565 = vld [vmem:[%s316 + $0x228] sm:$0xff]
        %v566 = vld [vmem:[%s316 + $0x230] sm:$0xff]
        %v567 = vld [vmem:[%s316 + $0x238] sm:$0xff]
        %v568 = vld [vmem:[%s316 + $0x240] sm:$0xff]
        %v569 = vld [vmem:[%s316 + $0x248] sm:$0xff]
        %v570 = vld [vmem:[%s316 + $0x250] sm:$0xff]
        %v571 = vld [vmem:[%s316 + $0x258] sm:$0xff]
        %v572 = vld [vmem:[%s316 + $0x260] sm:$0xff]
        %v573 = vld [vmem:[%s316 + $0x268] sm:$0xff]
        %v574 = vld [vmem:[%s316 + $0x270] sm:$0xff]
        %v575 = vld [vmem:[%s316 + $0x278] sm:$0xff]
        %v576 = vld [vmem:[%s316 + $0x280] sm:$0xff]
        %v577 = vld [vmem:[%s316 + $0x288] sm:$0xff]
        %v578 = vld [vmem:[%s316 + $0x290] sm:$0xff]
        %v579 = vld [vmem:[%s316 + $0x298] sm:$0xff]
        %v580 = vld [vmem:[%s316 + $0x2a0] sm:$0xff]
        %v581 = vld [vmem:[%s316 + $0x2a8] sm:$0xff]
        %v582 = vld [vmem:[%s316 + $0x2b0] sm:$0xff]
        %v583 = vld [vmem:[%s316 + $0x2b8] sm:$0xff]
        %v584 = vld [vmem:[%s316 + $0x2c0] sm:$0xff]
        %v585 = vld [vmem:[%s316 + $0x2c8] sm:$0xff]
        %v586 = vld [vmem:[%s316 + $0x2d0] sm:$0xff]
        %v587 = vld [vmem:[%s316 + $0x2d8] sm:$0xff]
        %v588 = vld [vmem:[%s316 + $0x2e0] sm:$0xff]
        %v589 = vld [vmem:[%s316 + $0x2e8] sm:$0xff]
        %v590 = vld [vmem:[%s316 + $0x2f0] sm:$0xff]
        %v591 = vld [vmem:[%s316 + $0x2f8] sm:$0xff]
        %v592 = vld [vmem:[%s316 + $0x300] sm:$0xff]
        %v593 = vld [vmem:[%s316 + $0x308] sm:$0xff]
        %v594 = vld [vmem:[%s316 + $0x310] sm:$0xff]
        %v595 = vld [vmem:[%s316 + $0x318] sm:$0xff]
        %v596 = vld [vmem:[%s316 + $0x320] sm:$0xff]
        %v597 = vld [vmem:[%s316 + $0x328] sm:$0xff]
        %v598 = vld [vmem:[%s316 + $0x330] sm:$0xff]
        %v599 = vld [vmem:[%s316 + $0x338] sm:$0xff]
        %v600 = vld [vmem:[%s316 + $0x340] sm:$0xff]
        %v601 = vld [vmem:[%s316 + $0x348] sm:$0xff]
        %v602 = vld [vmem:[%s316 + $0x350] sm:$0xff]
        %v603 = vld [vmem:[%s316 + $0x358] sm:$0xff]
        %v604 = vld [vmem:[%s316 + $0x360] sm:$0xff]
        %v605 = vld [vmem:[%s316 + $0x368] sm:$0xff]
        %v606 = vld [vmem:[%s316 + $0x370] sm:$0xff]
        %v607 = vld [vmem:[%s316 + $0x378] sm:$0xff]
        %v608 = vld [vmem:[%s316 + $0x380] sm:$0xff]
        %v609 = vld [vmem:[%s316 + $0x388] sm:$0xff]
        %v610 = vld [vmem:[%s316 + $0x390] sm:$0xff]
        %v611 = vld [vmem:[%s316 + $0x398] sm:$0xff]
        %v612 = vld [vmem:[%s316 + $0x3a0] sm:$0xff]
        %v613 = vld [vmem:[%s316 + $0x3a8] sm:$0xff]
        %v614 = vld [vmem:[%s316 + $0x3b0] sm:$0xff]
        %v615 = vld [vmem:[%s316 + $0x3b8] sm:$0xff]
        %v616 = vld [vmem:[%s316 + $0x3c0] sm:$0xff]
        %v617 = vld [vmem:[%s316 + $0x3c8] sm:$0xff]
        %v618 = vld [vmem:[%s316 + $0x3d0] sm:$0xff]
        %v619 = vld [vmem:[%s316 + $0x3d8] sm:$0xff]
        %v620 = vld [vmem:[%s316 + $0x3e0] sm:$0xff]
        %v621 = vld [vmem:[%s316 + $0x3e8] sm:$0xff]
        %v622 = vld [vmem:[%s316 + $0x3f0] sm:$0xff]
        %v623 = vld [vmem:[%s316 + $0x3f8] sm:$0xff]
        %p624 = scmp.eq.s32.totalorder %s24, 0
        // Predicated region
        $region57: #{bilstm_apply.1} parent=47 // pred_check
          %p625 = pneg %p624
        $region58: #{bilstm_apply.1} parent=47 // pred_check_branch
          %627 = sbr.rel (%p625) target = $region60
        $region59: #{bilstm_apply.1} parent=47 // pred_region
          %v628 = vld [vmem:[%s0] sm:$0xff]
          %v629 = vld [vmem:[%s0 + $0x8] sm:$0xff]
          %v630 = vld [vmem:[%s0 + $0x10] sm:$0xff]
          %v631 = vld [vmem:[%s0 + $0x18] sm:$0xff]
          %v632 = vld [vmem:[%s0 + $0x20] sm:$0xff]
          %v633 = vld [vmem:[%s0 + $0x28] sm:$0xff]
          %v634 = vld [vmem:[%s0 + $0x30] sm:$0xff]
          %v635 = vld [vmem:[%s0 + $0x38] sm:$0xff]
          %v636 = vpack.c.bf16 %v629, %v628
          %v637 = vpack.c.bf16 %v631, %v630
          %v638 = vpack.c.bf16 %v633, %v632
          %v639 = vpack.c.bf16 %v635, %v634
          %v704 = vunpack.c.l.b16 %v368
          %v705 = vunpack.c.h.b16 %v368
          %v706 = vunpack.c.l.b16 %v369
          %v707 = vunpack.c.h.b16 %v369
          %v708 = vunpack.c.l.b16 %v370
          %v709 = vunpack.c.h.b16 %v370
          %v710 = vunpack.c.l.b16 %v371
          %v711 = vunpack.c.h.b16 %v371
          %v712 = vunpack.c.l.b16 %v372
          %v713 = vunpack.c.h.b16 %v372
          %v714 = vunpack.c.l.b16 %v373
          %v715 = vunpack.c.h.b16 %v373
          %v716 = vunpack.c.l.b16 %v374
          %v717 = vunpack.c.h.b16 %v374
          %v718 = vunpack.c.l.b16 %v375
          %v719 = vunpack.c.h.b16 %v375
          %v720 = vunpack.c.l.b16 %v376
          %v721 = vunpack.c.h.b16 %v376
          %v722 = vunpack.c.l.b16 %v377
          %v723 = vunpack.c.h.b16 %v377
          %v724 = vunpack.c.l.b16 %v378
          %v725 = vunpack.c.h.b16 %v378
          %v726 = vunpack.c.l.b16 %v379
          %v727 = vunpack.c.h.b16 %v379
          %v728 = vunpack.c.l.b16 %v380
          %v729 = vunpack.c.h.b16 %v380
          %v730 = vunpack.c.l.b16 %v381
          %v731 = vunpack.c.h.b16 %v381
          %v732 = vunpack.c.l.b16 %v382
          %v733 = vunpack.c.h.b16 %v382
          %v734 = vunpack.c.l.b16 %v383
          %v735 = vunpack.c.h.b16 %v383
          %v736 = vunpack.c.l.b16 %v384
          %v737 = vunpack.c.h.b16 %v384
          %v738 = vunpack.c.l.b16 %v385
          %v739 = vunpack.c.h.b16 %v385
          %v740 = vunpack.c.l.b16 %v386
          %v741 = vunpack.c.h.b16 %v386
          %v742 = vunpack.c.l.b16 %v387
          %v743 = vunpack.c.h.b16 %v387
          %v744 = vunpack.c.l.b16 %v388
          %v745 = vunpack.c.h.b16 %v388
          %v746 = vunpack.c.l.b16 %v389
          %v747 = vunpack.c.h.b16 %v389
          %v748 = vunpack.c.l.b16 %v390
          %v749 = vunpack.c.h.b16 %v390
          %v750 = vunpack.c.l.b16 %v391
          %v751 = vunpack.c.h.b16 %v391
          %v752 = vunpack.c.l.b16 %v392
          %v753 = vunpack.c.h.b16 %v392
          %v754 = vunpack.c.l.b16 %v393
          %v755 = vunpack.c.h.b16 %v393
          %v756 = vunpack.c.l.b16 %v394
          %v757 = vunpack.c.h.b16 %v394
          %v758 = vunpack.c.l.b16 %v395
          %v759 = vunpack.c.h.b16 %v395
          %v760 = vunpack.c.l.b16 %v396
          %v761 = vunpack.c.h.b16 %v396
          %v762 = vunpack.c.l.b16 %v397
          %v763 = vunpack.c.h.b16 %v397
          %v764 = vunpack.c.l.b16 %v398
          %v765 = vunpack.c.h.b16 %v398
          %v766 = vunpack.c.l.b16 %v399
          %v767 = vunpack.c.h.b16 %v399
          %v768 = vunpack.c.l.b16 %v400
          %v769 = vunpack.c.h.b16 %v400
          %v770 = vunpack.c.l.b16 %v401
          %v771 = vunpack.c.h.b16 %v401
          %v772 = vunpack.c.l.b16 %v402
          %v773 = vunpack.c.h.b16 %v402
          %v774 = vunpack.c.l.b16 %v403
          %v775 = vunpack.c.h.b16 %v403
          %v776 = vunpack.c.l.b16 %v404
          %v777 = vunpack.c.h.b16 %v404
          %v778 = vunpack.c.l.b16 %v405
          %v779 = vunpack.c.h.b16 %v405
          %v780 = vunpack.c.l.b16 %v406
          %v781 = vunpack.c.h.b16 %v406
          %v782 = vunpack.c.l.b16 %v407
          %v783 = vunpack.c.h.b16 %v407
          %v784 = vunpack.c.l.b16 %v408
          %v785 = vunpack.c.h.b16 %v408
          %v786 = vunpack.c.l.b16 %v409
          %v787 = vunpack.c.h.b16 %v409
          %v788 = vunpack.c.l.b16 %v410
          %v789 = vunpack.c.h.b16 %v410
          %v790 = vunpack.c.l.b16 %v411
          %v791 = vunpack.c.h.b16 %v411
          %v792 = vunpack.c.l.b16 %v412
          %v793 = vunpack.c.h.b16 %v412
          %v794 = vunpack.c.l.b16 %v413
          %v795 = vunpack.c.h.b16 %v413
          %v796 = vunpack.c.l.b16 %v414
          %v797 = vunpack.c.h.b16 %v414
          %v798 = vunpack.c.l.b16 %v415
          %v799 = vunpack.c.h.b16 %v415
          %v800 = vunpack.c.l.b16 %v416
          %v801 = vunpack.c.h.b16 %v416
          %v802 = vunpack.c.l.b16 %v417
          %v803 = vunpack.c.h.b16 %v417
          %v804 = vunpack.c.l.b16 %v418
          %v805 = vunpack.c.h.b16 %v418
          %v806 = vunpack.c.l.b16 %v419
          %v807 = vunpack.c.h.b16 %v419
          %v808 = vunpack.c.l.b16 %v420
          %v809 = vunpack.c.h.b16 %v420
          %v810 = vunpack.c.l.b16 %v421
          %v811 = vunpack.c.h.b16 %v421
          %v812 = vunpack.c.l.b16 %v422
          %v813 = vunpack.c.h.b16 %v422
          %v814 = vunpack.c.l.b16 %v423
          %v815 = vunpack.c.h.b16 %v423
          %v816 = vunpack.c.l.b16 %v424
          %v817 = vunpack.c.h.b16 %v424
          %v818 = vunpack.c.l.b16 %v425
          %v819 = vunpack.c.h.b16 %v425
          %v820 = vunpack.c.l.b16 %v426
          %v821 = vunpack.c.h.b16 %v426
          %v822 = vunpack.c.l.b16 %v427
          %v823 = vunpack.c.h.b16 %v427
          %v824 = vunpack.c.l.b16 %v428
          %v825 = vunpack.c.h.b16 %v428
          %v826 = vunpack.c.l.b16 %v429
          %v827 = vunpack.c.h.b16 %v429
          %v828 = vunpack.c.l.b16 %v430
          %v829 = vunpack.c.h.b16 %v430
          %v830 = vunpack.c.l.b16 %v431
          %v831 = vunpack.c.h.b16 %v431
          %v832 = vpack.c.b16 %v712, %v704
          %v833 = vpack.c.b16 %v713, %v705
          %v834 = vpack.c.b16 %v714, %v706
          %v835 = vpack.c.b16 %v715, %v707
          %v836 = vpack.c.b16 %v716, %v708
          %v837 = vpack.c.b16 %v717, %v709
          %v838 = vpack.c.b16 %v718, %v710
          %v839 = vpack.c.b16 %v719, %v711
          %v840 = vpack.c.b16 %v728, %v720
          %v841 = vpack.c.b16 %v729, %v721
          %v842 = vpack.c.b16 %v730, %v722
          %v843 = vpack.c.b16 %v731, %v723
          %v844 = vpack.c.b16 %v732, %v724
          %v845 = vpack.c.b16 %v733, %v725
          %v846 = vpack.c.b16 %v734, %v726
          %v847 = vpack.c.b16 %v735, %v727
          %v848 = vpack.c.b16 %v744, %v736
          %v849 = vpack.c.b16 %v745, %v737
          %v850 = vpack.c.b16 %v746, %v738
          %v851 = vpack.c.b16 %v747, %v739
          %v852 = vpack.c.b16 %v748, %v740
          %v853 = vpack.c.b16 %v749, %v741
          %v854 = vpack.c.b16 %v750, %v742
          %v855 = vpack.c.b16 %v751, %v743
          %v856 = vpack.c.b16 %v760, %v752
          %v857 = vpack.c.b16 %v761, %v753
          %v858 = vpack.c.b16 %v762, %v754
          %v859 = vpack.c.b16 %v763, %v755
          %v860 = vpack.c.b16 %v764, %v756
          %v861 = vpack.c.b16 %v765, %v757
          %v862 = vpack.c.b16 %v766, %v758
          %v863 = vpack.c.b16 %v767, %v759
          %v864 = vpack.c.b16 %v776, %v768
          %v865 = vpack.c.b16 %v777, %v769
          %v866 = vpack.c.b16 %v778, %v770
          %v867 = vpack.c.b16 %v779, %v771
          %v868 = vpack.c.b16 %v780, %v772
          %v869 = vpack.c.b16 %v781, %v773
          %v870 = vpack.c.b16 %v782, %v774
          %v871 = vpack.c.b16 %v783, %v775
          %v872 = vpack.c.b16 %v792, %v784
          %v873 = vpack.c.b16 %v793, %v785
          %v874 = vpack.c.b16 %v794, %v786
          %v875 = vpack.c.b16 %v795, %v787
          %v876 = vpack.c.b16 %v796, %v788
          %v877 = vpack.c.b16 %v797, %v789
          %v878 = vpack.c.b16 %v798, %v790
          %v879 = vpack.c.b16 %v799, %v791
          %v880 = vpack.c.b16 %v808, %v800
          %v881 = vpack.c.b16 %v809, %v801
          %v882 = vpack.c.b16 %v810, %v802
          %v883 = vpack.c.b16 %v811, %v803
          %v884 = vpack.c.b16 %v812, %v804
          %v885 = vpack.c.b16 %v813, %v805
          %v886 = vpack.c.b16 %v814, %v806
          %v887 = vpack.c.b16 %v815, %v807
          %v888 = vpack.c.b16 %v824, %v816
          %v889 = vpack.c.b16 %v825, %v817
          %v890 = vpack.c.b16 %v826, %v818
          %v891 = vpack.c.b16 %v827, %v819
          %v892 = vpack.c.b16 %v828, %v820
          %v893 = vpack.c.b16 %v829, %v821
          %v894 = vpack.c.b16 %v830, %v822
          %v895 = vpack.c.b16 %v831, %v823
          %960 = vmatpush.bf16.msra.mxu0 %v888
          %961 = vmatpush.bf16.msra.mxu0 %v880
          %962 = vmatpush.bf16.msra.mxu0 %v872
          %963 = vmatpush.bf16.msra.mxu0 %v864
          %964 = vmatpush.bf16.msra.mxu0 %v856
          %965 = vmatpush.bf16.msra.mxu0 %v848
          %966 = vmatpush.bf16.msra.mxu0 %v840
          %967 = vmatpush.bf16.msra.mxu0 %v832
          %968 = vmatmul.bf16.gmra.mxu0 %v636
          %v969 = vpop.f32.mrf.mxu0
          %v970 = vadd.f32 0.0, %v969
          %v971 = vpop.f32.mrf.mxu0
          %v972 = vadd.f32 0.0, %v971
          %973 = vmatmul.bf16.gmra.mxu0 %v637
          %v974 = vpop.f32.mrf.mxu0
          %v975 = vadd.f32 0.0, %v974
          %v976 = vpop.f32.mrf.mxu0
          %v977 = vadd.f32 0.0, %v976
          %978 = vmatmul.bf16.gmra.mxu0 %v638
          %v979 = vpop.f32.mrf.mxu0
          %v980 = vadd.f32 0.0, %v979
          %v981 = vpop.f32.mrf.mxu0
          %v982 = vadd.f32 0.0, %v981
          %983 = vmatmul.bf16.gmra.mxu0 %v639
          %v984 = vpop.f32.mrf.mxu0
          %v985 = vadd.f32 0.0, %v984
          %v986 = vpop.f32.mrf.mxu0
          %v987 = vadd.f32 0.0, %v986
          %988 = vdwg.mxu0
          %989 = vmatpush.bf16.msra.mxu0 %v889
          %990 = vmatpush.bf16.msra.mxu0 %v881
          %991 = vmatpush.bf16.msra.mxu0 %v873
          %992 = vmatpush.bf16.msra.mxu0 %v865
          %993 = vmatpush.bf16.msra.mxu0 %v857
          %994 = vmatpush.bf16.msra.mxu0 %v849
          %995 = vmatpush.bf16.msra.mxu0 %v841
          %996 = vmatpush.bf16.msra.mxu0 %v833
          %997 = vmatmul.bf16.gmra.mxu0 %v636
          %v998 = vpop.f32.mrf.mxu0
          %v999 = vadd.f32 0.0, %v998
          %v1000 = vpop.f32.mrf.mxu0
          %v1001 = vadd.f32 0.0, %v1000
          %1002 = vmatmul.bf16.gmra.mxu0 %v637
          %v1003 = vpop.f32.mrf.mxu0
          %v1004 = vadd.f32 0.0, %v1003
          %v1005 = vpop.f32.mrf.mxu0
          %v1006 = vadd.f32 0.0, %v1005
          %1007 = vmatmul.bf16.gmra.mxu0 %v638
          %v1008 = vpop.f32.mrf.mxu0
          %v1009 = vadd.f32 0.0, %v1008
          %v1010 = vpop.f32.mrf.mxu0
          %v1011 = vadd.f32 0.0, %v1010
          %1012 = vmatmul.bf16.gmra.mxu0 %v639
          %v1013 = vpop.f32.mrf.mxu0
          %v1014 = vadd.f32 0.0, %v1013
          %v1015 = vpop.f32.mrf.mxu0
          %v1016 = vadd.f32 0.0, %v1015
          %1017 = vdwg.mxu0
          %1018 = vmatpush.bf16.msra.mxu0 %v890
          %1019 = vmatpush.bf16.msra.mxu0 %v882
          %1020 = vmatpush.bf16.msra.mxu0 %v874
          %1021 = vmatpush.bf16.msra.mxu0 %v866
          %1022 = vmatpush.bf16.msra.mxu0 %v858
          %1023 = vmatpush.bf16.msra.mxu0 %v850
          %1024 = vmatpush.bf16.msra.mxu0 %v842
          %1025 = vmatpush.bf16.msra.mxu0 %v834
          %1026 = vmatmul.bf16.gmra.mxu0 %v636
          %v1027 = vpop.f32.mrf.mxu0
          %v1028 = vadd.f32 0.0, %v1027
          %v1029 = vpop.f32.mrf.mxu0
          %v1030 = vadd.f32 0.0, %v1029
          %1031 = vmatmul.bf16.gmra.mxu0 %v637
          %v1032 = vpop.f32.mrf.mxu0
          %v1033 = vadd.f32 0.0, %v1032
          %v1034 = vpop.f32.mrf.mxu0
          %v1035 = vadd.f32 0.0, %v1034
          %1036 = vmatmul.bf16.gmra.mxu0 %v638
          %v1037 = vpop.f32.mrf.mxu0
          %v1038 = vadd.f32 0.0, %v1037
          %v1039 = vpop.f32.mrf.mxu0
          %v1040 = vadd.f32 0.0, %v1039
          %1041 = vmatmul.bf16.gmra.mxu0 %v639
          %v1042 = vpop.f32.mrf.mxu0
          %v1043 = vadd.f32 0.0, %v1042
          %v1044 = vpop.f32.mrf.mxu0
          %v1045 = vadd.f32 0.0, %v1044
          %1046 = vdwg.mxu0
          %1047 = vmatpush.bf16.msra.mxu0 %v891
          %1048 = vmatpush.bf16.msra.mxu0 %v883
          %1049 = vmatpush.bf16.msra.mxu0 %v875
          %1050 = vmatpush.bf16.msra.mxu0 %v867
          %1051 = vmatpush.bf16.msra.mxu0 %v859
          %1052 = vmatpush.bf16.msra.mxu0 %v851
          %1053 = vmatpush.bf16.msra.mxu0 %v843
          %1054 = vmatpush.bf16.msra.mxu0 %v835
          %1055 = vmatmul.bf16.gmra.mxu0 %v636
          %v1056 = vpop.f32.mrf.mxu0
          %v1057 = vadd.f32 0.0, %v1056
          %v1058 = vpop.f32.mrf.mxu0
          %v1059 = vadd.f32 0.0, %v1058
          %1060 = vmatmul.bf16.gmra.mxu0 %v637
          %v1061 = vpop.f32.mrf.mxu0
          %v1062 = vadd.f32 0.0, %v1061
          %v1063 = vpop.f32.mrf.mxu0
          %v1064 = vadd.f32 0.0, %v1063
          %1065 = vmatmul.bf16.gmra.mxu0 %v638
          %v1066 = vpop.f32.mrf.mxu0
          %v1067 = vadd.f32 0.0, %v1066
          %v1068 = vpop.f32.mrf.mxu0
          %v1069 = vadd.f32 0.0, %v1068
          %1070 = vmatmul.bf16.gmra.mxu0 %v639
          %v1071 = vpop.f32.mrf.mxu0
          %v1072 = vadd.f32 0.0, %v1071
          %v1073 = vpop.f32.mrf.mxu0
          %v1074 = vadd.f32 0.0, %v1073
          %1075 = vdwg.mxu0
          %1076 = vmatpush.bf16.msra.mxu0 %v892
          %1077 = vmatpush.bf16.msra.mxu0 %v884
          %1078 = vmatpush.bf16.msra.mxu0 %v876
          %1079 = vmatpush.bf16.msra.mxu0 %v868
          %1080 = vmatpush.bf16.msra.mxu0 %v860
          %1081 = vmatpush.bf16.msra.mxu0 %v852
          %1082 = vmatpush.bf16.msra.mxu0 %v844
          %1083 = vmatpush.bf16.msra.mxu0 %v836
          %1084 = vmatmul.bf16.gmra.mxu0 %v636
          %v1085 = vpop.f32.mrf.mxu0
          %v1086 = vadd.f32 0.0, %v1085
          %v1087 = vpop.f32.mrf.mxu0
          %v1088 = vadd.f32 0.0, %v1087
          %1089 = vmatmul.bf16.gmra.mxu0 %v637
          %v1090 = vpop.f32.mrf.mxu0
          %v1091 = vadd.f32 0.0, %v1090
          %v1092 = vpop.f32.mrf.mxu0
          %v1093 = vadd.f32 0.0, %v1092
          %1094 = vmatmul.bf16.gmra.mxu0 %v638
          %v1095 = vpop.f32.mrf.mxu0
          %v1096 = vadd.f32 0.0, %v1095
          %v1097 = vpop.f32.mrf.mxu0
          %v1098 = vadd.f32 0.0, %v1097
          %1099 = vmatmul.bf16.gmra.mxu0 %v639
          %v1100 = vpop.f32.mrf.mxu0
          %v1101 = vadd.f32 0.0, %v1100
          %v1102 = vpop.f32.mrf.mxu0
          %v1103 = vadd.f32 0.0, %v1102
          %1104 = vdwg.mxu0
          %1105 = vmatpush.bf16.msra.mxu0 %v893
          %1106 = vmatpush.bf16.msra.mxu0 %v885
          %1107 = vmatpush.bf16.msra.mxu0 %v877
          %1108 = vmatpush.bf16.msra.mxu0 %v869
          %1109 = vmatpush.bf16.msra.mxu0 %v861
          %1110 = vmatpush.bf16.msra.mxu0 %v853
          %1111 = vmatpush.bf16.msra.mxu0 %v845
          %1112 = vmatpush.bf16.msra.mxu0 %v837
          %1113 = vmatmul.bf16.gmra.mxu0 %v636
          %v1114 = vpop.f32.mrf.mxu0
          %v1115 = vadd.f32 0.0, %v1114
          %v1116 = vpop.f32.mrf.mxu0
          %v1117 = vadd.f32 0.0, %v1116
          %1118 = vmatmul.bf16.gmra.mxu0 %v637
          %v1119 = vpop.f32.mrf.mxu0
          %v1120 = vadd.f32 0.0, %v1119
          %v1121 = vpop.f32.mrf.mxu0
          %v1122 = vadd.f32 0.0, %v1121
          %1123 = vmatmul.bf16.gmra.mxu0 %v638
          %v1124 = vpop.f32.mrf.mxu0
          %v1125 = vadd.f32 0.0, %v1124
          %v1126 = vpop.f32.mrf.mxu0
          %v1127 = vadd.f32 0.0, %v1126
          %1128 = vmatmul.bf16.gmra.mxu0 %v639
          %v1129 = vpop.f32.mrf.mxu0
          %v1130 = vadd.f32 0.0, %v1129
          %v1131 = vpop.f32.mrf.mxu0
          %v1132 = vadd.f32 0.0, %v1131
          %1133 = vdwg.mxu0
          %1134 = vmatpush.bf16.msra.mxu0 %v894
          %1135 = vmatpush.bf16.msra.mxu0 %v886
          %1136 = vmatpush.bf16.msra.mxu0 %v878
          %1137 = vmatpush.bf16.msra.mxu0 %v870
          %1138 = vmatpush.bf16.msra.mxu0 %v862
          %1139 = vmatpush.bf16.msra.mxu0 %v854
          %1140 = vmatpush.bf16.msra.mxu0 %v846
          %1141 = vmatpush.bf16.msra.mxu0 %v838
          %1142 = vmatmul.bf16.gmra.mxu0 %v636
          %v1143 = vpop.f32.mrf.mxu0
          %v1144 = vadd.f32 0.0, %v1143
          %v1145 = vpop.f32.mrf.mxu0
          %v1146 = vadd.f32 0.0, %v1145
          %1147 = vmatmul.bf16.gmra.mxu0 %v637
          %v1148 = vpop.f32.mrf.mxu0
          %v1149 = vadd.f32 0.0, %v1148
          %v1150 = vpop.f32.mrf.mxu0
          %v1151 = vadd.f32 0.0, %v1150
          %1152 = vmatmul.bf16.gmra.mxu0 %v638
          %v1153 = vpop.f32.mrf.mxu0
          %v1154 = vadd.f32 0.0, %v1153
          %v1155 = vpop.f32.mrf.mxu0
          %v1156 = vadd.f32 0.0, %v1155
          %1157 = vmatmul.bf16.gmra.mxu0 %v639
          %v1158 = vpop.f32.mrf.mxu0
          %v1159 = vadd.f32 0.0, %v1158
          %v1160 = vpop.f32.mrf.mxu0
          %v1161 = vadd.f32 0.0, %v1160
          %1162 = vdwg.mxu0
          %1163 = vmatpush.bf16.msra.mxu0 %v895
          %1164 = vmatpush.bf16.msra.mxu0 %v887
          %1165 = vmatpush.bf16.msra.mxu0 %v879
          %1166 = vmatpush.bf16.msra.mxu0 %v871
          %1167 = vmatpush.bf16.msra.mxu0 %v863
          %1168 = vmatpush.bf16.msra.mxu0 %v855
          %1169 = vmatpush.bf16.msra.mxu0 %v847
          %1170 = vmatpush.bf16.msra.mxu0 %v839
          %1171 = vmatmul.bf16.gmra.mxu0 %v636
          %v1172 = vpop.f32.mrf.mxu0
          %v1173 = vadd.f32 0.0, %v1172
          %v1174 = vpop.f32.mrf.mxu0
          %v1175 = vadd.f32 0.0, %v1174
          %1176 = vmatmul.bf16.gmra.mxu0 %v637
          %v1177 = vpop.f32.mrf.mxu0
          %v1178 = vadd.f32 0.0, %v1177
          %v1179 = vpop.f32.mrf.mxu0
          %v1180 = vadd.f32 0.0, %v1179
          %1181 = vmatmul.bf16.gmra.mxu0 %v638
          %v1182 = vpop.f32.mrf.mxu0
          %v1183 = vadd.f32 0.0, %v1182
          %v1184 = vpop.f32.mrf.mxu0
          %v1185 = vadd.f32 0.0, %v1184
          %1186 = vmatmul.bf16.gmra.mxu0 %v639
          %v1187 = vpop.f32.mrf.mxu0
          %v1188 = vadd.f32 0.0, %v1187
          %v1189 = vpop.f32.mrf.mxu0
          %v1190 = vadd.f32 0.0, %v1189
          %1191 = vdwg.mxu0
          %1192 = vst [vmem:[#allocation3] sm:$0xff] %v970
          %1193 = vst [vmem:[#allocation3 + $0x8] sm:$0xff] %v999
          %1194 = vst [vmem:[#allocation3 + $0x10] sm:$0xff] %v1028
          %1195 = vst [vmem:[#allocation3 + $0x18] sm:$0xff] %v1057
          %1196 = vst [vmem:[#allocation3 + $0x20] sm:$0xff] %v1086
          %1197 = vst [vmem:[#allocation3 + $0x28] sm:$0xff] %v1115
          %1198 = vst [vmem:[#allocation3 + $0x30] sm:$0xff] %v1144
          %1199 = vst [vmem:[#allocation3 + $0x38] sm:$0xff] %v1173
          %1200 = vst [vmem:[#allocation3 + $0x40] sm:$0xff] %v972
          %1201 = vst [vmem:[#allocation3 + $0x48] sm:$0xff] %v1001
          %1202 = vst [vmem:[#allocation3 + $0x50] sm:$0xff] %v1030
          %1203 = vst [vmem:[#allocation3 + $0x58] sm:$0xff] %v1059
          %1204 = vst [vmem:[#allocation3 + $0x60] sm:$0xff] %v1088
          %1205 = vst [vmem:[#allocation3 + $0x68] sm:$0xff] %v1117
          %1206 = vst [vmem:[#allocation3 + $0x70] sm:$0xff] %v1146
          %1207 = vst [vmem:[#allocation3 + $0x78] sm:$0xff] %v1175
          %1208 = vst [vmem:[#allocation3 + $0x80] sm:$0xff] %v975
          %1209 = vst [vmem:[#allocation3 + $0x88] sm:$0xff] %v1004
          %1210 = vst [vmem:[#allocation3 + $0x90] sm:$0xff] %v1033
          %1211 = vst [vmem:[#allocation3 + $0x98] sm:$0xff] %v1062
          %1212 = vst [vmem:[#allocation3 + $0xa0] sm:$0xff] %v1091
          %1213 = vst [vmem:[#allocation3 + $0xa8] sm:$0xff] %v1120
          %1214 = vst [vmem:[#allocation3 + $0xb0] sm:$0xff] %v1149
          %1215 = vst [vmem:[#allocation3 + $0xb8] sm:$0xff] %v1178
          %1216 = vst [vmem:[#allocation3 + $0xc0] sm:$0xff] %v977
          %1217 = vst [vmem:[#allocation3 + $0xc8] sm:$0xff] %v1006
          %1218 = vst [vmem:[#allocation3 + $0xd0] sm:$0xff] %v1035
          %1219 = vst [vmem:[#allocation3 + $0xd8] sm:$0xff] %v1064
          %1220 = vst [vmem:[#allocation3 + $0xe0] sm:$0xff] %v1093
          %1221 = vst [vmem:[#allocation3 + $0xe8] sm:$0xff] %v1122
          %1222 = vst [vmem:[#allocation3 + $0xf0] sm:$0xff] %v1151
          %1223 = vst [vmem:[#allocation3 + $0xf8] sm:$0xff] %v1180
          %1224 = vst [vmem:[#allocation3 + $0x100] sm:$0xff] %v980
          %1225 = vst [vmem:[#allocation3 + $0x108] sm:$0xff] %v1009
          %1226 = vst [vmem:[#allocation3 + $0x110] sm:$0xff] %v1038
          %1227 = vst [vmem:[#allocation3 + $0x118] sm:$0xff] %v1067
          %1228 = vst [vmem:[#allocation3 + $0x120] sm:$0xff] %v1096
          %1229 = vst [vmem:[#allocation3 + $0x128] sm:$0xff] %v1125
          %1230 = vst [vmem:[#allocation3 + $0x130] sm:$0xff] %v1154
          %1231 = vst [vmem:[#allocation3 + $0x138] sm:$0xff] %v1183
          %1232 = vst [vmem:[#allocation3 + $0x140] sm:$0xff] %v982
          %1233 = vst [vmem:[#allocation3 + $0x148] sm:$0xff] %v1011
          %1234 = vst [vmem:[#allocation3 + $0x150] sm:$0xff] %v1040
          %1235 = vst [vmem:[#allocation3 + $0x158] sm:$0xff] %v1069
          %1236 = vst [vmem:[#allocation3 + $0x160] sm:$0xff] %v1098
          %1237 = vst [vmem:[#allocation3 + $0x168] sm:$0xff] %v1127
          %1238 = vst [vmem:[#allocation3 + $0x170] sm:$0xff] %v1156
          %1239 = vst [vmem:[#allocation3 + $0x178] sm:$0xff] %v1185
          %1240 = vst [vmem:[#allocation3 + $0x180] sm:$0xff] %v985
          %1241 = vst [vmem:[#allocation3 + $0x188] sm:$0xff] %v1014
          %1242 = vst [vmem:[#allocation3 + $0x190] sm:$0xff] %v1043
          %1243 = vst [vmem:[#allocation3 + $0x198] sm:$0xff] %v1072
          %1244 = vst [vmem:[#allocation3 + $0x1a0] sm:$0xff] %v1101
          %1245 = vst [vmem:[#allocation3 + $0x1a8] sm:$0xff] %v1130
          %1246 = vst [vmem:[#allocation3 + $0x1b0] sm:$0xff] %v1159
          %1247 = vst [vmem:[#allocation3 + $0x1b8] sm:$0xff] %v1188
          %1248 = vst [vmem:[#allocation3 + $0x1c0] sm:$0xff] %v987
          %1249 = vst [vmem:[#allocation3 + $0x1c8] sm:$0xff] %v1016
          %1250 = vst [vmem:[#allocation3 + $0x1d0] sm:$0xff] %v1045
          %1251 = vst [vmem:[#allocation3 + $0x1d8] sm:$0xff] %v1074
          %1252 = vst [vmem:[#allocation3 + $0x1e0] sm:$0xff] %v1103
          %1253 = vst [vmem:[#allocation3 + $0x1e8] sm:$0xff] %v1132
          %1254 = vst [vmem:[#allocation3 + $0x1f0] sm:$0xff] %v1161
          %1255 = vst [vmem:[#allocation3 + $0x1f8] sm:$0xff] %v1190
        $region60: #{bilstm_apply.1} parent=47 // pred_fallthru
          _
        %p1256 = scmp.gt.s32.totalorder %s24, 0
        // Predicated region
        $region61: #{bilstm_apply.1} parent=47 // pred_check
          %p1257 = pneg %p1256
        $region62: #{bilstm_apply.1} parent=47 // pred_check_branch
          %1259 = sbr.rel (%p1257) target = $region64
        $region63: #{bilstm_apply.1} parent=47 // pred_region
          %v1260 = vld [vmem:[#allocation2] sm:$0xff]
          %v1261 = vld [vmem:[#allocation2 + $0x8] sm:$0xff]
          %v1262 = vld [vmem:[#allocation2 + $0x10] sm:$0xff]
          %v1263 = vld [vmem:[#allocation2 + $0x18] sm:$0xff]
          %v1264 = vld [vmem:[#allocation2 + $0x20] sm:$0xff]
          %v1265 = vld [vmem:[#allocation2 + $0x28] sm:$0xff]
          %v1266 = vld [vmem:[#allocation2 + $0x30] sm:$0xff]
          %v1267 = vld [vmem:[#allocation2 + $0x38] sm:$0xff]
          %v1268 = vld [vmem:[#allocation2 + $0x40] sm:$0xff]
          %v1269 = vld [vmem:[#allocation2 + $0x48] sm:$0xff]
          %v1270 = vld [vmem:[#allocation2 + $0x50] sm:$0xff]
          %v1271 = vld [vmem:[#allocation2 + $0x58] sm:$0xff]
          %v1272 = vld [vmem:[#allocation2 + $0x60] sm:$0xff]
          %v1273 = vld [vmem:[#allocation2 + $0x68] sm:$0xff]
          %v1274 = vld [vmem:[#allocation2 + $0x70] sm:$0xff]
          %v1275 = vld [vmem:[#allocation2 + $0x78] sm:$0xff]
          %v1276 = vpack.c.bf16 %v1262, %v1260
          %v1277 = vpack.c.bf16 %v1263, %v1261
          %v1278 = vpack.c.bf16 %v1266, %v1264
          %v1279 = vpack.c.bf16 %v1267, %v1265
          %v1280 = vpack.c.bf16 %v1270, %v1268
          %v1281 = vpack.c.bf16 %v1271, %v1269
          %v1282 = vpack.c.bf16 %v1274, %v1272
          %v1283 = vpack.c.bf16 %v1275, %v1273
          %v1412 = vunpack.c.l.b16 %v368
          %v1413 = vunpack.c.h.b16 %v368
          %v1414 = vunpack.c.l.b16 %v369
          %v1415 = vunpack.c.h.b16 %v369
          %v1416 = vunpack.c.l.b16 %v370
          %v1417 = vunpack.c.h.b16 %v370
          %v1418 = vunpack.c.l.b16 %v371
          %v1419 = vunpack.c.h.b16 %v371
          %v1420 = vunpack.c.l.b16 %v372
          %v1421 = vunpack.c.h.b16 %v372
          %v1422 = vunpack.c.l.b16 %v373
          %v1423 = vunpack.c.h.b16 %v373
          %v1424 = vunpack.c.l.b16 %v374
          %v1425 = vunpack.c.h.b16 %v374
          %v1426 = vunpack.c.l.b16 %v375
          %v1427 = vunpack.c.h.b16 %v375
          %v1428 = vunpack.c.l.b16 %v376
          %v1429 = vunpack.c.h.b16 %v376
          %v1430 = vunpack.c.l.b16 %v377
          %v1431 = vunpack.c.h.b16 %v377
          %v1432 = vunpack.c.l.b16 %v378
          %v1433 = vunpack.c.h.b16 %v378
          %v1434 = vunpack.c.l.b16 %v379
          %v1435 = vunpack.c.h.b16 %v379
          %v1436 = vunpack.c.l.b16 %v380
          %v1437 = vunpack.c.h.b16 %v380
          %v1438 = vunpack.c.l.b16 %v381
          %v1439 = vunpack.c.h.b16 %v381
          %v1440 = vunpack.c.l.b16 %v382
          %v1441 = vunpack.c.h.b16 %v382
          %v1442 = vunpack.c.l.b16 %v383
          %v1443 = vunpack.c.h.b16 %v383
          %v1444 = vunpack.c.l.b16 %v384
          %v1445 = vunpack.c.h.b16 %v384
          %v1446 = vunpack.c.l.b16 %v385
          %v1447 = vunpack.c.h.b16 %v385
          %v1448 = vunpack.c.l.b16 %v386
          %v1449 = vunpack.c.h.b16 %v386
          %v1450 = vunpack.c.l.b16 %v387
          %v1451 = vunpack.c.h.b16 %v387
          %v1452 = vunpack.c.l.b16 %v388
          %v1453 = vunpack.c.h.b16 %v388
          %v1454 = vunpack.c.l.b16 %v389
          %v1455 = vunpack.c.h.b16 %v389
          %v1456 = vunpack.c.l.b16 %v390
          %v1457 = vunpack.c.h.b16 %v390
          %v1458 = vunpack.c.l.b16 %v391
          %v1459 = vunpack.c.h.b16 %v391
          %v1460 = vunpack.c.l.b16 %v392
          %v1461 = vunpack.c.h.b16 %v392
          %v1462 = vunpack.c.l.b16 %v393
          %v1463 = vunpack.c.h.b16 %v393
          %v1464 = vunpack.c.l.b16 %v394
          %v1465 = vunpack.c.h.b16 %v394
          %v1466 = vunpack.c.l.b16 %v395
          %v1467 = vunpack.c.h.b16 %v395
          %v1468 = vunpack.c.l.b16 %v396
          %v1469 = vunpack.c.h.b16 %v396
          %v1470 = vunpack.c.l.b16 %v397
          %v1471 = vunpack.c.h.b16 %v397
          %v1472 = vunpack.c.l.b16 %v398
          %v1473 = vunpack.c.h.b16 %v398
          %v1474 = vunpack.c.l.b16 %v399
          %v1475 = vunpack.c.h.b16 %v399
          %v1476 = vunpack.c.l.b16 %v400
          %v1477 = vunpack.c.h.b16 %v400
          %v1478 = vunpack.c.l.b16 %v401
          %v1479 = vunpack.c.h.b16 %v401
          %v1480 = vunpack.c.l.b16 %v402
          %v1481 = vunpack.c.h.b16 %v402
          %v1482 = vunpack.c.l.b16 %v403
          %v1483 = vunpack.c.h.b16 %v403
          %v1484 = vunpack.c.l.b16 %v404
          %v1485 = vunpack.c.h.b16 %v404
          %v1486 = vunpack.c.l.b16 %v405
          %v1487 = vunpack.c.h.b16 %v405
          %v1488 = vunpack.c.l.b16 %v406
          %v1489 = vunpack.c.h.b16 %v406
          %v1490 = vunpack.c.l.b16 %v407
          %v1491 = vunpack.c.h.b16 %v407
          %v1492 = vunpack.c.l.b16 %v408
          %v1493 = vunpack.c.h.b16 %v408
          %v1494 = vunpack.c.l.b16 %v409
          %v1495 = vunpack.c.h.b16 %v409
          %v1496 = vunpack.c.l.b16 %v410
          %v1497 = vunpack.c.h.b16 %v410
          %v1498 = vunpack.c.l.b16 %v411
          %v1499 = vunpack.c.h.b16 %v411
          %v1500 = vunpack.c.l.b16 %v412
          %v1501 = vunpack.c.h.b16 %v412
          %v1502 = vunpack.c.l.b16 %v413
          %v1503 = vunpack.c.h.b16 %v413
          %v1504 = vunpack.c.l.b16 %v414
          %v1505 = vunpack.c.h.b16 %v414
          %v1506 = vunpack.c.l.b16 %v415
          %v1507 = vunpack.c.h.b16 %v415
          %v1508 = vunpack.c.l.b16 %v416
          %v1509 = vunpack.c.h.b16 %v416
          %v1510 = vunpack.c.l.b16 %v417
          %v1511 = vunpack.c.h.b16 %v417
          %v1512 = vunpack.c.l.b16 %v418
          %v1513 = vunpack.c.h.b16 %v418
          %v1514 = vunpack.c.l.b16 %v419
          %v1515 = vunpack.c.h.b16 %v419
          %v1516 = vunpack.c.l.b16 %v420
          %v1517 = vunpack.c.h.b16 %v420
          %v1518 = vunpack.c.l.b16 %v421
          %v1519 = vunpack.c.h.b16 %v421
          %v1520 = vunpack.c.l.b16 %v422
          %v1521 = vunpack.c.h.b16 %v422
          %v1522 = vunpack.c.l.b16 %v423
          %v1523 = vunpack.c.h.b16 %v423
          %v1524 = vunpack.c.l.b16 %v424
          %v1525 = vunpack.c.h.b16 %v424
          %v1526 = vunpack.c.l.b16 %v425
          %v1527 = vunpack.c.h.b16 %v425
          %v1528 = vunpack.c.l.b16 %v426
          %v1529 = vunpack.c.h.b16 %v426
          %v1530 = vunpack.c.l.b16 %v427
          %v1531 = vunpack.c.h.b16 %v427
          %v1532 = vunpack.c.l.b16 %v428
          %v1533 = vunpack.c.h.b16 %v428
          %v1534 = vunpack.c.l.b16 %v429
          %v1535 = vunpack.c.h.b16 %v429
          %v1536 = vunpack.c.l.b16 %v430
          %v1537 = vunpack.c.h.b16 %v430
          %v1538 = vunpack.c.l.b16 %v431
          %v1539 = vunpack.c.h.b16 %v431
          %v1540 = vunpack.c.l.b16 %v432
          %v1541 = vunpack.c.h.b16 %v432
          %v1542 = vunpack.c.l.b16 %v433
          %v1543 = vunpack.c.h.b16 %v433
          %v1544 = vunpack.c.l.b16 %v434
          %v1545 = vunpack.c.h.b16 %v434
          %v1546 = vunpack.c.l.b16 %v435
          %v1547 = vunpack.c.h.b16 %v435
          %v1548 = vunpack.c.l.b16 %v436
          %v1549 = vunpack.c.h.b16 %v436
          %v1550 = vunpack.c.l.b16 %v437
          %v1551 = vunpack.c.h.b16 %v437
          %v1552 = vunpack.c.l.b16 %v438
          %v1553 = vunpack.c.h.b16 %v438
          %v1554 = vunpack.c.l.b16 %v439
          %v1555 = vunpack.c.h.b16 %v439
          %v1556 = vunpack.c.l.b16 %v440
          %v1557 = vunpack.c.h.b16 %v440
          %v1558 = vunpack.c.l.b16 %v441
          %v1559 = vunpack.c.h.b16 %v441
          %v1560 = vunpack.c.l.b16 %v442
          %v1561 = vunpack.c.h.b16 %v442
          %v1562 = vunpack.c.l.b16 %v443
          %v1563 = vunpack.c.h.b16 %v443
          %v1564 = vunpack.c.l.b16 %v444
          %v1565 = vunpack.c.h.b16 %v444
          %v1566 = vunpack.c.l.b16 %v445
          %v1567 = vunpack.c.h.b16 %v445
          %v1568 = vunpack.c.l.b16 %v446
          %v1569 = vunpack.c.h.b16 %v446
          %v1570 = vunpack.c.l.b16 %v447
          %v1571 = vunpack.c.h.b16 %v447
          %v1572 = vunpack.c.l.b16 %v448
          %v1573 = vunpack.c.h.b16 %v448
          %v1574 = vunpack.c.l.b16 %v449
          %v1575 = vunpack.c.h.b16 %v449
          %v1576 = vunpack.c.l.b16 %v450
          %v1577 = vunpack.c.h.b16 %v450
          %v1578 = vunpack.c.l.b16 %v451
          %v1579 = vunpack.c.h.b16 %v451
          %v1580 = vunpack.c.l.b16 %v452
          %v1581 = vunpack.c.h.b16 %v452
          %v1582 = vunpack.c.l.b16 %v453
          %v1583 = vunpack.c.h.b16 %v453
          %v1584 = vunpack.c.l.b16 %v454
          %v1585 = vunpack.c.h.b16 %v454
          %v1586 = vunpack.c.l.b16 %v455
          %v1587 = vunpack.c.h.b16 %v455
          %v1588 = vunpack.c.l.b16 %v456
          %v1589 = vunpack.c.h.b16 %v456
          %v1590 = vunpack.c.l.b16 %v457
          %v1591 = vunpack.c.h.b16 %v457
          %v1592 = vunpack.c.l.b16 %v458
          %v1593 = vunpack.c.h.b16 %v458
          %v1594 = vunpack.c.l.b16 %v459
          %v1595 = vunpack.c.h.b16 %v459
          %v1596 = vunpack.c.l.b16 %v460
          %v1597 = vunpack.c.h.b16 %v460
          %v1598 = vunpack.c.l.b16 %v461
          %v1599 = vunpack.c.h.b16 %v461
          %v1600 = vunpack.c.l.b16 %v462
          %v1601 = vunpack.c.h.b16 %v462
          %v1602 = vunpack.c.l.b16 %v463
          %v1603 = vunpack.c.h.b16 %v463
          %v1604 = vunpack.c.l.b16 %v464
          %v1605 = vunpack.c.h.b16 %v464
          %v1606 = vunpack.c.l.b16 %v465
          %v1607 = vunpack.c.h.b16 %v465
          %v1608 = vunpack.c.l.b16 %v466
          %v1609 = vunpack.c.h.b16 %v466
          %v1610 = vunpack.c.l.b16 %v467
          %v1611 = vunpack.c.h.b16 %v467
          %v1612 = vunpack.c.l.b16 %v468
          %v1613 = vunpack.c.h.b16 %v468
          %v1614 = vunpack.c.l.b16 %v469
          %v1615 = vunpack.c.h.b16 %v469
          %v1616 = vunpack.c.l.b16 %v470
          %v1617 = vunpack.c.h.b16 %v470
          %v1618 = vunpack.c.l.b16 %v471
          %v1619 = vunpack.c.h.b16 %v471
          %v1620 = vunpack.c.l.b16 %v472
          %v1621 = vunpack.c.h.b16 %v472
          %v1622 = vunpack.c.l.b16 %v473
          %v1623 = vunpack.c.h.b16 %v473
          %v1624 = vunpack.c.l.b16 %v474
          %v1625 = vunpack.c.h.b16 %v474
          %v1626 = vunpack.c.l.b16 %v475
          %v1627 = vunpack.c.h.b16 %v475
          %v1628 = vunpack.c.l.b16 %v476
          %v1629 = vunpack.c.h.b16 %v476
          %v1630 = vunpack.c.l.b16 %v477
          %v1631 = vunpack.c.h.b16 %v477
          %v1632 = vunpack.c.l.b16 %v478
          %v1633 = vunpack.c.h.b16 %v478
          %v1634 = vunpack.c.l.b16 %v479
          %v1635 = vunpack.c.h.b16 %v479
          %v1636 = vunpack.c.l.b16 %v480
          %v1637 = vunpack.c.h.b16 %v480
          %v1638 = vunpack.c.l.b16 %v481
          %v1639 = vunpack.c.h.b16 %v481
          %v1640 = vunpack.c.l.b16 %v482
          %v1641 = vunpack.c.h.b16 %v482
          %v1642 = vunpack.c.l.b16 %v483
          %v1643 = vunpack.c.h.b16 %v483
          %v1644 = vunpack.c.l.b16 %v484
          %v1645 = vunpack.c.h.b16 %v484
          %v1646 = vunpack.c.l.b16 %v485
          %v1647 = vunpack.c.h.b16 %v485
          %v1648 = vunpack.c.l.b16 %v486
          %v1649 = vunpack.c.h.b16 %v486
          %v1650 = vunpack.c.l.b16 %v487
          %v1651 = vunpack.c.h.b16 %v487
          %v1652 = vunpack.c.l.b16 %v488
          %v1653 = vunpack.c.h.b16 %v488
          %v1654 = vunpack.c.l.b16 %v489
          %v1655 = vunpack.c.h.b16 %v489
          %v1656 = vunpack.c.l.b16 %v490
          %v1657 = vunpack.c.h.b16 %v490
          %v1658 = vunpack.c.l.b16 %v491
          %v1659 = vunpack.c.h.b16 %v491
          %v1660 = vunpack.c.l.b16 %v492
          %v1661 = vunpack.c.h.b16 %v492
          %v1662 = vunpack.c.l.b16 %v493
          %v1663 = vunpack.c.h.b16 %v493
          %v1664 = vunpack.c.l.b16 %v494
          %v1665 = vunpack.c.h.b16 %v494
          %v1666 = vunpack.c.l.b16 %v495
          %v1667 = vunpack.c.h.b16 %v495
          %v1668 = vpack.c.b16 %v1420, %v1412
          %v1669 = vpack.c.b16 %v1421, %v1413
          %v1670 = vpack.c.b16 %v1422, %v1414
          %v1671 = vpack.c.b16 %v1423, %v1415
          %v1672 = vpack.c.b16 %v1424, %v1416
          %v1673 = vpack.c.b16 %v1425, %v1417
          %v1674 = vpack.c.b16 %v1426, %v1418
          %v1675 = vpack.c.b16 %v1427, %v1419
          %v1676 = vpack.c.b16 %v1436, %v1428
          %v1677 = vpack.c.b16 %v1437, %v1429
          %v1678 = vpack.c.b16 %v1438, %v1430
          %v1679 = vpack.c.b16 %v1439, %v1431
          %v1680 = vpack.c.b16 %v1440, %v1432
          %v1681 = vpack.c.b16 %v1441, %v1433
          %v1682 = vpack.c.b16 %v1442, %v1434
          %v1683 = vpack.c.b16 %v1443, %v1435
          %v1684 = vpack.c.b16 %v1452, %v1444
          %v1685 = vpack.c.b16 %v1453, %v1445
          %v1686 = vpack.c.b16 %v1454, %v1446
          %v1687 = vpack.c.b16 %v1455, %v1447
          %v1688 = vpack.c.b16 %v1456, %v1448
          %v1689 = vpack.c.b16 %v1457, %v1449
          %v1690 = vpack.c.b16 %v1458, %v1450
          %v1691 = vpack.c.b16 %v1459, %v1451
          %v1692 = vpack.c.b16 %v1468, %v1460
          %v1693 = vpack.c.b16 %v1469, %v1461
          %v1694 = vpack.c.b16 %v1470, %v1462
          %v1695 = vpack.c.b16 %v1471, %v1463
          %v1696 = vpack.c.b16 %v1472, %v1464
          %v1697 = vpack.c.b16 %v1473, %v1465
          %v1698 = vpack.c.b16 %v1474, %v1466
          %v1699 = vpack.c.b16 %v1475, %v1467
          %v1700 = vpack.c.b16 %v1484, %v1476
          %v1701 = vpack.c.b16 %v1485, %v1477
          %v1702 = vpack.c.b16 %v1486, %v1478
          %v1703 = vpack.c.b16 %v1487, %v1479
          %v1704 = vpack.c.b16 %v1488, %v1480
          %v1705 = vpack.c.b16 %v1489, %v1481
          %v1706 = vpack.c.b16 %v1490, %v1482
          %v1707 = vpack.c.b16 %v1491, %v1483
          %v1708 = vpack.c.b16 %v1500, %v1492
          %v1709 = vpack.c.b16 %v1501, %v1493
          %v1710 = vpack.c.b16 %v1502, %v1494
          %v1711 = vpack.c.b16 %v1503, %v1495
          %v1712 = vpack.c.b16 %v1504, %v1496
          %v1713 = vpack.c.b16 %v1505, %v1497
          %v1714 = vpack.c.b16 %v1506, %v1498
          %v1715 = vpack.c.b16 %v1507, %v1499
          %v1716 = vpack.c.b16 %v1516, %v1508
          %v1717 = vpack.c.b16 %v1517, %v1509
          %v1718 = vpack.c.b16 %v1518, %v1510
          %v1719 = vpack.c.b16 %v1519, %v1511
          %v1720 = vpack.c.b16 %v1520, %v1512
          %v1721 = vpack.c.b16 %v1521, %v1513
          %v1722 = vpack.c.b16 %v1522, %v1514
          %v1723 = vpack.c.b16 %v1523, %v1515
          %v1724 = vpack.c.b16 %v1532, %v1524
          %v1725 = vpack.c.b16 %v1533, %v1525
          %v1726 = vpack.c.b16 %v1534, %v1526
          %v1727 = vpack.c.b16 %v1535, %v1527
          %v1728 = vpack.c.b16 %v1536, %v1528
          %v1729 = vpack.c.b16 %v1537, %v1529
          %v1730 = vpack.c.b16 %v1538, %v1530
          %v1731 = vpack.c.b16 %v1539, %v1531
          %v1732 = vpack.c.b16 %v1548, %v1540
          %v1733 = vpack.c.b16 %v1549, %v1541
          %v1734 = vpack.c.b16 %v1550, %v1542
          %v1735 = vpack.c.b16 %v1551, %v1543
          %v1736 = vpack.c.b16 %v1552, %v1544
          %v1737 = vpack.c.b16 %v1553, %v1545
          %v1738 = vpack.c.b16 %v1554, %v1546
          %v1739 = vpack.c.b16 %v1555, %v1547
          %v1740 = vpack.c.b16 %v1564, %v1556
          %v1741 = vpack.c.b16 %v1565, %v1557
          %v1742 = vpack.c.b16 %v1566, %v1558
          %v1743 = vpack.c.b16 %v1567, %v1559
          %v1744 = vpack.c.b16 %v1568, %v1560
          %v1745 = vpack.c.b16 %v1569, %v1561
          %v1746 = vpack.c.b16 %v1570, %v1562
          %v1747 = vpack.c.b16 %v1571, %v1563
          %v1748 = vpack.c.b16 %v1580, %v1572
          %v1749 = vpack.c.b16 %v1581, %v1573
          %v1750 = vpack.c.b16 %v1582, %v1574
          %v1751 = vpack.c.b16 %v1583, %v1575
          %v1752 = vpack.c.b16 %v1584, %v1576
          %v1753 = vpack.c.b16 %v1585, %v1577
          %v1754 = vpack.c.b16 %v1586, %v1578
          %v1755 = vpack.c.b16 %v1587, %v1579
          %v1756 = vpack.c.b16 %v1596, %v1588
          %v1757 = vpack.c.b16 %v1597, %v1589
          %v1758 = vpack.c.b16 %v1598, %v1590
          %v1759 = vpack.c.b16 %v1599, %v1591
          %v1760 = vpack.c.b16 %v1600, %v1592
          %v1761 = vpack.c.b16 %v1601, %v1593
          %v1762 = vpack.c.b16 %v1602, %v1594
          %v1763 = vpack.c.b16 %v1603, %v1595
          %v1764 = vpack.c.b16 %v1612, %v1604
          %v1765 = vpack.c.b16 %v1613, %v1605
          %v1766 = vpack.c.b16 %v1614, %v1606
          %v1767 = vpack.c.b16 %v1615, %v1607
          %v1768 = vpack.c.b16 %v1616, %v1608
          %v1769 = vpack.c.b16 %v1617, %v1609
          %v1770 = vpack.c.b16 %v1618, %v1610
          %v1771 = vpack.c.b16 %v1619, %v1611
          %v1772 = vpack.c.b16 %v1628, %v1620
          %v1773 = vpack.c.b16 %v1629, %v1621
          %v1774 = vpack.c.b16 %v1630, %v1622
          %v1775 = vpack.c.b16 %v1631, %v1623
          %v1776 = vpack.c.b16 %v1632, %v1624
          %v1777 = vpack.c.b16 %v1633, %v1625
          %v1778 = vpack.c.b16 %v1634, %v1626
          %v1779 = vpack.c.b16 %v1635, %v1627
          %v1780 = vpack.c.b16 %v1644, %v1636
          %v1781 = vpack.c.b16 %v1645, %v1637
          %v1782 = vpack.c.b16 %v1646, %v1638
          %v1783 = vpack.c.b16 %v1647, %v1639
          %v1784 = vpack.c.b16 %v1648, %v1640
          %v1785 = vpack.c.b16 %v1649, %v1641
          %v1786 = vpack.c.b16 %v1650, %v1642
          %v1787 = vpack.c.b16 %v1651, %v1643
          %v1788 = vpack.c.b16 %v1660, %v1652
          %v1789 = vpack.c.b16 %v1661, %v1653
          %v1790 = vpack.c.b16 %v1662, %v1654
          %v1791 = vpack.c.b16 %v1663, %v1655
          %v1792 = vpack.c.b16 %v1664, %v1656
          %v1793 = vpack.c.b16 %v1665, %v1657
          %v1794 = vpack.c.b16 %v1666, %v1658
          %v1795 = vpack.c.b16 %v1667, %v1659
          %1924 = vmatpush.bf16.msra.mxu0 %v1724
          %1925 = vmatpush.bf16.msra.mxu0 %v1716
          %1926 = vmatpush.bf16.msra.mxu0 %v1708
          %1927 = vmatpush.bf16.msra.mxu0 %v1700
          %1928 = vmatpush.bf16.msra.mxu0 %v1692
          %1929 = vmatpush.bf16.msra.mxu0 %v1684
          %1930 = vmatpush.bf16.msra.mxu0 %v1676
          %1931 = vmatpush.bf16.msra.mxu0 %v1668
          %1932 = vmatmul.bf16.gmra.mxu0 %v1276
          %v1933 = vpop.f32.mrf.mxu0
          %v1934 = vadd.f32 0.0, %v1933
          %v1935 = vpop.f32.mrf.mxu0
          %v1936 = vadd.f32 0.0, %v1935
          %1937 = vmatmul.bf16.gmra.mxu0 %v1278
          %v1938 = vpop.f32.mrf.mxu0
          %v1939 = vadd.f32 0.0, %v1938
          %v1940 = vpop.f32.mrf.mxu0
          %v1941 = vadd.f32 0.0, %v1940
          %1942 = vmatmul.bf16.gmra.mxu0 %v1280
          %v1943 = vpop.f32.mrf.mxu0
          %v1944 = vadd.f32 0.0, %v1943
          %v1945 = vpop.f32.mrf.mxu0
          %v1946 = vadd.f32 0.0, %v1945
          %1947 = vmatmul.bf16.gmra.mxu0 %v1282
          %v1948 = vpop.f32.mrf.mxu0
          %v1949 = vadd.f32 0.0, %v1948
          %v1950 = vpop.f32.mrf.mxu0
          %v1951 = vadd.f32 0.0, %v1950
          %1952 = vdwg.mxu0
          %1953 = vmatpush.bf16.msra.mxu0 %v1788
          %1954 = vmatpush.bf16.msra.mxu0 %v1780
          %1955 = vmatpush.bf16.msra.mxu0 %v1772
          %1956 = vmatpush.bf16.msra.mxu0 %v1764
          %1957 = vmatpush.bf16.msra.mxu0 %v1756
          %1958 = vmatpush.bf16.msra.mxu0 %v1748
          %1959 = vmatpush.bf16.msra.mxu0 %v1740
          %1960 = vmatpush.bf16.msra.mxu0 %v1732
          %1961 = vmatmul.bf16.gmra.mxu0 %v1277
          %v1962 = vpop.f32.mrf.mxu0
          %v1963 = vadd.f32 %v1934, %v1962
          %v1964 = vpop.f32.mrf.mxu0
          %v1965 = vadd.f32 %v1936, %v1964
          %1966 = vmatmul.bf16.gmra.mxu0 %v1279
          %v1967 = vpop.f32.mrf.mxu0
          %v1968 = vadd.f32 %v1939, %v1967
          %v1969 = vpop.f32.mrf.mxu0
          %v1970 = vadd.f32 %v1941, %v1969
          %1971 = vmatmul.bf16.gmra.mxu0 %v1281
          %v1972 = vpop.f32.mrf.mxu0
          %v1973 = vadd.f32 %v1944, %v1972
          %v1974 = vpop.f32.mrf.mxu0
          %v1975 = vadd.f32 %v1946, %v1974
          %1976 = vmatmul.bf16.gmra.mxu0 %v1283
          %v1977 = vpop.f32.mrf.mxu0
          %v1978 = vadd.f32 %v1949, %v1977
          %v1979 = vpop.f32.mrf.mxu0
          %v1980 = vadd.f32 %v1951, %v1979
          %1981 = vdwg.mxu0
          %1982 = vmatpush.bf16.msra.mxu0 %v1725
          %1983 = vmatpush.bf16.msra.mxu0 %v1717
          %1984 = vmatpush.bf16.msra.mxu0 %v1709
          %1985 = vmatpush.bf16.msra.mxu0 %v1701
          %1986 = vmatpush.bf16.msra.mxu0 %v1693
          %1987 = vmatpush.bf16.msra.mxu0 %v1685
          %1988 = vmatpush.bf16.msra.mxu0 %v1677
          %1989 = vmatpush.bf16.msra.mxu0 %v1669
          %1990 = vmatmul.bf16.gmra.mxu0 %v1276
          %v1991 = vpop.f32.mrf.mxu0
          %v1992 = vadd.f32 0.0, %v1991
          %v1993 = vpop.f32.mrf.mxu0
          %v1994 = vadd.f32 0.0, %v1993
          %1995 = vmatmul.bf16.gmra.mxu0 %v1278
          %v1996 = vpop.f32.mrf.mxu0
          %v1997 = vadd.f32 0.0, %v1996
          %v1998 = vpop.f32.mrf.mxu0
          %v1999 = vadd.f32 0.0, %v1998
          %2000 = vmatmul.bf16.gmra.mxu0 %v1280
          %v2001 = vpop.f32.mrf.mxu0
          %v2002 = vadd.f32 0.0, %v2001
          %v2003 = vpop.f32.mrf.mxu0
          %v2004 = vadd.f32 0.0, %v2003
          %2005 = vmatmul.bf16.gmra.mxu0 %v1282
          %v2006 = vpop.f32.mrf.mxu0
          %v2007 = vadd.f32 0.0, %v2006
          %v2008 = vpop.f32.mrf.mxu0
          %v2009 = vadd.f32 0.0, %v2008
          %2010 = vdwg.mxu0
          %2011 = vmatpush.bf16.msra.mxu0 %v1789
          %2012 = vmatpush.bf16.msra.mxu0 %v1781
          %2013 = vmatpush.bf16.msra.mxu0 %v1773
          %2014 = vmatpush.bf16.msra.mxu0 %v1765
          %2015 = vmatpush.bf16.msra.mxu0 %v1757
          %2016 = vmatpush.bf16.msra.mxu0 %v1749
          %2017 = vmatpush.bf16.msra.mxu0 %v1741
          %2018 = vmatpush.bf16.msra.mxu0 %v1733
          %2019 = vmatmul.bf16.gmra.mxu0 %v1277
          %v2020 = vpop.f32.mrf.mxu0
          %v2021 = vadd.f32 %v1992, %v2020
          %v2022 = vpop.f32.mrf.mxu0
          %v2023 = vadd.f32 %v1994, %v2022
          %2024 = vmatmul.bf16.gmra.mxu0 %v1279
          %v2025 = vpop.f32.mrf.mxu0
          %v2026 = vadd.f32 %v1997, %v2025
          %v2027 = vpop.f32.mrf.mxu0
          %v2028 = vadd.f32 %v1999, %v2027
          %2029 = vmatmul.bf16.gmra.mxu0 %v1281
          %v2030 = vpop.f32.mrf.mxu0
          %v2031 = vadd.f32 %v2002, %v2030
          %v2032 = vpop.f32.mrf.mxu0
          %v2033 = vadd.f32 %v2004, %v2032
          %2034 = vmatmul.bf16.gmra.mxu0 %v1283
          %v2035 = vpop.f32.mrf.mxu0
          %v2036 = vadd.f32 %v2007, %v2035
          %v2037 = vpop.f32.mrf.mxu0
          %v2038 = vadd.f32 %v2009, %v2037
          %2039 = vdwg.mxu0
          %2040 = vmatpush.bf16.msra.mxu0 %v1726
          %2041 = vmatpush.bf16.msra.mxu0 %v1718
          %2042 = vmatpush.bf16.msra.mxu0 %v1710
          %2043 = vmatpush.bf16.msra.mxu0 %v1702
          %2044 = vmatpush.bf16.msra.mxu0 %v1694
          %2045 = vmatpush.bf16.msra.mxu0 %v1686
          %2046 = vmatpush.bf16.msra.mxu0 %v1678
          %2047 = vmatpush.bf16.msra.mxu0 %v1670
          %2048 = vmatmul.bf16.gmra.mxu0 %v1276
          %v2049 = vpop.f32.mrf.mxu0
          %v2050 = vadd.f32 0.0, %v2049
          %v2051 = vpop.f32.mrf.mxu0
          %v2052 = vadd.f32 0.0, %v2051
          %2053 = vmatmul.bf16.gmra.mxu0 %v1278
          %v2054 = vpop.f32.mrf.mxu0
          %v2055 = vadd.f32 0.0, %v2054
          %v2056 = vpop.f32.mrf.mxu0
          %v2057 = vadd.f32 0.0, %v2056
          %2058 = vmatmul.bf16.gmra.mxu0 %v1280
          %v2059 = vpop.f32.mrf.mxu0
          %v2060 = vadd.f32 0.0, %v2059
          %v2061 = vpop.f32.mrf.mxu0
          %v2062 = vadd.f32 0.0, %v2061
          %2063 = vmatmul.bf16.gmra.mxu0 %v1282
          %v2064 = vpop.f32.mrf.mxu0
          %v2065 = vadd.f32 0.0, %v2064
          %v2066 = vpop.f32.mrf.mxu0
          %v2067 = vadd.f32 0.0, %v2066
          %2068 = vdwg.mxu0
          %2069 = vmatpush.bf16.msra.mxu0 %v1790
          %2070 = vmatpush.bf16.msra.mxu0 %v1782
          %2071 = vmatpush.bf16.msra.mxu0 %v1774
          %2072 = vmatpush.bf16.msra.mxu0 %v1766
          %2073 = vmatpush.bf16.msra.mxu0 %v1758
          %2074 = vmatpush.bf16.msra.mxu0 %v1750
          %2075 = vmatpush.bf16.msra.mxu0 %v1742
          %2076 = vmatpush.bf16.msra.mxu0 %v1734
          %2077 = vmatmul.bf16.gmra.mxu0 %v1277
          %v2078 = vpop.f32.mrf.mxu0
          %v2079 = vadd.f32 %v2050, %v2078
          %v2080 = vpop.f32.mrf.mxu0
          %v2081 = vadd.f32 %v2052, %v2080
          %2082 = vmatmul.bf16.gmra.mxu0 %v1279
          %v2083 = vpop.f32.mrf.mxu0
          %v2084 = vadd.f32 %v2055, %v2083
          %v2085 = vpop.f32.mrf.mxu0
          %v2086 = vadd.f32 %v2057, %v2085
          %2087 = vmatmul.bf16.gmra.mxu0 %v1281
          %v2088 = vpop.f32.mrf.mxu0
          %v2089 = vadd.f32 %v2060, %v2088
          %v2090 = vpop.f32.mrf.mxu0
          %v2091 = vadd.f32 %v2062, %v2090
          %2092 = vmatmul.bf16.gmra.mxu0 %v1283
          %v2093 = vpop.f32.mrf.mxu0
          %v2094 = vadd.f32 %v2065, %v2093
          %v2095 = vpop.f32.mrf.mxu0
          %v2096 = vadd.f32 %v2067, %v2095
          %2097 = vdwg.mxu0
          %2098 = vmatpush.bf16.msra.mxu0 %v1727
          %2099 = vmatpush.bf16.msra.mxu0 %v1719
          %2100 = vmatpush.bf16.msra.mxu0 %v1711
          %2101 = vmatpush.bf16.msra.mxu0 %v1703
          %2102 = vmatpush.bf16.msra.mxu0 %v1695
          %2103 = vmatpush.bf16.msra.mxu0 %v1687
          %2104 = vmatpush.bf16.msra.mxu0 %v1679
          %2105 = vmatpush.bf16.msra.mxu0 %v1671
          %2106 = vmatmul.bf16.gmra.mxu0 %v1276
          %v2107 = vpop.f32.mrf.mxu0
          %v2108 = vadd.f32 0.0, %v2107
          %v2109 = vpop.f32.mrf.mxu0
          %v2110 = vadd.f32 0.0, %v2109
          %2111 = vmatmul.bf16.gmra.mxu0 %v1278
          %v2112 = vpop.f32.mrf.mxu0
          %v2113 = vadd.f32 0.0, %v2112
          %v2114 = vpop.f32.mrf.mxu0
          %v2115 = vadd.f32 0.0, %v2114
          %2116 = vmatmul.bf16.gmra.mxu0 %v1280
          %v2117 = vpop.f32.mrf.mxu0
          %v2118 = vadd.f32 0.0, %v2117
          %v2119 = vpop.f32.mrf.mxu0
          %v2120 = vadd.f32 0.0, %v2119
          %2121 = vmatmul.bf16.gmra.mxu0 %v1282
          %v2122 = vpop.f32.mrf.mxu0
          %v2123 = vadd.f32 0.0, %v2122
          %v2124 = vpop.f32.mrf.mxu0
          %v2125 = vadd.f32 0.0, %v2124
          %2126 = vdwg.mxu0
          %2127 = vmatpush.bf16.msra.mxu0 %v1791
          %2128 = vmatpush.bf16.msra.mxu0 %v1783
          %2129 = vmatpush.bf16.msra.mxu0 %v1775
          %2130 = vmatpush.bf16.msra.mxu0 %v1767
          %2131 = vmatpush.bf16.msra.mxu0 %v1759
          %2132 = vmatpush.bf16.msra.mxu0 %v1751
          %2133 = vmatpush.bf16.msra.mxu0 %v1743
          %2134 = vmatpush.bf16.msra.mxu0 %v1735
          %2135 = vmatmul.bf16.gmra.mxu0 %v1277
          %v2136 = vpop.f32.mrf.mxu0
          %v2137 = vadd.f32 %v2108, %v2136
          %v2138 = vpop.f32.mrf.mxu0
          %v2139 = vadd.f32 %v2110, %v2138
          %2140 = vmatmul.bf16.gmra.mxu0 %v1279
          %v2141 = vpop.f32.mrf.mxu0
          %v2142 = vadd.f32 %v2113, %v2141
          %v2143 = vpop.f32.mrf.mxu0
          %v2144 = vadd.f32 %v2115, %v2143
          %2145 = vmatmul.bf16.gmra.mxu0 %v1281
          %v2146 = vpop.f32.mrf.mxu0
          %v2147 = vadd.f32 %v2118, %v2146
          %v2148 = vpop.f32.mrf.mxu0
          %v2149 = vadd.f32 %v2120, %v2148
          %2150 = vmatmul.bf16.gmra.mxu0 %v1283
          %v2151 = vpop.f32.mrf.mxu0
          %v2152 = vadd.f32 %v2123, %v2151
          %v2153 = vpop.f32.mrf.mxu0
          %v2154 = vadd.f32 %v2125, %v2153
          %2155 = vdwg.mxu0
          %2156 = vmatpush.bf16.msra.mxu0 %v1728
          %2157 = vmatpush.bf16.msra.mxu0 %v1720
          %2158 = vmatpush.bf16.msra.mxu0 %v1712
          %2159 = vmatpush.bf16.msra.mxu0 %v1704
          %2160 = vmatpush.bf16.msra.mxu0 %v1696
          %2161 = vmatpush.bf16.msra.mxu0 %v1688
          %2162 = vmatpush.bf16.msra.mxu0 %v1680
          %2163 = vmatpush.bf16.msra.mxu0 %v1672
          %2164 = vmatmul.bf16.gmra.mxu0 %v1276
          %v2165 = vpop.f32.mrf.mxu0
          %v2166 = vadd.f32 0.0, %v2165
          %v2167 = vpop.f32.mrf.mxu0
          %v2168 = vadd.f32 0.0, %v2167
          %2169 = vmatmul.bf16.gmra.mxu0 %v1278
          %v2170 = vpop.f32.mrf.mxu0
          %v2171 = vadd.f32 0.0, %v2170
          %v2172 = vpop.f32.mrf.mxu0
          %v2173 = vadd.f32 0.0, %v2172
          %2174 = vmatmul.bf16.gmra.mxu0 %v1280
          %v2175 = vpop.f32.mrf.mxu0
          %v2176 = vadd.f32 0.0, %v2175
          %v2177 = vpop.f32.mrf.mxu0
          %v2178 = vadd.f32 0.0, %v2177
          %2179 = vmatmul.bf16.gmra.mxu0 %v1282
          %v2180 = vpop.f32.mrf.mxu0
          %v2181 = vadd.f32 0.0, %v2180
          %v2182 = vpop.f32.mrf.mxu0
          %v2183 = vadd.f32 0.0, %v2182
          %2184 = vdwg.mxu0
          %2185 = vmatpush.bf16.msra.mxu0 %v1792
          %2186 = vmatpush.bf16.msra.mxu0 %v1784
          %2187 = vmatpush.bf16.msra.mxu0 %v1776
          %2188 = vmatpush.bf16.msra.mxu0 %v1768
          %2189 = vmatpush.bf16.msra.mxu0 %v1760
          %2190 = vmatpush.bf16.msra.mxu0 %v1752
          %2191 = vmatpush.bf16.msra.mxu0 %v1744
          %2192 = vmatpush.bf16.msra.mxu0 %v1736
          %2193 = vmatmul.bf16.gmra.mxu0 %v1277
          %v2194 = vpop.f32.mrf.mxu0
          %v2195 = vadd.f32 %v2166, %v2194
          %v2196 = vpop.f32.mrf.mxu0
          %v2197 = vadd.f32 %v2168, %v2196
          %2198 = vmatmul.bf16.gmra.mxu0 %v1279
          %v2199 = vpop.f32.mrf.mxu0
          %v2200 = vadd.f32 %v2171, %v2199
          %v2201 = vpop.f32.mrf.mxu0
          %v2202 = vadd.f32 %v2173, %v2201
          %2203 = vmatmul.bf16.gmra.mxu0 %v1281
          %v2204 = vpop.f32.mrf.mxu0
          %v2205 = vadd.f32 %v2176, %v2204
          %v2206 = vpop.f32.mrf.mxu0
          %v2207 = vadd.f32 %v2178, %v2206
          %2208 = vmatmul.bf16.gmra.mxu0 %v1283
          %v2209 = vpop.f32.mrf.mxu0
          %v2210 = vadd.f32 %v2181, %v2209
          %v2211 = vpop.f32.mrf.mxu0
          %v2212 = vadd.f32 %v2183, %v2211
          %2213 = vdwg.mxu0
          %2214 = vmatpush.bf16.msra.mxu0 %v1729
          %2215 = vmatpush.bf16.msra.mxu0 %v1721
          %2216 = vmatpush.bf16.msra.mxu0 %v1713
          %2217 = vmatpush.bf16.msra.mxu0 %v1705
          %2218 = vmatpush.bf16.msra.mxu0 %v1697
          %2219 = vmatpush.bf16.msra.mxu0 %v1689
          %2220 = vmatpush.bf16.msra.mxu0 %v1681
          %2221 = vmatpush.bf16.msra.mxu0 %v1673
          %2222 = vmatmul.bf16.gmra.mxu0 %v1276
          %v2223 = vpop.f32.mrf.mxu0
          %v2224 = vadd.f32 0.0, %v2223
          %v2225 = vpop.f32.mrf.mxu0
          %v2226 = vadd.f32 0.0, %v2225
          %2227 = vmatmul.bf16.gmra.mxu0 %v1278
          %v2228 = vpop.f32.mrf.mxu0
          %v2229 = vadd.f32 0.0, %v2228
          %v2230 = vpop.f32.mrf.mxu0
          %v2231 = vadd.f32 0.0, %v2230
          %2232 = vmatmul.bf16.gmra.mxu0 %v1280
          %v2233 = vpop.f32.mrf.mxu0
          %v2234 = vadd.f32 0.0, %v2233
          %v2235 = vpop.f32.mrf.mxu0
          %v2236 = vadd.f32 0.0, %v2235
          %2237 = vmatmul.bf16.gmra.mxu0 %v1282
          %v2238 = vpop.f32.mrf.mxu0
          %v2239 = vadd.f32 0.0, %v2238
          %v2240 = vpop.f32.mrf.mxu0
          %v2241 = vadd.f32 0.0, %v2240
          %2242 = vdwg.mxu0
          %2243 = vmatpush.bf16.msra.mxu0 %v1793
          %2244 = vmatpush.bf16.msra.mxu0 %v1785
          %2245 = vmatpush.bf16.msra.mxu0 %v1777
          %2246 = vmatpush.bf16.msra.mxu0 %v1769
          %2247 = vmatpush.bf16.msra.mxu0 %v1761
          %2248 = vmatpush.bf16.msra.mxu0 %v1753
          %2249 = vmatpush.bf16.msra.mxu0 %v1745
          %2250 = vmatpush.bf16.msra.mxu0 %v1737
          %2251 = vmatmul.bf16.gmra.mxu0 %v1277
          %v2252 = vpop.f32.mrf.mxu0
          %v2253 = vadd.f32 %v2224, %v2252
          %v2254 = vpop.f32.mrf.mxu0
          %v2255 = vadd.f32 %v2226, %v2254
          %2256 = vmatmul.bf16.gmra.mxu0 %v1279
          %v2257 = vpop.f32.mrf.mxu0
          %v2258 = vadd.f32 %v2229, %v2257
          %v2259 = vpop.f32.mrf.mxu0
          %v2260 = vadd.f32 %v2231, %v2259
          %2261 = vmatmul.bf16.gmra.mxu0 %v1281
          %v2262 = vpop.f32.mrf.mxu0
          %v2263 = vadd.f32 %v2234, %v2262
          %v2264 = vpop.f32.mrf.mxu0
          %v2265 = vadd.f32 %v2236, %v2264
          %2266 = vmatmul.bf16.gmra.mxu0 %v1283
          %v2267 = vpop.f32.mrf.mxu0
          %v2268 = vadd.f32 %v2239, %v2267
          %v2269 = vpop.f32.mrf.mxu0
          %v2270 = vadd.f32 %v2241, %v2269
          %2271 = vdwg.mxu0
          %2272 = vmatpush.bf16.msra.mxu0 %v1730
          %2273 = vmatpush.bf16.msra.mxu0 %v1722
          %2274 = vmatpush.bf16.msra.mxu0 %v1714
          %2275 = vmatpush.bf16.msra.mxu0 %v1706
          %2276 = vmatpush.bf16.msra.mxu0 %v1698
          %2277 = vmatpush.bf16.msra.mxu0 %v1690
          %2278 = vmatpush.bf16.msra.mxu0 %v1682
          %2279 = vmatpush.bf16.msra.mxu0 %v1674
          %2280 = vmatmul.bf16.gmra.mxu0 %v1276
          %v2281 = vpop.f32.mrf.mxu0
          %v2282 = vadd.f32 0.0, %v2281
          %v2283 = vpop.f32.mrf.mxu0
          %v2284 = vadd.f32 0.0, %v2283
          %2285 = vmatmul.bf16.gmra.mxu0 %v1278
          %v2286 = vpop.f32.mrf.mxu0
          %v2287 = vadd.f32 0.0, %v2286
          %v2288 = vpop.f32.mrf.mxu0
          %v2289 = vadd.f32 0.0, %v2288
          %2290 = vmatmul.bf16.gmra.mxu0 %v1280
          %v2291 = vpop.f32.mrf.mxu0
          %v2292 = vadd.f32 0.0, %v2291
          %v2293 = vpop.f32.mrf.mxu0
          %v2294 = vadd.f32 0.0, %v2293
          %2295 = vmatmul.bf16.gmra.mxu0 %v1282
          %v2296 = vpop.f32.mrf.mxu0
          %v2297 = vadd.f32 0.0, %v2296
          %v2298 = vpop.f32.mrf.mxu0
          %v2299 = vadd.f32 0.0, %v2298
          %2300 = vdwg.mxu0
          %2301 = vmatpush.bf16.msra.mxu0 %v1794
          %2302 = vmatpush.bf16.msra.mxu0 %v1786
          %2303 = vmatpush.bf16.msra.mxu0 %v1778
          %2304 = vmatpush.bf16.msra.mxu0 %v1770
          %2305 = vmatpush.bf16.msra.mxu0 %v1762
          %2306 = vmatpush.bf16.msra.mxu0 %v1754
          %2307 = vmatpush.bf16.msra.mxu0 %v1746
          %2308 = vmatpush.bf16.msra.mxu0 %v1738
          %2309 = vmatmul.bf16.gmra.mxu0 %v1277
          %v2310 = vpop.f32.mrf.mxu0
          %v2311 = vadd.f32 %v2282, %v2310
          %v2312 = vpop.f32.mrf.mxu0
          %v2313 = vadd.f32 %v2284, %v2312
          %2314 = vmatmul.bf16.gmra.mxu0 %v1279
          %v2315 = vpop.f32.mrf.mxu0
          %v2316 = vadd.f32 %v2287, %v2315
          %v2317 = vpop.f32.mrf.mxu0
          %v2318 = vadd.f32 %v2289, %v2317
          %2319 = vmatmul.bf16.gmra.mxu0 %v1281
          %v2320 = vpop.f32.mrf.mxu0
          %v2321 = vadd.f32 %v2292, %v2320
          %v2322 = vpop.f32.mrf.mxu0
          %v2323 = vadd.f32 %v2294, %v2322
          %2324 = vmatmul.bf16.gmra.mxu0 %v1283
          %v2325 = vpop.f32.mrf.mxu0
          %v2326 = vadd.f32 %v2297, %v2325
          %v2327 = vpop.f32.mrf.mxu0
          %v2328 = vadd.f32 %v2299, %v2327
          %2329 = vdwg.mxu0
          %2330 = vmatpush.bf16.msra.mxu0 %v1731
          %2331 = vmatpush.bf16.msra.mxu0 %v1723
          %2332 = vmatpush.bf16.msra.mxu0 %v1715
          %2333 = vmatpush.bf16.msra.mxu0 %v1707
          %2334 = vmatpush.bf16.msra.mxu0 %v1699
          %2335 = vmatpush.bf16.msra.mxu0 %v1691
          %2336 = vmatpush.bf16.msra.mxu0 %v1683
          %2337 = vmatpush.bf16.msra.mxu0 %v1675
          %2338 = vmatmul.bf16.gmra.mxu0 %v1276
          %v2339 = vpop.f32.mrf.mxu0
          %v2340 = vadd.f32 0.0, %v2339
          %v2341 = vpop.f32.mrf.mxu0
          %v2342 = vadd.f32 0.0, %v2341
          %2343 = vmatmul.bf16.gmra.mxu0 %v1278
          %v2344 = vpop.f32.mrf.mxu0
          %v2345 = vadd.f32 0.0, %v2344
          %v2346 = vpop.f32.mrf.mxu0
          %v2347 = vadd.f32 0.0, %v2346
          %2348 = vmatmul.bf16.gmra.mxu0 %v1280
          %v2349 = vpop.f32.mrf.mxu0
          %v2350 = vadd.f32 0.0, %v2349
          %v2351 = vpop.f32.mrf.mxu0
          %v2352 = vadd.f32 0.0, %v2351
          %2353 = vmatmul.bf16.gmra.mxu0 %v1282
          %v2354 = vpop.f32.mrf.mxu0
          %v2355 = vadd.f32 0.0, %v2354
          %v2356 = vpop.f32.mrf.mxu0
          %v2357 = vadd.f32 0.0, %v2356
          %2358 = vdwg.mxu0
          %2359 = vmatpush.bf16.msra.mxu0 %v1795
          %2360 = vmatpush.bf16.msra.mxu0 %v1787
          %2361 = vmatpush.bf16.msra.mxu0 %v1779
          %2362 = vmatpush.bf16.msra.mxu0 %v1771
          %2363 = vmatpush.bf16.msra.mxu0 %v1763
          %2364 = vmatpush.bf16.msra.mxu0 %v1755
          %2365 = vmatpush.bf16.msra.mxu0 %v1747
          %2366 = vmatpush.bf16.msra.mxu0 %v1739
          %2367 = vmatmul.bf16.gmra.mxu0 %v1277
          %v2368 = vpop.f32.mrf.mxu0
          %v2369 = vadd.f32 %v2340, %v2368
          %v2370 = vpop.f32.mrf.mxu0
          %v2371 = vadd.f32 %v2342, %v2370
          %2372 = vmatmul.bf16.gmra.mxu0 %v1279
          %v2373 = vpop.f32.mrf.mxu0
          %v2374 = vadd.f32 %v2345, %v2373
          %v2375 = vpop.f32.mrf.mxu0
          %v2376 = vadd.f32 %v2347, %v2375
          %2377 = vmatmul.bf16.gmra.mxu0 %v1281
          %v2378 = vpop.f32.mrf.mxu0
          %v2379 = vadd.f32 %v2350, %v2378
          %v2380 = vpop.f32.mrf.mxu0
          %v2381 = vadd.f32 %v2352, %v2380
          %2382 = vmatmul.bf16.gmra.mxu0 %v1283
          %v2383 = vpop.f32.mrf.mxu0
          %v2384 = vadd.f32 %v2355, %v2383
          %v2385 = vpop.f32.mrf.mxu0
          %v2386 = vadd.f32 %v2357, %v2385
          %2387 = vdwg.mxu0
          %2388 = vst [vmem:[#allocation3] sm:$0xff] %v1963
          %2389 = vst [vmem:[#allocation3 + $0x8] sm:$0xff] %v2021
          %2390 = vst [vmem:[#allocation3 + $0x10] sm:$0xff] %v2079
          %2391 = vst [vmem:[#allocation3 + $0x18] sm:$0xff] %v2137
          %2392 = vst [vmem:[#allocation3 + $0x20] sm:$0xff] %v2195
          %2393 = vst [vmem:[#allocation3 + $0x28] sm:$0xff] %v2253
          %2394 = vst [vmem:[#allocation3 + $0x30] sm:$0xff] %v2311
          %2395 = vst [vmem:[#allocation3 + $0x38] sm:$0xff] %v2369
          %2396 = vst [vmem:[#allocation3 + $0x40] sm:$0xff] %v1965
          %2397 = vst [vmem:[#allocation3 + $0x48] sm:$0xff] %v2023
          %2398 = vst [vmem:[#allocation3 + $0x50] sm:$0xff] %v2081
          %2399 = vst [vmem:[#allocation3 + $0x58] sm:$0xff] %v2139
          %2400 = vst [vmem:[#allocation3 + $0x60] sm:$0xff] %v2197
          %2401 = vst [vmem:[#allocation3 + $0x68] sm:$0xff] %v2255
          %2402 = vst [vmem:[#allocation3 + $0x70] sm:$0xff] %v2313
          %2403 = vst [vmem:[#allocation3 + $0x78] sm:$0xff] %v2371
          %2404 = vst [vmem:[#allocation3 + $0x80] sm:$0xff] %v1968
          %2405 = vst [vmem:[#allocation3 + $0x88] sm:$0xff] %v2026
          %2406 = vst [vmem:[#allocation3 + $0x90] sm:$0xff] %v2084
          %2407 = vst [vmem:[#allocation3 + $0x98] sm:$0xff] %v2142
          %2408 = vst [vmem:[#allocation3 + $0xa0] sm:$0xff] %v2200
          %2409 = vst [vmem:[#allocation3 + $0xa8] sm:$0xff] %v2258
          %2410 = vst [vmem:[#allocation3 + $0xb0] sm:$0xff] %v2316
          %2411 = vst [vmem:[#allocation3 + $0xb8] sm:$0xff] %v2374
          %2412 = vst [vmem:[#allocation3 + $0xc0] sm:$0xff] %v1970
          %2413 = vst [vmem:[#allocation3 + $0xc8] sm:$0xff] %v2028
          %2414 = vst [vmem:[#allocation3 + $0xd0] sm:$0xff] %v2086
          %2415 = vst [vmem:[#allocation3 + $0xd8] sm:$0xff] %v2144
          %2416 = vst [vmem:[#allocation3 + $0xe0] sm:$0xff] %v2202
          %2417 = vst [vmem:[#allocation3 + $0xe8] sm:$0xff] %v2260
          %2418 = vst [vmem:[#allocation3 + $0xf0] sm:$0xff] %v2318
          %2419 = vst [vmem:[#allocation3 + $0xf8] sm:$0xff] %v2376
          %2420 = vst [vmem:[#allocation3 + $0x100] sm:$0xff] %v1973
          %2421 = vst [vmem:[#allocation3 + $0x108] sm:$0xff] %v2031
          %2422 = vst [vmem:[#allocation3 + $0x110] sm:$0xff] %v2089
          %2423 = vst [vmem:[#allocation3 + $0x118] sm:$0xff] %v2147
          %2424 = vst [vmem:[#allocation3 + $0x120] sm:$0xff] %v2205
          %2425 = vst [vmem:[#allocation3 + $0x128] sm:$0xff] %v2263
          %2426 = vst [vmem:[#allocation3 + $0x130] sm:$0xff] %v2321
          %2427 = vst [vmem:[#allocation3 + $0x138] sm:$0xff] %v2379
          %2428 = vst [vmem:[#allocation3 + $0x140] sm:$0xff] %v1975
          %2429 = vst [vmem:[#allocation3 + $0x148] sm:$0xff] %v2033
          %2430 = vst [vmem:[#allocation3 + $0x150] sm:$0xff] %v2091
          %2431 = vst [vmem:[#allocation3 + $0x158] sm:$0xff] %v2149
          %2432 = vst [vmem:[#allocation3 + $0x160] sm:$0xff] %v2207
          %2433 = vst [vmem:[#allocation3 + $0x168] sm:$0xff] %v2265
          %2434 = vst [vmem:[#allocation3 + $0x170] sm:$0xff] %v2323
          %2435 = vst [vmem:[#allocation3 + $0x178] sm:$0xff] %v2381
          %2436 = vst [vmem:[#allocation3 + $0x180] sm:$0xff] %v1978
          %2437 = vst [vmem:[#allocation3 + $0x188] sm:$0xff] %v2036
          %2438 = vst [vmem:[#allocation3 + $0x190] sm:$0xff] %v2094
          %2439 = vst [vmem:[#allocation3 + $0x198] sm:$0xff] %v2152
          %2440 = vst [vmem:[#allocation3 + $0x1a0] sm:$0xff] %v2210
          %2441 = vst [vmem:[#allocation3 + $0x1a8] sm:$0xff] %v2268
          %2442 = vst [vmem:[#allocation3 + $0x1b0] sm:$0xff] %v2326
          %2443 = vst [vmem:[#allocation3 + $0x1b8] sm:$0xff] %v2384
          %2444 = vst [vmem:[#allocation3 + $0x1c0] sm:$0xff] %v1980
          %2445 = vst [vmem:[#allocation3 + $0x1c8] sm:$0xff] %v2038
          %2446 = vst [vmem:[#allocation3 + $0x1d0] sm:$0xff] %v2096
          %2447 = vst [vmem:[#allocation3 + $0x1d8] sm:$0xff] %v2154
          %2448 = vst [vmem:[#allocation3 + $0x1e0] sm:$0xff] %v2212
          %2449 = vst [vmem:[#allocation3 + $0x1e8] sm:$0xff] %v2270
          %2450 = vst [vmem:[#allocation3 + $0x1f0] sm:$0xff] %v2328
          %2451 = vst [vmem:[#allocation3 + $0x1f8] sm:$0xff] %v2386
        $region64: #{bilstm_apply.1} parent=47 // pred_fallthru
          _
        %v2452 = vld [vmem:[%s362] sm:$0xff]
        %v2453 = vld [vmem:[%s362 + $0x8] sm:$0xff]
        %v2454 = vld [vmem:[%s367] sm:$0xff]
        %v2455 = vld [vmem:[%s367 + $0x8] sm:$0xff]
        %v2456 = vpack.c.bf16 %v2452, %v2452
        %v2457 = vpack.c.bf16 %v2453, %v2453
        %v2586 = vunpack.c.l.b16 %v496
        %v2587 = vunpack.c.h.b16 %v496
        %v2588 = vunpack.c.l.b16 %v497
        %v2589 = vunpack.c.h.b16 %v497
        %v2590 = vunpack.c.l.b16 %v498
        %v2591 = vunpack.c.h.b16 %v498
        %v2592 = vunpack.c.l.b16 %v499
        %v2593 = vunpack.c.h.b16 %v499
        %v2594 = vunpack.c.l.b16 %v500
        %v2595 = vunpack.c.h.b16 %v500
        %v2596 = vunpack.c.l.b16 %v501
        %v2597 = vunpack.c.h.b16 %v501
        %v2598 = vunpack.c.l.b16 %v502
        %v2599 = vunpack.c.h.b16 %v502
        %v2600 = vunpack.c.l.b16 %v503
        %v2601 = vunpack.c.h.b16 %v503
        %v2602 = vunpack.c.l.b16 %v504
        %v2603 = vunpack.c.h.b16 %v504
        %v2604 = vunpack.c.l.b16 %v505
        %v2605 = vunpack.c.h.b16 %v505
        %v2606 = vunpack.c.l.b16 %v506
        %v2607 = vunpack.c.h.b16 %v506
        %v2608 = vunpack.c.l.b16 %v507
        %v2609 = vunpack.c.h.b16 %v507
        %v2610 = vunpack.c.l.b16 %v508
        %v2611 = vunpack.c.h.b16 %v508
        %v2612 = vunpack.c.l.b16 %v509
        %v2613 = vunpack.c.h.b16 %v509
        %v2614 = vunpack.c.l.b16 %v510
        %v2615 = vunpack.c.h.b16 %v510
        %v2616 = vunpack.c.l.b16 %v511
        %v2617 = vunpack.c.h.b16 %v511
        %v2618 = vunpack.c.l.b16 %v512
        %v2619 = vunpack.c.h.b16 %v512
        %v2620 = vunpack.c.l.b16 %v513
        %v2621 = vunpack.c.h.b16 %v513
        %v2622 = vunpack.c.l.b16 %v514
        %v2623 = vunpack.c.h.b16 %v514
        %v2624 = vunpack.c.l.b16 %v515
        %v2625 = vunpack.c.h.b16 %v515
        %v2626 = vunpack.c.l.b16 %v516
        %v2627 = vunpack.c.h.b16 %v516
        %v2628 = vunpack.c.l.b16 %v517
        %v2629 = vunpack.c.h.b16 %v517
        %v2630 = vunpack.c.l.b16 %v518
        %v2631 = vunpack.c.h.b16 %v518
        %v2632 = vunpack.c.l.b16 %v519
        %v2633 = vunpack.c.h.b16 %v519
        %v2634 = vunpack.c.l.b16 %v520
        %v2635 = vunpack.c.h.b16 %v520
        %v2636 = vunpack.c.l.b16 %v521
        %v2637 = vunpack.c.h.b16 %v521
        %v2638 = vunpack.c.l.b16 %v522
        %v2639 = vunpack.c.h.b16 %v522
        %v2640 = vunpack.c.l.b16 %v523
        %v2641 = vunpack.c.h.b16 %v523
        %v2642 = vunpack.c.l.b16 %v524
        %v2643 = vunpack.c.h.b16 %v524
        %v2644 = vunpack.c.l.b16 %v525
        %v2645 = vunpack.c.h.b16 %v525
        %v2646 = vunpack.c.l.b16 %v526
        %v2647 = vunpack.c.h.b16 %v526
        %v2648 = vunpack.c.l.b16 %v527
        %v2649 = vunpack.c.h.b16 %v527
        %v2650 = vunpack.c.l.b16 %v528
        %v2651 = vunpack.c.h.b16 %v528
        %v2652 = vunpack.c.l.b16 %v529
        %v2653 = vunpack.c.h.b16 %v529
        %v2654 = vunpack.c.l.b16 %v530
        %v2655 = vunpack.c.h.b16 %v530
        %v2656 = vunpack.c.l.b16 %v531
        %v2657 = vunpack.c.h.b16 %v531
        %v2658 = vunpack.c.l.b16 %v532
        %v2659 = vunpack.c.h.b16 %v532
        %v2660 = vunpack.c.l.b16 %v533
        %v2661 = vunpack.c.h.b16 %v533
        %v2662 = vunpack.c.l.b16 %v534
        %v2663 = vunpack.c.h.b16 %v534
        %v2664 = vunpack.c.l.b16 %v535
        %v2665 = vunpack.c.h.b16 %v535
        %v2666 = vunpack.c.l.b16 %v536
        %v2667 = vunpack.c.h.b16 %v536
        %v2668 = vunpack.c.l.b16 %v537
        %v2669 = vunpack.c.h.b16 %v537
        %v2670 = vunpack.c.l.b16 %v538
        %v2671 = vunpack.c.h.b16 %v538
        %v2672 = vunpack.c.l.b16 %v539
        %v2673 = vunpack.c.h.b16 %v539
        %v2674 = vunpack.c.l.b16 %v540
        %v2675 = vunpack.c.h.b16 %v540
        %v2676 = vunpack.c.l.b16 %v541
        %v2677 = vunpack.c.h.b16 %v541
        %v2678 = vunpack.c.l.b16 %v542
        %v2679 = vunpack.c.h.b16 %v542
        %v2680 = vunpack.c.l.b16 %v543
        %v2681 = vunpack.c.h.b16 %v543
        %v2682 = vunpack.c.l.b16 %v544
        %v2683 = vunpack.c.h.b16 %v544
        %v2684 = vunpack.c.l.b16 %v545
        %v2685 = vunpack.c.h.b16 %v545
        %v2686 = vunpack.c.l.b16 %v546
        %v2687 = vunpack.c.h.b16 %v546
        %v2688 = vunpack.c.l.b16 %v547
        %v2689 = vunpack.c.h.b16 %v547
        %v2690 = vunpack.c.l.b16 %v548
        %v2691 = vunpack.c.h.b16 %v548
        %v2692 = vunpack.c.l.b16 %v549
        %v2693 = vunpack.c.h.b16 %v549
        %v2694 = vunpack.c.l.b16 %v550
        %v2695 = vunpack.c.h.b16 %v550
        %v2696 = vunpack.c.l.b16 %v551
        %v2697 = vunpack.c.h.b16 %v551
        %v2698 = vunpack.c.l.b16 %v552
        %v2699 = vunpack.c.h.b16 %v552
        %v2700 = vunpack.c.l.b16 %v553
        %v2701 = vunpack.c.h.b16 %v553
        %v2702 = vunpack.c.l.b16 %v554
        %v2703 = vunpack.c.h.b16 %v554
        %v2704 = vunpack.c.l.b16 %v555
        %v2705 = vunpack.c.h.b16 %v555
        %v2706 = vunpack.c.l.b16 %v556
        %v2707 = vunpack.c.h.b16 %v556
        %v2708 = vunpack.c.l.b16 %v557
        %v2709 = vunpack.c.h.b16 %v557
        %v2710 = vunpack.c.l.b16 %v558
        %v2711 = vunpack.c.h.b16 %v558
        %v2712 = vunpack.c.l.b16 %v559
        %v2713 = vunpack.c.h.b16 %v559
        %v2714 = vunpack.c.l.b16 %v560
        %v2715 = vunpack.c.h.b16 %v560
        %v2716 = vunpack.c.l.b16 %v561
        %v2717 = vunpack.c.h.b16 %v561
        %v2718 = vunpack.c.l.b16 %v562
        %v2719 = vunpack.c.h.b16 %v562
        %v2720 = vunpack.c.l.b16 %v563
        %v2721 = vunpack.c.h.b16 %v563
        %v2722 = vunpack.c.l.b16 %v564
        %v2723 = vunpack.c.h.b16 %v564
        %v2724 = vunpack.c.l.b16 %v565
        %v2725 = vunpack.c.h.b16 %v565
        %v2726 = vunpack.c.l.b16 %v566
        %v2727 = vunpack.c.h.b16 %v566
        %v2728 = vunpack.c.l.b16 %v567
        %v2729 = vunpack.c.h.b16 %v567
        %v2730 = vunpack.c.l.b16 %v568
        %v2731 = vunpack.c.h.b16 %v568
        %v2732 = vunpack.c.l.b16 %v569
        %v2733 = vunpack.c.h.b16 %v569
        %v2734 = vunpack.c.l.b16 %v570
        %v2735 = vunpack.c.h.b16 %v570
        %v2736 = vunpack.c.l.b16 %v571
        %v2737 = vunpack.c.h.b16 %v571
        %v2738 = vunpack.c.l.b16 %v572
        %v2739 = vunpack.c.h.b16 %v572
        %v2740 = vunpack.c.l.b16 %v573
        %v2741 = vunpack.c.h.b16 %v573
        %v2742 = vunpack.c.l.b16 %v574
        %v2743 = vunpack.c.h.b16 %v574
        %v2744 = vunpack.c.l.b16 %v575
        %v2745 = vunpack.c.h.b16 %v575
        %v2746 = vunpack.c.l.b16 %v576
        %v2747 = vunpack.c.h.b16 %v576
        %v2748 = vunpack.c.l.b16 %v577
        %v2749 = vunpack.c.h.b16 %v577
        %v2750 = vunpack.c.l.b16 %v578
        %v2751 = vunpack.c.h.b16 %v578
        %v2752 = vunpack.c.l.b16 %v579
        %v2753 = vunpack.c.h.b16 %v579
        %v2754 = vunpack.c.l.b16 %v580
        %v2755 = vunpack.c.h.b16 %v580
        %v2756 = vunpack.c.l.b16 %v581
        %v2757 = vunpack.c.h.b16 %v581
        %v2758 = vunpack.c.l.b16 %v582
        %v2759 = vunpack.c.h.b16 %v582
        %v2760 = vunpack.c.l.b16 %v583
        %v2761 = vunpack.c.h.b16 %v583
        %v2762 = vunpack.c.l.b16 %v584
        %v2763 = vunpack.c.h.b16 %v584
        %v2764 = vunpack.c.l.b16 %v585
        %v2765 = vunpack.c.h.b16 %v585
        %v2766 = vunpack.c.l.b16 %v586
        %v2767 = vunpack.c.h.b16 %v586
        %v2768 = vunpack.c.l.b16 %v587
        %v2769 = vunpack.c.h.b16 %v587
        %v2770 = vunpack.c.l.b16 %v588
        %v2771 = vunpack.c.h.b16 %v588
        %v2772 = vunpack.c.l.b16 %v589
        %v2773 = vunpack.c.h.b16 %v589
        %v2774 = vunpack.c.l.b16 %v590
        %v2775 = vunpack.c.h.b16 %v590
        %v2776 = vunpack.c.l.b16 %v591
        %v2777 = vunpack.c.h.b16 %v591
        %v2778 = vunpack.c.l.b16 %v592
        %v2779 = vunpack.c.h.b16 %v592
        %v2780 = vunpack.c.l.b16 %v593
        %v2781 = vunpack.c.h.b16 %v593
        %v2782 = vunpack.c.l.b16 %v594
        %v2783 = vunpack.c.h.b16 %v594
        %v2784 = vunpack.c.l.b16 %v595
        %v2785 = vunpack.c.h.b16 %v595
        %v2786 = vunpack.c.l.b16 %v596
        %v2787 = vunpack.c.h.b16 %v596
        %v2788 = vunpack.c.l.b16 %v597
        %v2789 = vunpack.c.h.b16 %v597
        %v2790 = vunpack.c.l.b16 %v598
        %v2791 = vunpack.c.h.b16 %v598
        %v2792 = vunpack.c.l.b16 %v599
        %v2793 = vunpack.c.h.b16 %v599
        %v2794 = vunpack.c.l.b16 %v600
        %v2795 = vunpack.c.h.b16 %v600
        %v2796 = vunpack.c.l.b16 %v601
        %v2797 = vunpack.c.h.b16 %v601
        %v2798 = vunpack.c.l.b16 %v602
        %v2799 = vunpack.c.h.b16 %v602
        %v2800 = vunpack.c.l.b16 %v603
        %v2801 = vunpack.c.h.b16 %v603
        %v2802 = vunpack.c.l.b16 %v604
        %v2803 = vunpack.c.h.b16 %v604
        %v2804 = vunpack.c.l.b16 %v605
        %v2805 = vunpack.c.h.b16 %v605
        %v2806 = vunpack.c.l.b16 %v606
        %v2807 = vunpack.c.h.b16 %v606
        %v2808 = vunpack.c.l.b16 %v607
        %v2809 = vunpack.c.h.b16 %v607
        %v2810 = vunpack.c.l.b16 %v608
        %v2811 = vunpack.c.h.b16 %v608
        %v2812 = vunpack.c.l.b16 %v609
        %v2813 = vunpack.c.h.b16 %v609
        %v2814 = vunpack.c.l.b16 %v610
        %v2815 = vunpack.c.h.b16 %v610
        %v2816 = vunpack.c.l.b16 %v611
        %v2817 = vunpack.c.h.b16 %v611
        %v2818 = vunpack.c.l.b16 %v612
        %v2819 = vunpack.c.h.b16 %v612
        %v2820 = vunpack.c.l.b16 %v613
        %v2821 = vunpack.c.h.b16 %v613
        %v2822 = vunpack.c.l.b16 %v614
        %v2823 = vunpack.c.h.b16 %v614
        %v2824 = vunpack.c.l.b16 %v615
        %v2825 = vunpack.c.h.b16 %v615
        %v2826 = vunpack.c.l.b16 %v616
        %v2827 = vunpack.c.h.b16 %v616
        %v2828 = vunpack.c.l.b16 %v617
        %v2829 = vunpack.c.h.b16 %v617
        %v2830 = vunpack.c.l.b16 %v618
        %v2831 = vunpack.c.h.b16 %v618
        %v2832 = vunpack.c.l.b16 %v619
        %v2833 = vunpack.c.h.b16 %v619
        %v2834 = vunpack.c.l.b16 %v620
        %v2835 = vunpack.c.h.b16 %v620
        %v2836 = vunpack.c.l.b16 %v621
        %v2837 = vunpack.c.h.b16 %v621
        %v2838 = vunpack.c.l.b16 %v622
        %v2839 = vunpack.c.h.b16 %v622
        %v2840 = vunpack.c.l.b16 %v623
        %v2841 = vunpack.c.h.b16 %v623
        %v2842 = vpack.c.b16 %v2594, %v2586
        %v2843 = vpack.c.b16 %v2595, %v2587
        %v2844 = vpack.c.b16 %v2596, %v2588
        %v2845 = vpack.c.b16 %v2597, %v2589
        %v2846 = vpack.c.b16 %v2598, %v2590
        %v2847 = vpack.c.b16 %v2599, %v2591
        %v2848 = vpack.c.b16 %v2600, %v2592
        %v2849 = vpack.c.b16 %v2601, %v2593
        %v2850 = vpack.c.b16 %v2610, %v2602
        %v2851 = vpack.c.b16 %v2611, %v2603
        %v2852 = vpack.c.b16 %v2612, %v2604
        %v2853 = vpack.c.b16 %v2613, %v2605
        %v2854 = vpack.c.b16 %v2614, %v2606
        %v2855 = vpack.c.b16 %v2615, %v2607
        %v2856 = vpack.c.b16 %v2616, %v2608
        %v2857 = vpack.c.b16 %v2617, %v2609
        %v2858 = vpack.c.b16 %v2626, %v2618
        %v2859 = vpack.c.b16 %v2627, %v2619
        %v2860 = vpack.c.b16 %v2628, %v2620
        %v2861 = vpack.c.b16 %v2629, %v2621
        %v2862 = vpack.c.b16 %v2630, %v2622
        %v2863 = vpack.c.b16 %v2631, %v2623
        %v2864 = vpack.c.b16 %v2632, %v2624
        %v2865 = vpack.c.b16 %v2633, %v2625
        %v2866 = vpack.c.b16 %v2642, %v2634
        %v2867 = vpack.c.b16 %v2643, %v2635
        %v2868 = vpack.c.b16 %v2644, %v2636
        %v2869 = vpack.c.b16 %v2645, %v2637
        %v2870 = vpack.c.b16 %v2646, %v2638
        %v2871 = vpack.c.b16 %v2647, %v2639
        %v2872 = vpack.c.b16 %v2648, %v2640
        %v2873 = vpack.c.b16 %v2649, %v2641
        %v2874 = vpack.c.b16 %v2658, %v2650
        %v2875 = vpack.c.b16 %v2659, %v2651
        %v2876 = vpack.c.b16 %v2660, %v2652
        %v2877 = vpack.c.b16 %v2661, %v2653
        %v2878 = vpack.c.b16 %v2662, %v2654
        %v2879 = vpack.c.b16 %v2663, %v2655
        %v2880 = vpack.c.b16 %v2664, %v2656
        %v2881 = vpack.c.b16 %v2665, %v2657
        %v2882 = vpack.c.b16 %v2674, %v2666
        %v2883 = vpack.c.b16 %v2675, %v2667
        %v2884 = vpack.c.b16 %v2676, %v2668
        %v2885 = vpack.c.b16 %v2677, %v2669
        %v2886 = vpack.c.b16 %v2678, %v2670
        %v2887 = vpack.c.b16 %v2679, %v2671
        %v2888 = vpack.c.b16 %v2680, %v2672
        %v2889 = vpack.c.b16 %v2681, %v2673
        %v2890 = vpack.c.b16 %v2690, %v2682
        %v2891 = vpack.c.b16 %v2691, %v2683
        %v2892 = vpack.c.b16 %v2692, %v2684
        %v2893 = vpack.c.b16 %v2693, %v2685
        %v2894 = vpack.c.b16 %v2694, %v2686
        %v2895 = vpack.c.b16 %v2695, %v2687
        %v2896 = vpack.c.b16 %v2696, %v2688
        %v2897 = vpack.c.b16 %v2697, %v2689
        %v2898 = vpack.c.b16 %v2706, %v2698
        %v2899 = vpack.c.b16 %v2707, %v2699
        %v2900 = vpack.c.b16 %v2708, %v2700
        %v2901 = vpack.c.b16 %v2709, %v2701
        %v2902 = vpack.c.b16 %v2710, %v2702
        %v2903 = vpack.c.b16 %v2711, %v2703
        %v2904 = vpack.c.b16 %v2712, %v2704
        %v2905 = vpack.c.b16 %v2713, %v2705
        %v2906 = vpack.c.b16 %v2722, %v2714
        %v2907 = vpack.c.b16 %v2723, %v2715
        %v2908 = vpack.c.b16 %v2724, %v2716
        %v2909 = vpack.c.b16 %v2725, %v2717
        %v2910 = vpack.c.b16 %v2726, %v2718
        %v2911 = vpack.c.b16 %v2727, %v2719
        %v2912 = vpack.c.b16 %v2728, %v2720
        %v2913 = vpack.c.b16 %v2729, %v2721
        %v2914 = vpack.c.b16 %v2738, %v2730
        %v2915 = vpack.c.b16 %v2739, %v2731
        %v2916 = vpack.c.b16 %v2740, %v2732
        %v2917 = vpack.c.b16 %v2741, %v2733
        %v2918 = vpack.c.b16 %v2742, %v2734
        %v2919 = vpack.c.b16 %v2743, %v2735
        %v2920 = vpack.c.b16 %v2744, %v2736
        %v2921 = vpack.c.b16 %v2745, %v2737
        %v2922 = vpack.c.b16 %v2754, %v2746
        %v2923 = vpack.c.b16 %v2755, %v2747
        %v2924 = vpack.c.b16 %v2756, %v2748
        %v2925 = vpack.c.b16 %v2757, %v2749
        %v2926 = vpack.c.b16 %v2758, %v2750
        %v2927 = vpack.c.b16 %v2759, %v2751
        %v2928 = vpack.c.b16 %v2760, %v2752
        %v2929 = vpack.c.b16 %v2761, %v2753
        %v2930 = vpack.c.b16 %v2770, %v2762
        %v2931 = vpack.c.b16 %v2771, %v2763
        %v2932 = vpack.c.b16 %v2772, %v2764
        %v2933 = vpack.c.b16 %v2773, %v2765
        %v2934 = vpack.c.b16 %v2774, %v2766
        %v2935 = vpack.c.b16 %v2775, %v2767
        %v2936 = vpack.c.b16 %v2776, %v2768
        %v2937 = vpack.c.b16 %v2777, %v2769
        %v2938 = vpack.c.b16 %v2786, %v2778
        %v2939 = vpack.c.b16 %v2787, %v2779
        %v2940 = vpack.c.b16 %v2788, %v2780
        %v2941 = vpack.c.b16 %v2789, %v2781
        %v2942 = vpack.c.b16 %v2790, %v2782
        %v2943 = vpack.c.b16 %v2791, %v2783
        %v2944 = vpack.c.b16 %v2792, %v2784
        %v2945 = vpack.c.b16 %v2793, %v2785
        %v2946 = vpack.c.b16 %v2802, %v2794
        %v2947 = vpack.c.b16 %v2803, %v2795
        %v2948 = vpack.c.b16 %v2804, %v2796
        %v2949 = vpack.c.b16 %v2805, %v2797
        %v2950 = vpack.c.b16 %v2806, %v2798
        %v2951 = vpack.c.b16 %v2807, %v2799
        %v2952 = vpack.c.b16 %v2808, %v2800
        %v2953 = vpack.c.b16 %v2809, %v2801
        %v2954 = vpack.c.b16 %v2818, %v2810
        %v2955 = vpack.c.b16 %v2819, %v2811
        %v2956 = vpack.c.b16 %v2820, %v2812
        %v2957 = vpack.c.b16 %v2821, %v2813
        %v2958 = vpack.c.b16 %v2822, %v2814
        %v2959 = vpack.c.b16 %v2823, %v2815
        %v2960 = vpack.c.b16 %v2824, %v2816
        %v2961 = vpack.c.b16 %v2825, %v2817
        %v2962 = vpack.c.b16 %v2834, %v2826
        %v2963 = vpack.c.b16 %v2835, %v2827
        %v2964 = vpack.c.b16 %v2836, %v2828
        %v2965 = vpack.c.b16 %v2837, %v2829
        %v2966 = vpack.c.b16 %v2838, %v2830
        %v2967 = vpack.c.b16 %v2839, %v2831
        %v2968 = vpack.c.b16 %v2840, %v2832
        %v2969 = vpack.c.b16 %v2841, %v2833
        %3098 = vmatpush.bf16.msra.mxu0 %v2898
        %3099 = vmatpush.bf16.msra.mxu0 %v2890
        %3100 = vmatpush.bf16.msra.mxu0 %v2882
        %3101 = vmatpush.bf16.msra.mxu0 %v2874
        %3102 = vmatpush.bf16.msra.mxu0 %v2866
        %3103 = vmatpush.bf16.msra.mxu0 %v2858
        %3104 = vmatpush.bf16.msra.mxu0 %v2850
        %3105 = vmatpush.bf16.msra.mxu0 %v2842
        %3106 = vmatmul.bf16.gmra.mxu0 %v2456
        %v3107 = vpop.f32.mrf.mxu0
        %v3108 = vadd.f32 0.0, %v3107
        %v3109 = vpop.f32.mrf.mxu0
        %3110 = vdwg.mxu0
        %3111 = vmatpush.bf16.msra.mxu0 %v2962
        %3112 = vmatpush.bf16.msra.mxu0 %v2954
        %3113 = vmatpush.bf16.msra.mxu0 %v2946
        %3114 = vmatpush.bf16.msra.mxu0 %v2938
        %3115 = vmatpush.bf16.msra.mxu0 %v2930
        %3116 = vmatpush.bf16.msra.mxu0 %v2922
        %3117 = vmatpush.bf16.msra.mxu0 %v2914
        %3118 = vmatpush.bf16.msra.mxu0 %v2906
        %3119 = vmatmul.bf16.gmra.mxu0 %v2457
        %v3120 = vpop.f32.mrf.mxu0
        %v3121 = vadd.f32 %v3108, %v3120
        %v3122 = vpop.f32.mrf.mxu0
        %3123 = vdwg.mxu0
        %3124 = vmatpush.bf16.msra.mxu0 %v2899
        %3125 = vmatpush.bf16.msra.mxu0 %v2891
        %3126 = vmatpush.bf16.msra.mxu0 %v2883
        %3127 = vmatpush.bf16.msra.mxu0 %v2875
        %3128 = vmatpush.bf16.msra.mxu0 %v2867
        %3129 = vmatpush.bf16.msra.mxu0 %v2859
        %3130 = vmatpush.bf16.msra.mxu0 %v2851
        %3131 = vmatpush.bf16.msra.mxu0 %v2843
        %3132 = vmatmul.bf16.gmra.mxu0 %v2456
        %v3133 = vpop.f32.mrf.mxu0
        %v3134 = vadd.f32 0.0, %v3133
        %v3135 = vpop.f32.mrf.mxu0
        %3136 = vdwg.mxu0
        %3137 = vmatpush.bf16.msra.mxu0 %v2963
        %3138 = vmatpush.bf16.msra.mxu0 %v2955
        %3139 = vmatpush.bf16.msra.mxu0 %v2947
        %3140 = vmatpush.bf16.msra.mxu0 %v2939
        %3141 = vmatpush.bf16.msra.mxu0 %v2931
        %3142 = vmatpush.bf16.msra.mxu0 %v2923
        %3143 = vmatpush.bf16.msra.mxu0 %v2915
        %3144 = vmatpush.bf16.msra.mxu0 %v2907
        %3145 = vmatmul.bf16.gmra.mxu0 %v2457
        %v3146 = vpop.f32.mrf.mxu0
        %v3147 = vadd.f32 %v3134, %v3146
        %v3148 = vpop.f32.mrf.mxu0
        %3149 = vdwg.mxu0
        %3150 = vmatpush.bf16.msra.mxu0 %v2900
        %3151 = vmatpush.bf16.msra.mxu0 %v2892
        %3152 = vmatpush.bf16.msra.mxu0 %v2884
        %3153 = vmatpush.bf16.msra.mxu0 %v2876
        %3154 = vmatpush.bf16.msra.mxu0 %v2868
        %3155 = vmatpush.bf16.msra.mxu0 %v2860
        %3156 = vmatpush.bf16.msra.mxu0 %v2852
        %3157 = vmatpush.bf16.msra.mxu0 %v2844
        %3158 = vmatmul.bf16.gmra.mxu0 %v2456
        %v3159 = vpop.f32.mrf.mxu0
        %v3160 = vadd.f32 0.0, %v3159
        %v3161 = vpop.f32.mrf.mxu0
        %3162 = vdwg.mxu0
        %3163 = vmatpush.bf16.msra.mxu0 %v2964
        %3164 = vmatpush.bf16.msra.mxu0 %v2956
        %3165 = vmatpush.bf16.msra.mxu0 %v2948
        %3166 = vmatpush.bf16.msra.mxu0 %v2940
        %3167 = vmatpush.bf16.msra.mxu0 %v2932
        %3168 = vmatpush.bf16.msra.mxu0 %v2924
        %3169 = vmatpush.bf16.msra.mxu0 %v2916
        %3170 = vmatpush.bf16.msra.mxu0 %v2908
        %3171 = vmatmul.bf16.gmra.mxu0 %v2457
        %v3172 = vpop.f32.mrf.mxu0
        %v3173 = vadd.f32 %v3160, %v3172
        %v3174 = vpop.f32.mrf.mxu0
        %3175 = vdwg.mxu0
        %3176 = vmatpush.bf16.msra.mxu0 %v2901
        %3177 = vmatpush.bf16.msra.mxu0 %v2893
        %3178 = vmatpush.bf16.msra.mxu0 %v2885
        %3179 = vmatpush.bf16.msra.mxu0 %v2877
        %3180 = vmatpush.bf16.msra.mxu0 %v2869
        %3181 = vmatpush.bf16.msra.mxu0 %v2861
        %3182 = vmatpush.bf16.msra.mxu0 %v2853
        %3183 = vmatpush.bf16.msra.mxu0 %v2845
        %3184 = vmatmul.bf16.gmra.mxu0 %v2456
        %v3185 = vpop.f32.mrf.mxu0
        %v3186 = vadd.f32 0.0, %v3185
        %v3187 = vpop.f32.mrf.mxu0
        %3188 = vdwg.mxu0
        %3189 = vmatpush.bf16.msra.mxu0 %v2965
        %3190 = vmatpush.bf16.msra.mxu0 %v2957
        %3191 = vmatpush.bf16.msra.mxu0 %v2949
        %3192 = vmatpush.bf16.msra.mxu0 %v2941
        %3193 = vmatpush.bf16.msra.mxu0 %v2933
        %3194 = vmatpush.bf16.msra.mxu0 %v2925
        %3195 = vmatpush.bf16.msra.mxu0 %v2917
        %3196 = vmatpush.bf16.msra.mxu0 %v2909
        %3197 = vmatmul.bf16.gmra.mxu0 %v2457
        %v3198 = vpop.f32.mrf.mxu0
        %v3199 = vadd.f32 %v3186, %v3198
        %v3200 = vpop.f32.mrf.mxu0
        %3201 = vdwg.mxu0
        %3202 = vmatpush.bf16.msra.mxu0 %v2902
        %3203 = vmatpush.bf16.msra.mxu0 %v2894
        %3204 = vmatpush.bf16.msra.mxu0 %v2886
        %3205 = vmatpush.bf16.msra.mxu0 %v2878
        %3206 = vmatpush.bf16.msra.mxu0 %v2870
        %3207 = vmatpush.bf16.msra.mxu0 %v2862
        %3208 = vmatpush.bf16.msra.mxu0 %v2854
        %3209 = vmatpush.bf16.msra.mxu0 %v2846
        %3210 = vmatmul.bf16.gmra.mxu0 %v2456
        %v3211 = vpop.f32.mrf.mxu0
        %v3212 = vadd.f32 0.0, %v3211
        %v3213 = vpop.f32.mrf.mxu0
        %3214 = vdwg.mxu0
        %3215 = vmatpush.bf16.msra.mxu0 %v2966
        %3216 = vmatpush.bf16.msra.mxu0 %v2958
        %3217 = vmatpush.bf16.msra.mxu0 %v2950
        %3218 = vmatpush.bf16.msra.mxu0 %v2942
        %3219 = vmatpush.bf16.msra.mxu0 %v2934
        %3220 = vmatpush.bf16.msra.mxu0 %v2926
        %3221 = vmatpush.bf16.msra.mxu0 %v2918
        %3222 = vmatpush.bf16.msra.mxu0 %v2910
        %3223 = vmatmul.bf16.gmra.mxu0 %v2457
        %v3224 = vpop.f32.mrf.mxu0
        %v3225 = vadd.f32 %v3212, %v3224
        %v3226 = vpop.f32.mrf.mxu0
        %3227 = vdwg.mxu0
        %3228 = vmatpush.bf16.msra.mxu0 %v2903
        %3229 = vmatpush.bf16.msra.mxu0 %v2895
        %3230 = vmatpush.bf16.msra.mxu0 %v2887
        %3231 = vmatpush.bf16.msra.mxu0 %v2879
        %3232 = vmatpush.bf16.msra.mxu0 %v2871
        %3233 = vmatpush.bf16.msra.mxu0 %v2863
        %3234 = vmatpush.bf16.msra.mxu0 %v2855
        %3235 = vmatpush.bf16.msra.mxu0 %v2847
        %3236 = vmatmul.bf16.gmra.mxu0 %v2456
        %v3237 = vpop.f32.mrf.mxu0
        %v3238 = vadd.f32 0.0, %v3237
        %v3239 = vpop.f32.mrf.mxu0
        %3240 = vdwg.mxu0
        %3241 = vmatpush.bf16.msra.mxu0 %v2967
        %3242 = vmatpush.bf16.msra.mxu0 %v2959
        %3243 = vmatpush.bf16.msra.mxu0 %v2951
        %3244 = vmatpush.bf16.msra.mxu0 %v2943
        %3245 = vmatpush.bf16.msra.mxu0 %v2935
        %3246 = vmatpush.bf16.msra.mxu0 %v2927
        %3247 = vmatpush.bf16.msra.mxu0 %v2919
        %3248 = vmatpush.bf16.msra.mxu0 %v2911
        %3249 = vmatmul.bf16.gmra.mxu0 %v2457
        %v3250 = vpop.f32.mrf.mxu0
        %v3251 = vadd.f32 %v3238, %v3250
        %v3252 = vpop.f32.mrf.mxu0
        %3253 = vdwg.mxu0
        %3254 = vmatpush.bf16.msra.mxu0 %v2904
        %3255 = vmatpush.bf16.msra.mxu0 %v2896
        %3256 = vmatpush.bf16.msra.mxu0 %v2888
        %3257 = vmatpush.bf16.msra.mxu0 %v2880
        %3258 = vmatpush.bf16.msra.mxu0 %v2872
        %3259 = vmatpush.bf16.msra.mxu0 %v2864
        %3260 = vmatpush.bf16.msra.mxu0 %v2856
        %3261 = vmatpush.bf16.msra.mxu0 %v2848
        %3262 = vmatmul.bf16.gmra.mxu0 %v2456
        %v3263 = vpop.f32.mrf.mxu0
        %v3264 = vadd.f32 0.0, %v3263
        %v3265 = vpop.f32.mrf.mxu0
        %3266 = vdwg.mxu0
        %3267 = vmatpush.bf16.msra.mxu0 %v2968
        %3268 = vmatpush.bf16.msra.mxu0 %v2960
        %3269 = vmatpush.bf16.msra.mxu0 %v2952
        %3270 = vmatpush.bf16.msra.mxu0 %v2944
        %3271 = vmatpush.bf16.msra.mxu0 %v2936
        %3272 = vmatpush.bf16.msra.mxu0 %v2928
        %3273 = vmatpush.bf16.msra.mxu0 %v2920
        %3274 = vmatpush.bf16.msra.mxu0 %v2912
        %3275 = vmatmul.bf16.gmra.mxu0 %v2457
        %v3276 = vpop.f32.mrf.mxu0
        %v3277 = vadd.f32 %v3264, %v3276
        %v3278 = vpop.f32.mrf.mxu0
        %3279 = vdwg.mxu0
        %3280 = vmatpush.bf16.msra.mxu0 %v2905
        %3281 = vmatpush.bf16.msra.mxu0 %v2897
        %3282 = vmatpush.bf16.msra.mxu0 %v2889
        %3283 = vmatpush.bf16.msra.mxu0 %v2881
        %3284 = vmatpush.bf16.msra.mxu0 %v2873
        %3285 = vmatpush.bf16.msra.mxu0 %v2865
        %3286 = vmatpush.bf16.msra.mxu0 %v2857
        %3287 = vmatpush.bf16.msra.mxu0 %v2849
        %3288 = vmatmul.bf16.gmra.mxu0 %v2456
        %v3289 = vpop.f32.mrf.mxu0
        %v3290 = vadd.f32 0.0, %v3289
        %v3291 = vpop.f32.mrf.mxu0
        %3292 = vdwg.mxu0
        %3293 = vmatpush.bf16.msra.mxu0 %v2969
        %3294 = vmatpush.bf16.msra.mxu0 %v2961
        %3295 = vmatpush.bf16.msra.mxu0 %v2953
        %3296 = vmatpush.bf16.msra.mxu0 %v2945
        %3297 = vmatpush.bf16.msra.mxu0 %v2937
        %3298 = vmatpush.bf16.msra.mxu0 %v2929
        %3299 = vmatpush.bf16.msra.mxu0 %v2921
        %3300 = vmatpush.bf16.msra.mxu0 %v2913
        %3301 = vmatmul.bf16.gmra.mxu0 %v2457
        %v3302 = vpop.f32.mrf.mxu0
        %v3303 = vadd.f32 %v3290, %v3302
        %v3304 = vpop.f32.mrf.mxu0
        %3305 = vdwg.mxu0
        %v3306 = vld [vmem:[#allocation3] sm:$0xff]
        %v3307 = vld [vmem:[#allocation3 + $0x8] sm:$0xff]
        %v3308 = vld [vmem:[#allocation3 + $0x10] sm:$0xff]
        %v3309 = vld [vmem:[#allocation3 + $0x18] sm:$0xff]
        %v3310 = vadd.f32 %v3306, %v3121
        %v3311 = vadd.f32 %v3307, %v3147
        %v3312 = vadd.f32 %v3308, %v3173
        %v3313 = vadd.f32 %v3309, %v3199
        %v3314 = vld [vmem:[#allocation3 + $0x1e0] sm:$0xff]
        %v3315 = vld [vmem:[#allocation3 + $0x1e8] sm:$0xff]
        %v3316 = vld [vmem:[#allocation3 + $0x1f0] sm:$0xff]
        %v3317 = vld [vmem:[#allocation3 + $0x1f8] sm:$0xff]
        %v3318 = vadd.f32 %v3314, %v3225
        %v3319 = vadd.f32 %v3315, %v3251
        %v3320 = vadd.f32 %v3316, %v3277
        %v3321 = vadd.f32 %v3317, %v3303
        %v3322 = vxor.u32 %v3310, 2147483648
        %v3323 = vmul.f32 %v3322, 1.442695
        %v3324 = vpow.pop %v3323
        %v3325 = vadd.f32 %v3324, 1.0
        %v3326 = vrcp.pop %v3325
        %v3327 = vmul.f32 %v3325, %v3326
        %v3328 = vsub.f32 1.0, %v3327
        %v3329 = vmul.f32 %v3326, %v3328
        %v3330 = vadd.f32 %v3326, %v3329
        %vm3331 = vweird.f32 %v3325
        %vm3332 = vweird.f32 %v3326
        %vm3333 = vmor %vm3331, %vm3332
        %v3334 = vsel %vm3333, %v3326, %v3330
        %v3335 = vand.u32 2147483647, %v3325
        %vm3336 = vcmp.eq.f32.partialorder %v3335, 8.507059e+37
        %v3337 = vand.u32 %v3325, 2147483648
        %v3338 = vor.u32 1.1754944e-38, %v3337
        %v3339 = vsel %vm3336, %v3338, %v3334
        %v3340 = vmul.f32 1.0, %v3339
        %v3341 = vxor.u32 %v3311, 2147483648
        %v3342 = vmul.f32 %v3341, 1.442695
        %v3343 = vpow.pop %v3342
        %v3344 = vadd.f32 %v3343, 1.0
        %v3345 = vrcp.pop %v3344
        %v3346 = vmul.f32 %v3344, %v3345
        %v3347 = vsub.f32 1.0, %v3346
        %v3348 = vmul.f32 %v3345, %v3347
        %v3349 = vadd.f32 %v3345, %v3348
        %vm3350 = vweird.f32 %v3344
        %vm3351 = vweird.f32 %v3345
        %vm3352 = vmor %vm3350, %vm3351
        %v3353 = vsel %vm3352, %v3345, %v3349
        %v3354 = vand.u32 2147483647, %v3344
        %vm3355 = vcmp.eq.f32.partialorder %v3354, 8.507059e+37
        %v3356 = vand.u32 %v3344, 2147483648
        %v3357 = vor.u32 1.1754944e-38, %v3356
        %v3358 = vsel %vm3355, %v3357, %v3353
        %v3359 = vmul.f32 1.0, %v3358
        %v3360 = vtanh.pop %v3312
        %v3361 = vxor.u32 %v3313, 2147483648
        %v3362 = vmul.f32 %v3361, 1.442695
        %v3363 = vpow.pop %v3362
        %v3364 = vadd.f32 %v3363, 1.0
        %v3365 = vrcp.pop %v3364
        %v3366 = vmul.f32 %v3364, %v3365
        %v3367 = vsub.f32 1.0, %v3366
        %v3368 = vmul.f32 %v3365, %v3367
        %v3369 = vadd.f32 %v3365, %v3368
        %vm3370 = vweird.f32 %v3364
        %vm3371 = vweird.f32 %v3365
        %vm3372 = vmor %vm3370, %vm3371
        %v3373 = vsel %vm3372, %v3365, %v3369
        %v3374 = vand.u32 2147483647, %v3364
        %vm3375 = vcmp.eq.f32.partialorder %v3374, 8.507059e+37
        %v3376 = vand.u32 %v3364, 2147483648
        %v3377 = vor.u32 1.1754944e-38, %v3376
        %v3378 = vsel %vm3375, %v3377, %v3373
        %v3379 = vmul.f32 1.0, %v3378
        %v3380 = vmul.f32 %v3359, %v2454
        %v3381 = vmul.f32 %v3340, %v3360
        %v3382 = vadd.f32 %v3380, %v3381
        %v3383 = vtanh.pop %v3382
        %v3384 = vmul.f32 %v3379, %v3383
        %v3385 = vxor.u32 %v3318, 2147483648
        %v3386 = vmul.f32 %v3385, 1.442695
        %v3387 = vpow.pop %v3386
        %v3388 = vadd.f32 %v3387, 1.0
        %v3389 = vrcp.pop %v3388
        %v3390 = vmul.f32 %v3388, %v3389
        %v3391 = vsub.f32 1.0, %v3390
        %v3392 = vmul.f32 %v3389, %v3391
        %v3393 = vadd.f32 %v3389, %v3392
        %vm3394 = vweird.f32 %v3388
        %vm3395 = vweird.f32 %v3389
        %vm3396 = vmor %vm3394, %vm3395
        %v3397 = vsel %vm3396, %v3389, %v3393
        %v3398 = vand.u32 2147483647, %v3388
        %vm3399 = vcmp.eq.f32.partialorder %v3398, 8.507059e+37
        %v3400 = vand.u32 %v3388, 2147483648
        %v3401 = vor.u32 1.1754944e-38, %v3400
        %v3402 = vsel %vm3399, %v3401, %v3397
        %v3403 = vmul.f32 1.0, %v3402
        %v3404 = vxor.u32 %v3319, 2147483648
        %v3405 = vmul.f32 %v3404, 1.442695
        %v3406 = vpow.pop %v3405
        %v3407 = vadd.f32 %v3406, 1.0
        %v3408 = vrcp.pop %v3407
        %v3409 = vmul.f32 %v3407, %v3408
        %v3410 = vsub.f32 1.0, %v3409
        %v3411 = vmul.f32 %v3408, %v3410
        %v3412 = vadd.f32 %v3408, %v3411
        %vm3413 = vweird.f32 %v3407
        %vm3414 = vweird.f32 %v3408
        %vm3415 = vmor %vm3413, %vm3414
        %v3416 = vsel %vm3415, %v3408, %v3412
        %v3417 = vand.u32 2147483647, %v3407
        %vm3418 = vcmp.eq.f32.partialorder %v3417, 8.507059e+37
        %v3419 = vand.u32 %v3407, 2147483648
        %v3420 = vor.u32 1.1754944e-38, %v3419
        %v3421 = vsel %vm3418, %v3420, %v3416
        %v3422 = vmul.f32 1.0, %v3421
        %v3423 = vtanh.pop %v3320
        %v3424 = vxor.u32 %v3321, 2147483648
        %v3425 = vmul.f32 %v3424, 1.442695
        %v3426 = vpow.pop %v3425
        %v3427 = vadd.f32 %v3426, 1.0
        %v3428 = vrcp.pop %v3427
        %v3429 = vmul.f32 %v3427, %v3428
        %v3430 = vsub.f32 1.0, %v3429
        %v3431 = vmul.f32 %v3428, %v3430
        %v3432 = vadd.f32 %v3428, %v3431
        %vm3433 = vweird.f32 %v3427
        %vm3434 = vweird.f32 %v3428
        %vm3435 = vmor %vm3433, %vm3434
        %v3436 = vsel %vm3435, %v3428, %v3432
        %v3437 = vand.u32 2147483647, %v3427
        %vm3438 = vcmp.eq.f32.partialorder %v3437, 8.507059e+37
        %v3439 = vand.u32 %v3427, 2147483648
        %v3440 = vor.u32 1.1754944e-38, %v3439
        %v3441 = vsel %vm3438, %v3440, %v3436
        %v3442 = vmul.f32 1.0, %v3441
        %v3443 = vmul.f32 %v3422, %v2455
        %v3444 = vmul.f32 %v3403, %v3423
        %v3445 = vadd.f32 %v3443, %v3444
        %v3446 = vtanh.pop %v3445
        %v3447 = vmul.f32 %v3442, %v3446
        %3448 = vst [vmem:[#allocation2] sm:$0xff] %v3384
        %3449 = vst [vmem:[#allocation2 + $0x78] sm:$0xff] %v3447
        %v3450 = vpack.c.bf16 %v3384, %v3384
        %v3451 = vpack.c.bf16 %v3447, %v3447
        %3452 = vmatpush.bf16.msra.mxu0 %v2898
        %3453 = vmatpush.bf16.msra.mxu0 %v2890
        %3454 = vmatpush.bf16.msra.mxu0 %v2882
        %3455 = vmatpush.bf16.msra.mxu0 %v2874
        %3456 = vmatpush.bf16.msra.mxu0 %v2866
        %3457 = vmatpush.bf16.msra.mxu0 %v2858
        %3458 = vmatpush.bf16.msra.mxu0 %v2850
        %3459 = vmatpush.bf16.msra.mxu0 %v2842
        %3460 = vmatmul.bf16.gmra.mxu0 %v3450
        %v3461 = vpop.f32.mrf.mxu0
        %v3462 = vadd.f32 0.0, %v3461
        %v3463 = vpop.f32.mrf.mxu0
        %3464 = vdwg.mxu0
        %3465 = vmatpush.bf16.msra.mxu0 %v2962
        %3466 = vmatpush.bf16.msra.mxu0 %v2954
        %3467 = vmatpush.bf16.msra.mxu0 %v2946
        %3468 = vmatpush.bf16.msra.mxu0 %v2938
        %3469 = vmatpush.bf16.msra.mxu0 %v2930
        %3470 = vmatpush.bf16.msra.mxu0 %v2922
        %3471 = vmatpush.bf16.msra.mxu0 %v2914
        %3472 = vmatpush.bf16.msra.mxu0 %v2906
        %3473 = vmatmul.bf16.gmra.mxu0 %v3451
        %v3474 = vpop.f32.mrf.mxu0
        %v3475 = vadd.f32 %v3462, %v3474
        %v3476 = vpop.f32.mrf.mxu0
        %3477 = vdwg.mxu0
        %3478 = vmatpush.bf16.msra.mxu0 %v2899
        %3479 = vmatpush.bf16.msra.mxu0 %v2891
        %3480 = vmatpush.bf16.msra.mxu0 %v2883
        %3481 = vmatpush.bf16.msra.mxu0 %v2875
        %3482 = vmatpush.bf16.msra.mxu0 %v2867
        %3483 = vmatpush.bf16.msra.mxu0 %v2859
        %3484 = vmatpush.bf16.msra.mxu0 %v2851
        %3485 = vmatpush.bf16.msra.mxu0 %v2843
        %3486 = vmatmul.bf16.gmra.mxu0 %v3450
        %v3487 = vpop.f32.mrf.mxu0
        %v3488 = vadd.f32 0.0, %v3487
        %v3489 = vpop.f32.mrf.mxu0
        %3490 = vdwg.mxu0
        %3491 = vmatpush.bf16.msra.mxu0 %v2963
        %3492 = vmatpush.bf16.msra.mxu0 %v2955
        %3493 = vmatpush.bf16.msra.mxu0 %v2947
        %3494 = vmatpush.bf16.msra.mxu0 %v2939
        %3495 = vmatpush.bf16.msra.mxu0 %v2931
        %3496 = vmatpush.bf16.msra.mxu0 %v2923
        %3497 = vmatpush.bf16.msra.mxu0 %v2915
        %3498 = vmatpush.bf16.msra.mxu0 %v2907
        %3499 = vmatmul.bf16.gmra.mxu0 %v3451
        %v3500 = vpop.f32.mrf.mxu0
        %v3501 = vadd.f32 %v3488, %v3500
        %v3502 = vpop.f32.mrf.mxu0
        %3503 = vdwg.mxu0
        %3504 = vmatpush.bf16.msra.mxu0 %v2900
        %3505 = vmatpush.bf16.msra.mxu0 %v2892
        %3506 = vmatpush.bf16.msra.mxu0 %v2884
        %3507 = vmatpush.bf16.msra.mxu0 %v2876
        %3508 = vmatpush.bf16.msra.mxu0 %v2868
        %3509 = vmatpush.bf16.msra.mxu0 %v2860
        %3510 = vmatpush.bf16.msra.mxu0 %v2852
        %3511 = vmatpush.bf16.msra.mxu0 %v2844
        %3512 = vmatmul.bf16.gmra.mxu0 %v3450
        %v3513 = vpop.f32.mrf.mxu0
        %v3514 = vadd.f32 0.0, %v3513
        %v3515 = vpop.f32.mrf.mxu0
        %3516 = vdwg.mxu0
        %3517 = vmatpush.bf16.msra.mxu0 %v2964
        %3518 = vmatpush.bf16.msra.mxu0 %v2956
        %3519 = vmatpush.bf16.msra.mxu0 %v2948
        %3520 = vmatpush.bf16.msra.mxu0 %v2940
        %3521 = vmatpush.bf16.msra.mxu0 %v2932
        %3522 = vmatpush.bf16.msra.mxu0 %v2924
        %3523 = vmatpush.bf16.msra.mxu0 %v2916
        %3524 = vmatpush.bf16.msra.mxu0 %v2908
        %3525 = vmatmul.bf16.gmra.mxu0 %v3451
        %v3526 = vpop.f32.mrf.mxu0
        %v3527 = vadd.f32 %v3514, %v3526
        %v3528 = vpop.f32.mrf.mxu0
        %3529 = vdwg.mxu0
        %3530 = vmatpush.bf16.msra.mxu0 %v2901
        %3531 = vmatpush.bf16.msra.mxu0 %v2893
        %3532 = vmatpush.bf16.msra.mxu0 %v2885
        %3533 = vmatpush.bf16.msra.mxu0 %v2877
        %3534 = vmatpush.bf16.msra.mxu0 %v2869
        %3535 = vmatpush.bf16.msra.mxu0 %v2861
        %3536 = vmatpush.bf16.msra.mxu0 %v2853
        %3537 = vmatpush.bf16.msra.mxu0 %v2845
        %3538 = vmatmul.bf16.gmra.mxu0 %v3450
        %v3539 = vpop.f32.mrf.mxu0
        %v3540 = vadd.f32 0.0, %v3539
        %v3541 = vpop.f32.mrf.mxu0
        %3542 = vdwg.mxu0
        %3543 = vmatpush.bf16.msra.mxu0 %v2965
        %3544 = vmatpush.bf16.msra.mxu0 %v2957
        %3545 = vmatpush.bf16.msra.mxu0 %v2949
        %3546 = vmatpush.bf16.msra.mxu0 %v2941
        %3547 = vmatpush.bf16.msra.mxu0 %v2933
        %3548 = vmatpush.bf16.msra.mxu0 %v2925
        %3549 = vmatpush.bf16.msra.mxu0 %v2917
        %3550 = vmatpush.bf16.msra.mxu0 %v2909
        %3551 = vmatmul.bf16.gmra.mxu0 %v3451
        %v3552 = vpop.f32.mrf.mxu0
        %v3553 = vadd.f32 %v3540, %v3552
        %v3554 = vpop.f32.mrf.mxu0
        %3555 = vdwg.mxu0
        %3556 = vmatpush.bf16.msra.mxu0 %v2902
        %3557 = vmatpush.bf16.msra.mxu0 %v2894
        %3558 = vmatpush.bf16.msra.mxu0 %v2886
        %3559 = vmatpush.bf16.msra.mxu0 %v2878
        %3560 = vmatpush.bf16.msra.mxu0 %v2870
        %3561 = vmatpush.bf16.msra.mxu0 %v2862
        %3562 = vmatpush.bf16.msra.mxu0 %v2854
        %3563 = vmatpush.bf16.msra.mxu0 %v2846
        %3564 = vmatmul.bf16.gmra.mxu0 %v3450
        %v3565 = vpop.f32.mrf.mxu0
        %v3566 = vadd.f32 0.0, %v3565
        %v3567 = vpop.f32.mrf.mxu0
        %3568 = vdwg.mxu0
        %3569 = vmatpush.bf16.msra.mxu0 %v2966
        %3570 = vmatpush.bf16.msra.mxu0 %v2958
        %3571 = vmatpush.bf16.msra.mxu0 %v2950
        %3572 = vmatpush.bf16.msra.mxu0 %v2942
        %3573 = vmatpush.bf16.msra.mxu0 %v2934
        %3574 = vmatpush.bf16.msra.mxu0 %v2926
        %3575 = vmatpush.bf16.msra.mxu0 %v2918
        %3576 = vmatpush.bf16.msra.mxu0 %v2910
        %3577 = vmatmul.bf16.gmra.mxu0 %v3451
        %v3578 = vpop.f32.mrf.mxu0
        %v3579 = vadd.f32 %v3566, %v3578
        %v3580 = vpop.f32.mrf.mxu0
        %3581 = vdwg.mxu0
        %3582 = vmatpush.bf16.msra.mxu0 %v2903
        %3583 = vmatpush.bf16.msra.mxu0 %v2895
        %3584 = vmatpush.bf16.msra.mxu0 %v2887
        %3585 = vmatpush.bf16.msra.mxu0 %v2879
        %3586 = vmatpush.bf16.msra.mxu0 %v2871
        %3587 = vmatpush.bf16.msra.mxu0 %v2863
        %3588 = vmatpush.bf16.msra.mxu0 %v2855
        %3589 = vmatpush.bf16.msra.mxu0 %v2847
        %3590 = vmatmul.bf16.gmra.mxu0 %v3450
        %v3591 = vpop.f32.mrf.mxu0
        %v3592 = vadd.f32 0.0, %v3591
        %v3593 = vpop.f32.mrf.mxu0
        %3594 = vdwg.mxu0
        %3595 = vmatpush.bf16.msra.mxu0 %v2967
        %3596 = vmatpush.bf16.msra.mxu0 %v2959
        %3597 = vmatpush.bf16.msra.mxu0 %v2951
        %3598 = vmatpush.bf16.msra.mxu0 %v2943
        %3599 = vmatpush.bf16.msra.mxu0 %v2935
        %3600 = vmatpush.bf16.msra.mxu0 %v2927
        %3601 = vmatpush.bf16.msra.mxu0 %v2919
        %3602 = vmatpush.bf16.msra.mxu0 %v2911
        %3603 = vmatmul.bf16.gmra.mxu0 %v3451
        %v3604 = vpop.f32.mrf.mxu0
        %v3605 = vadd.f32 %v3592, %v3604
        %v3606 = vpop.f32.mrf.mxu0
        %3607 = vdwg.mxu0
        %3608 = vmatpush.bf16.msra.mxu0 %v2904
        %3609 = vmatpush.bf16.msra.mxu0 %v2896
        %3610 = vmatpush.bf16.msra.mxu0 %v2888
        %3611 = vmatpush.bf16.msra.mxu0 %v2880
        %3612 = vmatpush.bf16.msra.mxu0 %v2872
        %3613 = vmatpush.bf16.msra.mxu0 %v2864
        %3614 = vmatpush.bf16.msra.mxu0 %v2856
        %3615 = vmatpush.bf16.msra.mxu0 %v2848
        %3616 = vmatmul.bf16.gmra.mxu0 %v3450
        %v3617 = vpop.f32.mrf.mxu0
        %v3618 = vadd.f32 0.0, %v3617
        %v3619 = vpop.f32.mrf.mxu0
        %3620 = vdwg.mxu0
        %3621 = vmatpush.bf16.msra.mxu0 %v2968
        %3622 = vmatpush.bf16.msra.mxu0 %v2960
        %3623 = vmatpush.bf16.msra.mxu0 %v2952
        %3624 = vmatpush.bf16.msra.mxu0 %v2944
        %3625 = vmatpush.bf16.msra.mxu0 %v2936
        %3626 = vmatpush.bf16.msra.mxu0 %v2928
        %3627 = vmatpush.bf16.msra.mxu0 %v2920
        %3628 = vmatpush.bf16.msra.mxu0 %v2912
        %3629 = vmatmul.bf16.gmra.mxu0 %v3451
        %v3630 = vpop.f32.mrf.mxu0
        %v3631 = vadd.f32 %v3618, %v3630
        %v3632 = vpop.f32.mrf.mxu0
        %3633 = vdwg.mxu0
        %3634 = vmatpush.bf16.msra.mxu0 %v2905
        %3635 = vmatpush.bf16.msra.mxu0 %v2897
        %3636 = vmatpush.bf16.msra.mxu0 %v2889
        %3637 = vmatpush.bf16.msra.mxu0 %v2881
        %3638 = vmatpush.bf16.msra.mxu0 %v2873
        %3639 = vmatpush.bf16.msra.mxu0 %v2865
        %3640 = vmatpush.bf16.msra.mxu0 %v2857
        %3641 = vmatpush.bf16.msra.mxu0 %v2849
        %3642 = vmatmul.bf16.gmra.mxu0 %v3450
        %v3643 = vpop.f32.mrf.mxu0
        %v3644 = vadd.f32 0.0, %v3643
        %v3645 = vpop.f32.mrf.mxu0
        %3646 = vdwg.mxu0
        %3647 = vmatpush.bf16.msra.mxu0 %v2969
        %3648 = vmatpush.bf16.msra.mxu0 %v2961
        %3649 = vmatpush.bf16.msra.mxu0 %v2953
        %3650 = vmatpush.bf16.msra.mxu0 %v2945
        %3651 = vmatpush.bf16.msra.mxu0 %v2937
        %3652 = vmatpush.bf16.msra.mxu0 %v2929
        %3653 = vmatpush.bf16.msra.mxu0 %v2921
        %3654 = vmatpush.bf16.msra.mxu0 %v2913
        %3655 = vmatmul.bf16.gmra.mxu0 %v3451
        %v3656 = vpop.f32.mrf.mxu0
        %v3657 = vadd.f32 %v3644, %v3656
        %v3658 = vpop.f32.mrf.mxu0
        %3659 = vdwg.mxu0
        %v3660 = vld [vmem:[#allocation3 + $0x40] sm:$0xff]
        %v3661 = vld [vmem:[#allocation3 + $0x48] sm:$0xff]
        %v3662 = vld [vmem:[#allocation3 + $0x50] sm:$0xff]
        %v3663 = vld [vmem:[#allocation3 + $0x58] sm:$0xff]
        %v3664 = vadd.f32 %v3660, %v3475
        %v3665 = vadd.f32 %v3661, %v3501
        %v3666 = vadd.f32 %v3662, %v3527
        %v3667 = vadd.f32 %v3663, %v3553
        %v3668 = vld [vmem:[#allocation3 + $0x1a0] sm:$0xff]
        %v3669 = vld [vmem:[#allocation3 + $0x1a8] sm:$0xff]
        %v3670 = vld [vmem:[#allocation3 + $0x1b0] sm:$0xff]
        %v3671 = vld [vmem:[#allocation3 + $0x1b8] sm:$0xff]
        %v3672 = vadd.f32 %v3668, %v3579
        %v3673 = vadd.f32 %v3669, %v3605
        %v3674 = vadd.f32 %v3670, %v3631
        %v3675 = vadd.f32 %v3671, %v3657
        %v3676 = vxor.u32 %v3664, 2147483648
        %v3677 = vmul.f32 %v3676, 1.442695
        %v3678 = vpow.pop %v3677
        %v3679 = vadd.f32 %v3678, 1.0
        %v3680 = vrcp.pop %v3679
        %v3681 = vmul.f32 %v3679, %v3680
        %v3682 = vsub.f32 1.0, %v3681
        %v3683 = vmul.f32 %v3680, %v3682
        %v3684 = vadd.f32 %v3680, %v3683
        %vm3685 = vweird.f32 %v3679
        %vm3686 = vweird.f32 %v3680
        %vm3687 = vmor %vm3685, %vm3686
        %v3688 = vsel %vm3687, %v3680, %v3684
        %v3689 = vand.u32 2147483647, %v3679
        %vm3690 = vcmp.eq.f32.partialorder %v3689, 8.507059e+37
        %v3691 = vand.u32 %v3679, 2147483648
        %v3692 = vor.u32 1.1754944e-38, %v3691
        %v3693 = vsel %vm3690, %v3692, %v3688
        %v3694 = vmul.f32 1.0, %v3693
        %v3695 = vxor.u32 %v3665, 2147483648
        %v3696 = vmul.f32 %v3695, 1.442695
        %v3697 = vpow.pop %v3696
        %v3698 = vadd.f32 %v3697, 1.0
        %v3699 = vrcp.pop %v3698
        %v3700 = vmul.f32 %v3698, %v3699
        %v3701 = vsub.f32 1.0, %v3700
        %v3702 = vmul.f32 %v3699, %v3701
        %v3703 = vadd.f32 %v3699, %v3702
        %vm3704 = vweird.f32 %v3698
        %vm3705 = vweird.f32 %v3699
        %vm3706 = vmor %vm3704, %vm3705
        %v3707 = vsel %vm3706, %v3699, %v3703
        %v3708 = vand.u32 2147483647, %v3698
        %vm3709 = vcmp.eq.f32.partialorder %v3708, 8.507059e+37
        %v3710 = vand.u32 %v3698, 2147483648
        %v3711 = vor.u32 1.1754944e-38, %v3710
        %v3712 = vsel %vm3709, %v3711, %v3707
        %v3713 = vmul.f32 1.0, %v3712
        %v3714 = vtanh.pop %v3666
        %v3715 = vxor.u32 %v3667, 2147483648
        %v3716 = vmul.f32 %v3715, 1.442695
        %v3717 = vpow.pop %v3716
        %v3718 = vadd.f32 %v3717, 1.0
        %v3719 = vrcp.pop %v3718
        %v3720 = vmul.f32 %v3718, %v3719
        %v3721 = vsub.f32 1.0, %v3720
        %v3722 = vmul.f32 %v3719, %v3721
        %v3723 = vadd.f32 %v3719, %v3722
        %vm3724 = vweird.f32 %v3718
        %vm3725 = vweird.f32 %v3719
        %vm3726 = vmor %vm3724, %vm3725
        %v3727 = vsel %vm3726, %v3719, %v3723
        %v3728 = vand.u32 2147483647, %v3718
        %vm3729 = vcmp.eq.f32.partialorder %v3728, 8.507059e+37
        %v3730 = vand.u32 %v3718, 2147483648
        %v3731 = vor.u32 1.1754944e-38, %v3730
        %v3732 = vsel %vm3729, %v3731, %v3727
        %v3733 = vmul.f32 1.0, %v3732
        %v3734 = vmul.f32 %v3713, %v3382
        %v3735 = vmul.f32 %v3694, %v3714
        %v3736 = vadd.f32 %v3734, %v3735
        %v3737 = vtanh.pop %v3736
        %v3738 = vmul.f32 %v3733, %v3737
        %v3739 = vxor.u32 %v3672, 2147483648
        %v3740 = vmul.f32 %v3739, 1.442695
        %v3741 = vpow.pop %v3740
        %v3742 = vadd.f32 %v3741, 1.0
        %v3743 = vrcp.pop %v3742
        %v3744 = vmul.f32 %v3742, %v3743
        %v3745 = vsub.f32 1.0, %v3744
        %v3746 = vmul.f32 %v3743, %v3745
        %v3747 = vadd.f32 %v3743, %v3746
        %vm3748 = vweird.f32 %v3742
        %vm3749 = vweird.f32 %v3743
        %vm3750 = vmor %vm3748, %vm3749
        %v3751 = vsel %vm3750, %v3743, %v3747
        %v3752 = vand.u32 2147483647, %v3742
        %vm3753 = vcmp.eq.f32.partialorder %v3752, 8.507059e+37
        %v3754 = vand.u32 %v3742, 2147483648
        %v3755 = vor.u32 1.1754944e-38, %v3754
        %v3756 = vsel %vm3753, %v3755, %v3751
        %v3757 = vmul.f32 1.0, %v3756
        %v3758 = vxor.u32 %v3673, 2147483648
        %v3759 = vmul.f32 %v3758, 1.442695
        %v3760 = vpow.pop %v3759
        %v3761 = vadd.f32 %v3760, 1.0
        %v3762 = vrcp.pop %v3761
        %v3763 = vmul.f32 %v3761, %v3762
        %v3764 = vsub.f32 1.0, %v3763
        %v3765 = vmul.f32 %v3762, %v3764
        %v3766 = vadd.f32 %v3762, %v3765
        %vm3767 = vweird.f32 %v3761
        %vm3768 = vweird.f32 %v3762
        %vm3769 = vmor %vm3767, %vm3768
        %v3770 = vsel %vm3769, %v3762, %v3766
        %v3771 = vand.u32 2147483647, %v3761
        %vm3772 = vcmp.eq.f32.partialorder %v3771, 8.507059e+37
        %v3773 = vand.u32 %v3761, 2147483648
        %v3774 = vor.u32 1.1754944e-38, %v3773
        %v3775 = vsel %vm3772, %v3774, %v3770
        %v3776 = vmul.f32 1.0, %v3775
        %v3777 = vtanh.pop %v3674
        %v3778 = vxor.u32 %v3675, 2147483648
        %v3779 = vmul.f32 %v3778, 1.442695
        %v3780 = vpow.pop %v3779
        %v3781 = vadd.f32 %v3780, 1.0
        %v3782 = vrcp.pop %v3781
        %v3783 = vmul.f32 %v3781, %v3782
        %v3784 = vsub.f32 1.0, %v3783
        %v3785 = vmul.f32 %v3782, %v3784
        %v3786 = vadd.f32 %v3782, %v3785
        %vm3787 = vweird.f32 %v3781
        %vm3788 = vweird.f32 %v3782
        %vm3789 = vmor %vm3787, %vm3788
        %v3790 = vsel %vm3789, %v3782, %v3786
        %v3791 = vand.u32 2147483647, %v3781
        %vm3792 = vcmp.eq.f32.partialorder %v3791, 8.507059e+37
        %v3793 = vand.u32 %v3781, 2147483648
        %v3794 = vor.u32 1.1754944e-38, %v3793
        %v3795 = vsel %vm3792, %v3794, %v3790
        %v3796 = vmul.f32 1.0, %v3795
        %v3797 = vmul.f32 %v3776, %v3445
        %v3798 = vmul.f32 %v3757, %v3777
        %v3799 = vadd.f32 %v3797, %v3798
        %v3800 = vtanh.pop %v3799
        %v3801 = vmul.f32 %v3796, %v3800
        %3802 = vst [vmem:[#allocation2 + $0x10] sm:$0xff] %v3738
        %3803 = vst [vmem:[#allocation2 + $0x68] sm:$0xff] %v3801
        %v3804 = vpack.c.bf16 %v3738, %v3738
        %v3805 = vpack.c.bf16 %v3801, %v3801
        %3806 = vmatpush.bf16.msra.mxu0 %v2898
        %3807 = vmatpush.bf16.msra.mxu0 %v2890
        %3808 = vmatpush.bf16.msra.mxu0 %v2882
        %3809 = vmatpush.bf16.msra.mxu0 %v2874
        %3810 = vmatpush.bf16.msra.mxu0 %v2866
        %3811 = vmatpush.bf16.msra.mxu0 %v2858
        %3812 = vmatpush.bf16.msra.mxu0 %v2850
        %3813 = vmatpush.bf16.msra.mxu0 %v2842
        %3814 = vmatmul.bf16.gmra.mxu0 %v3804
        %v3815 = vpop.f32.mrf.mxu0
        %v3816 = vadd.f32 0.0, %v3815
        %v3817 = vpop.f32.mrf.mxu0
        %3818 = vdwg.mxu0
        %3819 = vmatpush.bf16.msra.mxu0 %v2962
        %3820 = vmatpush.bf16.msra.mxu0 %v2954
        %3821 = vmatpush.bf16.msra.mxu0 %v2946
        %3822 = vmatpush.bf16.msra.mxu0 %v2938
        %3823 = vmatpush.bf16.msra.mxu0 %v2930
        %3824 = vmatpush.bf16.msra.mxu0 %v2922
        %3825 = vmatpush.bf16.msra.mxu0 %v2914
        %3826 = vmatpush.bf16.msra.mxu0 %v2906
        %3827 = vmatmul.bf16.gmra.mxu0 %v3805
        %v3828 = vpop.f32.mrf.mxu0
        %v3829 = vadd.f32 %v3816, %v3828
        %v3830 = vpop.f32.mrf.mxu0
        %3831 = vdwg.mxu0
        %3832 = vmatpush.bf16.msra.mxu0 %v2899
        %3833 = vmatpush.bf16.msra.mxu0 %v2891
        %3834 = vmatpush.bf16.msra.mxu0 %v2883
        %3835 = vmatpush.bf16.msra.mxu0 %v2875
        %3836 = vmatpush.bf16.msra.mxu0 %v2867
        %3837 = vmatpush.bf16.msra.mxu0 %v2859
        %3838 = vmatpush.bf16.msra.mxu0 %v2851
        %3839 = vmatpush.bf16.msra.mxu0 %v2843
        %3840 = vmatmul.bf16.gmra.mxu0 %v3804
        %v3841 = vpop.f32.mrf.mxu0
        %v3842 = vadd.f32 0.0, %v3841
        %v3843 = vpop.f32.mrf.mxu0
        %3844 = vdwg.mxu0
        %3845 = vmatpush.bf16.msra.mxu0 %v2963
        %3846 = vmatpush.bf16.msra.mxu0 %v2955
        %3847 = vmatpush.bf16.msra.mxu0 %v2947
        %3848 = vmatpush.bf16.msra.mxu0 %v2939
        %3849 = vmatpush.bf16.msra.mxu0 %v2931
        %3850 = vmatpush.bf16.msra.mxu0 %v2923
        %3851 = vmatpush.bf16.msra.mxu0 %v2915
        %3852 = vmatpush.bf16.msra.mxu0 %v2907
        %3853 = vmatmul.bf16.gmra.mxu0 %v3805
        %v3854 = vpop.f32.mrf.mxu0
        %v3855 = vadd.f32 %v3842, %v3854
        %v3856 = vpop.f32.mrf.mxu0
        %3857 = vdwg.mxu0
        %3858 = vmatpush.bf16.msra.mxu0 %v2900
        %3859 = vmatpush.bf16.msra.mxu0 %v2892
        %3860 = vmatpush.bf16.msra.mxu0 %v2884
        %3861 = vmatpush.bf16.msra.mxu0 %v2876
        %3862 = vmatpush.bf16.msra.mxu0 %v2868
        %3863 = vmatpush.bf16.msra.mxu0 %v2860
        %3864 = vmatpush.bf16.msra.mxu0 %v2852
        %3865 = vmatpush.bf16.msra.mxu0 %v2844
        %3866 = vmatmul.bf16.gmra.mxu0 %v3804
        %v3867 = vpop.f32.mrf.mxu0
        %v3868 = vadd.f32 0.0, %v3867
        %v3869 = vpop.f32.mrf.mxu0
        %3870 = vdwg.mxu0
        %3871 = vmatpush.bf16.msra.mxu0 %v2964
        %3872 = vmatpush.bf16.msra.mxu0 %v2956
        %3873 = vmatpush.bf16.msra.mxu0 %v2948
        %3874 = vmatpush.bf16.msra.mxu0 %v2940
        %3875 = vmatpush.bf16.msra.mxu0 %v2932
        %3876 = vmatpush.bf16.msra.mxu0 %v2924
        %3877 = vmatpush.bf16.msra.mxu0 %v2916
        %3878 = vmatpush.bf16.msra.mxu0 %v2908
        %3879 = vmatmul.bf16.gmra.mxu0 %v3805
        %v3880 = vpop.f32.mrf.mxu0
        %v3881 = vadd.f32 %v3868, %v3880
        %v3882 = vpop.f32.mrf.mxu0
        %3883 = vdwg.mxu0
        %3884 = vmatpush.bf16.msra.mxu0 %v2901
        %3885 = vmatpush.bf16.msra.mxu0 %v2893
        %3886 = vmatpush.bf16.msra.mxu0 %v2885
        %3887 = vmatpush.bf16.msra.mxu0 %v2877
        %3888 = vmatpush.bf16.msra.mxu0 %v2869
        %3889 = vmatpush.bf16.msra.mxu0 %v2861
        %3890 = vmatpush.bf16.msra.mxu0 %v2853
        %3891 = vmatpush.bf16.msra.mxu0 %v2845
        %3892 = vmatmul.bf16.gmra.mxu0 %v3804
        %v3893 = vpop.f32.mrf.mxu0
        %v3894 = vadd.f32 0.0, %v3893
        %v3895 = vpop.f32.mrf.mxu0
        %3896 = vdwg.mxu0
        %3897 = vmatpush.bf16.msra.mxu0 %v2965
        %3898 = vmatpush.bf16.msra.mxu0 %v2957
        %3899 = vmatpush.bf16.msra.mxu0 %v2949
        %3900 = vmatpush.bf16.msra.mxu0 %v2941
        %3901 = vmatpush.bf16.msra.mxu0 %v2933
        %3902 = vmatpush.bf16.msra.mxu0 %v2925
        %3903 = vmatpush.bf16.msra.mxu0 %v2917
        %3904 = vmatpush.bf16.msra.mxu0 %v2909
        %3905 = vmatmul.bf16.gmra.mxu0 %v3805
        %v3906 = vpop.f32.mrf.mxu0
        %v3907 = vadd.f32 %v3894, %v3906
        %v3908 = vpop.f32.mrf.mxu0
        %3909 = vdwg.mxu0
        %3910 = vmatpush.bf16.msra.mxu0 %v2902
        %3911 = vmatpush.bf16.msra.mxu0 %v2894
        %3912 = vmatpush.bf16.msra.mxu0 %v2886
        %3913 = vmatpush.bf16.msra.mxu0 %v2878
        %3914 = vmatpush.bf16.msra.mxu0 %v2870
        %3915 = vmatpush.bf16.msra.mxu0 %v2862
        %3916 = vmatpush.bf16.msra.mxu0 %v2854
        %3917 = vmatpush.bf16.msra.mxu0 %v2846
        %3918 = vmatmul.bf16.gmra.mxu0 %v3804
        %v3919 = vpop.f32.mrf.mxu0
        %v3920 = vadd.f32 0.0, %v3919
        %v3921 = vpop.f32.mrf.mxu0
        %3922 = vdwg.mxu0
        %3923 = vmatpush.bf16.msra.mxu0 %v2966
        %3924 = vmatpush.bf16.msra.mxu0 %v2958
        %3925 = vmatpush.bf16.msra.mxu0 %v2950
        %3926 = vmatpush.bf16.msra.mxu0 %v2942
        %3927 = vmatpush.bf16.msra.mxu0 %v2934
        %3928 = vmatpush.bf16.msra.mxu0 %v2926
        %3929 = vmatpush.bf16.msra.mxu0 %v2918
        %3930 = vmatpush.bf16.msra.mxu0 %v2910
        %3931 = vmatmul.bf16.gmra.mxu0 %v3805
        %v3932 = vpop.f32.mrf.mxu0
        %v3933 = vadd.f32 %v3920, %v3932
        %v3934 = vpop.f32.mrf.mxu0
        %3935 = vdwg.mxu0
        %3936 = vmatpush.bf16.msra.mxu0 %v2903
        %3937 = vmatpush.bf16.msra.mxu0 %v2895
        %3938 = vmatpush.bf16.msra.mxu0 %v2887
        %3939 = vmatpush.bf16.msra.mxu0 %v2879
        %3940 = vmatpush.bf16.msra.mxu0 %v2871
        %3941 = vmatpush.bf16.msra.mxu0 %v2863
        %3942 = vmatpush.bf16.msra.mxu0 %v2855
        %3943 = vmatpush.bf16.msra.mxu0 %v2847
        %3944 = vmatmul.bf16.gmra.mxu0 %v3804
        %v3945 = vpop.f32.mrf.mxu0
        %v3946 = vadd.f32 0.0, %v3945
        %v3947 = vpop.f32.mrf.mxu0
        %3948 = vdwg.mxu0
        %3949 = vmatpush.bf16.msra.mxu0 %v2967
        %3950 = vmatpush.bf16.msra.mxu0 %v2959
        %3951 = vmatpush.bf16.msra.mxu0 %v2951
        %3952 = vmatpush.bf16.msra.mxu0 %v2943
        %3953 = vmatpush.bf16.msra.mxu0 %v2935
        %3954 = vmatpush.bf16.msra.mxu0 %v2927
        %3955 = vmatpush.bf16.msra.mxu0 %v2919
        %3956 = vmatpush.bf16.msra.mxu0 %v2911
        %3957 = vmatmul.bf16.gmra.mxu0 %v3805
        %v3958 = vpop.f32.mrf.mxu0
        %v3959 = vadd.f32 %v3946, %v3958
        %v3960 = vpop.f32.mrf.mxu0
        %3961 = vdwg.mxu0
        %3962 = vmatpush.bf16.msra.mxu0 %v2904
        %3963 = vmatpush.bf16.msra.mxu0 %v2896
        %3964 = vmatpush.bf16.msra.mxu0 %v2888
        %3965 = vmatpush.bf16.msra.mxu0 %v2880
        %3966 = vmatpush.bf16.msra.mxu0 %v2872
        %3967 = vmatpush.bf16.msra.mxu0 %v2864
        %3968 = vmatpush.bf16.msra.mxu0 %v2856
        %3969 = vmatpush.bf16.msra.mxu0 %v2848
        %3970 = vmatmul.bf16.gmra.mxu0 %v3804
        %v3971 = vpop.f32.mrf.mxu0
        %v3972 = vadd.f32 0.0, %v3971
        %v3973 = vpop.f32.mrf.mxu0
        %3974 = vdwg.mxu0
        %3975 = vmatpush.bf16.msra.mxu0 %v2968
        %3976 = vmatpush.bf16.msra.mxu0 %v2960
        %3977 = vmatpush.bf16.msra.mxu0 %v2952
        %3978 = vmatpush.bf16.msra.mxu0 %v2944
        %3979 = vmatpush.bf16.msra.mxu0 %v2936
        %3980 = vmatpush.bf16.msra.mxu0 %v2928
        %3981 = vmatpush.bf16.msra.mxu0 %v2920
        %3982 = vmatpush.bf16.msra.mxu0 %v2912
        %3983 = vmatmul.bf16.gmra.mxu0 %v3805
        %v3984 = vpop.f32.mrf.mxu0
        %v3985 = vadd.f32 %v3972, %v3984
        %v3986 = vpop.f32.mrf.mxu0
        %3987 = vdwg.mxu0
        %3988 = vmatpush.bf16.msra.mxu0 %v2905
        %3989 = vmatpush.bf16.msra.mxu0 %v2897
        %3990 = vmatpush.bf16.msra.mxu0 %v2889
        %3991 = vmatpush.bf16.msra.mxu0 %v2881
        %3992 = vmatpush.bf16.msra.mxu0 %v2873
        %3993 = vmatpush.bf16.msra.mxu0 %v2865
        %3994 = vmatpush.bf16.msra.mxu0 %v2857
        %3995 = vmatpush.bf16.msra.mxu0 %v2849
        %3996 = vmatmul.bf16.gmra.mxu0 %v3804
        %v3997 = vpop.f32.mrf.mxu0
        %v3998 = vadd.f32 0.0, %v3997
        %v3999 = vpop.f32.mrf.mxu0
        %4000 = vdwg.mxu0
        %4001 = vmatpush.bf16.msra.mxu0 %v2969
        %4002 = vmatpush.bf16.msra.mxu0 %v2961
        %4003 = vmatpush.bf16.msra.mxu0 %v2953
        %4004 = vmatpush.bf16.msra.mxu0 %v2945
        %4005 = vmatpush.bf16.msra.mxu0 %v2937
        %4006 = vmatpush.bf16.msra.mxu0 %v2929
        %4007 = vmatpush.bf16.msra.mxu0 %v2921
        %4008 = vmatpush.bf16.msra.mxu0 %v2913
        %4009 = vmatmul.bf16.gmra.mxu0 %v3805
        %v4010 = vpop.f32.mrf.mxu0
        %v4011 = vadd.f32 %v3998, %v4010
        %v4012 = vpop.f32.mrf.mxu0
        %4013 = vdwg.mxu0
        %v4014 = vld [vmem:[#allocation3 + $0x80] sm:$0xff]
        %v4015 = vld [vmem:[#allocation3 + $0x88] sm:$0xff]
        %v4016 = vld [vmem:[#allocation3 + $0x90] sm:$0xff]
        %v4017 = vld [vmem:[#allocation3 + $0x98] sm:$0xff]
        %v4018 = vadd.f32 %v4014, %v3829
        %v4019 = vadd.f32 %v4015, %v3855
        %v4020 = vadd.f32 %v4016, %v3881
        %v4021 = vadd.f32 %v4017, %v3907
        %v4022 = vld [vmem:[#allocation3 + $0x160] sm:$0xff]
        %v4023 = vld [vmem:[#allocation3 + $0x168] sm:$0xff]
        %v4024 = vld [vmem:[#allocation3 + $0x170] sm:$0xff]
        %v4025 = vld [vmem:[#allocation3 + $0x178] sm:$0xff]
        %v4026 = vadd.f32 %v4022, %v3933
        %v4027 = vadd.f32 %v4023, %v3959
        %v4028 = vadd.f32 %v4024, %v3985
        %v4029 = vadd.f32 %v4025, %v4011
        %v4030 = vxor.u32 %v4018, 2147483648
        %v4031 = vmul.f32 %v4030, 1.442695
        %v4032 = vpow.pop %v4031
        %v4033 = vadd.f32 %v4032, 1.0
        %v4034 = vrcp.pop %v4033
        %v4035 = vmul.f32 %v4033, %v4034
        %v4036 = vsub.f32 1.0, %v4035
        %v4037 = vmul.f32 %v4034, %v4036
        %v4038 = vadd.f32 %v4034, %v4037
        %vm4039 = vweird.f32 %v4033
        %vm4040 = vweird.f32 %v4034
        %vm4041 = vmor %vm4039, %vm4040
        %v4042 = vsel %vm4041, %v4034, %v4038
        %v4043 = vand.u32 2147483647, %v4033
        %vm4044 = vcmp.eq.f32.partialorder %v4043, 8.507059e+37
        %v4045 = vand.u32 %v4033, 2147483648
        %v4046 = vor.u32 1.1754944e-38, %v4045
        %v4047 = vsel %vm4044, %v4046, %v4042
        %v4048 = vmul.f32 1.0, %v4047
        %v4049 = vxor.u32 %v4019, 2147483648
        %v4050 = vmul.f32 %v4049, 1.442695
        %v4051 = vpow.pop %v4050
        %v4052 = vadd.f32 %v4051, 1.0
        %v4053 = vrcp.pop %v4052
        %v4054 = vmul.f32 %v4052, %v4053
        %v4055 = vsub.f32 1.0, %v4054
        %v4056 = vmul.f32 %v4053, %v4055
        %v4057 = vadd.f32 %v4053, %v4056
        %vm4058 = vweird.f32 %v4052
        %vm4059 = vweird.f32 %v4053
        %vm4060 = vmor %vm4058, %vm4059
        %v4061 = vsel %vm4060, %v4053, %v4057
        %v4062 = vand.u32 2147483647, %v4052
        %vm4063 = vcmp.eq.f32.partialorder %v4062, 8.507059e+37
        %v4064 = vand.u32 %v4052, 2147483648
        %v4065 = vor.u32 1.1754944e-38, %v4064
        %v4066 = vsel %vm4063, %v4065, %v4061
        %v4067 = vmul.f32 1.0, %v4066
        %v4068 = vtanh.pop %v4020
        %v4069 = vxor.u32 %v4021, 2147483648
        %v4070 = vmul.f32 %v4069, 1.442695
        %v4071 = vpow.pop %v4070
        %v4072 = vadd.f32 %v4071, 1.0
        %v4073 = vrcp.pop %v4072
        %v4074 = vmul.f32 %v4072, %v4073
        %v4075 = vsub.f32 1.0, %v4074
        %v4076 = vmul.f32 %v4073, %v4075
        %v4077 = vadd.f32 %v4073, %v4076
        %vm4078 = vweird.f32 %v4072
        %vm4079 = vweird.f32 %v4073
        %vm4080 = vmor %vm4078, %vm4079
        %v4081 = vsel %vm4080, %v4073, %v4077
        %v4082 = vand.u32 2147483647, %v4072
        %vm4083 = vcmp.eq.f32.partialorder %v4082, 8.507059e+37
        %v4084 = vand.u32 %v4072, 2147483648
        %v4085 = vor.u32 1.1754944e-38, %v4084
        %v4086 = vsel %vm4083, %v4085, %v4081
        %v4087 = vmul.f32 1.0, %v4086
        %v4088 = vmul.f32 %v4067, %v3736
        %v4089 = vmul.f32 %v4048, %v4068
        %v4090 = vadd.f32 %v4088, %v4089
        %v4091 = vtanh.pop %v4090
        %v4092 = vmul.f32 %v4087, %v4091
        %v4093 = vxor.u32 %v4026, 2147483648
        %v4094 = vmul.f32 %v4093, 1.442695
        %v4095 = vpow.pop %v4094
        %v4096 = vadd.f32 %v4095, 1.0
        %v4097 = vrcp.pop %v4096
        %v4098 = vmul.f32 %v4096, %v4097
        %v4099 = vsub.f32 1.0, %v4098
        %v4100 = vmul.f32 %v4097, %v4099
        %v4101 = vadd.f32 %v4097, %v4100
        %vm4102 = vweird.f32 %v4096
        %vm4103 = vweird.f32 %v4097
        %vm4104 = vmor %vm4102, %vm4103
        %v4105 = vsel %vm4104, %v4097, %v4101
        %v4106 = vand.u32 2147483647, %v4096
        %vm4107 = vcmp.eq.f32.partialorder %v4106, 8.507059e+37
        %v4108 = vand.u32 %v4096, 2147483648
        %v4109 = vor.u32 1.1754944e-38, %v4108
        %v4110 = vsel %vm4107, %v4109, %v4105
        %v4111 = vmul.f32 1.0, %v4110
        %v4112 = vxor.u32 %v4027, 2147483648
        %v4113 = vmul.f32 %v4112, 1.442695
        %v4114 = vpow.pop %v4113
        %v4115 = vadd.f32 %v4114, 1.0
        %v4116 = vrcp.pop %v4115
        %v4117 = vmul.f32 %v4115, %v4116
        %v4118 = vsub.f32 1.0, %v4117
        %v4119 = vmul.f32 %v4116, %v4118
        %v4120 = vadd.f32 %v4116, %v4119
        %vm4121 = vweird.f32 %v4115
        %vm4122 = vweird.f32 %v4116
        %vm4123 = vmor %vm4121, %vm4122
        %v4124 = vsel %vm4123, %v4116, %v4120
        %v4125 = vand.u32 2147483647, %v4115
        %vm4126 = vcmp.eq.f32.partialorder %v4125, 8.507059e+37
        %v4127 = vand.u32 %v4115, 2147483648
        %v4128 = vor.u32 1.1754944e-38, %v4127
        %v4129 = vsel %vm4126, %v4128, %v4124
        %v4130 = vmul.f32 1.0, %v4129
        %v4131 = vtanh.pop %v4028
        %v4132 = vxor.u32 %v4029, 2147483648
        %v4133 = vmul.f32 %v4132, 1.442695
        %v4134 = vpow.pop %v4133
        %v4135 = vadd.f32 %v4134, 1.0
        %v4136 = vrcp.pop %v4135
        %v4137 = vmul.f32 %v4135, %v4136
        %v4138 = vsub.f32 1.0, %v4137
        %v4139 = vmul.f32 %v4136, %v4138
        %v4140 = vadd.f32 %v4136, %v4139
        %vm4141 = vweird.f32 %v4135
        %vm4142 = vweird.f32 %v4136
        %vm4143 = vmor %vm4141, %vm4142
        %v4144 = vsel %vm4143, %v4136, %v4140
        %v4145 = vand.u32 2147483647, %v4135
        %vm4146 = vcmp.eq.f32.partialorder %v4145, 8.507059e+37
        %v4147 = vand.u32 %v4135, 2147483648
        %v4148 = vor.u32 1.1754944e-38, %v4147
        %v4149 = vsel %vm4146, %v4148, %v4144
        %v4150 = vmul.f32 1.0, %v4149
        %v4151 = vmul.f32 %v4130, %v3799
        %v4152 = vmul.f32 %v4111, %v4131
        %v4153 = vadd.f32 %v4151, %v4152
        %v4154 = vtanh.pop %v4153
        %v4155 = vmul.f32 %v4150, %v4154
        %4156 = vst [vmem:[#allocation2 + $0x20] sm:$0xff] %v4092
        %4157 = vst [vmem:[#allocation2 + $0x58] sm:$0xff] %v4155
        %v4158 = vpack.c.bf16 %v4092, %v4092
        %v4159 = vpack.c.bf16 %v4155, %v4155
        %4160 = vmatpush.bf16.msra.mxu0 %v2898
        %4161 = vmatpush.bf16.msra.mxu0 %v2890
        %4162 = vmatpush.bf16.msra.mxu0 %v2882
        %4163 = vmatpush.bf16.msra.mxu0 %v2874
        %4164 = vmatpush.bf16.msra.mxu0 %v2866
        %4165 = vmatpush.bf16.msra.mxu0 %v2858
        %4166 = vmatpush.bf16.msra.mxu0 %v2850
        %4167 = vmatpush.bf16.msra.mxu0 %v2842
        %4168 = vmatmul.bf16.gmra.mxu0 %v4158
        %v4169 = vpop.f32.mrf.mxu0
        %v4170 = vadd.f32 0.0, %v4169
        %v4171 = vpop.f32.mrf.mxu0
        %4172 = vdwg.mxu0
        %4173 = vmatpush.bf16.msra.mxu0 %v2962
        %4174 = vmatpush.bf16.msra.mxu0 %v2954
        %4175 = vmatpush.bf16.msra.mxu0 %v2946
        %4176 = vmatpush.bf16.msra.mxu0 %v2938
        %4177 = vmatpush.bf16.msra.mxu0 %v2930
        %4178 = vmatpush.bf16.msra.mxu0 %v2922
        %4179 = vmatpush.bf16.msra.mxu0 %v2914
        %4180 = vmatpush.bf16.msra.mxu0 %v2906
        %4181 = vmatmul.bf16.gmra.mxu0 %v4159
        %v4182 = vpop.f32.mrf.mxu0
        %v4183 = vadd.f32 %v4170, %v4182
        %v4184 = vpop.f32.mrf.mxu0
        %4185 = vdwg.mxu0
        %4186 = vmatpush.bf16.msra.mxu0 %v2899
        %4187 = vmatpush.bf16.msra.mxu0 %v2891
        %4188 = vmatpush.bf16.msra.mxu0 %v2883
        %4189 = vmatpush.bf16.msra.mxu0 %v2875
        %4190 = vmatpush.bf16.msra.mxu0 %v2867
        %4191 = vmatpush.bf16.msra.mxu0 %v2859
        %4192 = vmatpush.bf16.msra.mxu0 %v2851
        %4193 = vmatpush.bf16.msra.mxu0 %v2843
        %4194 = vmatmul.bf16.gmra.mxu0 %v4158
        %v4195 = vpop.f32.mrf.mxu0
        %v4196 = vadd.f32 0.0, %v4195
        %v4197 = vpop.f32.mrf.mxu0
        %4198 = vdwg.mxu0
        %4199 = vmatpush.bf16.msra.mxu0 %v2963
        %4200 = vmatpush.bf16.msra.mxu0 %v2955
        %4201 = vmatpush.bf16.msra.mxu0 %v2947
        %4202 = vmatpush.bf16.msra.mxu0 %v2939
        %4203 = vmatpush.bf16.msra.mxu0 %v2931
        %4204 = vmatpush.bf16.msra.mxu0 %v2923
        %4205 = vmatpush.bf16.msra.mxu0 %v2915
        %4206 = vmatpush.bf16.msra.mxu0 %v2907
        %4207 = vmatmul.bf16.gmra.mxu0 %v4159
        %v4208 = vpop.f32.mrf.mxu0
        %v4209 = vadd.f32 %v4196, %v4208
        %v4210 = vpop.f32.mrf.mxu0
        %4211 = vdwg.mxu0
        %4212 = vmatpush.bf16.msra.mxu0 %v2900
        %4213 = vmatpush.bf16.msra.mxu0 %v2892
        %4214 = vmatpush.bf16.msra.mxu0 %v2884
        %4215 = vmatpush.bf16.msra.mxu0 %v2876
        %4216 = vmatpush.bf16.msra.mxu0 %v2868
        %4217 = vmatpush.bf16.msra.mxu0 %v2860
        %4218 = vmatpush.bf16.msra.mxu0 %v2852
        %4219 = vmatpush.bf16.msra.mxu0 %v2844
        %4220 = vmatmul.bf16.gmra.mxu0 %v4158
        %v4221 = vpop.f32.mrf.mxu0
        %v4222 = vadd.f32 0.0, %v4221
        %v4223 = vpop.f32.mrf.mxu0
        %4224 = vdwg.mxu0
        %4225 = vmatpush.bf16.msra.mxu0 %v2964
        %4226 = vmatpush.bf16.msra.mxu0 %v2956
        %4227 = vmatpush.bf16.msra.mxu0 %v2948
        %4228 = vmatpush.bf16.msra.mxu0 %v2940
        %4229 = vmatpush.bf16.msra.mxu0 %v2932
        %4230 = vmatpush.bf16.msra.mxu0 %v2924
        %4231 = vmatpush.bf16.msra.mxu0 %v2916
        %4232 = vmatpush.bf16.msra.mxu0 %v2908
        %4233 = vmatmul.bf16.gmra.mxu0 %v4159
        %v4234 = vpop.f32.mrf.mxu0
        %v4235 = vadd.f32 %v4222, %v4234
        %v4236 = vpop.f32.mrf.mxu0
        %4237 = vdwg.mxu0
        %4238 = vmatpush.bf16.msra.mxu0 %v2901
        %4239 = vmatpush.bf16.msra.mxu0 %v2893
        %4240 = vmatpush.bf16.msra.mxu0 %v2885
        %4241 = vmatpush.bf16.msra.mxu0 %v2877
        %4242 = vmatpush.bf16.msra.mxu0 %v2869
        %4243 = vmatpush.bf16.msra.mxu0 %v2861
        %4244 = vmatpush.bf16.msra.mxu0 %v2853
        %4245 = vmatpush.bf16.msra.mxu0 %v2845
        %4246 = vmatmul.bf16.gmra.mxu0 %v4158
        %v4247 = vpop.f32.mrf.mxu0
        %v4248 = vadd.f32 0.0, %v4247
        %v4249 = vpop.f32.mrf.mxu0
        %4250 = vdwg.mxu0
        %4251 = vmatpush.bf16.msra.mxu0 %v2965
        %4252 = vmatpush.bf16.msra.mxu0 %v2957
        %4253 = vmatpush.bf16.msra.mxu0 %v2949
        %4254 = vmatpush.bf16.msra.mxu0 %v2941
        %4255 = vmatpush.bf16.msra.mxu0 %v2933
        %4256 = vmatpush.bf16.msra.mxu0 %v2925
        %4257 = vmatpush.bf16.msra.mxu0 %v2917
        %4258 = vmatpush.bf16.msra.mxu0 %v2909
        %4259 = vmatmul.bf16.gmra.mxu0 %v4159
        %v4260 = vpop.f32.mrf.mxu0
        %v4261 = vadd.f32 %v4248, %v4260
        %v4262 = vpop.f32.mrf.mxu0
        %4263 = vdwg.mxu0
        %4264 = vmatpush.bf16.msra.mxu0 %v2902
        %4265 = vmatpush.bf16.msra.mxu0 %v2894
        %4266 = vmatpush.bf16.msra.mxu0 %v2886
        %4267 = vmatpush.bf16.msra.mxu0 %v2878
        %4268 = vmatpush.bf16.msra.mxu0 %v2870
        %4269 = vmatpush.bf16.msra.mxu0 %v2862
        %4270 = vmatpush.bf16.msra.mxu0 %v2854
        %4271 = vmatpush.bf16.msra.mxu0 %v2846
        %4272 = vmatmul.bf16.gmra.mxu0 %v4158
        %v4273 = vpop.f32.mrf.mxu0
        %v4274 = vadd.f32 0.0, %v4273
        %v4275 = vpop.f32.mrf.mxu0
        %4276 = vdwg.mxu0
        %4277 = vmatpush.bf16.msra.mxu0 %v2966
        %4278 = vmatpush.bf16.msra.mxu0 %v2958
        %4279 = vmatpush.bf16.msra.mxu0 %v2950
        %4280 = vmatpush.bf16.msra.mxu0 %v2942
        %4281 = vmatpush.bf16.msra.mxu0 %v2934
        %4282 = vmatpush.bf16.msra.mxu0 %v2926
        %4283 = vmatpush.bf16.msra.mxu0 %v2918
        %4284 = vmatpush.bf16.msra.mxu0 %v2910
        %4285 = vmatmul.bf16.gmra.mxu0 %v4159
        %v4286 = vpop.f32.mrf.mxu0
        %v4287 = vadd.f32 %v4274, %v4286
        %v4288 = vpop.f32.mrf.mxu0
        %4289 = vdwg.mxu0
        %4290 = vmatpush.bf16.msra.mxu0 %v2903
        %4291 = vmatpush.bf16.msra.mxu0 %v2895
        %4292 = vmatpush.bf16.msra.mxu0 %v2887
        %4293 = vmatpush.bf16.msra.mxu0 %v2879
        %4294 = vmatpush.bf16.msra.mxu0 %v2871
        %4295 = vmatpush.bf16.msra.mxu0 %v2863
        %4296 = vmatpush.bf16.msra.mxu0 %v2855
        %4297 = vmatpush.bf16.msra.mxu0 %v2847
        %4298 = vmatmul.bf16.gmra.mxu0 %v4158
        %v4299 = vpop.f32.mrf.mxu0
        %v4300 = vadd.f32 0.0, %v4299
        %v4301 = vpop.f32.mrf.mxu0
        %4302 = vdwg.mxu0
        %4303 = vmatpush.bf16.msra.mxu0 %v2967
        %4304 = vmatpush.bf16.msra.mxu0 %v2959
        %4305 = vmatpush.bf16.msra.mxu0 %v2951
        %4306 = vmatpush.bf16.msra.mxu0 %v2943
        %4307 = vmatpush.bf16.msra.mxu0 %v2935
        %4308 = vmatpush.bf16.msra.mxu0 %v2927
        %4309 = vmatpush.bf16.msra.mxu0 %v2919
        %4310 = vmatpush.bf16.msra.mxu0 %v2911
        %4311 = vmatmul.bf16.gmra.mxu0 %v4159
        %v4312 = vpop.f32.mrf.mxu0
        %v4313 = vadd.f32 %v4300, %v4312
        %v4314 = vpop.f32.mrf.mxu0
        %4315 = vdwg.mxu0
        %4316 = vmatpush.bf16.msra.mxu0 %v2904
        %4317 = vmatpush.bf16.msra.mxu0 %v2896
        %4318 = vmatpush.bf16.msra.mxu0 %v2888
        %4319 = vmatpush.bf16.msra.mxu0 %v2880
        %4320 = vmatpush.bf16.msra.mxu0 %v2872
        %4321 = vmatpush.bf16.msra.mxu0 %v2864
        %4322 = vmatpush.bf16.msra.mxu0 %v2856
        %4323 = vmatpush.bf16.msra.mxu0 %v2848
        %4324 = vmatmul.bf16.gmra.mxu0 %v4158
        %v4325 = vpop.f32.mrf.mxu0
        %v4326 = vadd.f32 0.0, %v4325
        %v4327 = vpop.f32.mrf.mxu0
        %4328 = vdwg.mxu0
        %4329 = vmatpush.bf16.msra.mxu0 %v2968
        %4330 = vmatpush.bf16.msra.mxu0 %v2960
        %4331 = vmatpush.bf16.msra.mxu0 %v2952
        %4332 = vmatpush.bf16.msra.mxu0 %v2944
        %4333 = vmatpush.bf16.msra.mxu0 %v2936
        %4334 = vmatpush.bf16.msra.mxu0 %v2928
        %4335 = vmatpush.bf16.msra.mxu0 %v2920
        %4336 = vmatpush.bf16.msra.mxu0 %v2912
        %4337 = vmatmul.bf16.gmra.mxu0 %v4159
        %v4338 = vpop.f32.mrf.mxu0
        %v4339 = vadd.f32 %v4326, %v4338
        %v4340 = vpop.f32.mrf.mxu0
        %4341 = vdwg.mxu0
        %4342 = vmatpush.bf16.msra.mxu0 %v2905
        %4343 = vmatpush.bf16.msra.mxu0 %v2897
        %4344 = vmatpush.bf16.msra.mxu0 %v2889
        %4345 = vmatpush.bf16.msra.mxu0 %v2881
        %4346 = vmatpush.bf16.msra.mxu0 %v2873
        %4347 = vmatpush.bf16.msra.mxu0 %v2865
        %4348 = vmatpush.bf16.msra.mxu0 %v2857
        %4349 = vmatpush.bf16.msra.mxu0 %v2849
        %4350 = vmatmul.bf16.gmra.mxu0 %v4158
        %v4351 = vpop.f32.mrf.mxu0
        %v4352 = vadd.f32 0.0, %v4351
        %v4353 = vpop.f32.mrf.mxu0
        %4354 = vdwg.mxu0
        %4355 = vmatpush.bf16.msra.mxu0 %v2969
        %4356 = vmatpush.bf16.msra.mxu0 %v2961
        %4357 = vmatpush.bf16.msra.mxu0 %v2953
        %4358 = vmatpush.bf16.msra.mxu0 %v2945
        %4359 = vmatpush.bf16.msra.mxu0 %v2937
        %4360 = vmatpush.bf16.msra.mxu0 %v2929
        %4361 = vmatpush.bf16.msra.mxu0 %v2921
        %4362 = vmatpush.bf16.msra.mxu0 %v2913
        %4363 = vmatmul.bf16.gmra.mxu0 %v4159
        %v4364 = vpop.f32.mrf.mxu0
        %v4365 = vadd.f32 %v4352, %v4364
        %v4366 = vpop.f32.mrf.mxu0
        %4367 = vdwg.mxu0
        %v4368 = vld [vmem:[#allocation3 + $0xc0] sm:$0xff]
        %v4369 = vld [vmem:[#allocation3 + $0xc8] sm:$0xff]
        %v4370 = vld [vmem:[#allocation3 + $0xd0] sm:$0xff]
        %v4371 = vld [vmem:[#allocation3 + $0xd8] sm:$0xff]
        %v4372 = vadd.f32 %v4368, %v4183
        %v4373 = vadd.f32 %v4369, %v4209
        %v4374 = vadd.f32 %v4370, %v4235
        %v4375 = vadd.f32 %v4371, %v4261
        %v4376 = vld [vmem:[#allocation3 + $0x120] sm:$0xff]
        %v4377 = vld [vmem:[#allocation3 + $0x128] sm:$0xff]
        %v4378 = vld [vmem:[#allocation3 + $0x130] sm:$0xff]
        %v4379 = vld [vmem:[#allocation3 + $0x138] sm:$0xff]
        %v4380 = vadd.f32 %v4376, %v4287
        %v4381 = vadd.f32 %v4377, %v4313
        %v4382 = vadd.f32 %v4378, %v4339
        %v4383 = vadd.f32 %v4379, %v4365
        %v4384 = vxor.u32 %v4372, 2147483648
        %v4385 = vmul.f32 %v4384, 1.442695
        %v4386 = vpow.pop %v4385
        %v4387 = vadd.f32 %v4386, 1.0
        %v4388 = vrcp.pop %v4387
        %v4389 = vmul.f32 %v4387, %v4388
        %v4390 = vsub.f32 1.0, %v4389
        %v4391 = vmul.f32 %v4388, %v4390
        %v4392 = vadd.f32 %v4388, %v4391
        %vm4393 = vweird.f32 %v4387
        %vm4394 = vweird.f32 %v4388
        %vm4395 = vmor %vm4393, %vm4394
        %v4396 = vsel %vm4395, %v4388, %v4392
        %v4397 = vand.u32 2147483647, %v4387
        %vm4398 = vcmp.eq.f32.partialorder %v4397, 8.507059e+37
        %v4399 = vand.u32 %v4387, 2147483648
        %v4400 = vor.u32 1.1754944e-38, %v4399
        %v4401 = vsel %vm4398, %v4400, %v4396
        %v4402 = vmul.f32 1.0, %v4401
        %v4403 = vxor.u32 %v4373, 2147483648
        %v4404 = vmul.f32 %v4403, 1.442695
        %v4405 = vpow.pop %v4404
        %v4406 = vadd.f32 %v4405, 1.0
        %v4407 = vrcp.pop %v4406
        %v4408 = vmul.f32 %v4406, %v4407
        %v4409 = vsub.f32 1.0, %v4408
        %v4410 = vmul.f32 %v4407, %v4409
        %v4411 = vadd.f32 %v4407, %v4410
        %vm4412 = vweird.f32 %v4406
        %vm4413 = vweird.f32 %v4407
        %vm4414 = vmor %vm4412, %vm4413
        %v4415 = vsel %vm4414, %v4407, %v4411
        %v4416 = vand.u32 2147483647, %v4406
        %vm4417 = vcmp.eq.f32.partialorder %v4416, 8.507059e+37
        %v4418 = vand.u32 %v4406, 2147483648
        %v4419 = vor.u32 1.1754944e-38, %v4418
        %v4420 = vsel %vm4417, %v4419, %v4415
        %v4421 = vmul.f32 1.0, %v4420
        %v4422 = vtanh.pop %v4374
        %v4423 = vxor.u32 %v4375, 2147483648
        %v4424 = vmul.f32 %v4423, 1.442695
        %v4425 = vpow.pop %v4424
        %v4426 = vadd.f32 %v4425, 1.0
        %v4427 = vrcp.pop %v4426
        %v4428 = vmul.f32 %v4426, %v4427
        %v4429 = vsub.f32 1.0, %v4428
        %v4430 = vmul.f32 %v4427, %v4429
        %v4431 = vadd.f32 %v4427, %v4430
        %vm4432 = vweird.f32 %v4426
        %vm4433 = vweird.f32 %v4427
        %vm4434 = vmor %vm4432, %vm4433
        %v4435 = vsel %vm4434, %v4427, %v4431
        %v4436 = vand.u32 2147483647, %v4426
        %vm4437 = vcmp.eq.f32.partialorder %v4436, 8.507059e+37
        %v4438 = vand.u32 %v4426, 2147483648
        %v4439 = vor.u32 1.1754944e-38, %v4438
        %v4440 = vsel %vm4437, %v4439, %v4435
        %v4441 = vmul.f32 1.0, %v4440
        %v4442 = vmul.f32 %v4421, %v4090
        %v4443 = vmul.f32 %v4402, %v4422
        %v4444 = vadd.f32 %v4442, %v4443
        %v4445 = vtanh.pop %v4444
        %v4446 = vmul.f32 %v4441, %v4445
        %v4447 = vxor.u32 %v4380, 2147483648
        %v4448 = vmul.f32 %v4447, 1.442695
        %v4449 = vpow.pop %v4448
        %v4450 = vadd.f32 %v4449, 1.0
        %v4451 = vrcp.pop %v4450
        %v4452 = vmul.f32 %v4450, %v4451
        %v4453 = vsub.f32 1.0, %v4452
        %v4454 = vmul.f32 %v4451, %v4453
        %v4455 = vadd.f32 %v4451, %v4454
        %vm4456 = vweird.f32 %v4450
        %vm4457 = vweird.f32 %v4451
        %vm4458 = vmor %vm4456, %vm4457
        %v4459 = vsel %vm4458, %v4451, %v4455
        %v4460 = vand.u32 2147483647, %v4450
        %vm4461 = vcmp.eq.f32.partialorder %v4460, 8.507059e+37
        %v4462 = vand.u32 %v4450, 2147483648
        %v4463 = vor.u32 1.1754944e-38, %v4462
        %v4464 = vsel %vm4461, %v4463, %v4459
        %v4465 = vmul.f32 1.0, %v4464
        %v4466 = vxor.u32 %v4381, 2147483648
        %v4467 = vmul.f32 %v4466, 1.442695
        %v4468 = vpow.pop %v4467
        %v4469 = vadd.f32 %v4468, 1.0
        %v4470 = vrcp.pop %v4469
        %v4471 = vmul.f32 %v4469, %v4470
        %v4472 = vsub.f32 1.0, %v4471
        %v4473 = vmul.f32 %v4470, %v4472
        %v4474 = vadd.f32 %v4470, %v4473
        %vm4475 = vweird.f32 %v4469
        %vm4476 = vweird.f32 %v4470
        %vm4477 = vmor %vm4475, %vm4476
        %v4478 = vsel %vm4477, %v4470, %v4474
        %v4479 = vand.u32 2147483647, %v4469
        %vm4480 = vcmp.eq.f32.partialorder %v4479, 8.507059e+37
        %v4481 = vand.u32 %v4469, 2147483648
        %v4482 = vor.u32 1.1754944e-38, %v4481
        %v4483 = vsel %vm4480, %v4482, %v4478
        %v4484 = vmul.f32 1.0, %v4483
        %v4485 = vtanh.pop %v4382
        %v4486 = vxor.u32 %v4383, 2147483648
        %v4487 = vmul.f32 %v4486, 1.442695
        %v4488 = vpow.pop %v4487
        %v4489 = vadd.f32 %v4488, 1.0
        %v4490 = vrcp.pop %v4489
        %v4491 = vmul.f32 %v4489, %v4490
        %v4492 = vsub.f32 1.0, %v4491
        %v4493 = vmul.f32 %v4490, %v4492
        %v4494 = vadd.f32 %v4490, %v4493
        %vm4495 = vweird.f32 %v4489
        %vm4496 = vweird.f32 %v4490
        %vm4497 = vmor %vm4495, %vm4496
        %v4498 = vsel %vm4497, %v4490, %v4494
        %v4499 = vand.u32 2147483647, %v4489
        %vm4500 = vcmp.eq.f32.partialorder %v4499, 8.507059e+37
        %v4501 = vand.u32 %v4489, 2147483648
        %v4502 = vor.u32 1.1754944e-38, %v4501
        %v4503 = vsel %vm4500, %v4502, %v4498
        %v4504 = vmul.f32 1.0, %v4503
        %v4505 = vmul.f32 %v4484, %v4153
        %v4506 = vmul.f32 %v4465, %v4485
        %v4507 = vadd.f32 %v4505, %v4506
        %v4508 = vtanh.pop %v4507
        %v4509 = vmul.f32 %v4504, %v4508
        %4510 = vst [vmem:[#allocation2 + $0x30] sm:$0xff] %v4446
        %4511 = vst [vmem:[#allocation2 + $0x48] sm:$0xff] %v4509
        %v4512 = vpack.c.bf16 %v4446, %v4446
        %v4513 = vpack.c.bf16 %v4509, %v4509
        %4514 = vmatpush.bf16.msra.mxu0 %v2898
        %4515 = vmatpush.bf16.msra.mxu0 %v2890
        %4516 = vmatpush.bf16.msra.mxu0 %v2882
        %4517 = vmatpush.bf16.msra.mxu0 %v2874
        %4518 = vmatpush.bf16.msra.mxu0 %v2866
        %4519 = vmatpush.bf16.msra.mxu0 %v2858
        %4520 = vmatpush.bf16.msra.mxu0 %v2850
        %4521 = vmatpush.bf16.msra.mxu0 %v2842
        %4522 = vmatmul.bf16.gmra.mxu0 %v4512
        %v4523 = vpop.f32.mrf.mxu0
        %v4524 = vadd.f32 0.0, %v4523
        %v4525 = vpop.f32.mrf.mxu0
        %4526 = vdwg.mxu0
        %4527 = vmatpush.bf16.msra.mxu0 %v2962
        %4528 = vmatpush.bf16.msra.mxu0 %v2954
        %4529 = vmatpush.bf16.msra.mxu0 %v2946
        %4530 = vmatpush.bf16.msra.mxu0 %v2938
        %4531 = vmatpush.bf16.msra.mxu0 %v2930
        %4532 = vmatpush.bf16.msra.mxu0 %v2922
        %4533 = vmatpush.bf16.msra.mxu0 %v2914
        %4534 = vmatpush.bf16.msra.mxu0 %v2906
        %4535 = vmatmul.bf16.gmra.mxu0 %v4513
        %v4536 = vpop.f32.mrf.mxu0
        %v4537 = vadd.f32 %v4524, %v4536
        %v4538 = vpop.f32.mrf.mxu0
        %4539 = vdwg.mxu0
        %4540 = vmatpush.bf16.msra.mxu0 %v2899
        %4541 = vmatpush.bf16.msra.mxu0 %v2891
        %4542 = vmatpush.bf16.msra.mxu0 %v2883
        %4543 = vmatpush.bf16.msra.mxu0 %v2875
        %4544 = vmatpush.bf16.msra.mxu0 %v2867
        %4545 = vmatpush.bf16.msra.mxu0 %v2859
        %4546 = vmatpush.bf16.msra.mxu0 %v2851
        %4547 = vmatpush.bf16.msra.mxu0 %v2843
        %4548 = vmatmul.bf16.gmra.mxu0 %v4512
        %v4549 = vpop.f32.mrf.mxu0
        %v4550 = vadd.f32 0.0, %v4549
        %v4551 = vpop.f32.mrf.mxu0
        %4552 = vdwg.mxu0
        %4553 = vmatpush.bf16.msra.mxu0 %v2963
        %4554 = vmatpush.bf16.msra.mxu0 %v2955
        %4555 = vmatpush.bf16.msra.mxu0 %v2947
        %4556 = vmatpush.bf16.msra.mxu0 %v2939
        %4557 = vmatpush.bf16.msra.mxu0 %v2931
        %4558 = vmatpush.bf16.msra.mxu0 %v2923
        %4559 = vmatpush.bf16.msra.mxu0 %v2915
        %4560 = vmatpush.bf16.msra.mxu0 %v2907
        %4561 = vmatmul.bf16.gmra.mxu0 %v4513
        %v4562 = vpop.f32.mrf.mxu0
        %v4563 = vadd.f32 %v4550, %v4562
        %v4564 = vpop.f32.mrf.mxu0
        %4565 = vdwg.mxu0
        %4566 = vmatpush.bf16.msra.mxu0 %v2900
        %4567 = vmatpush.bf16.msra.mxu0 %v2892
        %4568 = vmatpush.bf16.msra.mxu0 %v2884
        %4569 = vmatpush.bf16.msra.mxu0 %v2876
        %4570 = vmatpush.bf16.msra.mxu0 %v2868
        %4571 = vmatpush.bf16.msra.mxu0 %v2860
        %4572 = vmatpush.bf16.msra.mxu0 %v2852
        %4573 = vmatpush.bf16.msra.mxu0 %v2844
        %4574 = vmatmul.bf16.gmra.mxu0 %v4512
        %v4575 = vpop.f32.mrf.mxu0
        %v4576 = vadd.f32 0.0, %v4575
        %v4577 = vpop.f32.mrf.mxu0
        %4578 = vdwg.mxu0
        %4579 = vmatpush.bf16.msra.mxu0 %v2964
        %4580 = vmatpush.bf16.msra.mxu0 %v2956
        %4581 = vmatpush.bf16.msra.mxu0 %v2948
        %4582 = vmatpush.bf16.msra.mxu0 %v2940
        %4583 = vmatpush.bf16.msra.mxu0 %v2932
        %4584 = vmatpush.bf16.msra.mxu0 %v2924
        %4585 = vmatpush.bf16.msra.mxu0 %v2916
        %4586 = vmatpush.bf16.msra.mxu0 %v2908
        %4587 = vmatmul.bf16.gmra.mxu0 %v4513
        %v4588 = vpop.f32.mrf.mxu0
        %v4589 = vadd.f32 %v4576, %v4588
        %v4590 = vpop.f32.mrf.mxu0
        %4591 = vdwg.mxu0
        %4592 = vmatpush.bf16.msra.mxu0 %v2901
        %4593 = vmatpush.bf16.msra.mxu0 %v2893
        %4594 = vmatpush.bf16.msra.mxu0 %v2885
        %4595 = vmatpush.bf16.msra.mxu0 %v2877
        %4596 = vmatpush.bf16.msra.mxu0 %v2869
        %4597 = vmatpush.bf16.msra.mxu0 %v2861
        %4598 = vmatpush.bf16.msra.mxu0 %v2853
        %4599 = vmatpush.bf16.msra.mxu0 %v2845
        %4600 = vmatmul.bf16.gmra.mxu0 %v4512
        %v4601 = vpop.f32.mrf.mxu0
        %v4602 = vadd.f32 0.0, %v4601
        %v4603 = vpop.f32.mrf.mxu0
        %4604 = vdwg.mxu0
        %4605 = vmatpush.bf16.msra.mxu0 %v2965
        %4606 = vmatpush.bf16.msra.mxu0 %v2957
        %4607 = vmatpush.bf16.msra.mxu0 %v2949
        %4608 = vmatpush.bf16.msra.mxu0 %v2941
        %4609 = vmatpush.bf16.msra.mxu0 %v2933
        %4610 = vmatpush.bf16.msra.mxu0 %v2925
        %4611 = vmatpush.bf16.msra.mxu0 %v2917
        %4612 = vmatpush.bf16.msra.mxu0 %v2909
        %4613 = vmatmul.bf16.gmra.mxu0 %v4513
        %v4614 = vpop.f32.mrf.mxu0
        %v4615 = vadd.f32 %v4602, %v4614
        %v4616 = vpop.f32.mrf.mxu0
        %4617 = vdwg.mxu0
        %4618 = vmatpush.bf16.msra.mxu0 %v2902
        %4619 = vmatpush.bf16.msra.mxu0 %v2894
        %4620 = vmatpush.bf16.msra.mxu0 %v2886
        %4621 = vmatpush.bf16.msra.mxu0 %v2878
        %4622 = vmatpush.bf16.msra.mxu0 %v2870
        %4623 = vmatpush.bf16.msra.mxu0 %v2862
        %4624 = vmatpush.bf16.msra.mxu0 %v2854
        %4625 = vmatpush.bf16.msra.mxu0 %v2846
        %4626 = vmatmul.bf16.gmra.mxu0 %v4512
        %v4627 = vpop.f32.mrf.mxu0
        %v4628 = vadd.f32 0.0, %v4627
        %v4629 = vpop.f32.mrf.mxu0
        %4630 = vdwg.mxu0
        %4631 = vmatpush.bf16.msra.mxu0 %v2966
        %4632 = vmatpush.bf16.msra.mxu0 %v2958
        %4633 = vmatpush.bf16.msra.mxu0 %v2950
        %4634 = vmatpush.bf16.msra.mxu0 %v2942
        %4635 = vmatpush.bf16.msra.mxu0 %v2934
        %4636 = vmatpush.bf16.msra.mxu0 %v2926
        %4637 = vmatpush.bf16.msra.mxu0 %v2918
        %4638 = vmatpush.bf16.msra.mxu0 %v2910
        %4639 = vmatmul.bf16.gmra.mxu0 %v4513
        %v4640 = vpop.f32.mrf.mxu0
        %v4641 = vadd.f32 %v4628, %v4640
        %v4642 = vpop.f32.mrf.mxu0
        %4643 = vdwg.mxu0
        %4644 = vmatpush.bf16.msra.mxu0 %v2903
        %4645 = vmatpush.bf16.msra.mxu0 %v2895
        %4646 = vmatpush.bf16.msra.mxu0 %v2887
        %4647 = vmatpush.bf16.msra.mxu0 %v2879
        %4648 = vmatpush.bf16.msra.mxu0 %v2871
        %4649 = vmatpush.bf16.msra.mxu0 %v2863
        %4650 = vmatpush.bf16.msra.mxu0 %v2855
        %4651 = vmatpush.bf16.msra.mxu0 %v2847
        %4652 = vmatmul.bf16.gmra.mxu0 %v4512
        %v4653 = vpop.f32.mrf.mxu0
        %v4654 = vadd.f32 0.0, %v4653
        %v4655 = vpop.f32.mrf.mxu0
        %4656 = vdwg.mxu0
        %4657 = vmatpush.bf16.msra.mxu0 %v2967
        %4658 = vmatpush.bf16.msra.mxu0 %v2959
        %4659 = vmatpush.bf16.msra.mxu0 %v2951
        %4660 = vmatpush.bf16.msra.mxu0 %v2943
        %4661 = vmatpush.bf16.msra.mxu0 %v2935
        %4662 = vmatpush.bf16.msra.mxu0 %v2927
        %4663 = vmatpush.bf16.msra.mxu0 %v2919
        %4664 = vmatpush.bf16.msra.mxu0 %v2911
        %4665 = vmatmul.bf16.gmra.mxu0 %v4513
        %v4666 = vpop.f32.mrf.mxu0
        %v4667 = vadd.f32 %v4654, %v4666
        %v4668 = vpop.f32.mrf.mxu0
        %4669 = vdwg.mxu0
        %4670 = vmatpush.bf16.msra.mxu0 %v2904
        %4671 = vmatpush.bf16.msra.mxu0 %v2896
        %4672 = vmatpush.bf16.msra.mxu0 %v2888
        %4673 = vmatpush.bf16.msra.mxu0 %v2880
        %4674 = vmatpush.bf16.msra.mxu0 %v2872
        %4675 = vmatpush.bf16.msra.mxu0 %v2864
        %4676 = vmatpush.bf16.msra.mxu0 %v2856
        %4677 = vmatpush.bf16.msra.mxu0 %v2848
        %4678 = vmatmul.bf16.gmra.mxu0 %v4512
        %v4679 = vpop.f32.mrf.mxu0
        %v4680 = vadd.f32 0.0, %v4679
        %v4681 = vpop.f32.mrf.mxu0
        %4682 = vdwg.mxu0
        %4683 = vmatpush.bf16.msra.mxu0 %v2968
        %4684 = vmatpush.bf16.msra.mxu0 %v2960
        %4685 = vmatpush.bf16.msra.mxu0 %v2952
        %4686 = vmatpush.bf16.msra.mxu0 %v2944
        %4687 = vmatpush.bf16.msra.mxu0 %v2936
        %4688 = vmatpush.bf16.msra.mxu0 %v2928
        %4689 = vmatpush.bf16.msra.mxu0 %v2920
        %4690 = vmatpush.bf16.msra.mxu0 %v2912
        %4691 = vmatmul.bf16.gmra.mxu0 %v4513
        %v4692 = vpop.f32.mrf.mxu0
        %v4693 = vadd.f32 %v4680, %v4692
        %v4694 = vpop.f32.mrf.mxu0
        %4695 = vdwg.mxu0
        %4696 = vmatpush.bf16.msra.mxu0 %v2905
        %4697 = vmatpush.bf16.msra.mxu0 %v2897
        %4698 = vmatpush.bf16.msra.mxu0 %v2889
        %4699 = vmatpush.bf16.msra.mxu0 %v2881
        %4700 = vmatpush.bf16.msra.mxu0 %v2873
        %4701 = vmatpush.bf16.msra.mxu0 %v2865
        %4702 = vmatpush.bf16.msra.mxu0 %v2857
        %4703 = vmatpush.bf16.msra.mxu0 %v2849
        %4704 = vmatmul.bf16.gmra.mxu0 %v4512
        %v4705 = vpop.f32.mrf.mxu0
        %v4706 = vadd.f32 0.0, %v4705
        %v4707 = vpop.f32.mrf.mxu0
        %4708 = vdwg.mxu0
        %4709 = vmatpush.bf16.msra.mxu0 %v2969
        %4710 = vmatpush.bf16.msra.mxu0 %v2961
        %4711 = vmatpush.bf16.msra.mxu0 %v2953
        %4712 = vmatpush.bf16.msra.mxu0 %v2945
        %4713 = vmatpush.bf16.msra.mxu0 %v2937
        %4714 = vmatpush.bf16.msra.mxu0 %v2929
        %4715 = vmatpush.bf16.msra.mxu0 %v2921
        %4716 = vmatpush.bf16.msra.mxu0 %v2913
        %4717 = vmatmul.bf16.gmra.mxu0 %v4513
        %v4718 = vpop.f32.mrf.mxu0
        %v4719 = vadd.f32 %v4706, %v4718
        %v4720 = vpop.f32.mrf.mxu0
        %4721 = vdwg.mxu0
        %v4722 = vld [vmem:[#allocation3 + $0x100] sm:$0xff]
        %v4723 = vld [vmem:[#allocation3 + $0x108] sm:$0xff]
        %v4724 = vld [vmem:[#allocation3 + $0x110] sm:$0xff]
        %v4725 = vld [vmem:[#allocation3 + $0x118] sm:$0xff]
        %v4726 = vadd.f32 %v4722, %v4537
        %v4727 = vadd.f32 %v4723, %v4563
        %v4728 = vadd.f32 %v4724, %v4589
        %v4729 = vadd.f32 %v4725, %v4615
        %v4730 = vld [vmem:[#allocation3 + $0xe0] sm:$0xff]
        %v4731 = vld [vmem:[#allocation3 + $0xe8] sm:$0xff]
        %v4732 = vld [vmem:[#allocation3 + $0xf0] sm:$0xff]
        %v4733 = vld [vmem:[#allocation3 + $0xf8] sm:$0xff]
        %v4734 = vadd.f32 %v4730, %v4641
        %v4735 = vadd.f32 %v4731, %v4667
        %v4736 = vadd.f32 %v4732, %v4693
        %v4737 = vadd.f32 %v4733, %v4719
        %v4738 = vxor.u32 %v4726, 2147483648
        %v4739 = vmul.f32 %v4738, 1.442695
        %v4740 = vpow.pop %v4739
        %v4741 = vadd.f32 %v4740, 1.0
        %v4742 = vrcp.pop %v4741
        %v4743 = vmul.f32 %v4741, %v4742
        %v4744 = vsub.f32 1.0, %v4743
        %v4745 = vmul.f32 %v4742, %v4744
        %v4746 = vadd.f32 %v4742, %v4745
        %vm4747 = vweird.f32 %v4741
        %vm4748 = vweird.f32 %v4742
        %vm4749 = vmor %vm4747, %vm4748
        %v4750 = vsel %vm4749, %v4742, %v4746
        %v4751 = vand.u32 2147483647, %v4741
        %vm4752 = vcmp.eq.f32.partialorder %v4751, 8.507059e+37
        %v4753 = vand.u32 %v4741, 2147483648
        %v4754 = vor.u32 1.1754944e-38, %v4753
        %v4755 = vsel %vm4752, %v4754, %v4750
        %v4756 = vmul.f32 1.0, %v4755
        %v4757 = vxor.u32 %v4727, 2147483648
        %v4758 = vmul.f32 %v4757, 1.442695
        %v4759 = vpow.pop %v4758
        %v4760 = vadd.f32 %v4759, 1.0
        %v4761 = vrcp.pop %v4760
        %v4762 = vmul.f32 %v4760, %v4761
        %v4763 = vsub.f32 1.0, %v4762
        %v4764 = vmul.f32 %v4761, %v4763
        %v4765 = vadd.f32 %v4761, %v4764
        %vm4766 = vweird.f32 %v4760
        %vm4767 = vweird.f32 %v4761
        %vm4768 = vmor %vm4766, %vm4767
        %v4769 = vsel %vm4768, %v4761, %v4765
        %v4770 = vand.u32 2147483647, %v4760
        %vm4771 = vcmp.eq.f32.partialorder %v4770, 8.507059e+37
        %v4772 = vand.u32 %v4760, 2147483648
        %v4773 = vor.u32 1.1754944e-38, %v4772
        %v4774 = vsel %vm4771, %v4773, %v4769
        %v4775 = vmul.f32 1.0, %v4774
        %v4776 = vtanh.pop %v4728
        %v4777 = vxor.u32 %v4729, 2147483648
        %v4778 = vmul.f32 %v4777, 1.442695
        %v4779 = vpow.pop %v4778
        %v4780 = vadd.f32 %v4779, 1.0
        %v4781 = vrcp.pop %v4780
        %v4782 = vmul.f32 %v4780, %v4781
        %v4783 = vsub.f32 1.0, %v4782
        %v4784 = vmul.f32 %v4781, %v4783
        %v4785 = vadd.f32 %v4781, %v4784
        %vm4786 = vweird.f32 %v4780
        %vm4787 = vweird.f32 %v4781
        %vm4788 = vmor %vm4786, %vm4787
        %v4789 = vsel %vm4788, %v4781, %v4785
        %v4790 = vand.u32 2147483647, %v4780
        %vm4791 = vcmp.eq.f32.partialorder %v4790, 8.507059e+37
        %v4792 = vand.u32 %v4780, 2147483648
        %v4793 = vor.u32 1.1754944e-38, %v4792
        %v4794 = vsel %vm4791, %v4793, %v4789
        %v4795 = vmul.f32 1.0, %v4794
        %v4796 = vmul.f32 %v4775, %v4444
        %v4797 = vmul.f32 %v4756, %v4776
        %v4798 = vadd.f32 %v4796, %v4797
        %v4799 = vtanh.pop %v4798
        %v4800 = vmul.f32 %v4795, %v4799
        %v4801 = vxor.u32 %v4734, 2147483648
        %v4802 = vmul.f32 %v4801, 1.442695
        %v4803 = vpow.pop %v4802
        %v4804 = vadd.f32 %v4803, 1.0
        %v4805 = vrcp.pop %v4804
        %v4806 = vmul.f32 %v4804, %v4805
        %v4807 = vsub.f32 1.0, %v4806
        %v4808 = vmul.f32 %v4805, %v4807
        %v4809 = vadd.f32 %v4805, %v4808
        %vm4810 = vweird.f32 %v4804
        %vm4811 = vweird.f32 %v4805
        %vm4812 = vmor %vm4810, %vm4811
        %v4813 = vsel %vm4812, %v4805, %v4809
        %v4814 = vand.u32 2147483647, %v4804
        %vm4815 = vcmp.eq.f32.partialorder %v4814, 8.507059e+37
        %v4816 = vand.u32 %v4804, 2147483648
        %v4817 = vor.u32 1.1754944e-38, %v4816
        %v4818 = vsel %vm4815, %v4817, %v4813
        %v4819 = vmul.f32 1.0, %v4818
        %v4820 = vxor.u32 %v4735, 2147483648
        %v4821 = vmul.f32 %v4820, 1.442695
        %v4822 = vpow.pop %v4821
        %v4823 = vadd.f32 %v4822, 1.0
        %v4824 = vrcp.pop %v4823
        %v4825 = vmul.f32 %v4823, %v4824
        %v4826 = vsub.f32 1.0, %v4825
        %v4827 = vmul.f32 %v4824, %v4826
        %v4828 = vadd.f32 %v4824, %v4827
        %vm4829 = vweird.f32 %v4823
        %vm4830 = vweird.f32 %v4824
        %vm4831 = vmor %vm4829, %vm4830
        %v4832 = vsel %vm4831, %v4824, %v4828
        %v4833 = vand.u32 2147483647, %v4823
        %vm4834 = vcmp.eq.f32.partialorder %v4833, 8.507059e+37
        %v4835 = vand.u32 %v4823, 2147483648
        %v4836 = vor.u32 1.1754944e-38, %v4835
        %v4837 = vsel %vm4834, %v4836, %v4832
        %v4838 = vmul.f32 1.0, %v4837
        %v4839 = vtanh.pop %v4736
        %v4840 = vxor.u32 %v4737, 2147483648
        %v4841 = vmul.f32 %v4840, 1.442695
        %v4842 = vpow.pop %v4841
        %v4843 = vadd.f32 %v4842, 1.0
        %v4844 = vrcp.pop %v4843
        %v4845 = vmul.f32 %v4843, %v4844
        %v4846 = vsub.f32 1.0, %v4845
        %v4847 = vmul.f32 %v4844, %v4846
        %v4848 = vadd.f32 %v4844, %v4847
        %vm4849 = vweird.f32 %v4843
        %vm4850 = vweird.f32 %v4844
        %vm4851 = vmor %vm4849, %vm4850
        %v4852 = vsel %vm4851, %v4844, %v4848
        %v4853 = vand.u32 2147483647, %v4843
        %vm4854 = vcmp.eq.f32.partialorder %v4853, 8.507059e+37
        %v4855 = vand.u32 %v4843, 2147483648
        %v4856 = vor.u32 1.1754944e-38, %v4855
        %v4857 = vsel %vm4854, %v4856, %v4852
        %v4858 = vmul.f32 1.0, %v4857
        %v4859 = vmul.f32 %v4838, %v4507
        %v4860 = vmul.f32 %v4819, %v4839
        %v4861 = vadd.f32 %v4859, %v4860
        %v4862 = vtanh.pop %v4861
        %v4863 = vmul.f32 %v4858, %v4862
        %4864 = vst [vmem:[#allocation2 + $0x40] sm:$0xff] %v4800
        %4865 = vst [vmem:[#allocation2 + $0x38] sm:$0xff] %v4863
        %v4866 = vpack.c.bf16 %v4800, %v4800
        %v4867 = vpack.c.bf16 %v4863, %v4863
        %4868 = vmatpush.bf16.msra.mxu0 %v2898
        %4869 = vmatpush.bf16.msra.mxu0 %v2890
        %4870 = vmatpush.bf16.msra.mxu0 %v2882
        %4871 = vmatpush.bf16.msra.mxu0 %v2874
        %4872 = vmatpush.bf16.msra.mxu0 %v2866
        %4873 = vmatpush.bf16.msra.mxu0 %v2858
        %4874 = vmatpush.bf16.msra.mxu0 %v2850
        %4875 = vmatpush.bf16.msra.mxu0 %v2842
        %4876 = vmatmul.bf16.gmra.mxu0 %v4866
        %v4877 = vpop.f32.mrf.mxu0
        %v4878 = vadd.f32 0.0, %v4877
        %v4879 = vpop.f32.mrf.mxu0
        %4880 = vdwg.mxu0
        %4881 = vmatpush.bf16.msra.mxu0 %v2962
        %4882 = vmatpush.bf16.msra.mxu0 %v2954
        %4883 = vmatpush.bf16.msra.mxu0 %v2946
        %4884 = vmatpush.bf16.msra.mxu0 %v2938
        %4885 = vmatpush.bf16.msra.mxu0 %v2930
        %4886 = vmatpush.bf16.msra.mxu0 %v2922
        %4887 = vmatpush.bf16.msra.mxu0 %v2914
        %4888 = vmatpush.bf16.msra.mxu0 %v2906
        %4889 = vmatmul.bf16.gmra.mxu0 %v4867
        %v4890 = vpop.f32.mrf.mxu0
        %v4891 = vadd.f32 %v4878, %v4890
        %v4892 = vpop.f32.mrf.mxu0
        %4893 = vdwg.mxu0
        %4894 = vmatpush.bf16.msra.mxu0 %v2899
        %4895 = vmatpush.bf16.msra.mxu0 %v2891
        %4896 = vmatpush.bf16.msra.mxu0 %v2883
        %4897 = vmatpush.bf16.msra.mxu0 %v2875
        %4898 = vmatpush.bf16.msra.mxu0 %v2867
        %4899 = vmatpush.bf16.msra.mxu0 %v2859
        %4900 = vmatpush.bf16.msra.mxu0 %v2851
        %4901 = vmatpush.bf16.msra.mxu0 %v2843
        %4902 = vmatmul.bf16.gmra.mxu0 %v4866
        %v4903 = vpop.f32.mrf.mxu0
        %v4904 = vadd.f32 0.0, %v4903
        %v4905 = vpop.f32.mrf.mxu0
        %4906 = vdwg.mxu0
        %4907 = vmatpush.bf16.msra.mxu0 %v2963
        %4908 = vmatpush.bf16.msra.mxu0 %v2955
        %4909 = vmatpush.bf16.msra.mxu0 %v2947
        %4910 = vmatpush.bf16.msra.mxu0 %v2939
        %4911 = vmatpush.bf16.msra.mxu0 %v2931
        %4912 = vmatpush.bf16.msra.mxu0 %v2923
        %4913 = vmatpush.bf16.msra.mxu0 %v2915
        %4914 = vmatpush.bf16.msra.mxu0 %v2907
        %4915 = vmatmul.bf16.gmra.mxu0 %v4867
        %v4916 = vpop.f32.mrf.mxu0
        %v4917 = vadd.f32 %v4904, %v4916
        %v4918 = vpop.f32.mrf.mxu0
        %4919 = vdwg.mxu0
        %4920 = vmatpush.bf16.msra.mxu0 %v2900
        %4921 = vmatpush.bf16.msra.mxu0 %v2892
        %4922 = vmatpush.bf16.msra.mxu0 %v2884
        %4923 = vmatpush.bf16.msra.mxu0 %v2876
        %4924 = vmatpush.bf16.msra.mxu0 %v2868
        %4925 = vmatpush.bf16.msra.mxu0 %v2860
        %4926 = vmatpush.bf16.msra.mxu0 %v2852
        %4927 = vmatpush.bf16.msra.mxu0 %v2844
        %4928 = vmatmul.bf16.gmra.mxu0 %v4866
        %v4929 = vpop.f32.mrf.mxu0
        %v4930 = vadd.f32 0.0, %v4929
        %v4931 = vpop.f32.mrf.mxu0
        %4932 = vdwg.mxu0
        %4933 = vmatpush.bf16.msra.mxu0 %v2964
        %4934 = vmatpush.bf16.msra.mxu0 %v2956
        %4935 = vmatpush.bf16.msra.mxu0 %v2948
        %4936 = vmatpush.bf16.msra.mxu0 %v2940
        %4937 = vmatpush.bf16.msra.mxu0 %v2932
        %4938 = vmatpush.bf16.msra.mxu0 %v2924
        %4939 = vmatpush.bf16.msra.mxu0 %v2916
        %4940 = vmatpush.bf16.msra.mxu0 %v2908
        %4941 = vmatmul.bf16.gmra.mxu0 %v4867
        %v4942 = vpop.f32.mrf.mxu0
        %v4943 = vadd.f32 %v4930, %v4942
        %v4944 = vpop.f32.mrf.mxu0
        %4945 = vdwg.mxu0
        %4946 = vmatpush.bf16.msra.mxu0 %v2901
        %4947 = vmatpush.bf16.msra.mxu0 %v2893
        %4948 = vmatpush.bf16.msra.mxu0 %v2885
        %4949 = vmatpush.bf16.msra.mxu0 %v2877
        %4950 = vmatpush.bf16.msra.mxu0 %v2869
        %4951 = vmatpush.bf16.msra.mxu0 %v2861
        %4952 = vmatpush.bf16.msra.mxu0 %v2853
        %4953 = vmatpush.bf16.msra.mxu0 %v2845
        %4954 = vmatmul.bf16.gmra.mxu0 %v4866
        %v4955 = vpop.f32.mrf.mxu0
        %v4956 = vadd.f32 0.0, %v4955
        %v4957 = vpop.f32.mrf.mxu0
        %4958 = vdwg.mxu0
        %4959 = vmatpush.bf16.msra.mxu0 %v2965
        %4960 = vmatpush.bf16.msra.mxu0 %v2957
        %4961 = vmatpush.bf16.msra.mxu0 %v2949
        %4962 = vmatpush.bf16.msra.mxu0 %v2941
        %4963 = vmatpush.bf16.msra.mxu0 %v2933
        %4964 = vmatpush.bf16.msra.mxu0 %v2925
        %4965 = vmatpush.bf16.msra.mxu0 %v2917
        %4966 = vmatpush.bf16.msra.mxu0 %v2909
        %4967 = vmatmul.bf16.gmra.mxu0 %v4867
        %v4968 = vpop.f32.mrf.mxu0
        %v4969 = vadd.f32 %v4956, %v4968
        %v4970 = vpop.f32.mrf.mxu0
        %4971 = vdwg.mxu0
        %4972 = vmatpush.bf16.msra.mxu0 %v2902
        %4973 = vmatpush.bf16.msra.mxu0 %v2894
        %4974 = vmatpush.bf16.msra.mxu0 %v2886
        %4975 = vmatpush.bf16.msra.mxu0 %v2878
        %4976 = vmatpush.bf16.msra.mxu0 %v2870
        %4977 = vmatpush.bf16.msra.mxu0 %v2862
        %4978 = vmatpush.bf16.msra.mxu0 %v2854
        %4979 = vmatpush.bf16.msra.mxu0 %v2846
        %4980 = vmatmul.bf16.gmra.mxu0 %v4866
        %v4981 = vpop.f32.mrf.mxu0
        %v4982 = vadd.f32 0.0, %v4981
        %v4983 = vpop.f32.mrf.mxu0
        %4984 = vdwg.mxu0
        %4985 = vmatpush.bf16.msra.mxu0 %v2966
        %4986 = vmatpush.bf16.msra.mxu0 %v2958
        %4987 = vmatpush.bf16.msra.mxu0 %v2950
        %4988 = vmatpush.bf16.msra.mxu0 %v2942
        %4989 = vmatpush.bf16.msra.mxu0 %v2934
        %4990 = vmatpush.bf16.msra.mxu0 %v2926
        %4991 = vmatpush.bf16.msra.mxu0 %v2918
        %4992 = vmatpush.bf16.msra.mxu0 %v2910
        %4993 = vmatmul.bf16.gmra.mxu0 %v4867
        %v4994 = vpop.f32.mrf.mxu0
        %v4995 = vadd.f32 %v4982, %v4994
        %v4996 = vpop.f32.mrf.mxu0
        %4997 = vdwg.mxu0
        %4998 = vmatpush.bf16.msra.mxu0 %v2903
        %4999 = vmatpush.bf16.msra.mxu0 %v2895
        %5000 = vmatpush.bf16.msra.mxu0 %v2887
        %5001 = vmatpush.bf16.msra.mxu0 %v2879
        %5002 = vmatpush.bf16.msra.mxu0 %v2871
        %5003 = vmatpush.bf16.msra.mxu0 %v2863
        %5004 = vmatpush.bf16.msra.mxu0 %v2855
        %5005 = vmatpush.bf16.msra.mxu0 %v2847
        %5006 = vmatmul.bf16.gmra.mxu0 %v4866
        %v5007 = vpop.f32.mrf.mxu0
        %v5008 = vadd.f32 0.0, %v5007
        %v5009 = vpop.f32.mrf.mxu0
        %5010 = vdwg.mxu0
        %5011 = vmatpush.bf16.msra.mxu0 %v2967
        %5012 = vmatpush.bf16.msra.mxu0 %v2959
        %5013 = vmatpush.bf16.msra.mxu0 %v2951
        %5014 = vmatpush.bf16.msra.mxu0 %v2943
        %5015 = vmatpush.bf16.msra.mxu0 %v2935
        %5016 = vmatpush.bf16.msra.mxu0 %v2927
        %5017 = vmatpush.bf16.msra.mxu0 %v2919
        %5018 = vmatpush.bf16.msra.mxu0 %v2911
        %5019 = vmatmul.bf16.gmra.mxu0 %v4867
        %v5020 = vpop.f32.mrf.mxu0
        %v5021 = vadd.f32 %v5008, %v5020
        %v5022 = vpop.f32.mrf.mxu0
        %5023 = vdwg.mxu0
        %5024 = vmatpush.bf16.msra.mxu0 %v2904
        %5025 = vmatpush.bf16.msra.mxu0 %v2896
        %5026 = vmatpush.bf16.msra.mxu0 %v2888
        %5027 = vmatpush.bf16.msra.mxu0 %v2880
        %5028 = vmatpush.bf16.msra.mxu0 %v2872
        %5029 = vmatpush.bf16.msra.mxu0 %v2864
        %5030 = vmatpush.bf16.msra.mxu0 %v2856
        %5031 = vmatpush.bf16.msra.mxu0 %v2848
        %5032 = vmatmul.bf16.gmra.mxu0 %v4866
        %v5033 = vpop.f32.mrf.mxu0
        %v5034 = vadd.f32 0.0, %v5033
        %v5035 = vpop.f32.mrf.mxu0
        %5036 = vdwg.mxu0
        %5037 = vmatpush.bf16.msra.mxu0 %v2968
        %5038 = vmatpush.bf16.msra.mxu0 %v2960
        %5039 = vmatpush.bf16.msra.mxu0 %v2952
        %5040 = vmatpush.bf16.msra.mxu0 %v2944
        %5041 = vmatpush.bf16.msra.mxu0 %v2936
        %5042 = vmatpush.bf16.msra.mxu0 %v2928
        %5043 = vmatpush.bf16.msra.mxu0 %v2920
        %5044 = vmatpush.bf16.msra.mxu0 %v2912
        %5045 = vmatmul.bf16.gmra.mxu0 %v4867
        %v5046 = vpop.f32.mrf.mxu0
        %v5047 = vadd.f32 %v5034, %v5046
        %v5048 = vpop.f32.mrf.mxu0
        %5049 = vdwg.mxu0
        %5050 = vmatpush.bf16.msra.mxu0 %v2905
        %5051 = vmatpush.bf16.msra.mxu0 %v2897
        %5052 = vmatpush.bf16.msra.mxu0 %v2889
        %5053 = vmatpush.bf16.msra.mxu0 %v2881
        %5054 = vmatpush.bf16.msra.mxu0 %v2873
        %5055 = vmatpush.bf16.msra.mxu0 %v2865
        %5056 = vmatpush.bf16.msra.mxu0 %v2857
        %5057 = vmatpush.bf16.msra.mxu0 %v2849
        %5058 = vmatmul.bf16.gmra.mxu0 %v4866
        %v5059 = vpop.f32.mrf.mxu0
        %v5060 = vadd.f32 0.0, %v5059
        %v5061 = vpop.f32.mrf.mxu0
        %5062 = vdwg.mxu0
        %5063 = vmatpush.bf16.msra.mxu0 %v2969
        %5064 = vmatpush.bf16.msra.mxu0 %v2961
        %5065 = vmatpush.bf16.msra.mxu0 %v2953
        %5066 = vmatpush.bf16.msra.mxu0 %v2945
        %5067 = vmatpush.bf16.msra.mxu0 %v2937
        %5068 = vmatpush.bf16.msra.mxu0 %v2929
        %5069 = vmatpush.bf16.msra.mxu0 %v2921
        %5070 = vmatpush.bf16.msra.mxu0 %v2913
        %5071 = vmatmul.bf16.gmra.mxu0 %v4867
        %v5072 = vpop.f32.mrf.mxu0
        %v5073 = vadd.f32 %v5060, %v5072
        %v5074 = vpop.f32.mrf.mxu0
        %5075 = vdwg.mxu0
        %v5076 = vld [vmem:[#allocation3 + $0x140] sm:$0xff]
        %v5077 = vld [vmem:[#allocation3 + $0x148] sm:$0xff]
        %v5078 = vld [vmem:[#allocation3 + $0x150] sm:$0xff]
        %v5079 = vld [vmem:[#allocation3 + $0x158] sm:$0xff]
        %v5080 = vadd.f32 %v5076, %v4891
        %v5081 = vadd.f32 %v5077, %v4917
        %v5082 = vadd.f32 %v5078, %v4943
        %v5083 = vadd.f32 %v5079, %v4969
        %v5084 = vld [vmem:[#allocation3 + $0xa0] sm:$0xff]
        %v5085 = vld [vmem:[#allocation3 + $0xa8] sm:$0xff]
        %v5086 = vld [vmem:[#allocation3 + $0xb0] sm:$0xff]
        %v5087 = vld [vmem:[#allocation3 + $0xb8] sm:$0xff]
        %v5088 = vadd.f32 %v5084, %v4995
        %v5089 = vadd.f32 %v5085, %v5021
        %v5090 = vadd.f32 %v5086, %v5047
        %v5091 = vadd.f32 %v5087, %v5073
        %v5092 = vxor.u32 %v5080, 2147483648
        %v5093 = vmul.f32 %v5092, 1.442695
        %v5094 = vpow.pop %v5093
        %v5095 = vadd.f32 %v5094, 1.0
        %v5096 = vrcp.pop %v5095
        %v5097 = vmul.f32 %v5095, %v5096
        %v5098 = vsub.f32 1.0, %v5097
        %v5099 = vmul.f32 %v5096, %v5098
        %v5100 = vadd.f32 %v5096, %v5099
        %vm5101 = vweird.f32 %v5095
        %vm5102 = vweird.f32 %v5096
        %vm5103 = vmor %vm5101, %vm5102
        %v5104 = vsel %vm5103, %v5096, %v5100
        %v5105 = vand.u32 2147483647, %v5095
        %vm5106 = vcmp.eq.f32.partialorder %v5105, 8.507059e+37
        %v5107 = vand.u32 %v5095, 2147483648
        %v5108 = vor.u32 1.1754944e-38, %v5107
        %v5109 = vsel %vm5106, %v5108, %v5104
        %v5110 = vmul.f32 1.0, %v5109
        %v5111 = vxor.u32 %v5081, 2147483648
        %v5112 = vmul.f32 %v5111, 1.442695
        %v5113 = vpow.pop %v5112
        %v5114 = vadd.f32 %v5113, 1.0
        %v5115 = vrcp.pop %v5114
        %v5116 = vmul.f32 %v5114, %v5115
        %v5117 = vsub.f32 1.0, %v5116
        %v5118 = vmul.f32 %v5115, %v5117
        %v5119 = vadd.f32 %v5115, %v5118
        %vm5120 = vweird.f32 %v5114
        %vm5121 = vweird.f32 %v5115
        %vm5122 = vmor %vm5120, %vm5121
        %v5123 = vsel %vm5122, %v5115, %v5119
        %v5124 = vand.u32 2147483647, %v5114
        %vm5125 = vcmp.eq.f32.partialorder %v5124, 8.507059e+37
        %v5126 = vand.u32 %v5114, 2147483648
        %v5127 = vor.u32 1.1754944e-38, %v5126
        %v5128 = vsel %vm5125, %v5127, %v5123
        %v5129 = vmul.f32 1.0, %v5128
        %v5130 = vtanh.pop %v5082
        %v5131 = vxor.u32 %v5083, 2147483648
        %v5132 = vmul.f32 %v5131, 1.442695
        %v5133 = vpow.pop %v5132
        %v5134 = vadd.f32 %v5133, 1.0
        %v5135 = vrcp.pop %v5134
        %v5136 = vmul.f32 %v5134, %v5135
        %v5137 = vsub.f32 1.0, %v5136
        %v5138 = vmul.f32 %v5135, %v5137
        %v5139 = vadd.f32 %v5135, %v5138
        %vm5140 = vweird.f32 %v5134
        %vm5141 = vweird.f32 %v5135
        %vm5142 = vmor %vm5140, %vm5141
        %v5143 = vsel %vm5142, %v5135, %v5139
        %v5144 = vand.u32 2147483647, %v5134
        %vm5145 = vcmp.eq.f32.partialorder %v5144, 8.507059e+37
        %v5146 = vand.u32 %v5134, 2147483648
        %v5147 = vor.u32 1.1754944e-38, %v5146
        %v5148 = vsel %vm5145, %v5147, %v5143
        %v5149 = vmul.f32 1.0, %v5148
        %v5150 = vmul.f32 %v5129, %v4798
        %v5151 = vmul.f32 %v5110, %v5130
        %v5152 = vadd.f32 %v5150, %v5151
        %v5153 = vtanh.pop %v5152
        %v5154 = vmul.f32 %v5149, %v5153
        %v5155 = vxor.u32 %v5088, 2147483648
        %v5156 = vmul.f32 %v5155, 1.442695
        %v5157 = vpow.pop %v5156
        %v5158 = vadd.f32 %v5157, 1.0
        %v5159 = vrcp.pop %v5158
        %v5160 = vmul.f32 %v5158, %v5159
        %v5161 = vsub.f32 1.0, %v5160
        %v5162 = vmul.f32 %v5159, %v5161
        %v5163 = vadd.f32 %v5159, %v5162
        %vm5164 = vweird.f32 %v5158
        %vm5165 = vweird.f32 %v5159
        %vm5166 = vmor %vm5164, %vm5165
        %v5167 = vsel %vm5166, %v5159, %v5163
        %v5168 = vand.u32 2147483647, %v5158
        %vm5169 = vcmp.eq.f32.partialorder %v5168, 8.507059e+37
        %v5170 = vand.u32 %v5158, 2147483648
        %v5171 = vor.u32 1.1754944e-38, %v5170
        %v5172 = vsel %vm5169, %v5171, %v5167
        %v5173 = vmul.f32 1.0, %v5172
        %v5174 = vxor.u32 %v5089, 2147483648
        %v5175 = vmul.f32 %v5174, 1.442695
        %v5176 = vpow.pop %v5175
        %v5177 = vadd.f32 %v5176, 1.0
        %v5178 = vrcp.pop %v5177
        %v5179 = vmul.f32 %v5177, %v5178
        %v5180 = vsub.f32 1.0, %v5179
        %v5181 = vmul.f32 %v5178, %v5180
        %v5182 = vadd.f32 %v5178, %v5181
        %vm5183 = vweird.f32 %v5177
        %vm5184 = vweird.f32 %v5178
        %vm5185 = vmor %vm5183, %vm5184
        %v5186 = vsel %vm5185, %v5178, %v5182
        %v5187 = vand.u32 2147483647, %v5177
        %vm5188 = vcmp.eq.f32.partialorder %v5187, 8.507059e+37
        %v5189 = vand.u32 %v5177, 2147483648
        %v5190 = vor.u32 1.1754944e-38, %v5189
        %v5191 = vsel %vm5188, %v5190, %v5186
        %v5192 = vmul.f32 1.0, %v5191
        %v5193 = vtanh.pop %v5090
        %v5194 = vxor.u32 %v5091, 2147483648
        %v5195 = vmul.f32 %v5194, 1.442695
        %v5196 = vpow.pop %v5195
        %v5197 = vadd.f32 %v5196, 1.0
        %v5198 = vrcp.pop %v5197
        %v5199 = vmul.f32 %v5197, %v5198
        %v5200 = vsub.f32 1.0, %v5199
        %v5201 = vmul.f32 %v5198, %v5200
        %v5202 = vadd.f32 %v5198, %v5201
        %vm5203 = vweird.f32 %v5197
        %vm5204 = vweird.f32 %v5198
        %vm5205 = vmor %vm5203, %vm5204
        %v5206 = vsel %vm5205, %v5198, %v5202
        %v5207 = vand.u32 2147483647, %v5197
        %vm5208 = vcmp.eq.f32.partialorder %v5207, 8.507059e+37
        %v5209 = vand.u32 %v5197, 2147483648
        %v5210 = vor.u32 1.1754944e-38, %v5209
        %v5211 = vsel %vm5208, %v5210, %v5206
        %v5212 = vmul.f32 1.0, %v5211
        %v5213 = vmul.f32 %v5192, %v4861
        %v5214 = vmul.f32 %v5173, %v5193
        %v5215 = vadd.f32 %v5213, %v5214
        %v5216 = vtanh.pop %v5215
        %v5217 = vmul.f32 %v5212, %v5216
        %5218 = vst [vmem:[#allocation2 + $0x50] sm:$0xff] %v5154
        %5219 = vst [vmem:[#allocation2 + $0x28] sm:$0xff] %v5217
        %v5220 = vpack.c.bf16 %v5154, %v5154
        %v5221 = vpack.c.bf16 %v5217, %v5217
        %5222 = vmatpush.bf16.msra.mxu0 %v2898
        %5223 = vmatpush.bf16.msra.mxu0 %v2890
        %5224 = vmatpush.bf16.msra.mxu0 %v2882
        %5225 = vmatpush.bf16.msra.mxu0 %v2874
        %5226 = vmatpush.bf16.msra.mxu0 %v2866
        %5227 = vmatpush.bf16.msra.mxu0 %v2858
        %5228 = vmatpush.bf16.msra.mxu0 %v2850
        %5229 = vmatpush.bf16.msra.mxu0 %v2842
        %5230 = vmatmul.bf16.gmra.mxu0 %v5220
        %v5231 = vpop.f32.mrf.mxu0
        %v5232 = vadd.f32 0.0, %v5231
        %v5233 = vpop.f32.mrf.mxu0
        %5234 = vdwg.mxu0
        %5235 = vmatpush.bf16.msra.mxu0 %v2962
        %5236 = vmatpush.bf16.msra.mxu0 %v2954
        %5237 = vmatpush.bf16.msra.mxu0 %v2946
        %5238 = vmatpush.bf16.msra.mxu0 %v2938
        %5239 = vmatpush.bf16.msra.mxu0 %v2930
        %5240 = vmatpush.bf16.msra.mxu0 %v2922
        %5241 = vmatpush.bf16.msra.mxu0 %v2914
        %5242 = vmatpush.bf16.msra.mxu0 %v2906
        %5243 = vmatmul.bf16.gmra.mxu0 %v5221
        %v5244 = vpop.f32.mrf.mxu0
        %v5245 = vadd.f32 %v5232, %v5244
        %v5246 = vpop.f32.mrf.mxu0
        %5247 = vdwg.mxu0
        %5248 = vmatpush.bf16.msra.mxu0 %v2899
        %5249 = vmatpush.bf16.msra.mxu0 %v2891
        %5250 = vmatpush.bf16.msra.mxu0 %v2883
        %5251 = vmatpush.bf16.msra.mxu0 %v2875
        %5252 = vmatpush.bf16.msra.mxu0 %v2867
        %5253 = vmatpush.bf16.msra.mxu0 %v2859
        %5254 = vmatpush.bf16.msra.mxu0 %v2851
        %5255 = vmatpush.bf16.msra.mxu0 %v2843
        %5256 = vmatmul.bf16.gmra.mxu0 %v5220
        %v5257 = vpop.f32.mrf.mxu0
        %v5258 = vadd.f32 0.0, %v5257
        %v5259 = vpop.f32.mrf.mxu0
        %5260 = vdwg.mxu0
        %5261 = vmatpush.bf16.msra.mxu0 %v2963
        %5262 = vmatpush.bf16.msra.mxu0 %v2955
        %5263 = vmatpush.bf16.msra.mxu0 %v2947
        %5264 = vmatpush.bf16.msra.mxu0 %v2939
        %5265 = vmatpush.bf16.msra.mxu0 %v2931
        %5266 = vmatpush.bf16.msra.mxu0 %v2923
        %5267 = vmatpush.bf16.msra.mxu0 %v2915
        %5268 = vmatpush.bf16.msra.mxu0 %v2907
        %5269 = vmatmul.bf16.gmra.mxu0 %v5221
        %v5270 = vpop.f32.mrf.mxu0
        %v5271 = vadd.f32 %v5258, %v5270
        %v5272 = vpop.f32.mrf.mxu0
        %5273 = vdwg.mxu0
        %5274 = vmatpush.bf16.msra.mxu0 %v2900
        %5275 = vmatpush.bf16.msra.mxu0 %v2892
        %5276 = vmatpush.bf16.msra.mxu0 %v2884
        %5277 = vmatpush.bf16.msra.mxu0 %v2876
        %5278 = vmatpush.bf16.msra.mxu0 %v2868
        %5279 = vmatpush.bf16.msra.mxu0 %v2860
        %5280 = vmatpush.bf16.msra.mxu0 %v2852
        %5281 = vmatpush.bf16.msra.mxu0 %v2844
        %5282 = vmatmul.bf16.gmra.mxu0 %v5220
        %v5283 = vpop.f32.mrf.mxu0
        %v5284 = vadd.f32 0.0, %v5283
        %v5285 = vpop.f32.mrf.mxu0
        %5286 = vdwg.mxu0
        %5287 = vmatpush.bf16.msra.mxu0 %v2964
        %5288 = vmatpush.bf16.msra.mxu0 %v2956
        %5289 = vmatpush.bf16.msra.mxu0 %v2948
        %5290 = vmatpush.bf16.msra.mxu0 %v2940
        %5291 = vmatpush.bf16.msra.mxu0 %v2932
        %5292 = vmatpush.bf16.msra.mxu0 %v2924
        %5293 = vmatpush.bf16.msra.mxu0 %v2916
        %5294 = vmatpush.bf16.msra.mxu0 %v2908
        %5295 = vmatmul.bf16.gmra.mxu0 %v5221
        %v5296 = vpop.f32.mrf.mxu0
        %v5297 = vadd.f32 %v5284, %v5296
        %v5298 = vpop.f32.mrf.mxu0
        %5299 = vdwg.mxu0
        %5300 = vmatpush.bf16.msra.mxu0 %v2901
        %5301 = vmatpush.bf16.msra.mxu0 %v2893
        %5302 = vmatpush.bf16.msra.mxu0 %v2885
        %5303 = vmatpush.bf16.msra.mxu0 %v2877
        %5304 = vmatpush.bf16.msra.mxu0 %v2869
        %5305 = vmatpush.bf16.msra.mxu0 %v2861
        %5306 = vmatpush.bf16.msra.mxu0 %v2853
        %5307 = vmatpush.bf16.msra.mxu0 %v2845
        %5308 = vmatmul.bf16.gmra.mxu0 %v5220
        %v5309 = vpop.f32.mrf.mxu0
        %v5310 = vadd.f32 0.0, %v5309
        %v5311 = vpop.f32.mrf.mxu0
        %5312 = vdwg.mxu0
        %5313 = vmatpush.bf16.msra.mxu0 %v2965
        %5314 = vmatpush.bf16.msra.mxu0 %v2957
        %5315 = vmatpush.bf16.msra.mxu0 %v2949
        %5316 = vmatpush.bf16.msra.mxu0 %v2941
        %5317 = vmatpush.bf16.msra.mxu0 %v2933
        %5318 = vmatpush.bf16.msra.mxu0 %v2925
        %5319 = vmatpush.bf16.msra.mxu0 %v2917
        %5320 = vmatpush.bf16.msra.mxu0 %v2909
        %5321 = vmatmul.bf16.gmra.mxu0 %v5221
        %v5322 = vpop.f32.mrf.mxu0
        %v5323 = vadd.f32 %v5310, %v5322
        %v5324 = vpop.f32.mrf.mxu0
        %5325 = vdwg.mxu0
        %5326 = vmatpush.bf16.msra.mxu0 %v2902
        %5327 = vmatpush.bf16.msra.mxu0 %v2894
        %5328 = vmatpush.bf16.msra.mxu0 %v2886
        %5329 = vmatpush.bf16.msra.mxu0 %v2878
        %5330 = vmatpush.bf16.msra.mxu0 %v2870
        %5331 = vmatpush.bf16.msra.mxu0 %v2862
        %5332 = vmatpush.bf16.msra.mxu0 %v2854
        %5333 = vmatpush.bf16.msra.mxu0 %v2846
        %5334 = vmatmul.bf16.gmra.mxu0 %v5220
        %v5335 = vpop.f32.mrf.mxu0
        %v5336 = vadd.f32 0.0, %v5335
        %v5337 = vpop.f32.mrf.mxu0
        %5338 = vdwg.mxu0
        %5339 = vmatpush.bf16.msra.mxu0 %v2966
        %5340 = vmatpush.bf16.msra.mxu0 %v2958
        %5341 = vmatpush.bf16.msra.mxu0 %v2950
        %5342 = vmatpush.bf16.msra.mxu0 %v2942
        %5343 = vmatpush.bf16.msra.mxu0 %v2934
        %5344 = vmatpush.bf16.msra.mxu0 %v2926
        %5345 = vmatpush.bf16.msra.mxu0 %v2918
        %5346 = vmatpush.bf16.msra.mxu0 %v2910
        %5347 = vmatmul.bf16.gmra.mxu0 %v5221
        %v5348 = vpop.f32.mrf.mxu0
        %v5349 = vadd.f32 %v5336, %v5348
        %v5350 = vpop.f32.mrf.mxu0
        %5351 = vdwg.mxu0
        %5352 = vmatpush.bf16.msra.mxu0 %v2903
        %5353 = vmatpush.bf16.msra.mxu0 %v2895
        %5354 = vmatpush.bf16.msra.mxu0 %v2887
        %5355 = vmatpush.bf16.msra.mxu0 %v2879
        %5356 = vmatpush.bf16.msra.mxu0 %v2871
        %5357 = vmatpush.bf16.msra.mxu0 %v2863
        %5358 = vmatpush.bf16.msra.mxu0 %v2855
        %5359 = vmatpush.bf16.msra.mxu0 %v2847
        %5360 = vmatmul.bf16.gmra.mxu0 %v5220
        %v5361 = vpop.f32.mrf.mxu0
        %v5362 = vadd.f32 0.0, %v5361
        %v5363 = vpop.f32.mrf.mxu0
        %5364 = vdwg.mxu0
        %5365 = vmatpush.bf16.msra.mxu0 %v2967
        %5366 = vmatpush.bf16.msra.mxu0 %v2959
        %5367 = vmatpush.bf16.msra.mxu0 %v2951
        %5368 = vmatpush.bf16.msra.mxu0 %v2943
        %5369 = vmatpush.bf16.msra.mxu0 %v2935
        %5370 = vmatpush.bf16.msra.mxu0 %v2927
        %5371 = vmatpush.bf16.msra.mxu0 %v2919
        %5372 = vmatpush.bf16.msra.mxu0 %v2911
        %5373 = vmatmul.bf16.gmra.mxu0 %v5221
        %v5374 = vpop.f32.mrf.mxu0
        %v5375 = vadd.f32 %v5362, %v5374
        %v5376 = vpop.f32.mrf.mxu0
        %5377 = vdwg.mxu0
        %5378 = vmatpush.bf16.msra.mxu0 %v2904
        %5379 = vmatpush.bf16.msra.mxu0 %v2896
        %5380 = vmatpush.bf16.msra.mxu0 %v2888
        %5381 = vmatpush.bf16.msra.mxu0 %v2880
        %5382 = vmatpush.bf16.msra.mxu0 %v2872
        %5383 = vmatpush.bf16.msra.mxu0 %v2864
        %5384 = vmatpush.bf16.msra.mxu0 %v2856
        %5385 = vmatpush.bf16.msra.mxu0 %v2848
        %5386 = vmatmul.bf16.gmra.mxu0 %v5220
        %v5387 = vpop.f32.mrf.mxu0
        %v5388 = vadd.f32 0.0, %v5387
        %v5389 = vpop.f32.mrf.mxu0
        %5390 = vdwg.mxu0
        %5391 = vmatpush.bf16.msra.mxu0 %v2968
        %5392 = vmatpush.bf16.msra.mxu0 %v2960
        %5393 = vmatpush.bf16.msra.mxu0 %v2952
        %5394 = vmatpush.bf16.msra.mxu0 %v2944
        %5395 = vmatpush.bf16.msra.mxu0 %v2936
        %5396 = vmatpush.bf16.msra.mxu0 %v2928
        %5397 = vmatpush.bf16.msra.mxu0 %v2920
        %5398 = vmatpush.bf16.msra.mxu0 %v2912
        %5399 = vmatmul.bf16.gmra.mxu0 %v5221
        %v5400 = vpop.f32.mrf.mxu0
        %v5401 = vadd.f32 %v5388, %v5400
        %v5402 = vpop.f32.mrf.mxu0
        %5403 = vdwg.mxu0
        %5404 = vmatpush.bf16.msra.mxu0 %v2905
        %5405 = vmatpush.bf16.msra.mxu0 %v2897
        %5406 = vmatpush.bf16.msra.mxu0 %v2889
        %5407 = vmatpush.bf16.msra.mxu0 %v2881
        %5408 = vmatpush.bf16.msra.mxu0 %v2873
        %5409 = vmatpush.bf16.msra.mxu0 %v2865
        %5410 = vmatpush.bf16.msra.mxu0 %v2857
        %5411 = vmatpush.bf16.msra.mxu0 %v2849
        %5412 = vmatmul.bf16.gmra.mxu0 %v5220
        %v5413 = vpop.f32.mrf.mxu0
        %v5414 = vadd.f32 0.0, %v5413
        %v5415 = vpop.f32.mrf.mxu0
        %5416 = vdwg.mxu0
        %5417 = vmatpush.bf16.msra.mxu0 %v2969
        %5418 = vmatpush.bf16.msra.mxu0 %v2961
        %5419 = vmatpush.bf16.msra.mxu0 %v2953
        %5420 = vmatpush.bf16.msra.mxu0 %v2945
        %5421 = vmatpush.bf16.msra.mxu0 %v2937
        %5422 = vmatpush.bf16.msra.mxu0 %v2929
        %5423 = vmatpush.bf16.msra.mxu0 %v2921
        %5424 = vmatpush.bf16.msra.mxu0 %v2913
        %5425 = vmatmul.bf16.gmra.mxu0 %v5221
        %v5426 = vpop.f32.mrf.mxu0
        %v5427 = vadd.f32 %v5414, %v5426
        %v5428 = vpop.f32.mrf.mxu0
        %5429 = vdwg.mxu0
        %v5430 = vld [vmem:[#allocation3 + $0x180] sm:$0xff]
        %v5431 = vld [vmem:[#allocation3 + $0x188] sm:$0xff]
        %v5432 = vld [vmem:[#allocation3 + $0x190] sm:$0xff]
        %v5433 = vld [vmem:[#allocation3 + $0x198] sm:$0xff]
        %v5434 = vadd.f32 %v5430, %v5245
        %v5435 = vadd.f32 %v5431, %v5271
        %v5436 = vadd.f32 %v5432, %v5297
        %v5437 = vadd.f32 %v5433, %v5323
        %v5438 = vld [vmem:[#allocation3 + $0x60] sm:$0xff]
        %v5439 = vld [vmem:[#allocation3 + $0x68] sm:$0xff]
        %v5440 = vld [vmem:[#allocation3 + $0x70] sm:$0xff]
        %v5441 = vld [vmem:[#allocation3 + $0x78] sm:$0xff]
        %v5442 = vadd.f32 %v5438, %v5349
        %v5443 = vadd.f32 %v5439, %v5375
        %v5444 = vadd.f32 %v5440, %v5401
        %v5445 = vadd.f32 %v5441, %v5427
        %v5446 = vxor.u32 %v5434, 2147483648
        %v5447 = vmul.f32 %v5446, 1.442695
        %v5448 = vpow.pop %v5447
        %v5449 = vadd.f32 %v5448, 1.0
        %v5450 = vrcp.pop %v5449
        %v5451 = vmul.f32 %v5449, %v5450
        %v5452 = vsub.f32 1.0, %v5451
        %v5453 = vmul.f32 %v5450, %v5452
        %v5454 = vadd.f32 %v5450, %v5453
        %vm5455 = vweird.f32 %v5449
        %vm5456 = vweird.f32 %v5450
        %vm5457 = vmor %vm5455, %vm5456
        %v5458 = vsel %vm5457, %v5450, %v5454
        %v5459 = vand.u32 2147483647, %v5449
        %vm5460 = vcmp.eq.f32.partialorder %v5459, 8.507059e+37
        %v5461 = vand.u32 %v5449, 2147483648
        %v5462 = vor.u32 1.1754944e-38, %v5461
        %v5463 = vsel %vm5460, %v5462, %v5458
        %v5464 = vmul.f32 1.0, %v5463
        %v5465 = vxor.u32 %v5435, 2147483648
        %v5466 = vmul.f32 %v5465, 1.442695
        %v5467 = vpow.pop %v5466
        %v5468 = vadd.f32 %v5467, 1.0
        %v5469 = vrcp.pop %v5468
        %v5470 = vmul.f32 %v5468, %v5469
        %v5471 = vsub.f32 1.0, %v5470
        %v5472 = vmul.f32 %v5469, %v5471
        %v5473 = vadd.f32 %v5469, %v5472
        %vm5474 = vweird.f32 %v5468
        %vm5475 = vweird.f32 %v5469
        %vm5476 = vmor %vm5474, %vm5475
        %v5477 = vsel %vm5476, %v5469, %v5473
        %v5478 = vand.u32 2147483647, %v5468
        %vm5479 = vcmp.eq.f32.partialorder %v5478, 8.507059e+37
        %v5480 = vand.u32 %v5468, 2147483648
        %v5481 = vor.u32 1.1754944e-38, %v5480
        %v5482 = vsel %vm5479, %v5481, %v5477
        %v5483 = vmul.f32 1.0, %v5482
        %v5484 = vtanh.pop %v5436
        %v5485 = vxor.u32 %v5437, 2147483648
        %v5486 = vmul.f32 %v5485, 1.442695
        %v5487 = vpow.pop %v5486
        %v5488 = vadd.f32 %v5487, 1.0
        %v5489 = vrcp.pop %v5488
        %v5490 = vmul.f32 %v5488, %v5489
        %v5491 = vsub.f32 1.0, %v5490
        %v5492 = vmul.f32 %v5489, %v5491
        %v5493 = vadd.f32 %v5489, %v5492
        %vm5494 = vweird.f32 %v5488
        %vm5495 = vweird.f32 %v5489
        %vm5496 = vmor %vm5494, %vm5495
        %v5497 = vsel %vm5496, %v5489, %v5493
        %v5498 = vand.u32 2147483647, %v5488
        %vm5499 = vcmp.eq.f32.partialorder %v5498, 8.507059e+37
        %v5500 = vand.u32 %v5488, 2147483648
        %v5501 = vor.u32 1.1754944e-38, %v5500
        %v5502 = vsel %vm5499, %v5501, %v5497
        %v5503 = vmul.f32 1.0, %v5502
        %v5504 = vmul.f32 %v5483, %v5152
        %v5505 = vmul.f32 %v5464, %v5484
        %v5506 = vadd.f32 %v5504, %v5505
        %v5507 = vtanh.pop %v5506
        %v5508 = vmul.f32 %v5503, %v5507
        %v5509 = vxor.u32 %v5442, 2147483648
        %v5510 = vmul.f32 %v5509, 1.442695
        %v5511 = vpow.pop %v5510
        %v5512 = vadd.f32 %v5511, 1.0
        %v5513 = vrcp.pop %v5512
        %v5514 = vmul.f32 %v5512, %v5513
        %v5515 = vsub.f32 1.0, %v5514
        %v5516 = vmul.f32 %v5513, %v5515
        %v5517 = vadd.f32 %v5513, %v5516
        %vm5518 = vweird.f32 %v5512
        %vm5519 = vweird.f32 %v5513
        %vm5520 = vmor %vm5518, %vm5519
        %v5521 = vsel %vm5520, %v5513, %v5517
        %v5522 = vand.u32 2147483647, %v5512
        %vm5523 = vcmp.eq.f32.partialorder %v5522, 8.507059e+37
        %v5524 = vand.u32 %v5512, 2147483648
        %v5525 = vor.u32 1.1754944e-38, %v5524
        %v5526 = vsel %vm5523, %v5525, %v5521
        %v5527 = vmul.f32 1.0, %v5526
        %v5528 = vxor.u32 %v5443, 2147483648
        %v5529 = vmul.f32 %v5528, 1.442695
        %v5530 = vpow.pop %v5529
        %v5531 = vadd.f32 %v5530, 1.0
        %v5532 = vrcp.pop %v5531
        %v5533 = vmul.f32 %v5531, %v5532
        %v5534 = vsub.f32 1.0, %v5533
        %v5535 = vmul.f32 %v5532, %v5534
        %v5536 = vadd.f32 %v5532, %v5535
        %vm5537 = vweird.f32 %v5531
        %vm5538 = vweird.f32 %v5532
        %vm5539 = vmor %vm5537, %vm5538
        %v5540 = vsel %vm5539, %v5532, %v5536
        %v5541 = vand.u32 2147483647, %v5531
        %vm5542 = vcmp.eq.f32.partialorder %v5541, 8.507059e+37
        %v5543 = vand.u32 %v5531, 2147483648
        %v5544 = vor.u32 1.1754944e-38, %v5543
        %v5545 = vsel %vm5542, %v5544, %v5540
        %v5546 = vmul.f32 1.0, %v5545
        %v5547 = vtanh.pop %v5444
        %v5548 = vxor.u32 %v5445, 2147483648
        %v5549 = vmul.f32 %v5548, 1.442695
        %v5550 = vpow.pop %v5549
        %v5551 = vadd.f32 %v5550, 1.0
        %v5552 = vrcp.pop %v5551
        %v5553 = vmul.f32 %v5551, %v5552
        %v5554 = vsub.f32 1.0, %v5553
        %v5555 = vmul.f32 %v5552, %v5554
        %v5556 = vadd.f32 %v5552, %v5555
        %vm5557 = vweird.f32 %v5551
        %vm5558 = vweird.f32 %v5552
        %vm5559 = vmor %vm5557, %vm5558
        %v5560 = vsel %vm5559, %v5552, %v5556
        %v5561 = vand.u32 2147483647, %v5551
        %vm5562 = vcmp.eq.f32.partialorder %v5561, 8.507059e+37
        %v5563 = vand.u32 %v5551, 2147483648
        %v5564 = vor.u32 1.1754944e-38, %v5563
        %v5565 = vsel %vm5562, %v5564, %v5560
        %v5566 = vmul.f32 1.0, %v5565
        %v5567 = vmul.f32 %v5546, %v5215
        %v5568 = vmul.f32 %v5527, %v5547
        %v5569 = vadd.f32 %v5567, %v5568
        %v5570 = vtanh.pop %v5569
        %v5571 = vmul.f32 %v5566, %v5570
        %5572 = vst [vmem:[#allocation2 + $0x60] sm:$0xff] %v5508
        %5573 = vst [vmem:[#allocation2 + $0x18] sm:$0xff] %v5571
        %v5574 = vpack.c.bf16 %v5508, %v5508
        %v5575 = vpack.c.bf16 %v5571, %v5571
        %5576 = vmatpush.bf16.msra.mxu0 %v2898
        %5577 = vmatpush.bf16.msra.mxu0 %v2890
        %5578 = vmatpush.bf16.msra.mxu0 %v2882
        %5579 = vmatpush.bf16.msra.mxu0 %v2874
        %5580 = vmatpush.bf16.msra.mxu0 %v2866
        %5581 = vmatpush.bf16.msra.mxu0 %v2858
        %5582 = vmatpush.bf16.msra.mxu0 %v2850
        %5583 = vmatpush.bf16.msra.mxu0 %v2842
        %5584 = vmatmul.bf16.gmra.mxu0 %v5574
        %v5585 = vpop.f32.mrf.mxu0
        %v5586 = vadd.f32 0.0, %v5585
        %v5587 = vpop.f32.mrf.mxu0
        %5588 = vdwg.mxu0
        %5589 = vmatpush.bf16.msra.mxu0 %v2962
        %5590 = vmatpush.bf16.msra.mxu0 %v2954
        %5591 = vmatpush.bf16.msra.mxu0 %v2946
        %5592 = vmatpush.bf16.msra.mxu0 %v2938
        %5593 = vmatpush.bf16.msra.mxu0 %v2930
        %5594 = vmatpush.bf16.msra.mxu0 %v2922
        %5595 = vmatpush.bf16.msra.mxu0 %v2914
        %5596 = vmatpush.bf16.msra.mxu0 %v2906
        %5597 = vmatmul.bf16.gmra.mxu0 %v5575
        %v5598 = vpop.f32.mrf.mxu0
        %v5599 = vadd.f32 %v5586, %v5598
        %v5600 = vpop.f32.mrf.mxu0
        %5601 = vdwg.mxu0
        %5602 = vmatpush.bf16.msra.mxu0 %v2899
        %5603 = vmatpush.bf16.msra.mxu0 %v2891
        %5604 = vmatpush.bf16.msra.mxu0 %v2883
        %5605 = vmatpush.bf16.msra.mxu0 %v2875
        %5606 = vmatpush.bf16.msra.mxu0 %v2867
        %5607 = vmatpush.bf16.msra.mxu0 %v2859
        %5608 = vmatpush.bf16.msra.mxu0 %v2851
        %5609 = vmatpush.bf16.msra.mxu0 %v2843
        %5610 = vmatmul.bf16.gmra.mxu0 %v5574
        %v5611 = vpop.f32.mrf.mxu0
        %v5612 = vadd.f32 0.0, %v5611
        %v5613 = vpop.f32.mrf.mxu0
        %5614 = vdwg.mxu0
        %5615 = vmatpush.bf16.msra.mxu0 %v2963
        %5616 = vmatpush.bf16.msra.mxu0 %v2955
        %5617 = vmatpush.bf16.msra.mxu0 %v2947
        %5618 = vmatpush.bf16.msra.mxu0 %v2939
        %5619 = vmatpush.bf16.msra.mxu0 %v2931
        %5620 = vmatpush.bf16.msra.mxu0 %v2923
        %5621 = vmatpush.bf16.msra.mxu0 %v2915
        %5622 = vmatpush.bf16.msra.mxu0 %v2907
        %5623 = vmatmul.bf16.gmra.mxu0 %v5575
        %v5624 = vpop.f32.mrf.mxu0
        %v5625 = vadd.f32 %v5612, %v5624
        %v5626 = vpop.f32.mrf.mxu0
        %5627 = vdwg.mxu0
        %5628 = vmatpush.bf16.msra.mxu0 %v2900
        %5629 = vmatpush.bf16.msra.mxu0 %v2892
        %5630 = vmatpush.bf16.msra.mxu0 %v2884
        %5631 = vmatpush.bf16.msra.mxu0 %v2876
        %5632 = vmatpush.bf16.msra.mxu0 %v2868
        %5633 = vmatpush.bf16.msra.mxu0 %v2860
        %5634 = vmatpush.bf16.msra.mxu0 %v2852
        %5635 = vmatpush.bf16.msra.mxu0 %v2844
        %5636 = vmatmul.bf16.gmra.mxu0 %v5574
        %v5637 = vpop.f32.mrf.mxu0
        %v5638 = vadd.f32 0.0, %v5637
        %v5639 = vpop.f32.mrf.mxu0
        %5640 = vdwg.mxu0
        %5641 = vmatpush.bf16.msra.mxu0 %v2964
        %5642 = vmatpush.bf16.msra.mxu0 %v2956
        %5643 = vmatpush.bf16.msra.mxu0 %v2948
        %5644 = vmatpush.bf16.msra.mxu0 %v2940
        %5645 = vmatpush.bf16.msra.mxu0 %v2932
        %5646 = vmatpush.bf16.msra.mxu0 %v2924
        %5647 = vmatpush.bf16.msra.mxu0 %v2916
        %5648 = vmatpush.bf16.msra.mxu0 %v2908
        %5649 = vmatmul.bf16.gmra.mxu0 %v5575
        %v5650 = vpop.f32.mrf.mxu0
        %v5651 = vadd.f32 %v5638, %v5650
        %v5652 = vpop.f32.mrf.mxu0
        %5653 = vdwg.mxu0
        %5654 = vmatpush.bf16.msra.mxu0 %v2901
        %5655 = vmatpush.bf16.msra.mxu0 %v2893
        %5656 = vmatpush.bf16.msra.mxu0 %v2885
        %5657 = vmatpush.bf16.msra.mxu0 %v2877
        %5658 = vmatpush.bf16.msra.mxu0 %v2869
        %5659 = vmatpush.bf16.msra.mxu0 %v2861
        %5660 = vmatpush.bf16.msra.mxu0 %v2853
        %5661 = vmatpush.bf16.msra.mxu0 %v2845
        %5662 = vmatmul.bf16.gmra.mxu0 %v5574
        %v5663 = vpop.f32.mrf.mxu0
        %v5664 = vadd.f32 0.0, %v5663
        %v5665 = vpop.f32.mrf.mxu0
        %5666 = vdwg.mxu0
        %5667 = vmatpush.bf16.msra.mxu0 %v2965
        %5668 = vmatpush.bf16.msra.mxu0 %v2957
        %5669 = vmatpush.bf16.msra.mxu0 %v2949
        %5670 = vmatpush.bf16.msra.mxu0 %v2941
        %5671 = vmatpush.bf16.msra.mxu0 %v2933
        %5672 = vmatpush.bf16.msra.mxu0 %v2925
        %5673 = vmatpush.bf16.msra.mxu0 %v2917
        %5674 = vmatpush.bf16.msra.mxu0 %v2909
        %5675 = vmatmul.bf16.gmra.mxu0 %v5575
        %v5676 = vpop.f32.mrf.mxu0
        %v5677 = vadd.f32 %v5664, %v5676
        %v5678 = vpop.f32.mrf.mxu0
        %5679 = vdwg.mxu0
        %5680 = vmatpush.bf16.msra.mxu0 %v2902
        %5681 = vmatpush.bf16.msra.mxu0 %v2894
        %5682 = vmatpush.bf16.msra.mxu0 %v2886
        %5683 = vmatpush.bf16.msra.mxu0 %v2878
        %5684 = vmatpush.bf16.msra.mxu0 %v2870
        %5685 = vmatpush.bf16.msra.mxu0 %v2862
        %5686 = vmatpush.bf16.msra.mxu0 %v2854
        %5687 = vmatpush.bf16.msra.mxu0 %v2846
        %5688 = vmatmul.bf16.gmra.mxu0 %v5574
        %v5689 = vpop.f32.mrf.mxu0
        %v5690 = vadd.f32 0.0, %v5689
        %v5691 = vpop.f32.mrf.mxu0
        %5692 = vdwg.mxu0
        %5693 = vmatpush.bf16.msra.mxu0 %v2966
        %5694 = vmatpush.bf16.msra.mxu0 %v2958
        %5695 = vmatpush.bf16.msra.mxu0 %v2950
        %5696 = vmatpush.bf16.msra.mxu0 %v2942
        %5697 = vmatpush.bf16.msra.mxu0 %v2934
        %5698 = vmatpush.bf16.msra.mxu0 %v2926
        %5699 = vmatpush.bf16.msra.mxu0 %v2918
        %5700 = vmatpush.bf16.msra.mxu0 %v2910
        %5701 = vmatmul.bf16.gmra.mxu0 %v5575
        %v5702 = vpop.f32.mrf.mxu0
        %v5703 = vadd.f32 %v5690, %v5702
        %v5704 = vpop.f32.mrf.mxu0
        %5705 = vdwg.mxu0
        %5706 = vmatpush.bf16.msra.mxu0 %v2903
        %5707 = vmatpush.bf16.msra.mxu0 %v2895
        %5708 = vmatpush.bf16.msra.mxu0 %v2887
        %5709 = vmatpush.bf16.msra.mxu0 %v2879
        %5710 = vmatpush.bf16.msra.mxu0 %v2871
        %5711 = vmatpush.bf16.msra.mxu0 %v2863
        %5712 = vmatpush.bf16.msra.mxu0 %v2855
        %5713 = vmatpush.bf16.msra.mxu0 %v2847
        %5714 = vmatmul.bf16.gmra.mxu0 %v5574
        %v5715 = vpop.f32.mrf.mxu0
        %v5716 = vadd.f32 0.0, %v5715
        %v5717 = vpop.f32.mrf.mxu0
        %5718 = vdwg.mxu0
        %5719 = vmatpush.bf16.msra.mxu0 %v2967
        %5720 = vmatpush.bf16.msra.mxu0 %v2959
        %5721 = vmatpush.bf16.msra.mxu0 %v2951
        %5722 = vmatpush.bf16.msra.mxu0 %v2943
        %5723 = vmatpush.bf16.msra.mxu0 %v2935
        %5724 = vmatpush.bf16.msra.mxu0 %v2927
        %5725 = vmatpush.bf16.msra.mxu0 %v2919
        %5726 = vmatpush.bf16.msra.mxu0 %v2911
        %5727 = vmatmul.bf16.gmra.mxu0 %v5575
        %v5728 = vpop.f32.mrf.mxu0
        %v5729 = vadd.f32 %v5716, %v5728
        %v5730 = vpop.f32.mrf.mxu0
        %5731 = vdwg.mxu0
        %5732 = vmatpush.bf16.msra.mxu0 %v2904
        %5733 = vmatpush.bf16.msra.mxu0 %v2896
        %5734 = vmatpush.bf16.msra.mxu0 %v2888
        %5735 = vmatpush.bf16.msra.mxu0 %v2880
        %5736 = vmatpush.bf16.msra.mxu0 %v2872
        %5737 = vmatpush.bf16.msra.mxu0 %v2864
        %5738 = vmatpush.bf16.msra.mxu0 %v2856
        %5739 = vmatpush.bf16.msra.mxu0 %v2848
        %5740 = vmatmul.bf16.gmra.mxu0 %v5574
        %v5741 = vpop.f32.mrf.mxu0
        %v5742 = vadd.f32 0.0, %v5741
        %v5743 = vpop.f32.mrf.mxu0
        %5744 = vdwg.mxu0
        %5745 = vmatpush.bf16.msra.mxu0 %v2968
        %5746 = vmatpush.bf16.msra.mxu0 %v2960
        %5747 = vmatpush.bf16.msra.mxu0 %v2952
        %5748 = vmatpush.bf16.msra.mxu0 %v2944
        %5749 = vmatpush.bf16.msra.mxu0 %v2936
        %5750 = vmatpush.bf16.msra.mxu0 %v2928
        %5751 = vmatpush.bf16.msra.mxu0 %v2920
        %5752 = vmatpush.bf16.msra.mxu0 %v2912
        %5753 = vmatmul.bf16.gmra.mxu0 %v5575
        %v5754 = vpop.f32.mrf.mxu0
        %v5755 = vadd.f32 %v5742, %v5754
        %v5756 = vpop.f32.mrf.mxu0
        %5757 = vdwg.mxu0
        %5758 = vmatpush.bf16.msra.mxu0 %v2905
        %5759 = vmatpush.bf16.msra.mxu0 %v2897
        %5760 = vmatpush.bf16.msra.mxu0 %v2889
        %5761 = vmatpush.bf16.msra.mxu0 %v2881
        %5762 = vmatpush.bf16.msra.mxu0 %v2873
        %5763 = vmatpush.bf16.msra.mxu0 %v2865
        %5764 = vmatpush.bf16.msra.mxu0 %v2857
        %5765 = vmatpush.bf16.msra.mxu0 %v2849
        %5766 = vmatmul.bf16.gmra.mxu0 %v5574
        %v5767 = vpop.f32.mrf.mxu0
        %v5768 = vadd.f32 0.0, %v5767
        %v5769 = vpop.f32.mrf.mxu0
        %5770 = vdwg.mxu0
        %5771 = vmatpush.bf16.msra.mxu0 %v2969
        %5772 = vmatpush.bf16.msra.mxu0 %v2961
        %5773 = vmatpush.bf16.msra.mxu0 %v2953
        %5774 = vmatpush.bf16.msra.mxu0 %v2945
        %5775 = vmatpush.bf16.msra.mxu0 %v2937
        %5776 = vmatpush.bf16.msra.mxu0 %v2929
        %5777 = vmatpush.bf16.msra.mxu0 %v2921
        %5778 = vmatpush.bf16.msra.mxu0 %v2913
        %5779 = vmatmul.bf16.gmra.mxu0 %v5575
        %v5780 = vpop.f32.mrf.mxu0
        %v5781 = vadd.f32 %v5768, %v5780
        %v5782 = vpop.f32.mrf.mxu0
        %5783 = vdwg.mxu0
        %v5784 = vld [vmem:[#allocation3 + $0x1c0] sm:$0xff]
        %v5785 = vld [vmem:[#allocation3 + $0x1c8] sm:$0xff]
        %v5786 = vld [vmem:[#allocation3 + $0x1d0] sm:$0xff]
        %v5787 = vld [vmem:[#allocation3 + $0x1d8] sm:$0xff]
        %v5788 = vadd.f32 %v5784, %v5599
        %v5789 = vadd.f32 %v5785, %v5625
        %v5790 = vadd.f32 %v5786, %v5651
        %v5791 = vadd.f32 %v5787, %v5677
        %v5792 = vld [vmem:[#allocation3 + $0x20] sm:$0xff]
        %v5793 = vld [vmem:[#allocation3 + $0x28] sm:$0xff]
        %v5794 = vld [vmem:[#allocation3 + $0x30] sm:$0xff]
        %v5795 = vld [vmem:[#allocation3 + $0x38] sm:$0xff]
        %v5796 = vadd.f32 %v5792, %v5703
        %v5797 = vadd.f32 %v5793, %v5729
        %v5798 = vadd.f32 %v5794, %v5755
        %v5799 = vadd.f32 %v5795, %v5781
        %v5800 = vxor.u32 %v5788, 2147483648
        %v5801 = vmul.f32 %v5800, 1.442695
        %v5802 = vpow.pop %v5801
        %v5803 = vadd.f32 %v5802, 1.0
        %v5804 = vrcp.pop %v5803
        %v5805 = vmul.f32 %v5803, %v5804
        %v5806 = vsub.f32 1.0, %v5805
        %v5807 = vmul.f32 %v5804, %v5806
        %v5808 = vadd.f32 %v5804, %v5807
        %vm5809 = vweird.f32 %v5803
        %vm5810 = vweird.f32 %v5804
        %vm5811 = vmor %vm5809, %vm5810
        %v5812 = vsel %vm5811, %v5804, %v5808
        %v5813 = vand.u32 2147483647, %v5803
        %vm5814 = vcmp.eq.f32.partialorder %v5813, 8.507059e+37
        %v5815 = vand.u32 %v5803, 2147483648
        %v5816 = vor.u32 1.1754944e-38, %v5815
        %v5817 = vsel %vm5814, %v5816, %v5812
        %v5818 = vmul.f32 1.0, %v5817
        %v5819 = vxor.u32 %v5789, 2147483648
        %v5820 = vmul.f32 %v5819, 1.442695
        %v5821 = vpow.pop %v5820
        %v5822 = vadd.f32 %v5821, 1.0
        %v5823 = vrcp.pop %v5822
        %v5824 = vmul.f32 %v5822, %v5823
        %v5825 = vsub.f32 1.0, %v5824
        %v5826 = vmul.f32 %v5823, %v5825
        %v5827 = vadd.f32 %v5823, %v5826
        %vm5828 = vweird.f32 %v5822
        %vm5829 = vweird.f32 %v5823
        %vm5830 = vmor %vm5828, %vm5829
        %v5831 = vsel %vm5830, %v5823, %v5827
        %v5832 = vand.u32 2147483647, %v5822
        %vm5833 = vcmp.eq.f32.partialorder %v5832, 8.507059e+37
        %v5834 = vand.u32 %v5822, 2147483648
        %v5835 = vor.u32 1.1754944e-38, %v5834
        %v5836 = vsel %vm5833, %v5835, %v5831
        %v5837 = vmul.f32 1.0, %v5836
        %v5838 = vtanh.pop %v5790
        %v5839 = vxor.u32 %v5791, 2147483648
        %v5840 = vmul.f32 %v5839, 1.442695
        %v5841 = vpow.pop %v5840
        %v5842 = vadd.f32 %v5841, 1.0
        %v5843 = vrcp.pop %v5842
        %v5844 = vmul.f32 %v5842, %v5843
        %v5845 = vsub.f32 1.0, %v5844
        %v5846 = vmul.f32 %v5843, %v5845
        %v5847 = vadd.f32 %v5843, %v5846
        %vm5848 = vweird.f32 %v5842
        %vm5849 = vweird.f32 %v5843
        %vm5850 = vmor %vm5848, %vm5849
        %v5851 = vsel %vm5850, %v5843, %v5847
        %v5852 = vand.u32 2147483647, %v5842
        %vm5853 = vcmp.eq.f32.partialorder %v5852, 8.507059e+37
        %v5854 = vand.u32 %v5842, 2147483648
        %v5855 = vor.u32 1.1754944e-38, %v5854
        %v5856 = vsel %vm5853, %v5855, %v5851
        %v5857 = vmul.f32 1.0, %v5856
        %v5858 = vmul.f32 %v5837, %v5506
        %v5859 = vmul.f32 %v5818, %v5838
        %v5860 = vadd.f32 %v5858, %v5859
        %v5861 = vtanh.pop %v5860
        %v5862 = vmul.f32 %v5857, %v5861
        %v5863 = vxor.u32 %v5796, 2147483648
        %v5864 = vmul.f32 %v5863, 1.442695
        %v5865 = vpow.pop %v5864
        %v5866 = vadd.f32 %v5865, 1.0
        %v5867 = vrcp.pop %v5866
        %v5868 = vmul.f32 %v5866, %v5867
        %v5869 = vsub.f32 1.0, %v5868
        %v5870 = vmul.f32 %v5867, %v5869
        %v5871 = vadd.f32 %v5867, %v5870
        %vm5872 = vweird.f32 %v5866
        %vm5873 = vweird.f32 %v5867
        %vm5874 = vmor %vm5872, %vm5873
        %v5875 = vsel %vm5874, %v5867, %v5871
        %v5876 = vand.u32 2147483647, %v5866
        %vm5877 = vcmp.eq.f32.partialorder %v5876, 8.507059e+37
        %v5878 = vand.u32 %v5866, 2147483648
        %v5879 = vor.u32 1.1754944e-38, %v5878
        %v5880 = vsel %vm5877, %v5879, %v5875
        %v5881 = vmul.f32 1.0, %v5880
        %v5882 = vxor.u32 %v5797, 2147483648
        %v5883 = vmul.f32 %v5882, 1.442695
        %v5884 = vpow.pop %v5883
        %v5885 = vadd.f32 %v5884, 1.0
        %v5886 = vrcp.pop %v5885
        %v5887 = vmul.f32 %v5885, %v5886
        %v5888 = vsub.f32 1.0, %v5887
        %v5889 = vmul.f32 %v5886, %v5888
        %v5890 = vadd.f32 %v5886, %v5889
        %vm5891 = vweird.f32 %v5885
        %vm5892 = vweird.f32 %v5886
        %vm5893 = vmor %vm5891, %vm5892
        %v5894 = vsel %vm5893, %v5886, %v5890
        %v5895 = vand.u32 2147483647, %v5885
        %vm5896 = vcmp.eq.f32.partialorder %v5895, 8.507059e+37
        %v5897 = vand.u32 %v5885, 2147483648
        %v5898 = vor.u32 1.1754944e-38, %v5897
        %v5899 = vsel %vm5896, %v5898, %v5894
        %v5900 = vmul.f32 1.0, %v5899
        %v5901 = vtanh.pop %v5798
        %v5902 = vxor.u32 %v5799, 2147483648
        %v5903 = vmul.f32 %v5902, 1.442695
        %v5904 = vpow.pop %v5903
        %v5905 = vadd.f32 %v5904, 1.0
        %v5906 = vrcp.pop %v5905
        %v5907 = vmul.f32 %v5905, %v5906
        %v5908 = vsub.f32 1.0, %v5907
        %v5909 = vmul.f32 %v5906, %v5908
        %v5910 = vadd.f32 %v5906, %v5909
        %vm5911 = vweird.f32 %v5905
        %vm5912 = vweird.f32 %v5906
        %vm5913 = vmor %vm5911, %vm5912
        %v5914 = vsel %vm5913, %v5906, %v5910
        %v5915 = vand.u32 2147483647, %v5905
        %vm5916 = vcmp.eq.f32.partialorder %v5915, 8.507059e+37
        %v5917 = vand.u32 %v5905, 2147483648
        %v5918 = vor.u32 1.1754944e-38, %v5917
        %v5919 = vsel %vm5916, %v5918, %v5914
        %v5920 = vmul.f32 1.0, %v5919
        %v5921 = vmul.f32 %v5900, %v5569
        %v5922 = vmul.f32 %v5881, %v5901
        %v5923 = vadd.f32 %v5921, %v5922
        %v5924 = vtanh.pop %v5923
        %v5925 = vmul.f32 %v5920, %v5924
        %5926 = vst [vmem:[#allocation2 + $0x70] sm:$0xff] %v5862
        %5927 = vst [vmem:[#allocation2 + $0x8] sm:$0xff] %v5925
        %p5928 = scmp.eq.s32.totalorder %s24, 1
        // Predicated region
        $region65: #{bilstm_apply.1} parent=47 // pred_check
          %p5929 = pneg %p5928
        $region66: #{bilstm_apply.1} parent=47 // pred_check_branch
          %5931 = sbr.rel (%p5929) target = $region68
        $region67: #{bilstm_apply.1} parent=47 // pred_region
          %v5932 = vld [vmem:[#allocation2 + $0x70] sm:$0xff]
          %v5933 = vld [vmem:[#allocation2 + $0x78] sm:$0xff]
          %v5934 = vpack.c.bf16 %v5932, %v5932
          %v5935 = vpack.c.bf16 %v5933, %v5933
          %v5936 = vld [vmem:[%s5] sm:$0xf]
          %v5937 = vld [vmem:[%s5 + $0x4] sm:$0xf]
          %v5938 = vld [vmem:[%s5 + $0x8] sm:$0xf]
          %v5939 = vld [vmem:[%s5 + $0xc] sm:$0xf]
          %v5940 = vld [vmem:[%s5 + $0x10] sm:$0xf]
          %v5941 = vld [vmem:[%s5 + $0x14] sm:$0xf]
          %v5942 = vld [vmem:[%s5 + $0x18] sm:$0xf]
          %v5943 = vld [vmem:[%s5 + $0x1c] sm:$0xf]
          %v5944 = vld [vmem:[%s5 + $0x20] sm:$0xf]
          %v5945 = vld [vmem:[%s5 + $0x24] sm:$0xf]
          %v5946 = vld [vmem:[%s5 + $0x28] sm:$0xf]
          %v5947 = vld [vmem:[%s5 + $0x2c] sm:$0xf]
          %v5948 = vld [vmem:[%s5 + $0x30] sm:$0xf]
          %v5949 = vld [vmem:[%s5 + $0x34] sm:$0xf]
          %v5950 = vld [vmem:[%s5 + $0x38] sm:$0xf]
          %v5951 = vld [vmem:[%s5 + $0x3c] sm:$0xf]
          %v5952 = vld [vmem:[%s5 + $0x40] sm:$0xf]
          %v5953 = vld [vmem:[%s5 + $0x44] sm:$0xf]
          %v5954 = vld [vmem:[%s5 + $0x48] sm:$0xf]
          %v5955 = vld [vmem:[%s5 + $0x4c] sm:$0xf]
          %v5956 = vld [vmem:[%s5 + $0x50] sm:$0xf]
          %v5957 = vld [vmem:[%s5 + $0x54] sm:$0xf]
          %v5958 = vld [vmem:[%s5 + $0x58] sm:$0xf]
          %v5959 = vld [vmem:[%s5 + $0x5c] sm:$0xf]
          %v5960 = vld [vmem:[%s5 + $0x60] sm:$0xf]
          %v5961 = vld [vmem:[%s5 + $0x64] sm:$0xf]
          %v5962 = vld [vmem:[%s5 + $0x68] sm:$0xf]
          %v5963 = vld [vmem:[%s5 + $0x6c] sm:$0xf]
          %v5964 = vld [vmem:[%s5 + $0x70] sm:$0xf]
          %v5965 = vld [vmem:[%s5 + $0x74] sm:$0xf]
          %v5966 = vld [vmem:[%s5 + $0x78] sm:$0xf]
          %v5967 = vld [vmem:[%s5 + $0x7c] sm:$0xf]
          %v5968 = vld [vmem:[%s6] sm:$0x1]
          %v5970 = vperm.slane %v5968, 0
          %v6004 = vunpack.c.l.b16 %v5936
          %v6005 = vunpack.c.l.b16 %v5937
          %v6006 = vunpack.c.l.b16 %v5938
          %v6007 = vunpack.c.l.b16 %v5939
          %v6008 = vunpack.c.l.b16 %v5940
          %v6009 = vunpack.c.l.b16 %v5941
          %v6010 = vunpack.c.l.b16 %v5942
          %v6011 = vunpack.c.l.b16 %v5943
          %v6012 = vunpack.c.l.b16 %v5944
          %v6013 = vunpack.c.l.b16 %v5945
          %v6014 = vunpack.c.l.b16 %v5946
          %v6015 = vunpack.c.l.b16 %v5947
          %v6016 = vunpack.c.l.b16 %v5948
          %v6017 = vunpack.c.l.b16 %v5949
          %v6018 = vunpack.c.l.b16 %v5950
          %v6019 = vunpack.c.l.b16 %v5951
          %v6020 = vunpack.c.l.b16 %v5952
          %v6021 = vunpack.c.l.b16 %v5953
          %v6022 = vunpack.c.l.b16 %v5954
          %v6023 = vunpack.c.l.b16 %v5955
          %v6024 = vunpack.c.l.b16 %v5956
          %v6025 = vunpack.c.l.b16 %v5957
          %v6026 = vunpack.c.l.b16 %v5958
          %v6027 = vunpack.c.l.b16 %v5959
          %v6028 = vunpack.c.l.b16 %v5960
          %v6029 = vunpack.c.l.b16 %v5961
          %v6030 = vunpack.c.l.b16 %v5962
          %v6031 = vunpack.c.l.b16 %v5963
          %v6032 = vunpack.c.l.b16 %v5964
          %v6033 = vunpack.c.l.b16 %v5965
          %v6034 = vunpack.c.l.b16 %v5966
          %v6035 = vunpack.c.l.b16 %v5967
          %v6036 = vpack.c.b16 %v6005, %v6004
          %v6037 = vpack.c.b16 %v6007, %v6006
          %v6038 = vpack.c.b16 %v6009, %v6008
          %v6039 = vpack.c.b16 %v6011, %v6010
          %v6040 = vpack.c.b16 %v6013, %v6012
          %v6041 = vpack.c.b16 %v6015, %v6014
          %v6042 = vpack.c.b16 %v6017, %v6016
          %v6043 = vpack.c.b16 %v6019, %v6018
          %v6044 = vpack.c.b16 %v6021, %v6020
          %v6045 = vpack.c.b16 %v6023, %v6022
          %v6046 = vpack.c.b16 %v6025, %v6024
          %v6047 = vpack.c.b16 %v6027, %v6026
          %v6048 = vpack.c.b16 %v6029, %v6028
          %v6049 = vpack.c.b16 %v6031, %v6030
          %v6050 = vpack.c.b16 %v6033, %v6032
          %v6051 = vpack.c.b16 %v6035, %v6034
          %6068 = vmatpush.bf16.msra.mxu0 %v6043
          %6069 = vmatpush.bf16.msra.mxu0 %v6042
          %6070 = vmatpush.bf16.msra.mxu0 %v6041
          %6071 = vmatpush.bf16.msra.mxu0 %v6040
          %6072 = vmatpush.bf16.msra.mxu0 %v6039
          %6073 = vmatpush.bf16.msra.mxu0 %v6038
          %6074 = vmatpush.bf16.msra.mxu0 %v6037
          %6075 = vmatpush.bf16.msra.mxu0 %v6036
          %6076 = vmatmul.bf16.gmra.mxu0 %v5934
          %v6077 = vpop.f32.mrf.mxu0
          %v6078 = vadd.f32 %v5970, %v6077
          %v6079 = vpop.f32.mrf.mxu0
          %6080 = vdwg.mxu0
          %6081 = vmatpush.bf16.msra.mxu0 %v6051
          %6082 = vmatpush.bf16.msra.mxu0 %v6050
          %6083 = vmatpush.bf16.msra.mxu0 %v6049
          %6084 = vmatpush.bf16.msra.mxu0 %v6048
          %6085 = vmatpush.bf16.msra.mxu0 %v6047
          %6086 = vmatpush.bf16.msra.mxu0 %v6046
          %6087 = vmatpush.bf16.msra.mxu0 %v6045
          %6088 = vmatpush.bf16.msra.mxu0 %v6044
          %6089 = vmatmul.bf16.gmra.mxu0 %v5935
          %v6090 = vpop.f32.mrf.mxu0
          %v6091 = vadd.f32 %v6078, %v6090
          %v6092 = vpop.f32.mrf.mxu0
          %6093 = vdwg.mxu0
          %vm6094 = vcmask 15360
          %v6095 = vsel %vm6094, %v6091, -inf
          %6096 = vmax.xlane.f32.xlu0 %v6095
          %v6097 = vpop.xlane.xlu0 %6096
          %v6098 = vsub.f32 %v6091, %v6097
          %v6099 = vmul.f32 %v6098, 1.442695
          %v6100 = vpow.pop %v6099
          %v6101 = vsel %vm6094, %v6100, 0.0
          %6102 = vadd.xlane.f32.xlu0 %v6101
          %v6103 = vpop.xlane.xlu0 %6102
          %v6104 = vrcp.pop %v6103
          %v6105 = vmul.f32 %v6103, %v6104
          %v6106 = vsub.f32 1.0, %v6105
          %v6107 = vmul.f32 %v6104, %v6106
          %v6108 = vadd.f32 %v6104, %v6107
          %vm6109 = vweird.f32 %v6103
          %vm6110 = vweird.f32 %v6104
          %vm6111 = vmor %vm6109, %vm6110
          %v6112 = vsel %vm6111, %v6104, %v6108
          %v6113 = vand.u32 2147483647, %v6103
          %vm6114 = vcmp.eq.f32.partialorder %v6113, 8.507059e+37
          %v6115 = vand.u32 %v6103, 2147483648
          %v6116 = vor.u32 1.1754944e-38, %v6115
          %v6117 = vsel %vm6114, %v6116, %v6112
          %v6118 = vmul.f32 %v6100, %v6117
          %6119 = vst.msk [vmem:[%s7] sm:$0xff] %vm6094, %v6118
        $region68: #{bilstm_apply.1} parent=47 // pred_fallthru
          _
        // Predicated region
        $region69: #{bilstm_apply.1} parent=47 // pred_check
          %p6120 = pneg %p204
        $region70: #{bilstm_apply.1} parent=47 // pred_check_branch
          %6122 = sbr.rel (%p6120) target = $region72
        $region71: #{bilstm_apply.1} parent=47 // pred_region
          _
        $region72: #{bilstm_apply.1} parent=47 // pred_fallthru
          _
        // Predicated region
        $region73: #{bilstm_apply.1} parent=47 // pred_check
          %p6123 = pneg %p204
        $region74: #{bilstm_apply.1} parent=47 // pred_check_branch
          %6125 = sbr.rel (%p6123) target = $region76
        $region75: #{bilstm_apply.1} parent=47 // pred_region
          _
        $region76: #{bilstm_apply.1} parent=47 // pred_fallthru
          _
      $region48: #{bilstm_apply.1} parent=5 // pred_fallthru
        _
      %p6126 = scmp.le.s32.totalorder 2, %s19
      // Predicated region
      $region77: #{bilstm_apply.1} parent=5 // pred_check
        %p6127 = pneg %p6126
      $region78: #{bilstm_apply.1} parent=5 // pred_check_branch
        %6129 = sbr.rel (%p6127) target = $region80
      $region79: #{bilstm_apply.1} parent=5 // pred_region
        %s6130 = ssub.s32 %s19, 2
      $region80: #{bilstm_apply.1} parent=5 // pred_fallthru
        _
    $region6: #{bilstm_apply.1} parent=1 // loop_footer
      %s23 = sadd.s32 1, %s19
    $region7: #{bilstm_apply.1} parent=1 // loop_footer_branch
      %18 = sbr.rel target = $region3
    $region8: #{bilstm_apply.1} parent=1 // loop_exit
      _
    %6131 = vsyncpa [#allocation5], 1
    %s6132 = scalar_lea.sflag [#allocation5], 1
    %6133 = vsyncpa %s6132, 1
    %6134 = vsyncpa [#allocation7], 1
    %s6135 = scalar_lea.sflag [#allocation7], 1
    %6136 = vsyncpa %s6135, 1

</llo_original>
